<compile_context>
chip_gen: v5e
topology: v5e:2x2
jax: 0.10.0
libtpu: 0.0.40
codegen_flags: <defaults>
</compile_context>

<pallas_src>
import functools

import jax
import jax.numpy as jnp
from jax import lax
from jax.experimental import pallas as pl
from jax.experimental.pallas import tpu as pltpu


def _round_up(x, m):
    return (x + m - 1) // m * m


def _softplus(x):
    # numerically stable softplus built only from exp/log/abs/max (Mosaic-safe)
    return jnp.maximum(x, 0.0) + jnp.log(1.0 + jnp.exp(-jnp.abs(x)))


_TAPS = tuple((oy, ox) for oy in (-1, 0, 1) for ox in (-1, 0, 1))


# -----------------------------------------------------------------------------
# Fused kernel: conv1 -> relu -> conv2 -> relu -> fused heads -> packed MLS
# -----------------------------------------------------------------------------
def _unet_proto_kernel(
    x_ref, w1_ref, w2_ref, b2_ref, wh_ref, bh_ref, pmu_ref, psig_ref, sel_ref,
    out_ref,
    h1_ref, col_ref,
    *, S, Wg, Nr, hidden, nclasses, proj_dim, NP):
    """One grid step = one image; backbone activations never leave VMEM."""
    bf16 = jnp.bfloat16
    f32 = jnp.float32

    # ---- conv1: wrapper-built im2col (+ones column folds the bias and makes
    # every gap/halo row exactly zero after ReLU) -> one MXU dot ---------------
    acc1 = jnp.dot(x_ref[...], w1_ref[...], preferred_element_type=f32)
    h1_ref[...] = jnp.maximum(acc1, 0.0).astype(bf16)

    # ---- conv2: build the (Nr, 9*hidden) im2col in VMEM from 9 contiguous
    # shifted slices of the gapped h1 (no edge masks needed), then one K=288 dot
    for t, (oy, ox) in enumerate(_TAPS):
        off = S + oy * Wg + ox
        col_ref[:, t * hidden:(t + 1) * hidden] = h1_ref[off:off + Nr, :]
    acc2 = jnp.dot(col_ref[...], w2_ref[...], preferred_element_type=f32)
    feat = jnp.maximum(acc2 + b2_ref[...], 0.0).astype(bf16)

    # ---- fused 1x1 heads: one matmul whose column blocks are
    #   A  (128)  = [cls | 0 | sigma_lin | 0]   (already in output-slab lanes)
    #   Mu (NP)   = mu tiled nclasses times      (pre-normalize)
    #   Sg (NP)   = sigma_lin tiled nclasses times (pre-softplus)
    heads = jnp.dot(feat, wh_ref[...], preferred_element_type=f32) + bh_ref[...]
    a_blk = heads[:, 0:128]
    mu_t = heads[:, 128:128 + NP]
    sg_t = heads[:, 128 + NP:128 + 2 * NP]

    # TODO(synk): softplus(.)+1e-6 is an assumption about the unavailable
    #             Uncertainty_head.
    sigma_t = _softplus(sg_t) + 1e-6

    # F.normalize(mu, dim=-1) computed on the tiled copy (sum over all NP lanes
    # is nclasses * ||mu||^2; pad lanes are zero).
    ssq = jnp.sum(mu_t * mu_t, axis=-1, keepdims=True) * (1.0 / nclasses)
    mu_n = mu_t * lax.rsqrt(jnp.maximum(ssq, 1e-24))

    # ---- lane-packed mutual_likelihood_score + /temp ------------------------
    # prototypes arrive pre-normalized / lane-packed; selector dot does the
    # per-class sum on the MXU and drops results at slab lanes [C, 2C).
    diff = mu_n - pmu_ref[...]
    down = sigma_t + psig_ref[...]
    # approx reciprocal (EUP) -> ~1e-3 relative error in the scores vs exact /.
    term = diff * diff * pl.reciprocal(down, approx=True) + jnp.log(down)
    proto = jnp.dot(term, sel_ref[...], preferred_element_type=f32)

    # ---- assemble one lane-dense (Nr, 128) slab: [cls | proto | sigma | 0] ---
    lane = lax.broadcasted_iota(jnp.int32, (1, 128), 1)
    cls_mask = lane < nclasses
    sig_mask = (lane >= 2 * nclasses) & (lane < 2 * nclasses + proj_dim)
    out_ref[...] = (jnp.where(cls_mask, a_blk, 0.0)
                    + jnp.where(sig_mask, _softplus(a_blk) + 1e-6, 0.0)
                    + proto)


# -----------------------------------------------------------------------------
# Wrapper (NCHW in / NCHW out), jit-clean
# -----------------------------------------------------------------------------
@functools.partial(
    jax.jit, static_argnames=("hidden", "feat_ch", "nclasses", "proj_dim", "temp"))
def _unet_proto_forward(params, x_nchw, *, hidden, feat_ch, nclasses, proj_dim, temp):
    B, Cin, H, W = x_nchw.shape
    bf16 = jnp.bfloat16
    f32 = jnp.float32

    # gapped flat pixel geometry: real pixel (y, x) lives at S + y*Wg + x; the
    # >=1 zero gap columns per row and the zero halo rows make every 3x3 tap of
    # a real pixel read either the true neighbour or a zero.
    Wg = _round_up(W + 1, 8)
    S = _round_up(Wg + 1, 8)
    Nr = H * Wg                       # rows the kernel computes outputs for
    R = S + (H + 1) * Wg + 8          # rows of the gapped conv1/h1 layout
    K1 = 9 * Cin + 1                  # 9 taps * Cin + ones (bias) column
    CP = nclasses * proj_dim
    NP = _round_up(CP, 128)
    assert 2 * nclasses + proj_dim <= 128, "packed output slab needs <=128 lanes"

    # ---- conv1 im2col (with bias/ones column) in the gapped layout (bf16) ----
    x_nhwc = jnp.transpose(x_nchw, (0, 2, 3, 1))
    xp = jnp.pad(x_nhwc, ((0, 0), (1, 1), (1, 1), (0, 0)))
    taps = [xp[:, 1 + oy:1 + oy + H, 1 + ox:1 + ox + W, :] for oy, ox in _TAPS]
    ones = jnp.ones((B, H, W, 1), f32)
    patches = jnp.concatenate(taps + [ones], axis=-1)                 # (B,H,W,K1)
    patches = jnp.pad(patches, ((0, 0), (0, 0), (0, Wg - W), (0, 0)))  # gap cols
    x_aug = jnp.pad(patches.reshape(B, Nr, K1),
                    ((0, 0), (S, R - S - Nr), (0, 0))).astype(bf16)    # halo rows

    # ---- packed / fused weights (bf16 matmul operands, f32 biases) ----------
    w1a = jnp.concatenate([params["w1"], params["b1"]], axis=0).astype(bf16)
    w2 = params["w2"].astype(bf16)
    b2 = params["b2"]

    wc, bc = params["wc"], params["bc"]
    wm, bm = params["wm"], params["bm"]
    ws, bs = params["ws"], params["bs"]
    wA = jnp.zeros((feat_ch, 128), f32)
    wA = wA.at[:, 0:nclasses].set(wc)
    wA = wA.at[:, 2 * nclasses:2 * nclasses + proj_dim].set(ws)
    bA = jnp.zeros((1, 128), f32)
    bA = bA.at[:, 0:nclasses].set(bc)
    bA = bA.at[:, 2 * nclasses:2 * nclasses + proj_dim].set(bs)
    wM = jnp.zeros((feat_ch, NP), f32).at[:, 0:CP].set(jnp.tile(wm, (1, nclasses)))
    bM = jnp.zeros((1, NP), f32).at[:, 0:CP].set(jnp.tile(bm, (1, nclasses)))
    wS = jnp.zeros((feat_ch, NP), f32).at[:, 0:CP].set(jnp.tile(ws, (1, nclasses)))
    bS = jnp.zeros((1, NP), f32).at[:, 0:CP].set(jnp.tile(bs, (1, nclasses)))
    wH = jnp.concatenate([wA, wM, wS], axis=1).astype(bf16)           # (feat, 128+2NP)
    bH = jnp.concatenate([bA, bM, bS], axis=1)                        # (1, 128+2NP)

    # prototype normalization hoisted out of the kernel; lane-pack (class, dim)
    pmu = params["proto_mu"]
    pmu_n = pmu * lax.rsqrt(
        jnp.maximum(jnp.sum(pmu * pmu, axis=-1, keepdims=True), 1e-24))
    pmu_p = jnp.zeros((1, NP), f32).at[:, 0:CP].set(pmu_n.reshape(1, CP))
    psig_p = jnp.ones((1, NP), f32).at[:, 0:CP].set(
        params["proto_sigma"].reshape(1, CP))

    # block-diagonal per-class sum selector with the -0.5/(dim*temp) scale
    # folded in; results land at slab lanes [nclasses, 2*nclasses)
    scale = -0.5 / (float(proj_dim) * float(temp))
    rows = jnp.arange(CP)
    sel = jnp.zeros((NP, 128), f32).at[rows, nclasses + rows // proj_dim].set(scale)

    kernel = functools.partial(
        _unet_proto_kernel, S=S, Wg=Wg, Nr=Nr, hidden=hidden,
        nclasses=nclasses, proj_dim=proj_dim, NP=NP)

    in_arrays = (x_aug, w1a, w2, b2, wH, bH, pmu_p, psig_p, sel)
    NH = 128 + 2 * NP
    flops = int(B * (2 * R * K1 * hidden + 2 * Nr * 9 * hidden * feat_ch
                     + 2 * Nr * feat_ch * NH + 2 * Nr * NP * 128
                     + 10 * Nr * NP))
    transcendentals = int(B * Nr * (3 * NP + 3 * 128))
    bytes_accessed = int(x_aug.size * 2 + (w1a.size + w2.size + wH.size) * 2
                         + (b2.size + bH.size + pmu_p.size + psig_p.size
                            + sel.size) * 4
                         + B * Nr * 128 * 4)

    out = pl.pallas_call(
        kernel,
        out_shape=jax.ShapeDtypeStruct((B, Nr, 128), jnp.float32),
        grid_spec=pltpu.PrefetchScalarGridSpec(
            num_scalar_prefetch=0,
            grid=(B,),
            in_specs=[
                pl.BlockSpec((None, R, K1), lambda b: (b, 0, 0)),
                pl.BlockSpec((K1, hidden), lambda b: (0, 0)),
                pl.BlockSpec((9 * hidden, feat_ch), lambda b: (0, 0)),
                pl.BlockSpec((1, feat_ch), lambda b: (0, 0)),
                pl.BlockSpec((feat_ch, NH), lambda b: (0, 0)),
                pl.BlockSpec((1, NH), lambda b: (0, 0)),
                pl.BlockSpec((1, NP), lambda b: (0, 0)),
                pl.BlockSpec((1, NP), lambda b: (0, 0)),
                pl.BlockSpec((NP, 128), lambda b: (0, 0)),
            ],
            out_specs=pl.BlockSpec((None, Nr, 128), lambda b: (b, 0, 0)),
            scratch_shapes=[
                pltpu.VMEM((R, hidden), jnp.bfloat16),      # gapped h1
                pltpu.VMEM((Nr, 9 * hidden), jnp.bfloat16),  # conv2 im2col
            ],
        ),
        compiler_params=pltpu.CompilerParams(
            dimension_semantics=("parallel",),
            vmem_limit_bytes=48 * 1024 * 1024),
        cost_estimate=pl.CostEstimate(
            flops=flops, transcendentals=transcendentals,
            bytes_accessed=bytes_accessed),
    )(*in_arrays)

    # un-gap and split the packed slab: [cls | proto | sigma | pad]
    out = out.reshape(B, H, Wg, 128)[:, :, :W, :]
    cls_seg = jnp.transpose(out[..., 0:nclasses], (0, 3, 1, 2))
    proto_seg = jnp.transpose(out[..., nclasses:2 * nclasses], (0, 3, 1, 2))
    sigma = jnp.transpose(
        out[..., 2 * nclasses:2 * nclasses + proj_dim], (0, 3, 1, 2))
    return cls_seg, sigma, proto_seg


class UNetProtoPallas:
    def __init__(self, inchannel, nclasses, proj_dim=32, proto_mu=None,
                 proto_sigma=None, temp=100, feat_ch=64, hidden=32, seed=0):
        self.inchannel = inchannel
        self.nclasses = nclasses
        self.proj_dim = proj_dim
        self.temp = temp
        self.feat_ch = feat_ch
        self.hidden = hidden

        key = jax.random.PRNGKey(seed)
        ks = jax.random.split(key, 8)

        def init(k, shape, scale):
            return jax.random.normal(k, shape, jnp.float32) * scale

        p = {}
        # stand-in backbone: conv3x3->relu->conv3x3->relu   (see TODO at top)
        p["w1"] = init(ks[0], (9 * inchannel, hidden), 0.10)
        p["b1"] = jnp.zeros((1, hidden), jnp.float32)
        p["w2"] = init(ks[1], (9 * hidden, feat_ch), 0.05)
        p["b2"] = jnp.zeros((1, feat_ch), jnp.float32)
        # 1x1 heads: classifier / projection mu / uncertainty sigma
        p["wc"] = init(ks[2], (feat_ch, nclasses), 0.10)
        p["bc"] = jnp.zeros((1, nclasses), jnp.float32)
        p["wm"] = init(ks[3], (feat_ch, proj_dim), 0.10)
        p["bm"] = jnp.zeros((1, proj_dim), jnp.float32)
        p["ws"] = init(ks[4], (feat_ch, proj_dim), 0.10)
        p["bs"] = jnp.zeros((1, proj_dim), jnp.float32)
        if proto_mu is not None and proto_sigma is not None:
            p["proto_mu"] = jnp.asarray(proto_mu, jnp.float32)
            p["proto_sigma"] = jnp.asarray(proto_sigma, jnp.float32)
        else:
            # seeded non-zero so forward() takes the MLS path (the reference
            # would otherwise call initialize(), which needs concat_all_gather).
            p["proto_mu"] = init(ks[5], (nclasses, proj_dim), 1.0)
            p["proto_sigma"] = jax.nn.softplus(
                init(ks[6], (nclasses, proj_dim), 1.0)) + 0.1
        self.params = p

        # decided once in Python (no traced-bool branch inside forward/jit)
        self._protos_initialized = bool(
            jnp.any(p["proto_mu"] != 0) | jnp.any(p["proto_sigma"] != 0))

    def forward(self, x_2d, label=None, mask=None, update_prototype=False):
        B, Cin, H, W = x_2d.shape
        assert Cin == self.inchannel
        cls_seg, sigma, proto_seg = _unet_proto_forward(
            self.params, x_2d, hidden=self.hidden, feat_ch=self.feat_ch,
            nclasses=self.nclasses, proj_dim=self.proj_dim, temp=self.temp)
        out = {"cls_seg": cls_seg, "sigma": sigma}
        if not self._protos_initialized:
            # TODO(synk): prototype initialization needs concat_all_gather +
            #             one-hot label masking (distributed, data-dependent);
            #             mirror the reference failure path instead.
            out["proto_seg"] = cls_seg
            return out
        out["proto_seg"] = proto_seg
        if update_prototype:
            # TODO(synk): prototype_learning() needs concat_all_gather; not
            #             translated.
            pass
        return out


if __name__ == "__main__":
    B, Cin, H, W = 2, 1, 16, 16
    nclasses, proj_dim = 4, 32

    key = jax.random.PRNGKey(0)
    x = jax.random.normal(key, (B, Cin, H, W), jnp.float32)

    model = UNetProtoPallas(inchannel=Cin, nclasses=nclasses,
                            proj_dim=proj_dim, temp=100)
    out = model.forward(x)
    jax.block_until_ready(out["cls_seg"])
    jax.block_until_ready(out["sigma"])
    jax.block_until_ready(out["proto_seg"])

    assert out["cls_seg"].shape == (B, nclasses, H, W)
    assert out["sigma"].shape == (B, proj_dim, H, W)
    assert out["proto_seg"].shape == (B, nclasses, H, W)
    assert bool(jnp.all(jnp.isfinite(out["cls_seg"])))
    assert bool(jnp.all(jnp.isfinite(out["sigma"])))
    assert bool(jnp.all(jnp.isfinite(out["proto_seg"])))
    print("KERNEL_OK")
</pallas_src>

<mosaic_0001>
module attributes {stable_mosaic.version = 11 : i64} {
  func.func @_unet_proto_kernel(%arg0: i32, %arg1: memref<1x448x10xbf16, #tpu.memory_space<vmem>>, %arg2: memref<10x32xbf16, #tpu.memory_space<vmem>>, %arg3: memref<288x64xbf16, #tpu.memory_space<vmem>>, %arg4: memref<1x64xf32, #tpu.memory_space<vmem>>, %arg5: memref<64x384xbf16, #tpu.memory_space<vmem>>, %arg6: memref<1x384xf32, #tpu.memory_space<vmem>>, %arg7: memref<1x128xf32, #tpu.memory_space<vmem>>, %arg8: memref<1x128xf32, #tpu.memory_space<vmem>>, %arg9: memref<128x128xf32, #tpu.memory_space<vmem>>, %arg10: memref<1x384x128xf32, #tpu.memory_space<vmem>>, %arg11: memref<448x32xbf16, #tpu.memory_space<vmem>>, %arg12: memref<384x288xbf16, #tpu.memory_space<vmem>>) attributes {dimension_semantics = [#tpu.dimension_semantics<parallel>], iteration_bounds = array<i64: 2>, scalar_prefetch = 0 : i64, scratch_operands = 2 : i64, tpu.core_type = #tpu.core_type<tc>, window_params = [{transform_indices = @transform_0, window_bounds = array<i64: 1, 448, 10>}, {pipeline_mode = #tpu.pipeline_mode<synchronous>, transform_indices = @transform_1, window_bounds = array<i64: 10, 32>}, {pipeline_mode = #tpu.pipeline_mode<synchronous>, transform_indices = @transform_2, window_bounds = array<i64: 288, 64>}, {pipeline_mode = #tpu.pipeline_mode<synchronous>, transform_indices = @transform_3, window_bounds = array<i64: 1, 64>}, {pipeline_mode = #tpu.pipeline_mode<synchronous>, transform_indices = @transform_4, window_bounds = array<i64: 64, 384>}, {pipeline_mode = #tpu.pipeline_mode<synchronous>, transform_indices = @transform_5, window_bounds = array<i64: 1, 384>}, {pipeline_mode = #tpu.pipeline_mode<synchronous>, transform_indices = @transform_6, window_bounds = array<i64: 1, 128>}, {pipeline_mode = #tpu.pipeline_mode<synchronous>, transform_indices = @transform_7, window_bounds = array<i64: 1, 128>}, {pipeline_mode = #tpu.pipeline_mode<synchronous>, transform_indices = @transform_8, window_bounds = array<i64: 128, 128>}, {transform_indices = @transform_9, window_bounds = array<i64: 1, 384, 128>}]} {
    %c0 = arith.constant 0 : index
    %c0_0 = arith.constant 0 : index
    %c0_1 = arith.constant 0 : index
    %0 = vector.load %arg1[%c0, %c0_0, %c0_1] : memref<1x448x10xbf16, #tpu.memory_space<vmem>>, vector<1x448x10xbf16>
    %1 = vector.shape_cast %0 : vector<1x448x10xbf16> to vector<448x10xbf16>
    %c0_2 = arith.constant 0 : index
    %c0_3 = arith.constant 0 : index
    %2 = vector.load %arg2[%c0_2, %c0_3] : memref<10x32xbf16, #tpu.memory_space<vmem>>, vector<10x32xbf16>
    %cst = arith.constant dense<0.000000e+00> : vector<448x32xf32>
    %3 = tpu.matmul %1, %2, %cst {dimension_numbers = #tpu.dot_dimension_numbers<[1], [0], [0], [1], [0, 0, 1, 1], [], []>} : vector<448x10xbf16>, vector<10x32xbf16>, vector<448x32xf32> -> vector<448x32xf32>
    %cst_4 = arith.constant 0.000000e+00 : f32
    %4 = vector.broadcast %cst_4 : f32 to vector<448x32xf32>
    %5 = arith.maximumf %3, %4 : vector<448x32xf32>
    %6 = arith.truncf %5 : vector<448x32xf32> to vector<448x32xbf16>
    %c0_5 = arith.constant 0 : index
    %c0_6 = arith.constant 0 : index
    %7 = vector.load %arg11[%c0_5, %c0_6] : memref<448x32xbf16, #tpu.memory_space<vmem>>, vector<448x32xbf16>
    tpu.vector_store %arg11[%c0_5, %c0_6], %6 {strides = array<i32>} : memref<448x32xbf16, #tpu.memory_space<vmem>>, vector<448x32xbf16>,
    %c7 = arith.constant 7 : index
    %c0_7 = arith.constant 0 : index
    %8 = vector.load %arg11[%c7, %c0_7] : memref<448x32xbf16, #tpu.memory_space<vmem>>, vector<384x32xbf16>
    %c0_8 = arith.constant 0 : index
    %c0_9 = arith.constant 0 : index
    %9 = vector.load %arg12[%c0_8, %c0_9] : memref<384x288xbf16, #tpu.memory_space<vmem>>, vector<384x32xbf16>
    tpu.vector_store %arg12[%c0_8, %c0_9], %8 {strides = array<i32>} : memref<384x288xbf16, #tpu.memory_space<vmem>>, vector<384x32xbf16>,
    %c8 = arith.constant 8 : index
    %c0_10 = arith.constant 0 : index
    %10 = vector.load %arg11[%c8, %c0_10] : memref<448x32xbf16, #tpu.memory_space<vmem>>, vector<384x32xbf16>
    %c0_11 = arith.constant 0 : index
    %c32 = arith.constant 32 : index
    %11 = vector.load %arg12[%c0_11, %c32] : memref<384x288xbf16, #tpu.memory_space<vmem>>, vector<384x32xbf16>
    tpu.vector_store %arg12[%c0_11, %c32], %10 {strides = array<i32>} : memref<384x288xbf16, #tpu.memory_space<vmem>>, vector<384x32xbf16>,
    %c9 = arith.constant 9 : index
    %c0_12 = arith.constant 0 : index
    %12 = vector.load %arg11[%c9, %c0_12] : memref<448x32xbf16, #tpu.memory_space<vmem>>, vector<384x32xbf16>
    %c0_13 = arith.constant 0 : index
    %c64 = arith.constant 64 : index
    %13 = vector.load %arg12[%c0_13, %c64] : memref<384x288xbf16, #tpu.memory_space<vmem>>, vector<384x32xbf16>
    tpu.vector_store %arg12[%c0_13, %c64], %12 {strides = array<i32>} : memref<384x288xbf16, #tpu.memory_space<vmem>>, vector<384x32xbf16>,
    %c31 = arith.constant 31 : index
    %c0_14 = arith.constant 0 : index
    %14 = vector.load %arg11[%c31, %c0_14] : memref<448x32xbf16, #tpu.memory_space<vmem>>, vector<384x32xbf16>
    %c0_15 = arith.constant 0 : index
    %c96 = arith.constant 96 : index
    %15 = vector.load %arg12[%c0_15, %c96] : memref<384x288xbf16, #tpu.memory_space<vmem>>, vector<384x32xbf16>
    tpu.vector_store %arg12[%c0_15, %c96], %14 {strides = array<i32>} : memref<384x288xbf16, #tpu.memory_space<vmem>>, vector<384x32xbf16>,
    %c32_16 = arith.constant 32 : index
    %c0_17 = arith.constant 0 : index
    %16 = vector.load %arg11[%c32_16, %c0_17] : memref<448x32xbf16, #tpu.memory_space<vmem>>, vector<384x32xbf16>
    %c0_18 = arith.constant 0 : index
    %c128 = arith.constant 128 : index
    %17 = vector.load %arg12[%c0_18, %c128] : memref<384x288xbf16, #tpu.memory_space<vmem>>, vector<384x32xbf16>
    tpu.vector_store %arg12[%c0_18, %c128], %16 {strides = array<i32>} : memref<384x288xbf16, #tpu.memory_space<vmem>>, vector<384x32xbf16>,
    %c33 = arith.constant 33 : index
    %c0_19 = arith.constant 0 : index
    %18 = vector.load %arg11[%c33, %c0_19] : memref<448x32xbf16, #tpu.memory_space<vmem>>, vector<384x32xbf16>
    %c0_20 = arith.constant 0 : index
    %c160 = arith.constant 160 : index
    %19 = vector.load %arg12[%c0_20, %c160] : memref<384x288xbf16, #tpu.memory_space<vmem>>, vector<384x32xbf16>
    tpu.vector_store %arg12[%c0_20, %c160], %18 {strides = array<i32>} : memref<384x288xbf16, #tpu.memory_space<vmem>>, vector<384x32xbf16>,
    %c55 = arith.constant 55 : index
    %c0_21 = arith.constant 0 : index
    %20 = vector.load %arg11[%c55, %c0_21] : memref<448x32xbf16, #tpu.memory_space<vmem>>, vector<384x32xbf16>
    %c0_22 = arith.constant 0 : index
    %c192 = arith.constant 192 : index
    %21 = vector.load %arg12[%c0_22, %c192] : memref<384x288xbf16, #tpu.memory_space<vmem>>, vector<384x32xbf16>
    tpu.vector_store %arg12[%c0_22, %c192], %20 {strides = array<i32>} : memref<384x288xbf16, #tpu.memory_space<vmem>>, vector<384x32xbf16>,
    %c56 = arith.constant 56 : index
    %c0_23 = arith.constant 0 : index
    %22 = vector.load %arg11[%c56, %c0_23] : memref<448x32xbf16, #tpu.memory_space<vmem>>, vector<384x32xbf16>
    %c0_24 = arith.constant 0 : index
    %c224 = arith.constant 224 : index
    %23 = vector.load %arg12[%c0_24, %c224] : memref<384x288xbf16, #tpu.memory_space<vmem>>, vector<384x32xbf16>
    tpu.vector_store %arg12[%c0_24, %c224], %22 {strides = array<i32>} : memref<384x288xbf16, #tpu.memory_space<vmem>>, vector<384x32xbf16>,
    %c57 = arith.constant 57 : index
    %c0_25 = arith.constant 0 : index
    %24 = vector.load %arg11[%c57, %c0_25] : memref<448x32xbf16, #tpu.memory_space<vmem>>, vector<384x32xbf16>
    %c0_26 = arith.constant 0 : index
    %c256 = arith.constant 256 : index
    %25 = vector.load %arg12[%c0_26, %c256] : memref<384x288xbf16, #tpu.memory_space<vmem>>, vector<384x32xbf16>
    tpu.vector_store %arg12[%c0_26, %c256], %24 {strides = array<i32>} : memref<384x288xbf16, #tpu.memory_space<vmem>>, vector<384x32xbf16>,
    %c0_27 = arith.constant 0 : index
    %c0_28 = arith.constant 0 : index
    %26 = vector.load %arg12[%c0_27, %c0_28] : memref<384x288xbf16, #tpu.memory_space<vmem>>, vector<384x288xbf16>
    %c0_29 = arith.constant 0 : index
    %c0_30 = arith.constant 0 : index
    %27 = vector.load %arg3[%c0_29, %c0_30] : memref<288x64xbf16, #tpu.memory_space<vmem>>, vector<288x64xbf16>
    %cst_31 = arith.constant dense<0.000000e+00> : vector<384x64xf32>
    %28 = tpu.matmul %26, %27, %cst_31 {dimension_numbers = #tpu.dot_dimension_numbers<[1], [0], [0], [1], [0, 0, 1, 1], [], []>} : vector<384x288xbf16>, vector<288x64xbf16>, vector<384x64xf32> -> vector<384x64xf32>
    %c0_32 = arith.constant 0 : index
    %c0_33 = arith.constant 0 : index
    %29 = vector.load %arg4[%c0_32, %c0_33] : memref<1x64xf32, #tpu.memory_space<vmem>>, vector<1x64xf32>
    %30 = vector.broadcast %29 : vector<1x64xf32> to vector<384x64xf32>
    %31 = arith.addf %28, %30 : vector<384x64xf32>
    %cst_34 = arith.constant 0.000000e+00 : f32
    %32 = vector.broadcast %cst_34 : f32 to vector<384x64xf32>
    %33 = arith.maximumf %31, %32 : vector<384x64xf32>
    %34 = arith.truncf %33 : vector<384x64xf32> to vector<384x64xbf16>
    %c0_35 = arith.constant 0 : index
    %c0_36 = arith.constant 0 : index
    %35 = vector.load %arg5[%c0_35, %c0_36] : memref<64x384xbf16, #tpu.memory_space<vmem>>, vector<64x384xbf16>
    %cst_37 = arith.constant dense<0.000000e+00> : vector<384x384xf32>
    %36 = tpu.matmul %34, %35, %cst_37 {dimension_numbers = #tpu.dot_dimension_numbers<[1], [0], [0], [1], [0, 0, 1, 1], [], []>} : vector<384x64xbf16>, vector<64x384xbf16>, vector<384x384xf32> -> vector<384x384xf32>
    %c0_38 = arith.constant 0 : index
    %c0_39 = arith.constant 0 : index
    %37 = vector.load %arg6[%c0_38, %c0_39] : memref<1x384xf32, #tpu.memory_space<vmem>>, vector<1x384xf32>
    %38 = vector.broadcast %37 : vector<1x384xf32> to vector<384x384xf32>
    %39 = arith.addf %36, %38 : vector<384x384xf32>
    %40 = vector.extract_strided_slice %39 {offsets = [0, 0], sizes = [384, 128], strides = [1, 1]} : vector<384x384xf32> to vector<384x128xf32>
    %41 = vector.extract_strided_slice %39 {offsets = [0, 128], sizes = [384, 128], strides = [1, 1]} : vector<384x384xf32> to vector<384x128xf32>
    %42 = vector.extract_strided_slice %39 {offsets = [0, 256], sizes = [384, 128], strides = [1, 1]} : vector<384x384xf32> to vector<384x128xf32>
    %cst_40 = arith.constant 0.000000e+00 : f32
    %43 = vector.broadcast %cst_40 : f32 to vector<384x128xf32>
    %44 = arith.maximumf %42, %43 : vector<384x128xf32>
    %45 = math.absf %42 : vector<384x128xf32>
    %cst_41 = arith.constant 0.000000e+00 : f32
    %46 = vector.broadcast %cst_41 : f32 to vector<384x128xf32>
    %47 = arith.subf %46, %45 : vector<384x128xf32>
    %48 = math.exp %47 : vector<384x128xf32>
    %cst_42 = arith.constant 1.000000e+00 : f32
    %49 = vector.broadcast %cst_42 : f32 to vector<384x128xf32>
    %50 = arith.addf %49, %48 : vector<384x128xf32>
    %51 = math.log %50 : vector<384x128xf32>
    %52 = arith.addf %44, %51 : vector<384x128xf32>
    %cst_43 = arith.constant 9.99999997E-7 : f32
    %53 = vector.broadcast %cst_43 : f32 to vector<384x128xf32>
    %54 = arith.addf %52, %53 : vector<384x128xf32>
    %55 = arith.mulf %41, %41 : vector<384x128xf32>
    %cst_44 = arith.constant dense<0.000000e+00> : vector<384xf32>
    %56 = vector.multi_reduction <add>, %55, %cst_44 [1] : vector<384x128xf32> to vector<384xf32>
    %57 = vector.shape_cast %56 : vector<384xf32> to vector<384x1xf32>
    %cst_45 = arith.constant 2.500000e-01 : f32
    %58 = vector.broadcast %cst_45 : f32 to vector<384x1xf32>
    %59 = arith.mulf %57, %58 : vector<384x1xf32>
    %cst_46 = arith.constant 1.000000e-24 : f32
    %60 = vector.broadcast %cst_46 : f32 to vector<384x1xf32>
    %61 = arith.maximumf %59, %60 : vector<384x1xf32>
    %62 = math.rsqrt %61 : vector<384x1xf32>
    %63 = vector.broadcast %62 : vector<384x1xf32> to vector<384x128xf32>
    %64 = arith.mulf %41, %63 : vector<384x128xf32>
    %c0_47 = arith.constant 0 : index
    %c0_48 = arith.constant 0 : index
    %65 = vector.load %arg7[%c0_47, %c0_48] : memref<1x128xf32, #tpu.memory_space<vmem>>, vector<1x128xf32>
    %66 = vector.broadcast %65 : vector<1x128xf32> to vector<384x128xf32>
    %67 = arith.subf %64, %66 : vector<384x128xf32>
    %c0_49 = arith.constant 0 : index
    %c0_50 = arith.constant 0 : index
    %68 = vector.load %arg8[%c0_49, %c0_50] : memref<1x128xf32, #tpu.memory_space<vmem>>, vector<1x128xf32>
    %69 = vector.broadcast %68 : vector<1x128xf32> to vector<384x128xf32>
    %70 = arith.addf %54, %69 : vector<384x128xf32>
    %71 = arith.mulf %67, %67 : vector<384x128xf32>
    %72 = tpu.reciprocal %70 {approx = true} : vector<384x128xf32> -> vector<384x128xf32>
    %73 = arith.mulf %71, %72 : vector<384x128xf32>
    %74 = math.log %70 : vector<384x128xf32>
    %75 = arith.addf %73, %74 : vector<384x128xf32>
    %c0_51 = arith.constant 0 : index
    %c0_52 = arith.constant 0 : index
    %76 = vector.load %arg9[%c0_51, %c0_52] : memref<128x128xf32, #tpu.memory_space<vmem>>, vector<128x128xf32>
    %cst_53 = arith.constant dense<0.000000e+00> : vector<384x128xf32>
    %77 = tpu.matmul %75, %76, %cst_53 {dimension_numbers = #tpu.dot_dimension_numbers<[1], [0], [0], [1], [0, 0, 1, 1], [], []>} : vector<384x128xf32>, vector<128x128xf32>, vector<384x128xf32> -> vector<384x128xf32>
    %78 = tpu.iota {dimensions = array<i32: 1>} : vector<1x128xi32>
    %c4_i32 = arith.constant 4 : i32
    %79 = vector.broadcast %c4_i32 : i32 to vector<1x128xi32>
    %80 = arith.cmpi slt, %78, %79 : vector<1x128xi32>
    %c8_i32 = arith.constant 8 : i32
    %81 = vector.broadcast %c8_i32 : i32 to vector<1x128xi32>
    %82 = arith.cmpi sge, %78, %81 : vector<1x128xi32>
    %c40_i32 = arith.constant 40 : i32
    %83 = vector.broadcast %c40_i32 : i32 to vector<1x128xi32>
    %84 = arith.cmpi slt, %78, %83 : vector<1x128xi32>
    %85 = arith.andi %82, %84 : vector<1x128xi1>
    %cst_54 = arith.constant 0.000000e+00 : f32
    %86 = vector.shape_cast %80 : vector<1x128xi1> to vector<1x128xi1>
    %87 = vector.broadcast %86 : vector<1x128xi1> to vector<384x128xi1>
    %88 = vector.broadcast %cst_54 : f32 to vector<384x128xf32>
    %89 = arith.select %87, %40, %88 : vector<384x128xi1>, vector<384x128xf32>
    %cst_55 = arith.constant 0.000000e+00 : f32
    %90 = vector.broadcast %cst_55 : f32 to vector<384x128xf32>
    %91 = arith.maximumf %40, %90 : vector<384x128xf32>
    %92 = math.absf %40 : vector<384x128xf32>
    %cst_56 = arith.constant 0.000000e+00 : f32
    %93 = vector.broadcast %cst_56 : f32 to vector<384x128xf32>
    %94 = arith.subf %93, %92 : vector<384x128xf32>
    %95 = math.exp %94 : vector<384x128xf32>
    %cst_57 = arith.constant 1.000000e+00 : f32
    %96 = vector.broadcast %cst_57 : f32 to vector<384x128xf32>
    %97 = arith.addf %96, %95 : vector<384x128xf32>
    %98 = math.log %97 : vector<384x128xf32>
    %99 = arith.addf %91, %98 : vector<384x128xf32>
    %cst_58 = arith.constant 9.99999997E-7 : f32
    %100 = vector.broadcast %cst_58 : f32 to vector<384x128xf32>
    %101 = arith.addf %99, %100 : vector<384x128xf32>
    %cst_59 = arith.constant 0.000000e+00 : f32
    %102 = vector.shape_cast %85 : vector<1x128xi1> to vector<1x128xi1>
    %103 = vector.broadcast %102 : vector<1x128xi1> to vector<384x128xi1>
    %104 = vector.broadcast %cst_59 : f32 to vector<384x128xf32>
    %105 = arith.select %103, %101, %104 : vector<384x128xi1>, vector<384x128xf32>
    %106 = arith.addf %89, %105 : vector<384x128xf32>
    %107 = arith.addf %106, %77 : vector<384x128xf32>
    %c0_60 = arith.constant 0 : index
    %c0_61 = arith.constant 0 : index
    %c0_62 = arith.constant 0 : index
    %108 = vector.load %arg10[%c0_60, %c0_61, %c0_62] : memref<1x384x128xf32, #tpu.memory_space<vmem>>, vector<1x384x128xf32>
    %109 = vector.shape_cast %108 : vector<1x384x128xf32> to vector<384x128xf32>
    %110 = vector.shape_cast %107 : vector<384x128xf32> to vector<1x384x128xf32>
    tpu.vector_store %arg10[%c0_60, %c0_61, %c0_62], %110 {strides = array<i32>} : memref<1x384x128xf32, #tpu.memory_space<vmem>>, vector<1x384x128xf32>,
    return
  }
  func.func @transform_0(%arg0: i32) -> (i32, i32, i32) {
    %c0_i32 = arith.constant 0 : i32
    %c0_i32_0 = arith.constant 0 : i32
    %c0_i32_1 = arith.constant 0 : i32
    return %arg0, %c0_i32, %c0_i32_0 : i32, i32, i32
  }
  func.func @transform_1(%arg0: i32) -> (i32, i32) {
    %c0_i32 = arith.constant 0 : i32
    %c0_i32_0 = arith.constant 0 : i32
    %c0_i32_1 = arith.constant 0 : i32
    return %c0_i32, %c0_i32_0 : i32, i32
  }
  func.func @transform_2(%arg0: i32) -> (i32, i32) {
    %c0_i32 = arith.constant 0 : i32
    %c0_i32_0 = arith.constant 0 : i32
    %c0_i32_1 = arith.constant 0 : i32
    return %c0_i32, %c0_i32_0 : i32, i32
  }
  func.func @transform_3(%arg0: i32) -> (i32, i32) {
    %c0_i32 = arith.constant 0 : i32
    %c0_i32_0 = arith.constant 0 : i32
    %c0_i32_1 = arith.constant 0 : i32
    return %c0_i32, %c0_i32_0 : i32, i32
  }
  func.func @transform_4(%arg0: i32) -> (i32, i32) {
    %c0_i32 = arith.constant 0 : i32
    %c0_i32_0 = arith.constant 0 : i32
    %c0_i32_1 = arith.constant 0 : i32
    return %c0_i32, %c0_i32_0 : i32, i32
  }
  func.func @transform_5(%arg0: i32) -> (i32, i32) {
    %c0_i32 = arith.constant 0 : i32
    %c0_i32_0 = arith.constant 0 : i32
    %c0_i32_1 = arith.constant 0 : i32
    return %c0_i32, %c0_i32_0 : i32, i32
  }
  func.func @transform_6(%arg0: i32) -> (i32, i32) {
    %c0_i32 = arith.constant 0 : i32
    %c0_i32_0 = arith.constant 0 : i32
    %c0_i32_1 = arith.constant 0 : i32
    return %c0_i32, %c0_i32_0 : i32, i32
  }
  func.func @transform_7(%arg0: i32) -> (i32, i32) {
    %c0_i32 = arith.constant 0 : i32
    %c0_i32_0 = arith.constant 0 : i32
    %c0_i32_1 = arith.constant 0 : i32
    return %c0_i32, %c0_i32_0 : i32, i32
  }
  func.func @transform_8(%arg0: i32) -> (i32, i32) {
    %c0_i32 = arith.constant 0 : i32
    %c0_i32_0 = arith.constant 0 : i32
    %c0_i32_1 = arith.constant 0 : i32
    return %c0_i32, %c0_i32_0 : i32, i32
  }
  func.func @transform_9(%arg0: i32) -> (i32, i32, i32) {
    %c0_i32 = arith.constant 0 : i32
    %c0_i32_0 = arith.constant 0 : i32
    %c0_i32_1 = arith.constant 0 : i32
    return %arg0, %c0_i32, %c0_i32_0 : i32, i32, i32
  }
}

</mosaic_0001>

<llo_original>
// kernel: _unet_proto_forward.1
$region0: #{_unet_proto_forward.1}
  #allocation0 [shape = 'u32[]', space=smem, size = 0x4, offset = 0x4, fixed_abs, tag = 'smem constant byte address 0x4 - core index']
  #allocation1 [shape = 'u32[72,128]{1,0:T(1,128)}', space=vmem, size = 0x9000, scoped, tag = 'internal scratch']
  #allocation2 [shape = 'bf16[448,32]{1,0:T(8,128)(2,1)}', space=vmem, size = 0x1c000, scoped, tag = 'scratch operand']
  #allocation3 [shape = 'bf16[384,288]{1,0:T(8,128)(2,1)}', space=vmem, size = 0x48000, scoped, tag = 'scratch operand']
  %s0 = inlined_call_operand.vmem [shape: bf16[2,448,10], index: 0, kind: input, shape index: {}]
  %s1 = inlined_call_operand.vmem [shape: bf16[10,32], index: 1, kind: input, shape index: {}]
  %s2 = inlined_call_operand.vmem [shape: bf16[288,64], index: 2, kind: input, shape index: {}]
  %s3 = inlined_call_operand.vmem [shape: f32[1,64], index: 3, kind: input, shape index: {}]
  %s4 = inlined_call_operand.vmem [shape: bf16[64,384], index: 4, kind: input, shape index: {}]
  %s5 = inlined_call_operand.vmem [shape: f32[1,384], index: 5, kind: input, shape index: {}]
  %s6 = inlined_call_operand.vmem [shape: f32[1,128], index: 6, kind: input, shape index: {}]
  %s7 = inlined_call_operand.vmem [shape: f32[1,128], index: 7, kind: input, shape index: {}]
  %s8 = inlined_call_operand.vmem [shape: f32[128,128], index: 8, kind: input, shape index: {}]
  %s9 = inlined_call_operand.vmem [shape: f32[2,384,128], index: 9, kind: output, shape index: {}]
  %s10 = sld [smem:[#allocation0]]
  $region69: #{_unet_proto_forward.1} parent=0
    _
  %s12 = ssub.s32 1, %s10
  %s13 = scalar_select 0, %s12, %s10
  loop: start=0, step=1, limit=4
  $region2: #{_unet_proto_forward.1} parent=0 // loop_pre_header
    _
  $region3: #{_unet_proto_forward.1} parent=0 // loop_header
    %s15 = sphi 0, %s19
    %p16 = scmp.ge.s32.totalorder %s15, 4
    %s25 = sphi 0, %s27
    %s28 = sphi 0, %s25
    %s29 = sphi 0, %s28
    %s45 = sphi 0, %s29
    %s49 = sphi 0, %s49
    %s51 = sphi 0, %s49
    %s52 = sphi 0, %s51
    %s66 = sphi 0, %s52
    %s70 = sphi 0, %s70
    %s72 = sphi 0, %s70
    %s73 = sphi 0, %s72
    %s87 = sphi 0, %s73
    %s91 = sphi 0, %s91
    %s93 = sphi 0, %s91
    %s94 = sphi 0, %s93
    %s108 = sphi 0, %s94
    %s112 = sphi 0, %s112
    %s114 = sphi 0, %s112
    %s115 = sphi 0, %s114
    %s129 = sphi 0, %s115
    %s133 = sphi 0, %s133
    %s135 = sphi 0, %s133
    %s136 = sphi 0, %s135
    %s150 = sphi 0, %s136
    %s154 = sphi 0, %s154
    %s156 = sphi 0, %s154
    %s157 = sphi 0, %s156
    %s171 = sphi 0, %s157
    %s175 = sphi 0, %s175
    %s177 = sphi 0, %s175
    %s178 = sphi 0, %s177
    %s192 = sphi 0, %s178
    %s196 = sphi 0, %s196
    %s198 = sphi 0, %s196
    %s199 = sphi 0, %s198
    %s213 = sphi 0, %s199
    %s219 = sphi 0, %s221
    %s222 = sphi 0, %s219
    %s223 = sphi 0, %s222
    %s239 = sphi 0, %s223
  $region4: #{_unet_proto_forward.1} parent=0 // loop_header_branch
    %18 = sbr.rel (%p16) target = $region8
  $region5: #{_unet_proto_forward.1} parent=0 // loop_body
    %s20 = ssub.s32 %s15, 1
    %s21 = ssub.s32 %s15, 2
    %s22 = sadd.s32 %s15, 1
    %s23 = ssub.s32 %s15, %s22
    %p24 = scmp.eq.s32.totalorder %s23, 0
    %s26 = sadd.s32 %s25, 1
    %s27 = scalar_select %p24, %s25, %s26
    %p30 = pneg %p24
    %p31 = scmp.eq.s32.totalorder %s15, 1
    %p32 = por %p30, %p31
    %p33 = scmp.ne.s32.totalorder %s25, %s28
    %p34 = scmp.eq.s32.totalorder %s15, 0
    %p35 = por %p33, %p34
    %p36 = scmp.ne.s32.totalorder %s25, %s28
    %p37 = scmp.eq.s32.totalorder %s20, 1
    %p38 = por %p36, %p37
    %p39 = scmp.ne.s32.totalorder %s28, %s29
    %p40 = scmp.eq.s32.totalorder %s20, 0
    %p41 = por %p39, %p40
    %p42 = scmp.ne.s32.totalorder %s28, %s29
    %p43 = scmp.eq.s32.totalorder %s21, 1
    %p44 = por %p42, %p43
    %p46 = scmp.ne.s32.totalorder %s29, %s45
    %p47 = scmp.eq.s32.totalorder %s21, 0
    %p48 = por %p46, %p47
    %s50 = sadd.s32 %s49, 1
    %p53 = scmp.eq.s32.totalorder %s15, 1
    %p54 = scmp.ne.s32.totalorder %s49, %s51
    %p55 = scmp.eq.s32.totalorder %s15, 0
    %p56 = por %p54, %p55
    %p57 = scmp.ne.s32.totalorder %s49, %s51
    %p58 = scmp.eq.s32.totalorder %s20, 1
    %p59 = por %p57, %p58
    %p60 = scmp.ne.s32.totalorder %s51, %s52
    %p61 = scmp.eq.s32.totalorder %s20, 0
    %p62 = por %p60, %p61
    %p63 = scmp.ne.s32.totalorder %s51, %s52
    %p64 = scmp.eq.s32.totalorder %s21, 1
    %p65 = por %p63, %p64
    %p67 = scmp.ne.s32.totalorder %s52, %s66
    %p68 = scmp.eq.s32.totalorder %s21, 0
    %p69 = por %p67, %p68
    %s71 = sadd.s32 %s70, 1
    %p74 = scmp.eq.s32.totalorder %s15, 1
    %p75 = scmp.ne.s32.totalorder %s70, %s72
    %p76 = scmp.eq.s32.totalorder %s15, 0
    %p77 = por %p75, %p76
    %p78 = scmp.ne.s32.totalorder %s70, %s72
    %p79 = scmp.eq.s32.totalorder %s20, 1
    %p80 = por %p78, %p79
    %p81 = scmp.ne.s32.totalorder %s72, %s73
    %p82 = scmp.eq.s32.totalorder %s20, 0
    %p83 = por %p81, %p82
    %p84 = scmp.ne.s32.totalorder %s72, %s73
    %p85 = scmp.eq.s32.totalorder %s21, 1
    %p86 = por %p84, %p85
    %p88 = scmp.ne.s32.totalorder %s73, %s87
    %p89 = scmp.eq.s32.totalorder %s21, 0
    %p90 = por %p88, %p89
    %s92 = sadd.s32 %s91, 1
    %p95 = scmp.eq.s32.totalorder %s15, 1
    %p96 = scmp.ne.s32.totalorder %s91, %s93
    %p97 = scmp.eq.s32.totalorder %s15, 0
    %p98 = por %p96, %p97
    %p99 = scmp.ne.s32.totalorder %s91, %s93
    %p100 = scmp.eq.s32.totalorder %s20, 1
    %p101 = por %p99, %p100
    %p102 = scmp.ne.s32.totalorder %s93, %s94
    %p103 = scmp.eq.s32.totalorder %s20, 0
    %p104 = por %p102, %p103
    %p105 = scmp.ne.s32.totalorder %s93, %s94
    %p106 = scmp.eq.s32.totalorder %s21, 1
    %p107 = por %p105, %p106
    %p109 = scmp.ne.s32.totalorder %s94, %s108
    %p110 = scmp.eq.s32.totalorder %s21, 0
    %p111 = por %p109, %p110
    %s113 = sadd.s32 %s112, 1
    %p116 = scmp.eq.s32.totalorder %s15, 1
    %p117 = scmp.ne.s32.totalorder %s112, %s114
    %p118 = scmp.eq.s32.totalorder %s15, 0
    %p119 = por %p117, %p118
    %p120 = scmp.ne.s32.totalorder %s112, %s114
    %p121 = scmp.eq.s32.totalorder %s20, 1
    %p122 = por %p120, %p121
    %p123 = scmp.ne.s32.totalorder %s114, %s115
    %p124 = scmp.eq.s32.totalorder %s20, 0
    %p125 = por %p123, %p124
    %p126 = scmp.ne.s32.totalorder %s114, %s115
    %p127 = scmp.eq.s32.totalorder %s21, 1
    %p128 = por %p126, %p127
    %p130 = scmp.ne.s32.totalorder %s115, %s129
    %p131 = scmp.eq.s32.totalorder %s21, 0
    %p132 = por %p130, %p131
    %s134 = sadd.s32 %s133, 1
    %p137 = scmp.eq.s32.totalorder %s15, 1
    %p138 = scmp.ne.s32.totalorder %s133, %s135
    %p139 = scmp.eq.s32.totalorder %s15, 0
    %p140 = por %p138, %p139
    %p141 = scmp.ne.s32.totalorder %s133, %s135
    %p142 = scmp.eq.s32.totalorder %s20, 1
    %p143 = por %p141, %p142
    %p144 = scmp.ne.s32.totalorder %s135, %s136
    %p145 = scmp.eq.s32.totalorder %s20, 0
    %p146 = por %p144, %p145
    %p147 = scmp.ne.s32.totalorder %s135, %s136
    %p148 = scmp.eq.s32.totalorder %s21, 1
    %p149 = por %p147, %p148
    %p151 = scmp.ne.s32.totalorder %s136, %s150
    %p152 = scmp.eq.s32.totalorder %s21, 0
    %p153 = por %p151, %p152
    %s155 = sadd.s32 %s154, 1
    %p158 = scmp.eq.s32.totalorder %s15, 1
    %p159 = scmp.ne.s32.totalorder %s154, %s156
    %p160 = scmp.eq.s32.totalorder %s15, 0
    %p161 = por %p159, %p160
    %p162 = scmp.ne.s32.totalorder %s154, %s156
    %p163 = scmp.eq.s32.totalorder %s20, 1
    %p164 = por %p162, %p163
    %p165 = scmp.ne.s32.totalorder %s156, %s157
    %p166 = scmp.eq.s32.totalorder %s20, 0
    %p167 = por %p165, %p166
    %p168 = scmp.ne.s32.totalorder %s156, %s157
    %p169 = scmp.eq.s32.totalorder %s21, 1
    %p170 = por %p168, %p169
    %p172 = scmp.ne.s32.totalorder %s157, %s171
    %p173 = scmp.eq.s32.totalorder %s21, 0
    %p174 = por %p172, %p173
    %s176 = sadd.s32 %s175, 1
    %p179 = scmp.eq.s32.totalorder %s15, 1
    %p180 = scmp.ne.s32.totalorder %s175, %s177
    %p181 = scmp.eq.s32.totalorder %s15, 0
    %p182 = por %p180, %p181
    %p183 = scmp.ne.s32.totalorder %s175, %s177
    %p184 = scmp.eq.s32.totalorder %s20, 1
    %p185 = por %p183, %p184
    %p186 = scmp.ne.s32.totalorder %s177, %s178
    %p187 = scmp.eq.s32.totalorder %s20, 0
    %p188 = por %p186, %p187
    %p189 = scmp.ne.s32.totalorder %s177, %s178
    %p190 = scmp.eq.s32.totalorder %s21, 1
    %p191 = por %p189, %p190
    %p193 = scmp.ne.s32.totalorder %s178, %s192
    %p194 = scmp.eq.s32.totalorder %s21, 0
    %p195 = por %p193, %p194
    %s197 = sadd.s32 %s196, 1
    %p200 = scmp.eq.s32.totalorder %s15, 1
    %p201 = scmp.ne.s32.totalorder %s196, %s198
    %p202 = scmp.eq.s32.totalorder %s15, 0
    %p203 = por %p201, %p202
    %p204 = scmp.ne.s32.totalorder %s196, %s198
    %p205 = scmp.eq.s32.totalorder %s20, 1
    %p206 = por %p204, %p205
    %p207 = scmp.ne.s32.totalorder %s198, %s199
    %p208 = scmp.eq.s32.totalorder %s20, 0
    %p209 = por %p207, %p208
    %p210 = scmp.ne.s32.totalorder %s198, %s199
    %p211 = scmp.eq.s32.totalorder %s21, 1
    %p212 = por %p210, %p211
    %p214 = scmp.ne.s32.totalorder %s199, %s213
    %p215 = scmp.eq.s32.totalorder %s21, 0
    %p216 = por %p214, %p215
    %s217 = ssub.s32 %s15, %s22
    %p218 = scmp.eq.s32.totalorder %s217, 0
    %s220 = sadd.s32 %s219, 1
    %s221 = scalar_select %p218, %s219, %s220
    %p224 = pneg %p218
    %p225 = scmp.eq.s32.totalorder %s15, 1
    %p226 = por %p224, %p225
    %p227 = scmp.ne.s32.totalorder %s219, %s222
    %p228 = scmp.eq.s32.totalorder %s15, 0
    %p229 = por %p227, %p228
    %p230 = scmp.ne.s32.totalorder %s219, %s222
    %p231 = scmp.eq.s32.totalorder %s20, 1
    %p232 = por %p230, %p231
    %p233 = scmp.ne.s32.totalorder %s222, %s223
    %p234 = scmp.eq.s32.totalorder %s20, 0
    %p235 = por %p233, %p234
    %p236 = scmp.ne.s32.totalorder %s222, %s223
    %p237 = scmp.eq.s32.totalorder %s21, 1
    %p238 = por %p236, %p237
    %p240 = scmp.ne.s32.totalorder %s223, %s239
    %p241 = scmp.eq.s32.totalorder %s21, 0
    %p242 = por %p240, %p241
    %p243 = scmp.le.s32.totalorder 1, %s15
    %p244 = scmp.lt.s32.totalorder %s15, 3
    %p245 = pnand %p243, %p244
    %p246 = pneg %p245
    // Predicated region
    $region9: #{_unet_proto_forward.1} parent=5 // pred_check
      _
    $region10: #{_unet_proto_forward.1} parent=5 // pred_check_branch
      %248 = sbr.rel (%p245) target = $region12
    $region11: #{_unet_proto_forward.1} parent=5 // pred_region
      %s249 = ssub.s32 %s15, 1
      // Predicated region
      $region13: #{_unet_proto_forward.1} parent=11 // pred_check
        %p250 = pneg %p62
      $region14: #{_unet_proto_forward.1} parent=11 // pred_check_branch
        %252 = sbr.rel (%p250) target = $region16
      $region15: #{_unet_proto_forward.1} parent=11 // pred_region
        _
      $region16: #{_unet_proto_forward.1} parent=11 // pred_fallthru
        _
      // Predicated region
      $region17: #{_unet_proto_forward.1} parent=11 // pred_check
        %p253 = pneg %p83
      $region18: #{_unet_proto_forward.1} parent=11 // pred_check_branch
        %255 = sbr.rel (%p253) target = $region20
      $region19: #{_unet_proto_forward.1} parent=11 // pred_region
        _
      $region20: #{_unet_proto_forward.1} parent=11 // pred_fallthru
        _
      // Predicated region
      $region21: #{_unet_proto_forward.1} parent=11 // pred_check
        %p256 = pneg %p104
      $region22: #{_unet_proto_forward.1} parent=11 // pred_check_branch
        %258 = sbr.rel (%p256) target = $region24
      $region23: #{_unet_proto_forward.1} parent=11 // pred_region
        _
      $region24: #{_unet_proto_forward.1} parent=11 // pred_fallthru
        _
      // Predicated region
      $region25: #{_unet_proto_forward.1} parent=11 // pred_check
        %p259 = pneg %p125
      $region26: #{_unet_proto_forward.1} parent=11 // pred_check_branch
        %261 = sbr.rel (%p259) target = $region28
      $region27: #{_unet_proto_forward.1} parent=11 // pred_region
        _
      $region28: #{_unet_proto_forward.1} parent=11 // pred_fallthru
        _
      // Predicated region
      $region29: #{_unet_proto_forward.1} parent=11 // pred_check
        %p262 = pneg %p146
      $region30: #{_unet_proto_forward.1} parent=11 // pred_check_branch
        %264 = sbr.rel (%p262) target = $region32
      $region31: #{_unet_proto_forward.1} parent=11 // pred_region
        _
      $region32: #{_unet_proto_forward.1} parent=11 // pred_fallthru
        _
      // Predicated region
      $region33: #{_unet_proto_forward.1} parent=11 // pred_check
        %p265 = pneg %p167
      $region34: #{_unet_proto_forward.1} parent=11 // pred_check_branch
        %267 = sbr.rel (%p265) target = $region36
      $region35: #{_unet_proto_forward.1} parent=11 // pred_region
        _
      $region36: #{_unet_proto_forward.1} parent=11 // pred_fallthru
        _
      // Predicated region
      $region37: #{_unet_proto_forward.1} parent=11 // pred_check
        %p268 = pneg %p188
      $region38: #{_unet_proto_forward.1} parent=11 // pred_check_branch
        %270 = sbr.rel (%p268) target = $region40
      $region39: #{_unet_proto_forward.1} parent=11 // pred_region
        _
      $region40: #{_unet_proto_forward.1} parent=11 // pred_fallthru
        _
      // Predicated region
      $region41: #{_unet_proto_forward.1} parent=11 // pred_check
        %p271 = pneg %p209
      $region42: #{_unet_proto_forward.1} parent=11 // pred_check_branch
        %273 = sbr.rel (%p271) target = $region44
      $region43: #{_unet_proto_forward.1} parent=11 // pred_region
        _
      $region44: #{_unet_proto_forward.1} parent=11 // pred_fallthru
        _
    $region12: #{_unet_proto_forward.1} parent=5 // pred_fallthru
      _
    %p274 = scmp.lt.s32.totalorder %s15, 2
    // Predicated region
    $region45: #{_unet_proto_forward.1} parent=5 // pred_check
      %p275 = pneg %p274
    $region46: #{_unet_proto_forward.1} parent=5 // pred_check_branch
      %277 = sbr.rel (%p275) target = $region48
    $region47: #{_unet_proto_forward.1} parent=5 // pred_region
      // Predicated region
      $region49: #{_unet_proto_forward.1} parent=47 // pred_check
        %p278 = pneg %p35
      $region50: #{_unet_proto_forward.1} parent=47 // pred_check_branch
        %280 = sbr.rel (%p278) target = $region52
      $region51: #{_unet_proto_forward.1} parent=47 // pred_region
        %p281 = scmp.lt.s32.totalorder %s15, 1
        %s282 = scalar_select %p281, %s15, 1
        %s283 = smul.addr %s282, 56
        %s284 = smul.addr %s283, 4
        %s285 = scalar_lea.vmem %s0, %s284
      $region52: #{_unet_proto_forward.1} parent=47 // pred_fallthru
        _
    $region48: #{_unet_proto_forward.1} parent=5 // pred_fallthru
      _
    %p286 = scmp.le.s32.totalorder 1, %s15
    %p287 = scmp.lt.s32.totalorder %s15, 3
    %p288 = pnand %p286, %p287
    %p289 = pneg %p288
    // Predicated region
    $region53: #{_unet_proto_forward.1} parent=5 // pred_check
      _
    $region54: #{_unet_proto_forward.1} parent=5 // pred_check_branch
      %291 = sbr.rel (%p288) target = $region56
    $region55: #{_unet_proto_forward.1} parent=5 // pred_region
      %s292 = ssub.s32 %s15, 1
      %p293 = scmp.lt.s32.totalorder %s20, 1
      %s294 = scalar_select %p293, %s20, 1
      %s295 = smul.addr %s294, 56
      %s296 = smul.addr %s295, 4
      %s297 = scalar_lea.vmem %s0, %s296
      %p298 = pneg %p41
      %p299 = pneg %p38
      %p300 = pneg %p62
      %p301 = pneg %p59
      %p302 = pneg %p83
      %p303 = pneg %p80
      %p304 = pneg %p104
      %p305 = pneg %p101
      %p306 = pneg %p125
      %p307 = pneg %p122
      %p308 = pneg %p146
      %p309 = pneg %p143
      %p310 = pneg %p167
      %p311 = pneg %p164
      %p312 = pneg %p188
      %p313 = pneg %p185
      %p314 = pneg %p209
      %p315 = pneg %p206
      %p316 = pneg %p235
      %p317 = pneg %p232
      %p318 = scmp.lt.s32.totalorder %s20, 1
      %s319 = scalar_select %p318, %s20, 1
      %s320 = smul.addr %s319, 48
      %s321 = smul.addr %s320, 8
      %s322 = scalar_lea.vmem %s9, %s321
      %p323 = scmp.lt.s32.totalorder %s20, 1
      %s324 = scalar_select %p323, %s20, 1
      %s325 = smul.addr %s324, 56
      %s326 = smul.addr %s325, 4
      %s327 = scalar_lea.vmem %s0, %s326
      %p328 = scmp.lt.s32.totalorder %s20, 1
      %s329 = scalar_select %p328, %s20, 1
      %s330 = smul.addr %s329, 48
      %s331 = smul.addr %s330, 8
      %s332 = scalar_lea.vmem %s9, %s331
      %v334 = vld [vmem:[%s327] sm:$0xf]
      %v335 = vld [vmem:[%s327 + $0x4] sm:$0xf]
      %v336 = vld [vmem:[%s327 + $0x8] sm:$0xf]
      %v337 = vld [vmem:[%s327 + $0xc] sm:$0xf]
      %v338 = vld [vmem:[%s327 + $0x10] sm:$0xf]
      %v339 = vld [vmem:[%s327 + $0x14] sm:$0xf]
      %v340 = vld [vmem:[%s327 + $0x18] sm:$0xf]
      %v341 = vld [vmem:[%s327 + $0x1c] sm:$0xf]
      %v342 = vld [vmem:[%s327 + $0x20] sm:$0xf]
      %v343 = vld [vmem:[%s327 + $0x24] sm:$0xf]
      %v344 = vld [vmem:[%s327 + $0x28] sm:$0xf]
      %v345 = vld [vmem:[%s327 + $0x2c] sm:$0xf]
      %v346 = vld [vmem:[%s327 + $0x30] sm:$0xf]
      %v347 = vld [vmem:[%s327 + $0x34] sm:$0xf]
      %v348 = vld [vmem:[%s327 + $0x38] sm:$0xf]
      %v349 = vld [vmem:[%s327 + $0x3c] sm:$0xf]
      %v350 = vld [vmem:[%s327 + $0x40] sm:$0xf]
      %v351 = vld [vmem:[%s327 + $0x44] sm:$0xf]
      %v352 = vld [vmem:[%s327 + $0x48] sm:$0xf]
      %v353 = vld [vmem:[%s327 + $0x4c] sm:$0xf]
      %v354 = vld [vmem:[%s327 + $0x50] sm:$0xf]
      %v355 = vld [vmem:[%s327 + $0x54] sm:$0xf]
      %v356 = vld [vmem:[%s327 + $0x58] sm:$0xf]
      %v357 = vld [vmem:[%s327 + $0x5c] sm:$0xf]
      %v358 = vld [vmem:[%s327 + $0x60] sm:$0xf]
      %v359 = vld [vmem:[%s327 + $0x64] sm:$0xf]
      %v360 = vld [vmem:[%s327 + $0x68] sm:$0xf]
      %v361 = vld [vmem:[%s327 + $0x6c] sm:$0xf]
      %v362 = vld [vmem:[%s327 + $0x70] sm:$0xf]
      %v363 = vld [vmem:[%s327 + $0x74] sm:$0xf]
      %v364 = vld [vmem:[%s327 + $0x78] sm:$0xf]
      %v365 = vld [vmem:[%s327 + $0x7c] sm:$0xf]
      %v366 = vld [vmem:[%s327 + $0x80] sm:$0xf]
      %v367 = vld [vmem:[%s327 + $0x84] sm:$0xf]
      %v368 = vld [vmem:[%s327 + $0x88] sm:$0xf]
      %v369 = vld [vmem:[%s327 + $0x8c] sm:$0xf]
      %v370 = vld [vmem:[%s327 + $0x90] sm:$0xf]
      %v371 = vld [vmem:[%s327 + $0x94] sm:$0xf]
      %v372 = vld [vmem:[%s327 + $0x98] sm:$0xf]
      %v373 = vld [vmem:[%s327 + $0x9c] sm:$0xf]
      %v374 = vld [vmem:[%s327 + $0xa0] sm:$0xf]
      %v375 = vld [vmem:[%s327 + $0xa4] sm:$0xf]
      %v376 = vld [vmem:[%s327 + $0xa8] sm:$0xf]
      %v377 = vld [vmem:[%s327 + $0xac] sm:$0xf]
      %v378 = vld [vmem:[%s327 + $0xb0] sm:$0xf]
      %v379 = vld [vmem:[%s327 + $0xb4] sm:$0xf]
      %v380 = vld [vmem:[%s327 + $0xb8] sm:$0xf]
      %v381 = vld [vmem:[%s327 + $0xbc] sm:$0xf]
      %v382 = vld [vmem:[%s327 + $0xc0] sm:$0xf]
      %v383 = vld [vmem:[%s327 + $0xc4] sm:$0xf]
      %v384 = vld [vmem:[%s327 + $0xc8] sm:$0xf]
      %v385 = vld [vmem:[%s327 + $0xcc] sm:$0xf]
      %v386 = vld [vmem:[%s327 + $0xd0] sm:$0xf]
      %v387 = vld [vmem:[%s327 + $0xd4] sm:$0xf]
      %v388 = vld [vmem:[%s327 + $0xd8] sm:$0xf]
      %v389 = vld [vmem:[%s327 + $0xdc] sm:$0xf]
      %v390 = vld [vmem:[%s1] sm:$0xf]
      %v391 = vld [vmem:[%s1 + $0x4] sm:$0x1]
      %v448 = vunpack.c.l.b16 %v334
      %v449 = vunpack.c.l.b16 %v335
      %v450 = vunpack.c.l.b16 %v336
      %v451 = vunpack.c.l.b16 %v337
      %v452 = vunpack.c.l.b16 %v338
      %v453 = vunpack.c.l.b16 %v339
      %v454 = vunpack.c.l.b16 %v340
      %v455 = vunpack.c.l.b16 %v341
      %v456 = vunpack.c.l.b16 %v342
      %v457 = vunpack.c.l.b16 %v343
      %v458 = vunpack.c.l.b16 %v344
      %v459 = vunpack.c.l.b16 %v345
      %v460 = vunpack.c.l.b16 %v346
      %v461 = vunpack.c.l.b16 %v347
      %v462 = vunpack.c.l.b16 %v348
      %v463 = vunpack.c.l.b16 %v349
      %v464 = vunpack.c.l.b16 %v350
      %v465 = vunpack.c.l.b16 %v351
      %v466 = vunpack.c.l.b16 %v352
      %v467 = vunpack.c.l.b16 %v353
      %v468 = vunpack.c.l.b16 %v354
      %v469 = vunpack.c.l.b16 %v355
      %v470 = vunpack.c.l.b16 %v356
      %v471 = vunpack.c.l.b16 %v357
      %v472 = vunpack.c.l.b16 %v358
      %v473 = vunpack.c.l.b16 %v359
      %v474 = vunpack.c.l.b16 %v360
      %v475 = vunpack.c.l.b16 %v361
      %v476 = vunpack.c.l.b16 %v362
      %v477 = vunpack.c.l.b16 %v363
      %v478 = vunpack.c.l.b16 %v364
      %v479 = vunpack.c.l.b16 %v365
      %v480 = vunpack.c.l.b16 %v366
      %v481 = vunpack.c.l.b16 %v367
      %v482 = vunpack.c.l.b16 %v368
      %v483 = vunpack.c.l.b16 %v369
      %v484 = vunpack.c.l.b16 %v370
      %v485 = vunpack.c.l.b16 %v371
      %v486 = vunpack.c.l.b16 %v372
      %v487 = vunpack.c.l.b16 %v373
      %v488 = vunpack.c.l.b16 %v374
      %v489 = vunpack.c.l.b16 %v375
      %v490 = vunpack.c.l.b16 %v376
      %v491 = vunpack.c.l.b16 %v377
      %v492 = vunpack.c.l.b16 %v378
      %v493 = vunpack.c.l.b16 %v379
      %v494 = vunpack.c.l.b16 %v380
      %v495 = vunpack.c.l.b16 %v381
      %v496 = vunpack.c.l.b16 %v382
      %v497 = vunpack.c.l.b16 %v383
      %v498 = vunpack.c.l.b16 %v384
      %v499 = vunpack.c.l.b16 %v385
      %v500 = vunpack.c.l.b16 %v386
      %v501 = vunpack.c.l.b16 %v387
      %v502 = vunpack.c.l.b16 %v388
      %v503 = vunpack.c.l.b16 %v389
      %v504 = vpack.c.b16 %v449, %v448
      %v505 = vpack.c.b16 %v451, %v450
      %v506 = vpack.c.b16 %v453, %v452
      %v507 = vpack.c.b16 %v455, %v454
      %v508 = vpack.c.b16 %v457, %v456
      %v509 = vpack.c.b16 %v459, %v458
      %v510 = vpack.c.b16 %v461, %v460
      %v511 = vpack.c.b16 %v463, %v462
      %v512 = vpack.c.b16 %v465, %v464
      %v513 = vpack.c.b16 %v467, %v466
      %v514 = vpack.c.b16 %v469, %v468
      %v515 = vpack.c.b16 %v471, %v470
      %v516 = vpack.c.b16 %v473, %v472
      %v517 = vpack.c.b16 %v475, %v474
      %v518 = vpack.c.b16 %v477, %v476
      %v519 = vpack.c.b16 %v479, %v478
      %v520 = vpack.c.b16 %v481, %v480
      %v521 = vpack.c.b16 %v483, %v482
      %v522 = vpack.c.b16 %v485, %v484
      %v523 = vpack.c.b16 %v487, %v486
      %v524 = vpack.c.b16 %v489, %v488
      %v525 = vpack.c.b16 %v491, %v490
      %v526 = vpack.c.b16 %v493, %v492
      %v527 = vpack.c.b16 %v495, %v494
      %v528 = vpack.c.b16 %v497, %v496
      %v529 = vpack.c.b16 %v499, %v498
      %v530 = vpack.c.b16 %v501, %v500
      %v531 = vpack.c.b16 %v503, %v502
      %v534 = vunpack.c.l.b16 %v390
      %v535 = vunpack.c.l.b16 %v391
      %v536 = vpack.c.b16 %v535, %v534
      %vm537 = vcmask 80896
      %v539 = vsel %vm537, %v504, 0
      %v542 = vsel %vm537, %v505, 0
      %v545 = vsel %vm537, %v506, 0
      %v548 = vsel %vm537, %v507, 0
      %v551 = vsel %vm537, %v508, 0
      %v554 = vsel %vm537, %v509, 0
      %v557 = vsel %vm537, %v510, 0
      %v560 = vsel %vm537, %v511, 0
      %v563 = vsel %vm537, %v512, 0
      %v566 = vsel %vm537, %v513, 0
      %v569 = vsel %vm537, %v514, 0
      %v572 = vsel %vm537, %v515, 0
      %v575 = vsel %vm537, %v516, 0
      %v578 = vsel %vm537, %v517, 0
      %v581 = vsel %vm537, %v518, 0
      %v584 = vsel %vm537, %v519, 0
      %v587 = vsel %vm537, %v520, 0
      %v590 = vsel %vm537, %v521, 0
      %v593 = vsel %vm537, %v522, 0
      %v596 = vsel %vm537, %v523, 0
      %v599 = vsel %vm537, %v524, 0
      %v602 = vsel %vm537, %v525, 0
      %v605 = vsel %vm537, %v526, 0
      %v608 = vsel %vm537, %v527, 0
      %v611 = vsel %vm537, %v528, 0
      %v614 = vsel %vm537, %v529, 0
      %v617 = vsel %vm537, %v530, 0
      %v620 = vsel %vm537, %v531, 0
      %vm622 = vcmask 1044480
      %v624 = vsel %vm622, %v536, 0
      %626 = vmatpush.bf16.msra.mxu0 0
      %627 = vmatpush.bf16.msra.mxu0 0
      %628 = vmatpush.bf16.msra.mxu0 0
      %629 = vmatpush.bf16.msra.mxu0 0
      %630 = vmatpush.bf16.msra.mxu0 0
      %631 = vmatpush.bf16.msra.mxu0 0
      %632 = vmatpush.bf16.msra.mxu0 0
      %633 = vmatpush.bf16.msra.mxu0 %v624
      %634 = vmatmul.bf16.gmra.mxu0 %v539
      %v635 = vpop.f32.mrf.mxu0
      %v636 = vadd.f32 0.0, %v635
      %v637 = vpop.f32.mrf.mxu0
      %v638 = vadd.f32 0.0, %v637
      %639 = vmatmul.bf16.gmra.mxu0 %v542
      %v640 = vpop.f32.mrf.mxu0
      %v641 = vadd.f32 0.0, %v640
      %v642 = vpop.f32.mrf.mxu0
      %v643 = vadd.f32 0.0, %v642
      %644 = vmatmul.bf16.gmra.mxu0 %v545
      %v645 = vpop.f32.mrf.mxu0
      %v646 = vadd.f32 0.0, %v645
      %v647 = vpop.f32.mrf.mxu0
      %v648 = vadd.f32 0.0, %v647
      %649 = vmatmul.bf16.gmra.mxu0 %v548
      %v650 = vpop.f32.mrf.mxu0
      %v651 = vadd.f32 0.0, %v650
      %v652 = vpop.f32.mrf.mxu0
      %v653 = vadd.f32 0.0, %v652
      %654 = vmatmul.bf16.gmra.mxu0 %v551
      %v655 = vpop.f32.mrf.mxu0
      %v656 = vadd.f32 0.0, %v655
      %v657 = vpop.f32.mrf.mxu0
      %v658 = vadd.f32 0.0, %v657
      %659 = vmatmul.bf16.gmra.mxu0 %v554
      %v660 = vpop.f32.mrf.mxu0
      %v661 = vadd.f32 0.0, %v660
      %v662 = vpop.f32.mrf.mxu0
      %v663 = vadd.f32 0.0, %v662
      %664 = vmatmul.bf16.gmra.mxu0 %v557
      %v665 = vpop.f32.mrf.mxu0
      %v666 = vadd.f32 0.0, %v665
      %v667 = vpop.f32.mrf.mxu0
      %v668 = vadd.f32 0.0, %v667
      %669 = vmatmul.bf16.gmra.mxu0 %v560
      %v670 = vpop.f32.mrf.mxu0
      %v671 = vadd.f32 0.0, %v670
      %v672 = vpop.f32.mrf.mxu0
      %v673 = vadd.f32 0.0, %v672
      %674 = vmatmul.bf16.gmra.mxu0 %v563
      %v675 = vpop.f32.mrf.mxu0
      %v676 = vadd.f32 0.0, %v675
      %v677 = vpop.f32.mrf.mxu0
      %v678 = vadd.f32 0.0, %v677
      %679 = vmatmul.bf16.gmra.mxu0 %v566
      %v680 = vpop.f32.mrf.mxu0
      %v681 = vadd.f32 0.0, %v680
      %v682 = vpop.f32.mrf.mxu0
      %v683 = vadd.f32 0.0, %v682
      %684 = vmatmul.bf16.gmra.mxu0 %v569
      %v685 = vpop.f32.mrf.mxu0
      %v686 = vadd.f32 0.0, %v685
      %v687 = vpop.f32.mrf.mxu0
      %v688 = vadd.f32 0.0, %v687
      %689 = vmatmul.bf16.gmra.mxu0 %v572
      %v690 = vpop.f32.mrf.mxu0
      %v691 = vadd.f32 0.0, %v690
      %v692 = vpop.f32.mrf.mxu0
      %v693 = vadd.f32 0.0, %v692
      %694 = vmatmul.bf16.gmra.mxu0 %v575
      %v695 = vpop.f32.mrf.mxu0
      %v696 = vadd.f32 0.0, %v695
      %v697 = vpop.f32.mrf.mxu0
      %v698 = vadd.f32 0.0, %v697
      %699 = vmatmul.bf16.gmra.mxu0 %v578
      %v700 = vpop.f32.mrf.mxu0
      %v701 = vadd.f32 0.0, %v700
      %v702 = vpop.f32.mrf.mxu0
      %v703 = vadd.f32 0.0, %v702
      %704 = vmatmul.bf16.gmra.mxu0 %v581
      %v705 = vpop.f32.mrf.mxu0
      %v706 = vadd.f32 0.0, %v705
      %v707 = vpop.f32.mrf.mxu0
      %v708 = vadd.f32 0.0, %v707
      %709 = vmatmul.bf16.gmra.mxu0 %v584
      %v710 = vpop.f32.mrf.mxu0
      %v711 = vadd.f32 0.0, %v710
      %v712 = vpop.f32.mrf.mxu0
      %v713 = vadd.f32 0.0, %v712
      %714 = vmatmul.bf16.gmra.mxu0 %v587
      %v715 = vpop.f32.mrf.mxu0
      %v716 = vadd.f32 0.0, %v715
      %v717 = vpop.f32.mrf.mxu0
      %v718 = vadd.f32 0.0, %v717
      %719 = vmatmul.bf16.gmra.mxu0 %v590
      %v720 = vpop.f32.mrf.mxu0
      %v721 = vadd.f32 0.0, %v720
      %v722 = vpop.f32.mrf.mxu0
      %v723 = vadd.f32 0.0, %v722
      %724 = vmatmul.bf16.gmra.mxu0 %v593
      %v725 = vpop.f32.mrf.mxu0
      %v726 = vadd.f32 0.0, %v725
      %v727 = vpop.f32.mrf.mxu0
      %v728 = vadd.f32 0.0, %v727
      %729 = vmatmul.bf16.gmra.mxu0 %v596
      %v730 = vpop.f32.mrf.mxu0
      %v731 = vadd.f32 0.0, %v730
      %v732 = vpop.f32.mrf.mxu0
      %v733 = vadd.f32 0.0, %v732
      %734 = vmatmul.bf16.gmra.mxu0 %v599
      %v735 = vpop.f32.mrf.mxu0
      %v736 = vadd.f32 0.0, %v735
      %v737 = vpop.f32.mrf.mxu0
      %v738 = vadd.f32 0.0, %v737
      %739 = vmatmul.bf16.gmra.mxu0 %v602
      %v740 = vpop.f32.mrf.mxu0
      %v741 = vadd.f32 0.0, %v740
      %v742 = vpop.f32.mrf.mxu0
      %v743 = vadd.f32 0.0, %v742
      %744 = vmatmul.bf16.gmra.mxu0 %v605
      %v745 = vpop.f32.mrf.mxu0
      %v746 = vadd.f32 0.0, %v745
      %v747 = vpop.f32.mrf.mxu0
      %v748 = vadd.f32 0.0, %v747
      %749 = vmatmul.bf16.gmra.mxu0 %v608
      %v750 = vpop.f32.mrf.mxu0
      %v751 = vadd.f32 0.0, %v750
      %v752 = vpop.f32.mrf.mxu0
      %v753 = vadd.f32 0.0, %v752
      %754 = vmatmul.bf16.gmra.mxu0 %v611
      %v755 = vpop.f32.mrf.mxu0
      %v756 = vadd.f32 0.0, %v755
      %v757 = vpop.f32.mrf.mxu0
      %v758 = vadd.f32 0.0, %v757
      %759 = vmatmul.bf16.gmra.mxu0 %v614
      %v760 = vpop.f32.mrf.mxu0
      %v761 = vadd.f32 0.0, %v760
      %v762 = vpop.f32.mrf.mxu0
      %v763 = vadd.f32 0.0, %v762
      %764 = vmatmul.bf16.gmra.mxu0 %v617
      %v765 = vpop.f32.mrf.mxu0
      %v766 = vadd.f32 0.0, %v765
      %v767 = vpop.f32.mrf.mxu0
      %v768 = vadd.f32 0.0, %v767
      %769 = vmatmul.bf16.gmra.mxu0 %v620
      %v770 = vpop.f32.mrf.mxu0
      %v771 = vadd.f32 0.0, %v770
      %v772 = vpop.f32.mrf.mxu0
      %v773 = vadd.f32 0.0, %v772
      %774 = vdwg.mxu0
      %v775 = vmax.f32 %v636, 0.0
      %v776 = vmax.f32 %v638, 0.0
      %v777 = vmax.f32 %v641, 0.0
      %v778 = vmax.f32 %v643, 0.0
      %v779 = vmax.f32 %v646, 0.0
      %v780 = vmax.f32 %v648, 0.0
      %v781 = vmax.f32 %v651, 0.0
      %v782 = vmax.f32 %v653, 0.0
      %v783 = vmax.f32 %v656, 0.0
      %v784 = vmax.f32 %v658, 0.0
      %v785 = vmax.f32 %v661, 0.0
      %v786 = vmax.f32 %v663, 0.0
      %v787 = vmax.f32 %v666, 0.0
      %v788 = vmax.f32 %v668, 0.0
      %v789 = vmax.f32 %v671, 0.0
      %v790 = vmax.f32 %v673, 0.0
      %v791 = vmax.f32 %v676, 0.0
      %v792 = vmax.f32 %v678, 0.0
      %v793 = vmax.f32 %v681, 0.0
      %v794 = vmax.f32 %v683, 0.0
      %v795 = vmax.f32 %v686, 0.0
      %v796 = vmax.f32 %v688, 0.0
      %v797 = vmax.f32 %v691, 0.0
      %v798 = vmax.f32 %v693, 0.0
      %v799 = vmax.f32 %v696, 0.0
      %v800 = vmax.f32 %v698, 0.0
      %v801 = vmax.f32 %v701, 0.0
      %v802 = vmax.f32 %v703, 0.0
      %v803 = vmax.f32 %v706, 0.0
      %v804 = vmax.f32 %v708, 0.0
      %v805 = vmax.f32 %v711, 0.0
      %v806 = vmax.f32 %v713, 0.0
      %v807 = vmax.f32 %v716, 0.0
      %v808 = vmax.f32 %v718, 0.0
      %v809 = vmax.f32 %v721, 0.0
      %v810 = vmax.f32 %v723, 0.0
      %v811 = vmax.f32 %v726, 0.0
      %v812 = vmax.f32 %v728, 0.0
      %v813 = vmax.f32 %v731, 0.0
      %v814 = vmax.f32 %v733, 0.0
      %v815 = vmax.f32 %v736, 0.0
      %v816 = vmax.f32 %v738, 0.0
      %v817 = vmax.f32 %v741, 0.0
      %v818 = vmax.f32 %v743, 0.0
      %v819 = vmax.f32 %v746, 0.0
      %v820 = vmax.f32 %v748, 0.0
      %v821 = vmax.f32 %v751, 0.0
      %v822 = vmax.f32 %v753, 0.0
      %v823 = vmax.f32 %v756, 0.0
      %v824 = vmax.f32 %v758, 0.0
      %v825 = vmax.f32 %v761, 0.0
      %v826 = vmax.f32 %v763, 0.0
      %v827 = vmax.f32 %v766, 0.0
      %v828 = vmax.f32 %v768, 0.0
      %v829 = vmax.f32 %v771, 0.0
      %v830 = vmax.f32 %v773, 0.0
      %v831 = vpack.c.bf16 %v775, %v775
      %v832 = vpack.c.bf16 %v776, %v776
      %v833 = vpack.c.bf16 %v777, %v777
      %v834 = vpack.c.bf16 %v778, %v778
      %v835 = vpack.c.bf16 %v779, %v779
      %v836 = vpack.c.bf16 %v780, %v780
      %v837 = vpack.c.bf16 %v781, %v781
      %v838 = vpack.c.bf16 %v782, %v782
      %v839 = vpack.c.bf16 %v783, %v783
      %v840 = vpack.c.bf16 %v784, %v784
      %v841 = vpack.c.bf16 %v785, %v785
      %v842 = vpack.c.bf16 %v786, %v786
      %v843 = vpack.c.bf16 %v787, %v787
      %v844 = vpack.c.bf16 %v788, %v788
      %v845 = vpack.c.bf16 %v789, %v789
      %v846 = vpack.c.bf16 %v790, %v790
      %v847 = vpack.c.bf16 %v791, %v791
      %v848 = vpack.c.bf16 %v792, %v792
      %v849 = vpack.c.bf16 %v793, %v793
      %v850 = vpack.c.bf16 %v794, %v794
      %v851 = vpack.c.bf16 %v795, %v795
      %v852 = vpack.c.bf16 %v796, %v796
      %v853 = vpack.c.bf16 %v797, %v797
      %v854 = vpack.c.bf16 %v798, %v798
      %v855 = vpack.c.bf16 %v799, %v799
      %v856 = vpack.c.bf16 %v800, %v800
      %v857 = vpack.c.bf16 %v801, %v801
      %v858 = vpack.c.bf16 %v802, %v802
      %v859 = vpack.c.bf16 %v803, %v803
      %v860 = vpack.c.bf16 %v804, %v804
      %v861 = vpack.c.bf16 %v805, %v805
      %v862 = vpack.c.bf16 %v806, %v806
      %v863 = vpack.c.bf16 %v807, %v807
      %v864 = vpack.c.bf16 %v808, %v808
      %v865 = vpack.c.bf16 %v809, %v809
      %v866 = vpack.c.bf16 %v810, %v810
      %v867 = vpack.c.bf16 %v811, %v811
      %v868 = vpack.c.bf16 %v812, %v812
      %v869 = vpack.c.bf16 %v813, %v813
      %v870 = vpack.c.bf16 %v814, %v814
      %v871 = vpack.c.bf16 %v815, %v815
      %v872 = vpack.c.bf16 %v816, %v816
      %v873 = vpack.c.bf16 %v817, %v817
      %v874 = vpack.c.bf16 %v818, %v818
      %v875 = vpack.c.bf16 %v819, %v819
      %v876 = vpack.c.bf16 %v820, %v820
      %v877 = vpack.c.bf16 %v821, %v821
      %v878 = vpack.c.bf16 %v822, %v822
      %v879 = vpack.c.bf16 %v823, %v823
      %v880 = vpack.c.bf16 %v824, %v824
      %v881 = vpack.c.bf16 %v825, %v825
      %v882 = vpack.c.bf16 %v826, %v826
      %v883 = vpack.c.bf16 %v827, %v827
      %v884 = vpack.c.bf16 %v828, %v828
      %v885 = vpack.c.bf16 %v829, %v829
      %v886 = vpack.c.bf16 %v830, %v830
      %vm887 = vcmask 257024
      %888 = vst.msk [vmem:[#allocation2] sm:$0xf] %vm887, %v831
      %889 = vst.msk [vmem:[#allocation2 + $0x4] sm:$0xf] %vm887, %v832
      %890 = vst.msk [vmem:[#allocation2 + $0x8] sm:$0xf] %vm887, %v833
      %891 = vst.msk [vmem:[#allocation2 + $0xc] sm:$0xf] %vm887, %v834
      %892 = vst.msk [vmem:[#allocation2 + $0x10] sm:$0xf] %vm887, %v835
      %893 = vst.msk [vmem:[#allocation2 + $0x14] sm:$0xf] %vm887, %v836
      %894 = vst.msk [vmem:[#allocation2 + $0x18] sm:$0xf] %vm887, %v837
      %895 = vst.msk [vmem:[#allocation2 + $0x1c] sm:$0xf] %vm887, %v838
      %896 = vst.msk [vmem:[#allocation2 + $0x20] sm:$0xf] %vm887, %v839
      %897 = vst.msk [vmem:[#allocation2 + $0x24] sm:$0xf] %vm887, %v840
      %898 = vst.msk [vmem:[#allocation2 + $0x28] sm:$0xf] %vm887, %v841
      %899 = vst.msk [vmem:[#allocation2 + $0x2c] sm:$0xf] %vm887, %v842
      %900 = vst.msk [vmem:[#allocation2 + $0x30] sm:$0xf] %vm887, %v843
      %901 = vst.msk [vmem:[#allocation2 + $0x34] sm:$0xf] %vm887, %v844
      %902 = vst.msk [vmem:[#allocation2 + $0x38] sm:$0xf] %vm887, %v845
      %903 = vst.msk [vmem:[#allocation2 + $0x3c] sm:$0xf] %vm887, %v846
      %904 = vst.msk [vmem:[#allocation2 + $0x40] sm:$0xf] %vm887, %v847
      %905 = vst.msk [vmem:[#allocation2 + $0x44] sm:$0xf] %vm887, %v848
      %906 = vst.msk [vmem:[#allocation2 + $0x48] sm:$0xf] %vm887, %v849
      %907 = vst.msk [vmem:[#allocation2 + $0x4c] sm:$0xf] %vm887, %v850
      %908 = vst.msk [vmem:[#allocation2 + $0x50] sm:$0xf] %vm887, %v851
      %909 = vst.msk [vmem:[#allocation2 + $0x54] sm:$0xf] %vm887, %v852
      %910 = vst.msk [vmem:[#allocation2 + $0x58] sm:$0xf] %vm887, %v853
      %911 = vst.msk [vmem:[#allocation2 + $0x5c] sm:$0xf] %vm887, %v854
      %912 = vst.msk [vmem:[#allocation2 + $0x60] sm:$0xf] %vm887, %v855
      %913 = vst.msk [vmem:[#allocation2 + $0x64] sm:$0xf] %vm887, %v856
      %914 = vst.msk [vmem:[#allocation2 + $0x68] sm:$0xf] %vm887, %v857
      %915 = vst.msk [vmem:[#allocation2 + $0x6c] sm:$0xf] %vm887, %v858
      %916 = vst.msk [vmem:[#allocation2 + $0x70] sm:$0xf] %vm887, %v859
      %917 = vst.msk [vmem:[#allocation2 + $0x74] sm:$0xf] %vm887, %v860
      %918 = vst.msk [vmem:[#allocation2 + $0x78] sm:$0xf] %vm887, %v861
      %919 = vst.msk [vmem:[#allocation2 + $0x7c] sm:$0xf] %vm887, %v862
      %920 = vst.msk [vmem:[#allocation2 + $0x80] sm:$0xf] %vm887, %v863
      %921 = vst.msk [vmem:[#allocation2 + $0x84] sm:$0xf] %vm887, %v864
      %922 = vst.msk [vmem:[#allocation2 + $0x88] sm:$0xf] %vm887, %v865
      %923 = vst.msk [vmem:[#allocation2 + $0x8c] sm:$0xf] %vm887, %v866
      %924 = vst.msk [vmem:[#allocation2 + $0x90] sm:$0xf] %vm887, %v867
      %925 = vst.msk [vmem:[#allocation2 + $0x94] sm:$0xf] %vm887, %v868
      %926 = vst.msk [vmem:[#allocation2 + $0x98] sm:$0xf] %vm887, %v869
      %927 = vst.msk [vmem:[#allocation2 + $0x9c] sm:$0xf] %vm887, %v870
      %928 = vst.msk [vmem:[#allocation2 + $0xa0] sm:$0xf] %vm887, %v871
      %929 = vst.msk [vmem:[#allocation2 + $0xa4] sm:$0xf] %vm887, %v872
      %930 = vst.msk [vmem:[#allocation2 + $0xa8] sm:$0xf] %vm887, %v873
      %931 = vst.msk [vmem:[#allocation2 + $0xac] sm:$0xf] %vm887, %v874
      %932 = vst.msk [vmem:[#allocation2 + $0xb0] sm:$0xf] %vm887, %v875
      %933 = vst.msk [vmem:[#allocation2 + $0xb4] sm:$0xf] %vm887, %v876
      %934 = vst.msk [vmem:[#allocation2 + $0xb8] sm:$0xf] %vm887, %v877
      %935 = vst.msk [vmem:[#allocation2 + $0xbc] sm:$0xf] %vm887, %v878
      %936 = vst.msk [vmem:[#allocation2 + $0xc0] sm:$0xf] %vm887, %v879
      %937 = vst.msk [vmem:[#allocation2 + $0xc4] sm:$0xf] %vm887, %v880
      %938 = vst.msk [vmem:[#allocation2 + $0xc8] sm:$0xf] %vm887, %v881
      %939 = vst.msk [vmem:[#allocation2 + $0xcc] sm:$0xf] %vm887, %v882
      %940 = vst.msk [vmem:[#allocation2 + $0xd0] sm:$0xf] %vm887, %v883
      %941 = vst.msk [vmem:[#allocation2 + $0xd4] sm:$0xf] %vm887, %v884
      %942 = vst.msk [vmem:[#allocation2 + $0xd8] sm:$0xf] %vm887, %v885
      %943 = vst.msk [vmem:[#allocation2 + $0xdc] sm:$0xf] %vm887, %v886
      %v944 = vld [vmem:[#allocation2] sm:$0x8]
      %v945 = vld [vmem:[#allocation2 + $0x4] sm:$0xf]
      %v946 = vld [vmem:[#allocation2 + $0x8] sm:$0xf]
      %v947 = vld [vmem:[#allocation2 + $0xc] sm:$0xf]
      %v948 = vld [vmem:[#allocation2 + $0x10] sm:$0xf]
      %v949 = vld [vmem:[#allocation2 + $0x14] sm:$0xf]
      %v950 = vld [vmem:[#allocation2 + $0x18] sm:$0xf]
      %v951 = vld [vmem:[#allocation2 + $0x1c] sm:$0xf]
      %v952 = vld [vmem:[#allocation2 + $0x20] sm:$0xf]
      %v953 = vld [vmem:[#allocation2 + $0x24] sm:$0xf]
      %v954 = vld [vmem:[#allocation2 + $0x28] sm:$0xf]
      %v955 = vld [vmem:[#allocation2 + $0x2c] sm:$0xf]
      %v956 = vld [vmem:[#allocation2 + $0x30] sm:$0xf]
      %v957 = vld [vmem:[#allocation2 + $0x34] sm:$0xf]
      %v958 = vld [vmem:[#allocation2 + $0x38] sm:$0xf]
      %v959 = vld [vmem:[#allocation2 + $0x3c] sm:$0xf]
      %v960 = vld [vmem:[#allocation2 + $0x40] sm:$0xf]
      %v961 = vld [vmem:[#allocation2 + $0x44] sm:$0xf]
      %v962 = vld [vmem:[#allocation2 + $0x48] sm:$0xf]
      %v963 = vld [vmem:[#allocation2 + $0x4c] sm:$0xf]
      %v964 = vld [vmem:[#allocation2 + $0x50] sm:$0xf]
      %v965 = vld [vmem:[#allocation2 + $0x54] sm:$0xf]
      %v966 = vld [vmem:[#allocation2 + $0x58] sm:$0xf]
      %v967 = vld [vmem:[#allocation2 + $0x5c] sm:$0xf]
      %v968 = vld [vmem:[#allocation2 + $0x60] sm:$0xf]
      %v969 = vld [vmem:[#allocation2 + $0x64] sm:$0xf]
      %v970 = vld [vmem:[#allocation2 + $0x68] sm:$0xf]
      %v971 = vld [vmem:[#allocation2 + $0x6c] sm:$0xf]
      %v972 = vld [vmem:[#allocation2 + $0x70] sm:$0xf]
      %v973 = vld [vmem:[#allocation2 + $0x74] sm:$0xf]
      %v974 = vld [vmem:[#allocation2 + $0x78] sm:$0xf]
      %v975 = vld [vmem:[#allocation2 + $0x7c] sm:$0xf]
      %v976 = vld [vmem:[#allocation2 + $0x80] sm:$0xf]
      %v977 = vld [vmem:[#allocation2 + $0x84] sm:$0xf]
      %v978 = vld [vmem:[#allocation2 + $0x88] sm:$0xf]
      %v979 = vld [vmem:[#allocation2 + $0x8c] sm:$0xf]
      %v980 = vld [vmem:[#allocation2 + $0x90] sm:$0xf]
      %v981 = vld [vmem:[#allocation2 + $0x94] sm:$0xf]
      %v982 = vld [vmem:[#allocation2 + $0x98] sm:$0xf]
      %v983 = vld [vmem:[#allocation2 + $0x9c] sm:$0xf]
      %v984 = vld [vmem:[#allocation2 + $0xa0] sm:$0xf]
      %v985 = vld [vmem:[#allocation2 + $0xa4] sm:$0xf]
      %v986 = vld [vmem:[#allocation2 + $0xa8] sm:$0xf]
      %v987 = vld [vmem:[#allocation2 + $0xac] sm:$0xf]
      %v988 = vld [vmem:[#allocation2 + $0xb0] sm:$0xf]
      %v989 = vld [vmem:[#allocation2 + $0xb4] sm:$0xf]
      %v990 = vld [vmem:[#allocation2 + $0xb8] sm:$0xf]
      %v991 = vld [vmem:[#allocation2 + $0xbc] sm:$0xf]
      %v992 = vld [vmem:[#allocation2 + $0xc0] sm:$0xf]
      %vm993 = vsmask.f32 256
      %vm994 = vsmask.f32 4368
      %vm995 = vmor %vm993, %vm994
      %v997 = vshrl.u32 %v944, 16
      %v999 = vrot.slane %v997, 7
      %v1000 = vrot.slane %v999, 4
      %v1002 = vshrl.u32 %v945, 16
      %v1004 = vrot.slane %v1002, 7
      %v1005 = vshll.u32 %v945, 16
      %v1007 = vor.u32 %v1004, %v1005
      %v1008 = vsel %vm995, %v1000, %v1007
      %v1009 = vrot.slane %v1004, 4
      %v1011 = vshrl.u32 %v946, 16
      %v1013 = vrot.slane %v1011, 7
      %v1014 = vshll.u32 %v946, 16
      %v1016 = vor.u32 %v1013, %v1014
      %v1017 = vsel %vm995, %v1009, %v1016
      %v1018 = vrot.slane %v1013, 4
      %v1020 = vshrl.u32 %v947, 16
      %v1022 = vrot.slane %v1020, 7
      %v1023 = vshll.u32 %v947, 16
      %v1025 = vor.u32 %v1022, %v1023
      %v1026 = vsel %vm995, %v1018, %v1025
      %v1027 = vrot.slane %v1022, 4
      %v1029 = vshrl.u32 %v948, 16
      %v1031 = vrot.slane %v1029, 7
      %v1032 = vshll.u32 %v948, 16
      %v1034 = vor.u32 %v1031, %v1032
      %v1035 = vsel %vm995, %v1027, %v1034
      %v1036 = vrot.slane %v1031, 4
      %v1038 = vshrl.u32 %v949, 16
      %v1040 = vrot.slane %v1038, 7
      %v1041 = vshll.u32 %v949, 16
      %v1043 = vor.u32 %v1040, %v1041
      %v1044 = vsel %vm995, %v1036, %v1043
      %v1045 = vrot.slane %v1040, 4
      %v1047 = vshrl.u32 %v950, 16
      %v1049 = vrot.slane %v1047, 7
      %v1050 = vshll.u32 %v950, 16
      %v1052 = vor.u32 %v1049, %v1050
      %v1053 = vsel %vm995, %v1045, %v1052
      %v1054 = vrot.slane %v1049, 4
      %v1056 = vshrl.u32 %v951, 16
      %v1058 = vrot.slane %v1056, 7
      %v1059 = vshll.u32 %v951, 16
      %v1061 = vor.u32 %v1058, %v1059
      %v1062 = vsel %vm995, %v1054, %v1061
      %v1063 = vrot.slane %v1058, 4
      %v1065 = vshrl.u32 %v952, 16
      %v1067 = vrot.slane %v1065, 7
      %v1068 = vshll.u32 %v952, 16
      %v1070 = vor.u32 %v1067, %v1068
      %v1071 = vsel %vm995, %v1063, %v1070
      %v1072 = vrot.slane %v1067, 4
      %v1074 = vshrl.u32 %v953, 16
      %v1076 = vrot.slane %v1074, 7
      %v1077 = vshll.u32 %v953, 16
      %v1079 = vor.u32 %v1076, %v1077
      %v1080 = vsel %vm995, %v1072, %v1079
      %v1081 = vrot.slane %v1076, 4
      %v1083 = vshrl.u32 %v954, 16
      %v1085 = vrot.slane %v1083, 7
      %v1086 = vshll.u32 %v954, 16
      %v1088 = vor.u32 %v1085, %v1086
      %v1089 = vsel %vm995, %v1081, %v1088
      %v1090 = vrot.slane %v1085, 4
      %v1092 = vshrl.u32 %v955, 16
      %v1094 = vrot.slane %v1092, 7
      %v1095 = vshll.u32 %v955, 16
      %v1097 = vor.u32 %v1094, %v1095
      %v1098 = vsel %vm995, %v1090, %v1097
      %v1099 = vrot.slane %v1094, 4
      %v1101 = vshrl.u32 %v956, 16
      %v1103 = vrot.slane %v1101, 7
      %v1104 = vshll.u32 %v956, 16
      %v1106 = vor.u32 %v1103, %v1104
      %v1107 = vsel %vm995, %v1099, %v1106
      %v1108 = vrot.slane %v1103, 4
      %v1110 = vshrl.u32 %v957, 16
      %v1112 = vrot.slane %v1110, 7
      %v1113 = vshll.u32 %v957, 16
      %v1115 = vor.u32 %v1112, %v1113
      %v1116 = vsel %vm995, %v1108, %v1115
      %v1117 = vrot.slane %v1112, 4
      %v1119 = vshrl.u32 %v958, 16
      %v1121 = vrot.slane %v1119, 7
      %v1122 = vshll.u32 %v958, 16
      %v1124 = vor.u32 %v1121, %v1122
      %v1125 = vsel %vm995, %v1117, %v1124
      %v1126 = vrot.slane %v1121, 4
      %v1128 = vshrl.u32 %v959, 16
      %v1130 = vrot.slane %v1128, 7
      %v1131 = vshll.u32 %v959, 16
      %v1133 = vor.u32 %v1130, %v1131
      %v1134 = vsel %vm995, %v1126, %v1133
      %v1135 = vrot.slane %v1130, 4
      %v1137 = vshrl.u32 %v960, 16
      %v1139 = vrot.slane %v1137, 7
      %v1140 = vshll.u32 %v960, 16
      %v1142 = vor.u32 %v1139, %v1140
      %v1143 = vsel %vm995, %v1135, %v1142
      %v1144 = vrot.slane %v1139, 4
      %v1146 = vshrl.u32 %v961, 16
      %v1148 = vrot.slane %v1146, 7
      %v1149 = vshll.u32 %v961, 16
      %v1151 = vor.u32 %v1148, %v1149
      %v1152 = vsel %vm995, %v1144, %v1151
      %v1153 = vrot.slane %v1148, 4
      %v1155 = vshrl.u32 %v962, 16
      %v1157 = vrot.slane %v1155, 7
      %v1158 = vshll.u32 %v962, 16
      %v1160 = vor.u32 %v1157, %v1158
      %v1161 = vsel %vm995, %v1153, %v1160
      %v1162 = vrot.slane %v1157, 4
      %v1164 = vshrl.u32 %v963, 16
      %v1166 = vrot.slane %v1164, 7
      %v1167 = vshll.u32 %v963, 16
      %v1169 = vor.u32 %v1166, %v1167
      %v1170 = vsel %vm995, %v1162, %v1169
      %v1171 = vrot.slane %v1166, 4
      %v1173 = vshrl.u32 %v964, 16
      %v1175 = vrot.slane %v1173, 7
      %v1176 = vshll.u32 %v964, 16
      %v1178 = vor.u32 %v1175, %v1176
      %v1179 = vsel %vm995, %v1171, %v1178
      %v1180 = vrot.slane %v1175, 4
      %v1182 = vshrl.u32 %v965, 16
      %v1184 = vrot.slane %v1182, 7
      %v1185 = vshll.u32 %v965, 16
      %v1187 = vor.u32 %v1184, %v1185
      %v1188 = vsel %vm995, %v1180, %v1187
      %v1189 = vrot.slane %v1184, 4
      %v1191 = vshrl.u32 %v966, 16
      %v1193 = vrot.slane %v1191, 7
      %v1194 = vshll.u32 %v966, 16
      %v1196 = vor.u32 %v1193, %v1194
      %v1197 = vsel %vm995, %v1189, %v1196
      %v1198 = vrot.slane %v1193, 4
      %v1200 = vshrl.u32 %v967, 16
      %v1202 = vrot.slane %v1200, 7
      %v1203 = vshll.u32 %v967, 16
      %v1205 = vor.u32 %v1202, %v1203
      %v1206 = vsel %vm995, %v1198, %v1205
      %v1207 = vrot.slane %v1202, 4
      %v1209 = vshrl.u32 %v968, 16
      %v1211 = vrot.slane %v1209, 7
      %v1212 = vshll.u32 %v968, 16
      %v1214 = vor.u32 %v1211, %v1212
      %v1215 = vsel %vm995, %v1207, %v1214
      %v1216 = vrot.slane %v1211, 4
      %v1218 = vshrl.u32 %v969, 16
      %v1220 = vrot.slane %v1218, 7
      %v1221 = vshll.u32 %v969, 16
      %v1223 = vor.u32 %v1220, %v1221
      %v1224 = vsel %vm995, %v1216, %v1223
      %v1225 = vrot.slane %v1220, 4
      %v1227 = vshrl.u32 %v970, 16
      %v1229 = vrot.slane %v1227, 7
      %v1230 = vshll.u32 %v970, 16
      %v1232 = vor.u32 %v1229, %v1230
      %v1233 = vsel %vm995, %v1225, %v1232
      %v1234 = vrot.slane %v1229, 4
      %v1236 = vshrl.u32 %v971, 16
      %v1238 = vrot.slane %v1236, 7
      %v1239 = vshll.u32 %v971, 16
      %v1241 = vor.u32 %v1238, %v1239
      %v1242 = vsel %vm995, %v1234, %v1241
      %v1243 = vrot.slane %v1238, 4
      %v1245 = vshrl.u32 %v972, 16
      %v1247 = vrot.slane %v1245, 7
      %v1248 = vshll.u32 %v972, 16
      %v1250 = vor.u32 %v1247, %v1248
      %v1251 = vsel %vm995, %v1243, %v1250
      %v1252 = vrot.slane %v1247, 4
      %v1254 = vshrl.u32 %v973, 16
      %v1256 = vrot.slane %v1254, 7
      %v1257 = vshll.u32 %v973, 16
      %v1259 = vor.u32 %v1256, %v1257
      %v1260 = vsel %vm995, %v1252, %v1259
      %v1261 = vrot.slane %v1256, 4
      %v1263 = vshrl.u32 %v974, 16
      %v1265 = vrot.slane %v1263, 7
      %v1266 = vshll.u32 %v974, 16
      %v1268 = vor.u32 %v1265, %v1266
      %v1269 = vsel %vm995, %v1261, %v1268
      %v1270 = vrot.slane %v1265, 4
      %v1272 = vshrl.u32 %v975, 16
      %v1274 = vrot.slane %v1272, 7
      %v1275 = vshll.u32 %v975, 16
      %v1277 = vor.u32 %v1274, %v1275
      %v1278 = vsel %vm995, %v1270, %v1277
      %v1279 = vrot.slane %v1274, 4
      %v1281 = vshrl.u32 %v976, 16
      %v1283 = vrot.slane %v1281, 7
      %v1284 = vshll.u32 %v976, 16
      %v1286 = vor.u32 %v1283, %v1284
      %v1287 = vsel %vm995, %v1279, %v1286
      %v1288 = vrot.slane %v1283, 4
      %v1290 = vshrl.u32 %v977, 16
      %v1292 = vrot.slane %v1290, 7
      %v1293 = vshll.u32 %v977, 16
      %v1295 = vor.u32 %v1292, %v1293
      %v1296 = vsel %vm995, %v1288, %v1295
      %v1297 = vrot.slane %v1292, 4
      %v1299 = vshrl.u32 %v978, 16
      %v1301 = vrot.slane %v1299, 7
      %v1302 = vshll.u32 %v978, 16
      %v1304 = vor.u32 %v1301, %v1302
      %v1305 = vsel %vm995, %v1297, %v1304
      %v1306 = vrot.slane %v1301, 4
      %v1308 = vshrl.u32 %v979, 16
      %v1310 = vrot.slane %v1308, 7
      %v1311 = vshll.u32 %v979, 16
      %v1313 = vor.u32 %v1310, %v1311
      %v1314 = vsel %vm995, %v1306, %v1313
      %v1315 = vrot.slane %v1310, 4
      %v1317 = vshrl.u32 %v980, 16
      %v1319 = vrot.slane %v1317, 7
      %v1320 = vshll.u32 %v980, 16
      %v1322 = vor.u32 %v1319, %v1320
      %v1323 = vsel %vm995, %v1315, %v1322
      %v1324 = vrot.slane %v1319, 4
      %v1326 = vshrl.u32 %v981, 16
      %v1328 = vrot.slane %v1326, 7
      %v1329 = vshll.u32 %v981, 16
      %v1331 = vor.u32 %v1328, %v1329
      %v1332 = vsel %vm995, %v1324, %v1331
      %v1333 = vrot.slane %v1328, 4
      %v1335 = vshrl.u32 %v982, 16
      %v1337 = vrot.slane %v1335, 7
      %v1338 = vshll.u32 %v982, 16
      %v1340 = vor.u32 %v1337, %v1338
      %v1341 = vsel %vm995, %v1333, %v1340
      %v1342 = vrot.slane %v1337, 4
      %v1344 = vshrl.u32 %v983, 16
      %v1346 = vrot.slane %v1344, 7
      %v1347 = vshll.u32 %v983, 16
      %v1349 = vor.u32 %v1346, %v1347
      %v1350 = vsel %vm995, %v1342, %v1349
      %v1351 = vrot.slane %v1346, 4
      %v1353 = vshrl.u32 %v984, 16
      %v1355 = vrot.slane %v1353, 7
      %v1356 = vshll.u32 %v984, 16
      %v1358 = vor.u32 %v1355, %v1356
      %v1359 = vsel %vm995, %v1351, %v1358
      %v1360 = vrot.slane %v1355, 4
      %v1362 = vshrl.u32 %v985, 16
      %v1364 = vrot.slane %v1362, 7
      %v1365 = vshll.u32 %v985, 16
      %v1367 = vor.u32 %v1364, %v1365
      %v1368 = vsel %vm995, %v1360, %v1367
      %v1369 = vrot.slane %v1364, 4
      %v1371 = vshrl.u32 %v986, 16
      %v1373 = vrot.slane %v1371, 7
      %v1374 = vshll.u32 %v986, 16
      %v1376 = vor.u32 %v1373, %v1374
      %v1377 = vsel %vm995, %v1369, %v1376
      %v1378 = vrot.slane %v1373, 4
      %v1380 = vshrl.u32 %v987, 16
      %v1382 = vrot.slane %v1380, 7
      %v1383 = vshll.u32 %v987, 16
      %v1385 = vor.u32 %v1382, %v1383
      %v1386 = vsel %vm995, %v1378, %v1385
      %v1387 = vrot.slane %v1382, 4
      %v1389 = vshrl.u32 %v988, 16
      %v1391 = vrot.slane %v1389, 7
      %v1392 = vshll.u32 %v988, 16
      %v1394 = vor.u32 %v1391, %v1392
      %v1395 = vsel %vm995, %v1387, %v1394
      %v1396 = vrot.slane %v1391, 4
      %v1398 = vshrl.u32 %v989, 16
      %v1400 = vrot.slane %v1398, 7
      %v1401 = vshll.u32 %v989, 16
      %v1403 = vor.u32 %v1400, %v1401
      %v1404 = vsel %vm995, %v1396, %v1403
      %v1405 = vrot.slane %v1400, 4
      %v1407 = vshrl.u32 %v990, 16
      %v1409 = vrot.slane %v1407, 7
      %v1410 = vshll.u32 %v990, 16
      %v1412 = vor.u32 %v1409, %v1410
      %v1413 = vsel %vm995, %v1405, %v1412
      %v1414 = vrot.slane %v1409, 4
      %v1416 = vshrl.u32 %v991, 16
      %v1418 = vrot.slane %v1416, 7
      %v1419 = vshll.u32 %v991, 16
      %v1421 = vor.u32 %v1418, %v1419
      %v1422 = vsel %vm995, %v1414, %v1421
      %v1423 = vrot.slane %v1418, 4
      %v1425 = vshrl.u32 %v992, 16
      %v1427 = vrot.slane %v1425, 7
      %v1428 = vshll.u32 %v992, 16
      %v1430 = vor.u32 %v1427, %v1428
      %v1431 = vsel %vm995, %v1423, %v1430
      %1480 = vst.msk [vmem:[#allocation3] sm:$0xf] %vm887, %v1008
      %1481 = vst.msk [vmem:[#allocation3 + $0xc] sm:$0xf] %vm887, %v1017
      %1482 = vst.msk [vmem:[#allocation3 + $0x18] sm:$0xf] %vm887, %v1026
      %1483 = vst.msk [vmem:[#allocation3 + $0x24] sm:$0xf] %vm887, %v1035
      %1484 = vst.msk [vmem:[#allocation3 + $0x30] sm:$0xf] %vm887, %v1044
      %1485 = vst.msk [vmem:[#allocation3 + $0x3c] sm:$0xf] %vm887, %v1053
      %1486 = vst.msk [vmem:[#allocation3 + $0x48] sm:$0xf] %vm887, %v1062
      %1487 = vst.msk [vmem:[#allocation3 + $0x54] sm:$0xf] %vm887, %v1071
      %1488 = vst.msk [vmem:[#allocation3 + $0x60] sm:$0xf] %vm887, %v1080
      %1489 = vst.msk [vmem:[#allocation3 + $0x6c] sm:$0xf] %vm887, %v1089
      %1490 = vst.msk [vmem:[#allocation3 + $0x78] sm:$0xf] %vm887, %v1098
      %1491 = vst.msk [vmem:[#allocation3 + $0x84] sm:$0xf] %vm887, %v1107
      %1492 = vst.msk [vmem:[#allocation3 + $0x90] sm:$0xf] %vm887, %v1116
      %1493 = vst.msk [vmem:[#allocation3 + $0x9c] sm:$0xf] %vm887, %v1125
      %1494 = vst.msk [vmem:[#allocation3 + $0xa8] sm:$0xf] %vm887, %v1134
      %1495 = vst.msk [vmem:[#allocation3 + $0xb4] sm:$0xf] %vm887, %v1143
      %1496 = vst.msk [vmem:[#allocation3 + $0xc0] sm:$0xf] %vm887, %v1152
      %1497 = vst.msk [vmem:[#allocation3 + $0xcc] sm:$0xf] %vm887, %v1161
      %1498 = vst.msk [vmem:[#allocation3 + $0xd8] sm:$0xf] %vm887, %v1170
      %1499 = vst.msk [vmem:[#allocation3 + $0xe4] sm:$0xf] %vm887, %v1179
      %1500 = vst.msk [vmem:[#allocation3 + $0xf0] sm:$0xf] %vm887, %v1188
      %1501 = vst.msk [vmem:[#allocation3 + $0xfc] sm:$0xf] %vm887, %v1197
      %1502 = vst.msk [vmem:[#allocation3 + $0x108] sm:$0xf] %vm887, %v1206
      %1503 = vst.msk [vmem:[#allocation3 + $0x114] sm:$0xf] %vm887, %v1215
      %1504 = vst.msk [vmem:[#allocation3 + $0x120] sm:$0xf] %vm887, %v1224
      %1505 = vst.msk [vmem:[#allocation3 + $0x12c] sm:$0xf] %vm887, %v1233
      %1506 = vst.msk [vmem:[#allocation3 + $0x138] sm:$0xf] %vm887, %v1242
      %1507 = vst.msk [vmem:[#allocation3 + $0x144] sm:$0xf] %vm887, %v1251
      %1508 = vst.msk [vmem:[#allocation3 + $0x150] sm:$0xf] %vm887, %v1260
      %1509 = vst.msk [vmem:[#allocation3 + $0x15c] sm:$0xf] %vm887, %v1269
      %1510 = vst.msk [vmem:[#allocation3 + $0x168] sm:$0xf] %vm887, %v1278
      %1511 = vst.msk [vmem:[#allocation3 + $0x174] sm:$0xf] %vm887, %v1287
      %1512 = vst.msk [vmem:[#allocation3 + $0x180] sm:$0xf] %vm887, %v1296
      %1513 = vst.msk [vmem:[#allocation3 + $0x18c] sm:$0xf] %vm887, %v1305
      %1514 = vst.msk [vmem:[#allocation3 + $0x198] sm:$0xf] %vm887, %v1314
      %1515 = vst.msk [vmem:[#allocation3 + $0x1a4] sm:$0xf] %vm887, %v1323
      %1516 = vst.msk [vmem:[#allocation3 + $0x1b0] sm:$0xf] %vm887, %v1332
      %1517 = vst.msk [vmem:[#allocation3 + $0x1bc] sm:$0xf] %vm887, %v1341
      %1518 = vst.msk [vmem:[#allocation3 + $0x1c8] sm:$0xf] %vm887, %v1350
      %1519 = vst.msk [vmem:[#allocation3 + $0x1d4] sm:$0xf] %vm887, %v1359
      %1520 = vst.msk [vmem:[#allocation3 + $0x1e0] sm:$0xf] %vm887, %v1368
      %1521 = vst.msk [vmem:[#allocation3 + $0x1ec] sm:$0xf] %vm887, %v1377
      %1522 = vst.msk [vmem:[#allocation3 + $0x1f8] sm:$0xf] %vm887, %v1386
      %1523 = vst.msk [vmem:[#allocation3 + $0x204] sm:$0xf] %vm887, %v1395
      %1524 = vst.msk [vmem:[#allocation3 + $0x210] sm:$0xf] %vm887, %v1404
      %1525 = vst.msk [vmem:[#allocation3 + $0x21c] sm:$0xf] %vm887, %v1413
      %1526 = vst.msk [vmem:[#allocation3 + $0x228] sm:$0xf] %vm887, %v1422
      %1527 = vst.msk [vmem:[#allocation3 + $0x234] sm:$0xf] %vm887, %v1431
      %v1528 = vld [vmem:[#allocation2 + $0x4] sm:$0xf]
      %v1529 = vld [vmem:[#allocation2 + $0x8] sm:$0xf]
      %v1530 = vld [vmem:[#allocation2 + $0xc] sm:$0xf]
      %v1531 = vld [vmem:[#allocation2 + $0x10] sm:$0xf]
      %v1532 = vld [vmem:[#allocation2 + $0x14] sm:$0xf]
      %v1533 = vld [vmem:[#allocation2 + $0x18] sm:$0xf]
      %v1534 = vld [vmem:[#allocation2 + $0x1c] sm:$0xf]
      %v1535 = vld [vmem:[#allocation2 + $0x20] sm:$0xf]
      %v1536 = vld [vmem:[#allocation2 + $0x24] sm:$0xf]
      %v1537 = vld [vmem:[#allocation2 + $0x28] sm:$0xf]
      %v1538 = vld [vmem:[#allocation2 + $0x2c] sm:$0xf]
      %v1539 = vld [vmem:[#allocation2 + $0x30] sm:$0xf]
      %v1540 = vld [vmem:[#allocation2 + $0x34] sm:$0xf]
      %v1541 = vld [vmem:[#allocation2 + $0x38] sm:$0xf]
      %v1542 = vld [vmem:[#allocation2 + $0x3c] sm:$0xf]
      %v1543 = vld [vmem:[#allocation2 + $0x40] sm:$0xf]
      %v1544 = vld [vmem:[#allocation2 + $0x44] sm:$0xf]
      %v1545 = vld [vmem:[#allocation2 + $0x48] sm:$0xf]
      %v1546 = vld [vmem:[#allocation2 + $0x4c] sm:$0xf]
      %v1547 = vld [vmem:[#allocation2 + $0x50] sm:$0xf]
      %v1548 = vld [vmem:[#allocation2 + $0x54] sm:$0xf]
      %v1549 = vld [vmem:[#allocation2 + $0x58] sm:$0xf]
      %v1550 = vld [vmem:[#allocation2 + $0x5c] sm:$0xf]
      %v1551 = vld [vmem:[#allocation2 + $0x60] sm:$0xf]
      %v1552 = vld [vmem:[#allocation2 + $0x64] sm:$0xf]
      %v1553 = vld [vmem:[#allocation2 + $0x68] sm:$0xf]
      %v1554 = vld [vmem:[#allocation2 + $0x6c] sm:$0xf]
      %v1555 = vld [vmem:[#allocation2 + $0x70] sm:$0xf]
      %v1556 = vld [vmem:[#allocation2 + $0x74] sm:$0xf]
      %v1557 = vld [vmem:[#allocation2 + $0x78] sm:$0xf]
      %v1558 = vld [vmem:[#allocation2 + $0x7c] sm:$0xf]
      %v1559 = vld [vmem:[#allocation2 + $0x80] sm:$0xf]
      %v1560 = vld [vmem:[#allocation2 + $0x84] sm:$0xf]
      %v1561 = vld [vmem:[#allocation2 + $0x88] sm:$0xf]
      %v1562 = vld [vmem:[#allocation2 + $0x8c] sm:$0xf]
      %v1563 = vld [vmem:[#allocation2 + $0x90] sm:$0xf]
      %v1564 = vld [vmem:[#allocation2 + $0x94] sm:$0xf]
      %v1565 = vld [vmem:[#allocation2 + $0x98] sm:$0xf]
      %v1566 = vld [vmem:[#allocation2 + $0x9c] sm:$0xf]
      %v1567 = vld [vmem:[#allocation2 + $0xa0] sm:$0xf]
      %v1568 = vld [vmem:[#allocation2 + $0xa4] sm:$0xf]
      %v1569 = vld [vmem:[#allocation2 + $0xa8] sm:$0xf]
      %v1570 = vld [vmem:[#allocation2 + $0xac] sm:$0xf]
      %v1571 = vld [vmem:[#allocation2 + $0xb0] sm:$0xf]
      %v1572 = vld [vmem:[#allocation2 + $0xb4] sm:$0xf]
      %v1573 = vld [vmem:[#allocation2 + $0xb8] sm:$0xf]
      %v1574 = vld [vmem:[#allocation2 + $0xbc] sm:$0xf]
      %v1575 = vld [vmem:[#allocation2 + $0xc0] sm:$0xf]
      %1624 = vrot.lane.b32.xlu0 %v1528, 32
      %v1625 = vpop.permute.xlu0 %1624
      %1626 = vrot.lane.b32.xlu0 %v1529, 32
      %v1627 = vpop.permute.xlu0 %1626
      %1628 = vrot.lane.b32.xlu0 %v1530, 32
      %v1629 = vpop.permute.xlu0 %1628
      %1630 = vrot.lane.b32.xlu0 %v1531, 32
      %v1631 = vpop.permute.xlu0 %1630
      %1632 = vrot.lane.b32.xlu0 %v1532, 32
      %v1633 = vpop.permute.xlu0 %1632
      %1634 = vrot.lane.b32.xlu0 %v1533, 32
      %v1635 = vpop.permute.xlu0 %1634
      %1636 = vrot.lane.b32.xlu0 %v1534, 32
      %v1637 = vpop.permute.xlu0 %1636
      %1638 = vrot.lane.b32.xlu0 %v1535, 32
      %v1639 = vpop.permute.xlu0 %1638
      %1640 = vrot.lane.b32.xlu0 %v1536, 32
      %v1641 = vpop.permute.xlu0 %1640
      %1642 = vrot.lane.b32.xlu0 %v1537, 32
      %v1643 = vpop.permute.xlu0 %1642
      %1644 = vrot.lane.b32.xlu0 %v1538, 32
      %v1645 = vpop.permute.xlu0 %1644
      %1646 = vrot.lane.b32.xlu0 %v1539, 32
      %v1647 = vpop.permute.xlu0 %1646
      %1648 = vrot.lane.b32.xlu0 %v1540, 32
      %v1649 = vpop.permute.xlu0 %1648
      %1650 = vrot.lane.b32.xlu0 %v1541, 32
      %v1651 = vpop.permute.xlu0 %1650
      %1652 = vrot.lane.b32.xlu0 %v1542, 32
      %v1653 = vpop.permute.xlu0 %1652
      %1654 = vrot.lane.b32.xlu0 %v1543, 32
      %v1655 = vpop.permute.xlu0 %1654
      %1656 = vrot.lane.b32.xlu0 %v1544, 32
      %v1657 = vpop.permute.xlu0 %1656
      %1658 = vrot.lane.b32.xlu0 %v1545, 32
      %v1659 = vpop.permute.xlu0 %1658
      %1660 = vrot.lane.b32.xlu0 %v1546, 32
      %v1661 = vpop.permute.xlu0 %1660
      %1662 = vrot.lane.b32.xlu0 %v1547, 32
      %v1663 = vpop.permute.xlu0 %1662
      %1664 = vrot.lane.b32.xlu0 %v1548, 32
      %v1665 = vpop.permute.xlu0 %1664
      %1666 = vrot.lane.b32.xlu0 %v1549, 32
      %v1667 = vpop.permute.xlu0 %1666
      %1668 = vrot.lane.b32.xlu0 %v1550, 32
      %v1669 = vpop.permute.xlu0 %1668
      %1670 = vrot.lane.b32.xlu0 %v1551, 32
      %v1671 = vpop.permute.xlu0 %1670
      %1672 = vrot.lane.b32.xlu0 %v1552, 32
      %v1673 = vpop.permute.xlu0 %1672
      %1674 = vrot.lane.b32.xlu0 %v1553, 32
      %v1675 = vpop.permute.xlu0 %1674
      %1676 = vrot.lane.b32.xlu0 %v1554, 32
      %v1677 = vpop.permute.xlu0 %1676
      %1678 = vrot.lane.b32.xlu0 %v1555, 32
      %v1679 = vpop.permute.xlu0 %1678
      %1680 = vrot.lane.b32.xlu0 %v1556, 32
      %v1681 = vpop.permute.xlu0 %1680
      %1682 = vrot.lane.b32.xlu0 %v1557, 32
      %v1683 = vpop.permute.xlu0 %1682
      %1684 = vrot.lane.b32.xlu0 %v1558, 32
      %v1685 = vpop.permute.xlu0 %1684
      %1686 = vrot.lane.b32.xlu0 %v1559, 32
      %v1687 = vpop.permute.xlu0 %1686
      %1688 = vrot.lane.b32.xlu0 %v1560, 32
      %v1689 = vpop.permute.xlu0 %1688
      %1690 = vrot.lane.b32.xlu0 %v1561, 32
      %v1691 = vpop.permute.xlu0 %1690
      %1692 = vrot.lane.b32.xlu0 %v1562, 32
      %v1693 = vpop.permute.xlu0 %1692
      %1694 = vrot.lane.b32.xlu0 %v1563, 32
      %v1695 = vpop.permute.xlu0 %1694
      %1696 = vrot.lane.b32.xlu0 %v1564, 32
      %v1697 = vpop.permute.xlu0 %1696
      %1698 = vrot.lane.b32.xlu0 %v1565, 32
      %v1699 = vpop.permute.xlu0 %1698
      %1700 = vrot.lane.b32.xlu0 %v1566, 32
      %v1701 = vpop.permute.xlu0 %1700
      %1702 = vrot.lane.b32.xlu0 %v1567, 32
      %v1703 = vpop.permute.xlu0 %1702
      %1704 = vrot.lane.b32.xlu0 %v1568, 32
      %v1705 = vpop.permute.xlu0 %1704
      %1706 = vrot.lane.b32.xlu0 %v1569, 32
      %v1707 = vpop.permute.xlu0 %1706
      %1708 = vrot.lane.b32.xlu0 %v1570, 32
      %v1709 = vpop.permute.xlu0 %1708
      %1710 = vrot.lane.b32.xlu0 %v1571, 32
      %v1711 = vpop.permute.xlu0 %1710
      %1712 = vrot.lane.b32.xlu0 %v1572, 32
      %v1713 = vpop.permute.xlu0 %1712
      %1714 = vrot.lane.b32.xlu0 %v1573, 32
      %v1715 = vpop.permute.xlu0 %1714
      %1716 = vrot.lane.b32.xlu0 %v1574, 32
      %v1717 = vpop.permute.xlu0 %1716
      %1718 = vrot.lane.b32.xlu0 %v1575, 32
      %v1719 = vpop.permute.xlu0 %1718
      %vm1768 = vcmask 519424
      %1769 = vst.msk [vmem:[#allocation3] sm:$0xf] %vm1768, %v1625
      %1770 = vst.msk [vmem:[#allocation3 + $0xc] sm:$0xf] %vm1768, %v1627
      %1771 = vst.msk [vmem:[#allocation3 + $0x18] sm:$0xf] %vm1768, %v1629
      %1772 = vst.msk [vmem:[#allocation3 + $0x24] sm:$0xf] %vm1768, %v1631
      %1773 = vst.msk [vmem:[#allocation3 + $0x30] sm:$0xf] %vm1768, %v1633
      %1774 = vst.msk [vmem:[#allocation3 + $0x3c] sm:$0xf] %vm1768, %v1635
      %1775 = vst.msk [vmem:[#allocation3 + $0x48] sm:$0xf] %vm1768, %v1637
      %1776 = vst.msk [vmem:[#allocation3 + $0x54] sm:$0xf] %vm1768, %v1639
      %1777 = vst.msk [vmem:[#allocation3 + $0x60] sm:$0xf] %vm1768, %v1641
      %1778 = vst.msk [vmem:[#allocation3 + $0x6c] sm:$0xf] %vm1768, %v1643
      %1779 = vst.msk [vmem:[#allocation3 + $0x78] sm:$0xf] %vm1768, %v1645
      %1780 = vst.msk [vmem:[#allocation3 + $0x84] sm:$0xf] %vm1768, %v1647
      %1781 = vst.msk [vmem:[#allocation3 + $0x90] sm:$0xf] %vm1768, %v1649
      %1782 = vst.msk [vmem:[#allocation3 + $0x9c] sm:$0xf] %vm1768, %v1651
      %1783 = vst.msk [vmem:[#allocation3 + $0xa8] sm:$0xf] %vm1768, %v1653
      %1784 = vst.msk [vmem:[#allocation3 + $0xb4] sm:$0xf] %vm1768, %v1655
      %1785 = vst.msk [vmem:[#allocation3 + $0xc0] sm:$0xf] %vm1768, %v1657
      %1786 = vst.msk [vmem:[#allocation3 + $0xcc] sm:$0xf] %vm1768, %v1659
      %1787 = vst.msk [vmem:[#allocation3 + $0xd8] sm:$0xf] %vm1768, %v1661
      %1788 = vst.msk [vmem:[#allocation3 + $0xe4] sm:$0xf] %vm1768, %v1663
      %1789 = vst.msk [vmem:[#allocation3 + $0xf0] sm:$0xf] %vm1768, %v1665
      %1790 = vst.msk [vmem:[#allocation3 + $0xfc] sm:$0xf] %vm1768, %v1667
      %1791 = vst.msk [vmem:[#allocation3 + $0x108] sm:$0xf] %vm1768, %v1669
      %1792 = vst.msk [vmem:[#allocation3 + $0x114] sm:$0xf] %vm1768, %v1671
      %1793 = vst.msk [vmem:[#allocation3 + $0x120] sm:$0xf] %vm1768, %v1673
      %1794 = vst.msk [vmem:[#allocation3 + $0x12c] sm:$0xf] %vm1768, %v1675
      %1795 = vst.msk [vmem:[#allocation3 + $0x138] sm:$0xf] %vm1768, %v1677
      %1796 = vst.msk [vmem:[#allocation3 + $0x144] sm:$0xf] %vm1768, %v1679
      %1797 = vst.msk [vmem:[#allocation3 + $0x150] sm:$0xf] %vm1768, %v1681
      %1798 = vst.msk [vmem:[#allocation3 + $0x15c] sm:$0xf] %vm1768, %v1683
      %1799 = vst.msk [vmem:[#allocation3 + $0x168] sm:$0xf] %vm1768, %v1685
      %1800 = vst.msk [vmem:[#allocation3 + $0x174] sm:$0xf] %vm1768, %v1687
      %1801 = vst.msk [vmem:[#allocation3 + $0x180] sm:$0xf] %vm1768, %v1689
      %1802 = vst.msk [vmem:[#allocation3 + $0x18c] sm:$0xf] %vm1768, %v1691
      %1803 = vst.msk [vmem:[#allocation3 + $0x198] sm:$0xf] %vm1768, %v1693
      %1804 = vst.msk [vmem:[#allocation3 + $0x1a4] sm:$0xf] %vm1768, %v1695
      %1805 = vst.msk [vmem:[#allocation3 + $0x1b0] sm:$0xf] %vm1768, %v1697
      %1806 = vst.msk [vmem:[#allocation3 + $0x1bc] sm:$0xf] %vm1768, %v1699
      %1807 = vst.msk [vmem:[#allocation3 + $0x1c8] sm:$0xf] %vm1768, %v1701
      %1808 = vst.msk [vmem:[#allocation3 + $0x1d4] sm:$0xf] %vm1768, %v1703
      %1809 = vst.msk [vmem:[#allocation3 + $0x1e0] sm:$0xf] %vm1768, %v1705
      %1810 = vst.msk [vmem:[#allocation3 + $0x1ec] sm:$0xf] %vm1768, %v1707
      %1811 = vst.msk [vmem:[#allocation3 + $0x1f8] sm:$0xf] %vm1768, %v1709
      %1812 = vst.msk [vmem:[#allocation3 + $0x204] sm:$0xf] %vm1768, %v1711
      %1813 = vst.msk [vmem:[#allocation3 + $0x210] sm:$0xf] %vm1768, %v1713
      %1814 = vst.msk [vmem:[#allocation3 + $0x21c] sm:$0xf] %vm1768, %v1715
      %1815 = vst.msk [vmem:[#allocation3 + $0x228] sm:$0xf] %vm1768, %v1717
      %1816 = vst.msk [vmem:[#allocation3 + $0x234] sm:$0xf] %vm1768, %v1719
      %v1817 = vld [vmem:[#allocation2 + $0x4] sm:$0xf]
      %v1818 = vld [vmem:[#allocation2 + $0x8] sm:$0xf]
      %v1819 = vld [vmem:[#allocation2 + $0xc] sm:$0xf]
      %v1820 = vld [vmem:[#allocation2 + $0x10] sm:$0xf]
      %v1821 = vld [vmem:[#allocation2 + $0x14] sm:$0xf]
      %v1822 = vld [vmem:[#allocation2 + $0x18] sm:$0xf]
      %v1823 = vld [vmem:[#allocation2 + $0x1c] sm:$0xf]
      %v1824 = vld [vmem:[#allocation2 + $0x20] sm:$0xf]
      %v1825 = vld [vmem:[#allocation2 + $0x24] sm:$0xf]
      %v1826 = vld [vmem:[#allocation2 + $0x28] sm:$0xf]
      %v1827 = vld [vmem:[#allocation2 + $0x2c] sm:$0xf]
      %v1828 = vld [vmem:[#allocation2 + $0x30] sm:$0xf]
      %v1829 = vld [vmem:[#allocation2 + $0x34] sm:$0xf]
      %v1830 = vld [vmem:[#allocation2 + $0x38] sm:$0xf]
      %v1831 = vld [vmem:[#allocation2 + $0x3c] sm:$0xf]
      %v1832 = vld [vmem:[#allocation2 + $0x40] sm:$0xf]
      %v1833 = vld [vmem:[#allocation2 + $0x44] sm:$0xf]
      %v1834 = vld [vmem:[#allocation2 + $0x48] sm:$0xf]
      %v1835 = vld [vmem:[#allocation2 + $0x4c] sm:$0xf]
      %v1836 = vld [vmem:[#allocation2 + $0x50] sm:$0xf]
      %v1837 = vld [vmem:[#allocation2 + $0x54] sm:$0xf]
      %v1838 = vld [vmem:[#allocation2 + $0x58] sm:$0xf]
      %v1839 = vld [vmem:[#allocation2 + $0x5c] sm:$0xf]
      %v1840 = vld [vmem:[#allocation2 + $0x60] sm:$0xf]
      %v1841 = vld [vmem:[#allocation2 + $0x64] sm:$0xf]
      %v1842 = vld [vmem:[#allocation2 + $0x68] sm:$0xf]
      %v1843 = vld [vmem:[#allocation2 + $0x6c] sm:$0xf]
      %v1844 = vld [vmem:[#allocation2 + $0x70] sm:$0xf]
      %v1845 = vld [vmem:[#allocation2 + $0x74] sm:$0xf]
      %v1846 = vld [vmem:[#allocation2 + $0x78] sm:$0xf]
      %v1847 = vld [vmem:[#allocation2 + $0x7c] sm:$0xf]
      %v1848 = vld [vmem:[#allocation2 + $0x80] sm:$0xf]
      %v1849 = vld [vmem:[#allocation2 + $0x84] sm:$0xf]
      %v1850 = vld [vmem:[#allocation2 + $0x88] sm:$0xf]
      %v1851 = vld [vmem:[#allocation2 + $0x8c] sm:$0xf]
      %v1852 = vld [vmem:[#allocation2 + $0x90] sm:$0xf]
      %v1853 = vld [vmem:[#allocation2 + $0x94] sm:$0xf]
      %v1854 = vld [vmem:[#allocation2 + $0x98] sm:$0xf]
      %v1855 = vld [vmem:[#allocation2 + $0x9c] sm:$0xf]
      %v1856 = vld [vmem:[#allocation2 + $0xa0] sm:$0xf]
      %v1857 = vld [vmem:[#allocation2 + $0xa4] sm:$0xf]
      %v1858 = vld [vmem:[#allocation2 + $0xa8] sm:$0xf]
      %v1859 = vld [vmem:[#allocation2 + $0xac] sm:$0xf]
      %v1860 = vld [vmem:[#allocation2 + $0xb0] sm:$0xf]
      %v1861 = vld [vmem:[#allocation2 + $0xb4] sm:$0xf]
      %v1862 = vld [vmem:[#allocation2 + $0xb8] sm:$0xf]
      %v1863 = vld [vmem:[#allocation2 + $0xbc] sm:$0xf]
      %v1864 = vld [vmem:[#allocation2 + $0xc0] sm:$0xf]
      %v1865 = vld [vmem:[#allocation2 + $0xc4] sm:$0x1]
      %vm1866 = vsmask.f32 3328
      %vm1867 = vsmask.f32 7440
      %vm1868 = vmor %vm1866, %vm1867
      %v1870 = vshrl.u32 %v1817, 16
      %v1872 = vrot.slane %v1870, 4
      %v1873 = vshll.u32 %v1817, 16
      %v1875 = vrot.slane %v1873, 5
      %v1876 = vor.u32 %v1872, %v1875
      %v1877 = vrot.slane %v1876, 4
      %v1879 = vshll.u32 %v1818, 16
      %v1881 = vrot.slane %v1879, 5
      %v1882 = vsel %vm1868, %v1877, %v1881
      %v1883 = vshrl.u32 %v1818, 16
      %v1885 = vrot.slane %v1883, 4
      %v1886 = vor.u32 %v1885, %v1881
      %v1887 = vrot.slane %v1886, 4
      %v1889 = vshll.u32 %v1819, 16
      %v1891 = vrot.slane %v1889, 5
      %v1892 = vsel %vm1868, %v1887, %v1891
      %v1893 = vshrl.u32 %v1819, 16
      %v1895 = vrot.slane %v1893, 4
      %v1896 = vor.u32 %v1895, %v1891
      %v1897 = vrot.slane %v1896, 4
      %v1899 = vshll.u32 %v1820, 16
      %v1901 = vrot.slane %v1899, 5
      %v1902 = vsel %vm1868, %v1897, %v1901
      %v1903 = vshrl.u32 %v1820, 16
      %v1905 = vrot.slane %v1903, 4
      %v1906 = vor.u32 %v1905, %v1901
      %v1907 = vrot.slane %v1906, 4
      %v1909 = vshll.u32 %v1821, 16
      %v1911 = vrot.slane %v1909, 5
      %v1912 = vsel %vm1868, %v1907, %v1911
      %v1913 = vshrl.u32 %v1821, 16
      %v1915 = vrot.slane %v1913, 4
      %v1916 = vor.u32 %v1915, %v1911
      %v1917 = vrot.slane %v1916, 4
      %v1919 = vshll.u32 %v1822, 16
      %v1921 = vrot.slane %v1919, 5
      %v1922 = vsel %vm1868, %v1917, %v1921
      %v1923 = vshrl.u32 %v1822, 16
      %v1925 = vrot.slane %v1923, 4
      %v1926 = vor.u32 %v1925, %v1921
      %v1927 = vrot.slane %v1926, 4
      %v1929 = vshll.u32 %v1823, 16
      %v1931 = vrot.slane %v1929, 5
      %v1932 = vsel %vm1868, %v1927, %v1931
      %v1933 = vshrl.u32 %v1823, 16
      %v1935 = vrot.slane %v1933, 4
      %v1936 = vor.u32 %v1935, %v1931
      %v1937 = vrot.slane %v1936, 4
      %v1939 = vshll.u32 %v1824, 16
      %v1941 = vrot.slane %v1939, 5
      %v1942 = vsel %vm1868, %v1937, %v1941
      %v1943 = vshrl.u32 %v1824, 16
      %v1945 = vrot.slane %v1943, 4
      %v1946 = vor.u32 %v1945, %v1941
      %v1947 = vrot.slane %v1946, 4
      %v1949 = vshll.u32 %v1825, 16
      %v1951 = vrot.slane %v1949, 5
      %v1952 = vsel %vm1868, %v1947, %v1951
      %v1953 = vshrl.u32 %v1825, 16
      %v1955 = vrot.slane %v1953, 4
      %v1956 = vor.u32 %v1955, %v1951
      %v1957 = vrot.slane %v1956, 4
      %v1959 = vshll.u32 %v1826, 16
      %v1961 = vrot.slane %v1959, 5
      %v1962 = vsel %vm1868, %v1957, %v1961
      %v1963 = vshrl.u32 %v1826, 16
      %v1965 = vrot.slane %v1963, 4
      %v1966 = vor.u32 %v1965, %v1961
      %v1967 = vrot.slane %v1966, 4
      %v1969 = vshll.u32 %v1827, 16
      %v1971 = vrot.slane %v1969, 5
      %v1972 = vsel %vm1868, %v1967, %v1971
      %v1973 = vshrl.u32 %v1827, 16
      %v1975 = vrot.slane %v1973, 4
      %v1976 = vor.u32 %v1975, %v1971
      %v1977 = vrot.slane %v1976, 4
      %v1979 = vshll.u32 %v1828, 16
      %v1981 = vrot.slane %v1979, 5
      %v1982 = vsel %vm1868, %v1977, %v1981
      %v1983 = vshrl.u32 %v1828, 16
      %v1985 = vrot.slane %v1983, 4
      %v1986 = vor.u32 %v1985, %v1981
      %v1987 = vrot.slane %v1986, 4
      %v1989 = vshll.u32 %v1829, 16
      %v1991 = vrot.slane %v1989, 5
      %v1992 = vsel %vm1868, %v1987, %v1991
      %v1993 = vshrl.u32 %v1829, 16
      %v1995 = vrot.slane %v1993, 4
      %v1996 = vor.u32 %v1995, %v1991
      %v1997 = vrot.slane %v1996, 4
      %v1999 = vshll.u32 %v1830, 16
      %v2001 = vrot.slane %v1999, 5
      %v2002 = vsel %vm1868, %v1997, %v2001
      %v2003 = vshrl.u32 %v1830, 16
      %v2005 = vrot.slane %v2003, 4
      %v2006 = vor.u32 %v2005, %v2001
      %v2007 = vrot.slane %v2006, 4
      %v2009 = vshll.u32 %v1831, 16
      %v2011 = vrot.slane %v2009, 5
      %v2012 = vsel %vm1868, %v2007, %v2011
      %v2013 = vshrl.u32 %v1831, 16
      %v2015 = vrot.slane %v2013, 4
      %v2016 = vor.u32 %v2015, %v2011
      %v2017 = vrot.slane %v2016, 4
      %v2019 = vshll.u32 %v1832, 16
      %v2021 = vrot.slane %v2019, 5
      %v2022 = vsel %vm1868, %v2017, %v2021
      %v2023 = vshrl.u32 %v1832, 16
      %v2025 = vrot.slane %v2023, 4
      %v2026 = vor.u32 %v2025, %v2021
      %v2027 = vrot.slane %v2026, 4
      %v2029 = vshll.u32 %v1833, 16
      %v2031 = vrot.slane %v2029, 5
      %v2032 = vsel %vm1868, %v2027, %v2031
      %v2033 = vshrl.u32 %v1833, 16
      %v2035 = vrot.slane %v2033, 4
      %v2036 = vor.u32 %v2035, %v2031
      %v2037 = vrot.slane %v2036, 4
      %v2039 = vshll.u32 %v1834, 16
      %v2041 = vrot.slane %v2039, 5
      %v2042 = vsel %vm1868, %v2037, %v2041
      %v2043 = vshrl.u32 %v1834, 16
      %v2045 = vrot.slane %v2043, 4
      %v2046 = vor.u32 %v2045, %v2041
      %v2047 = vrot.slane %v2046, 4
      %v2049 = vshll.u32 %v1835, 16
      %v2051 = vrot.slane %v2049, 5
      %v2052 = vsel %vm1868, %v2047, %v2051
      %v2053 = vshrl.u32 %v1835, 16
      %v2055 = vrot.slane %v2053, 4
      %v2056 = vor.u32 %v2055, %v2051
      %v2057 = vrot.slane %v2056, 4
      %v2059 = vshll.u32 %v1836, 16
      %v2061 = vrot.slane %v2059, 5
      %v2062 = vsel %vm1868, %v2057, %v2061
      %v2063 = vshrl.u32 %v1836, 16
      %v2065 = vrot.slane %v2063, 4
      %v2066 = vor.u32 %v2065, %v2061
      %v2067 = vrot.slane %v2066, 4
      %v2069 = vshll.u32 %v1837, 16
      %v2071 = vrot.slane %v2069, 5
      %v2072 = vsel %vm1868, %v2067, %v2071
      %v2073 = vshrl.u32 %v1837, 16
      %v2075 = vrot.slane %v2073, 4
      %v2076 = vor.u32 %v2075, %v2071
      %v2077 = vrot.slane %v2076, 4
      %v2079 = vshll.u32 %v1838, 16
      %v2081 = vrot.slane %v2079, 5
      %v2082 = vsel %vm1868, %v2077, %v2081
      %v2083 = vshrl.u32 %v1838, 16
      %v2085 = vrot.slane %v2083, 4
      %v2086 = vor.u32 %v2085, %v2081
      %v2087 = vrot.slane %v2086, 4
      %v2089 = vshll.u32 %v1839, 16
      %v2091 = vrot.slane %v2089, 5
      %v2092 = vsel %vm1868, %v2087, %v2091
      %v2093 = vshrl.u32 %v1839, 16
      %v2095 = vrot.slane %v2093, 4
      %v2096 = vor.u32 %v2095, %v2091
      %v2097 = vrot.slane %v2096, 4
      %v2099 = vshll.u32 %v1840, 16
      %v2101 = vrot.slane %v2099, 5
      %v2102 = vsel %vm1868, %v2097, %v2101
      %v2103 = vshrl.u32 %v1840, 16
      %v2105 = vrot.slane %v2103, 4
      %v2106 = vor.u32 %v2105, %v2101
      %v2107 = vrot.slane %v2106, 4
      %v2109 = vshll.u32 %v1841, 16
      %v2111 = vrot.slane %v2109, 5
      %v2112 = vsel %vm1868, %v2107, %v2111
      %v2113 = vshrl.u32 %v1841, 16
      %v2115 = vrot.slane %v2113, 4
      %v2116 = vor.u32 %v2115, %v2111
      %v2117 = vrot.slane %v2116, 4
      %v2119 = vshll.u32 %v1842, 16
      %v2121 = vrot.slane %v2119, 5
      %v2122 = vsel %vm1868, %v2117, %v2121
      %v2123 = vshrl.u32 %v1842, 16
      %v2125 = vrot.slane %v2123, 4
      %v2126 = vor.u32 %v2125, %v2121
      %v2127 = vrot.slane %v2126, 4
      %v2129 = vshll.u32 %v1843, 16
      %v2131 = vrot.slane %v2129, 5
      %v2132 = vsel %vm1868, %v2127, %v2131
      %v2133 = vshrl.u32 %v1843, 16
      %v2135 = vrot.slane %v2133, 4
      %v2136 = vor.u32 %v2135, %v2131
      %v2137 = vrot.slane %v2136, 4
      %v2139 = vshll.u32 %v1844, 16
      %v2141 = vrot.slane %v2139, 5
      %v2142 = vsel %vm1868, %v2137, %v2141
      %v2143 = vshrl.u32 %v1844, 16
      %v2145 = vrot.slane %v2143, 4
      %v2146 = vor.u32 %v2145, %v2141
      %v2147 = vrot.slane %v2146, 4
      %v2149 = vshll.u32 %v1845, 16
      %v2151 = vrot.slane %v2149, 5
      %v2152 = vsel %vm1868, %v2147, %v2151
      %v2153 = vshrl.u32 %v1845, 16
      %v2155 = vrot.slane %v2153, 4
      %v2156 = vor.u32 %v2155, %v2151
      %v2157 = vrot.slane %v2156, 4
      %v2159 = vshll.u32 %v1846, 16
      %v2161 = vrot.slane %v2159, 5
      %v2162 = vsel %vm1868, %v2157, %v2161
      %v2163 = vshrl.u32 %v1846, 16
      %v2165 = vrot.slane %v2163, 4
      %v2166 = vor.u32 %v2165, %v2161
      %v2167 = vrot.slane %v2166, 4
      %v2169 = vshll.u32 %v1847, 16
      %v2171 = vrot.slane %v2169, 5
      %v2172 = vsel %vm1868, %v2167, %v2171
      %v2173 = vshrl.u32 %v1847, 16
      %v2175 = vrot.slane %v2173, 4
      %v2176 = vor.u32 %v2175, %v2171
      %v2177 = vrot.slane %v2176, 4
      %v2179 = vshll.u32 %v1848, 16
      %v2181 = vrot.slane %v2179, 5
      %v2182 = vsel %vm1868, %v2177, %v2181
      %v2183 = vshrl.u32 %v1848, 16
      %v2185 = vrot.slane %v2183, 4
      %v2186 = vor.u32 %v2185, %v2181
      %v2187 = vrot.slane %v2186, 4
      %v2189 = vshll.u32 %v1849, 16
      %v2191 = vrot.slane %v2189, 5
      %v2192 = vsel %vm1868, %v2187, %v2191
      %v2193 = vshrl.u32 %v1849, 16
      %v2195 = vrot.slane %v2193, 4
      %v2196 = vor.u32 %v2195, %v2191
      %v2197 = vrot.slane %v2196, 4
      %v2199 = vshll.u32 %v1850, 16
      %v2201 = vrot.slane %v2199, 5
      %v2202 = vsel %vm1868, %v2197, %v2201
      %v2203 = vshrl.u32 %v1850, 16
      %v2205 = vrot.slane %v2203, 4
      %v2206 = vor.u32 %v2205, %v2201
      %v2207 = vrot.slane %v2206, 4
      %v2209 = vshll.u32 %v1851, 16
      %v2211 = vrot.slane %v2209, 5
      %v2212 = vsel %vm1868, %v2207, %v2211
      %v2213 = vshrl.u32 %v1851, 16
      %v2215 = vrot.slane %v2213, 4
      %v2216 = vor.u32 %v2215, %v2211
      %v2217 = vrot.slane %v2216, 4
      %v2219 = vshll.u32 %v1852, 16
      %v2221 = vrot.slane %v2219, 5
      %v2222 = vsel %vm1868, %v2217, %v2221
      %v2223 = vshrl.u32 %v1852, 16
      %v2225 = vrot.slane %v2223, 4
      %v2226 = vor.u32 %v2225, %v2221
      %v2227 = vrot.slane %v2226, 4
      %v2229 = vshll.u32 %v1853, 16
      %v2231 = vrot.slane %v2229, 5
      %v2232 = vsel %vm1868, %v2227, %v2231
      %v2233 = vshrl.u32 %v1853, 16
      %v2235 = vrot.slane %v2233, 4
      %v2236 = vor.u32 %v2235, %v2231
      %v2237 = vrot.slane %v2236, 4
      %v2239 = vshll.u32 %v1854, 16
      %v2241 = vrot.slane %v2239, 5
      %v2242 = vsel %vm1868, %v2237, %v2241
      %v2243 = vshrl.u32 %v1854, 16
      %v2245 = vrot.slane %v2243, 4
      %v2246 = vor.u32 %v2245, %v2241
      %v2247 = vrot.slane %v2246, 4
      %v2249 = vshll.u32 %v1855, 16
      %v2251 = vrot.slane %v2249, 5
      %v2252 = vsel %vm1868, %v2247, %v2251
      %v2253 = vshrl.u32 %v1855, 16
      %v2255 = vrot.slane %v2253, 4
      %v2256 = vor.u32 %v2255, %v2251
      %v2257 = vrot.slane %v2256, 4
      %v2259 = vshll.u32 %v1856, 16
      %v2261 = vrot.slane %v2259, 5
      %v2262 = vsel %vm1868, %v2257, %v2261
      %v2263 = vshrl.u32 %v1856, 16
      %v2265 = vrot.slane %v2263, 4
      %v2266 = vor.u32 %v2265, %v2261
      %v2267 = vrot.slane %v2266, 4
      %v2269 = vshll.u32 %v1857, 16
      %v2271 = vrot.slane %v2269, 5
      %v2272 = vsel %vm1868, %v2267, %v2271
      %v2273 = vshrl.u32 %v1857, 16
      %v2275 = vrot.slane %v2273, 4
      %v2276 = vor.u32 %v2275, %v2271
      %v2277 = vrot.slane %v2276, 4
      %v2279 = vshll.u32 %v1858, 16
      %v2281 = vrot.slane %v2279, 5
      %v2282 = vsel %vm1868, %v2277, %v2281
      %v2283 = vshrl.u32 %v1858, 16
      %v2285 = vrot.slane %v2283, 4
      %v2286 = vor.u32 %v2285, %v2281
      %v2287 = vrot.slane %v2286, 4
      %v2289 = vshll.u32 %v1859, 16
      %v2291 = vrot.slane %v2289, 5
      %v2292 = vsel %vm1868, %v2287, %v2291
      %v2293 = vshrl.u32 %v1859, 16
      %v2295 = vrot.slane %v2293, 4
      %v2296 = vor.u32 %v2295, %v2291
      %v2297 = vrot.slane %v2296, 4
      %v2299 = vshll.u32 %v1860, 16
      %v2301 = vrot.slane %v2299, 5
      %v2302 = vsel %vm1868, %v2297, %v2301
      %v2303 = vshrl.u32 %v1860, 16
      %v2305 = vrot.slane %v2303, 4
      %v2306 = vor.u32 %v2305, %v2301
      %v2307 = vrot.slane %v2306, 4
      %v2309 = vshll.u32 %v1861, 16
      %v2311 = vrot.slane %v2309, 5
      %v2312 = vsel %vm1868, %v2307, %v2311
      %v2313 = vshrl.u32 %v1861, 16
      %v2315 = vrot.slane %v2313, 4
      %v2316 = vor.u32 %v2315, %v2311
      %v2317 = vrot.slane %v2316, 4
      %v2319 = vshll.u32 %v1862, 16
      %v2321 = vrot.slane %v2319, 5
      %v2322 = vsel %vm1868, %v2317, %v2321
      %v2323 = vshrl.u32 %v1862, 16
      %v2325 = vrot.slane %v2323, 4
      %v2326 = vor.u32 %v2325, %v2321
      %v2327 = vrot.slane %v2326, 4
      %v2329 = vshll.u32 %v1863, 16
      %v2331 = vrot.slane %v2329, 5
      %v2332 = vsel %vm1868, %v2327, %v2331
      %v2333 = vshrl.u32 %v1863, 16
      %v2335 = vrot.slane %v2333, 4
      %v2336 = vor.u32 %v2335, %v2331
      %v2337 = vrot.slane %v2336, 4
      %v2339 = vshll.u32 %v1864, 16
      %v2341 = vrot.slane %v2339, 5
      %v2342 = vsel %vm1868, %v2337, %v2341
      %v2343 = vshrl.u32 %v1864, 16
      %v2345 = vrot.slane %v2343, 4
      %v2346 = vor.u32 %v2345, %v2341
      %v2347 = vrot.slane %v2346, 4
      %v2349 = vshll.u32 %v1865, 16
      %v2351 = vrot.slane %v2349, 5
      %v2352 = vsel %vm1868, %v2347, %v2351
      %2353 = vrot.lane.b32.xlu0 %v1882, 64
      %v2354 = vpop.permute.xlu0 %2353
      %2355 = vrot.lane.b32.xlu0 %v1892, 64
      %v2356 = vpop.permute.xlu0 %2355
      %2357 = vrot.lane.b32.xlu0 %v1902, 64
      %v2358 = vpop.permute.xlu0 %2357
      %2359 = vrot.lane.b32.xlu0 %v1912, 64
      %v2360 = vpop.permute.xlu0 %2359
      %2361 = vrot.lane.b32.xlu0 %v1922, 64
      %v2362 = vpop.permute.xlu0 %2361
      %2363 = vrot.lane.b32.xlu0 %v1932, 64
      %v2364 = vpop.permute.xlu0 %2363
      %2365 = vrot.lane.b32.xlu0 %v1942, 64
      %v2366 = vpop.permute.xlu0 %2365
      %2367 = vrot.lane.b32.xlu0 %v1952, 64
      %v2368 = vpop.permute.xlu0 %2367
      %2369 = vrot.lane.b32.xlu0 %v1962, 64
      %v2370 = vpop.permute.xlu0 %2369
      %2371 = vrot.lane.b32.xlu0 %v1972, 64
      %v2372 = vpop.permute.xlu0 %2371
      %2373 = vrot.lane.b32.xlu0 %v1982, 64
      %v2374 = vpop.permute.xlu0 %2373
      %2375 = vrot.lane.b32.xlu0 %v1992, 64
      %v2376 = vpop.permute.xlu0 %2375
      %2377 = vrot.lane.b32.xlu0 %v2002, 64
      %v2378 = vpop.permute.xlu0 %2377
      %2379 = vrot.lane.b32.xlu0 %v2012, 64
      %v2380 = vpop.permute.xlu0 %2379
      %2381 = vrot.lane.b32.xlu0 %v2022, 64
      %v2382 = vpop.permute.xlu0 %2381
      %2383 = vrot.lane.b32.xlu0 %v2032, 64
      %v2384 = vpop.permute.xlu0 %2383
      %2385 = vrot.lane.b32.xlu0 %v2042, 64
      %v2386 = vpop.permute.xlu0 %2385
      %2387 = vrot.lane.b32.xlu0 %v2052, 64
      %v2388 = vpop.permute.xlu0 %2387
      %2389 = vrot.lane.b32.xlu0 %v2062, 64
      %v2390 = vpop.permute.xlu0 %2389
      %2391 = vrot.lane.b32.xlu0 %v2072, 64
      %v2392 = vpop.permute.xlu0 %2391
      %2393 = vrot.lane.b32.xlu0 %v2082, 64
      %v2394 = vpop.permute.xlu0 %2393
      %2395 = vrot.lane.b32.xlu0 %v2092, 64
      %v2396 = vpop.permute.xlu0 %2395
      %2397 = vrot.lane.b32.xlu0 %v2102, 64
      %v2398 = vpop.permute.xlu0 %2397
      %2399 = vrot.lane.b32.xlu0 %v2112, 64
      %v2400 = vpop.permute.xlu0 %2399
      %2401 = vrot.lane.b32.xlu0 %v2122, 64
      %v2402 = vpop.permute.xlu0 %2401
      %2403 = vrot.lane.b32.xlu0 %v2132, 64
      %v2404 = vpop.permute.xlu0 %2403
      %2405 = vrot.lane.b32.xlu0 %v2142, 64
      %v2406 = vpop.permute.xlu0 %2405
      %2407 = vrot.lane.b32.xlu0 %v2152, 64
      %v2408 = vpop.permute.xlu0 %2407
      %2409 = vrot.lane.b32.xlu0 %v2162, 64
      %v2410 = vpop.permute.xlu0 %2409
      %2411 = vrot.lane.b32.xlu0 %v2172, 64
      %v2412 = vpop.permute.xlu0 %2411
      %2413 = vrot.lane.b32.xlu0 %v2182, 64
      %v2414 = vpop.permute.xlu0 %2413
      %2415 = vrot.lane.b32.xlu0 %v2192, 64
      %v2416 = vpop.permute.xlu0 %2415
      %2417 = vrot.lane.b32.xlu0 %v2202, 64
      %v2418 = vpop.permute.xlu0 %2417
      %2419 = vrot.lane.b32.xlu0 %v2212, 64
      %v2420 = vpop.permute.xlu0 %2419
      %2421 = vrot.lane.b32.xlu0 %v2222, 64
      %v2422 = vpop.permute.xlu0 %2421
      %2423 = vrot.lane.b32.xlu0 %v2232, 64
      %v2424 = vpop.permute.xlu0 %2423
      %2425 = vrot.lane.b32.xlu0 %v2242, 64
      %v2426 = vpop.permute.xlu0 %2425
      %2427 = vrot.lane.b32.xlu0 %v2252, 64
      %v2428 = vpop.permute.xlu0 %2427
      %2429 = vrot.lane.b32.xlu0 %v2262, 64
      %v2430 = vpop.permute.xlu0 %2429
      %2431 = vrot.lane.b32.xlu0 %v2272, 64
      %v2432 = vpop.permute.xlu0 %2431
      %2433 = vrot.lane.b32.xlu0 %v2282, 64
      %v2434 = vpop.permute.xlu0 %2433
      %2435 = vrot.lane.b32.xlu0 %v2292, 64
      %v2436 = vpop.permute.xlu0 %2435
      %2437 = vrot.lane.b32.xlu0 %v2302, 64
      %v2438 = vpop.permute.xlu0 %2437
      %2439 = vrot.lane.b32.xlu0 %v2312, 64
      %v2440 = vpop.permute.xlu0 %2439
      %2441 = vrot.lane.b32.xlu0 %v2322, 64
      %v2442 = vpop.permute.xlu0 %2441
      %2443 = vrot.lane.b32.xlu0 %v2332, 64
      %v2444 = vpop.permute.xlu0 %2443
      %2445 = vrot.lane.b32.xlu0 %v2342, 64
      %v2446 = vpop.permute.xlu0 %2445
      %2447 = vrot.lane.b32.xlu0 %v2352, 64
      %v2448 = vpop.permute.xlu0 %2447
      %vm2497 = vcmask 781824
      %2498 = vst.msk [vmem:[#allocation3] sm:$0xf] %vm2497, %v2354
      %2499 = vst.msk [vmem:[#allocation3 + $0xc] sm:$0xf] %vm2497, %v2356
      %2500 = vst.msk [vmem:[#allocation3 + $0x18] sm:$0xf] %vm2497, %v2358
      %2501 = vst.msk [vmem:[#allocation3 + $0x24] sm:$0xf] %vm2497, %v2360
      %2502 = vst.msk [vmem:[#allocation3 + $0x30] sm:$0xf] %vm2497, %v2362
      %2503 = vst.msk [vmem:[#allocation3 + $0x3c] sm:$0xf] %vm2497, %v2364
      %2504 = vst.msk [vmem:[#allocation3 + $0x48] sm:$0xf] %vm2497, %v2366
      %2505 = vst.msk [vmem:[#allocation3 + $0x54] sm:$0xf] %vm2497, %v2368
      %2506 = vst.msk [vmem:[#allocation3 + $0x60] sm:$0xf] %vm2497, %v2370
      %2507 = vst.msk [vmem:[#allocation3 + $0x6c] sm:$0xf] %vm2497, %v2372
      %2508 = vst.msk [vmem:[#allocation3 + $0x78] sm:$0xf] %vm2497, %v2374
      %2509 = vst.msk [vmem:[#allocation3 + $0x84] sm:$0xf] %vm2497, %v2376
      %2510 = vst.msk [vmem:[#allocation3 + $0x90] sm:$0xf] %vm2497, %v2378
      %2511 = vst.msk [vmem:[#allocation3 + $0x9c] sm:$0xf] %vm2497, %v2380
      %2512 = vst.msk [vmem:[#allocation3 + $0xa8] sm:$0xf] %vm2497, %v2382
      %2513 = vst.msk [vmem:[#allocation3 + $0xb4] sm:$0xf] %vm2497, %v2384
      %2514 = vst.msk [vmem:[#allocation3 + $0xc0] sm:$0xf] %vm2497, %v2386
      %2515 = vst.msk [vmem:[#allocation3 + $0xcc] sm:$0xf] %vm2497, %v2388
      %2516 = vst.msk [vmem:[#allocation3 + $0xd8] sm:$0xf] %vm2497, %v2390
      %2517 = vst.msk [vmem:[#allocation3 + $0xe4] sm:$0xf] %vm2497, %v2392
      %2518 = vst.msk [vmem:[#allocation3 + $0xf0] sm:$0xf] %vm2497, %v2394
      %2519 = vst.msk [vmem:[#allocation3 + $0xfc] sm:$0xf] %vm2497, %v2396
      %2520 = vst.msk [vmem:[#allocation3 + $0x108] sm:$0xf] %vm2497, %v2398
      %2521 = vst.msk [vmem:[#allocation3 + $0x114] sm:$0xf] %vm2497, %v2400
      %2522 = vst.msk [vmem:[#allocation3 + $0x120] sm:$0xf] %vm2497, %v2402
      %2523 = vst.msk [vmem:[#allocation3 + $0x12c] sm:$0xf] %vm2497, %v2404
      %2524 = vst.msk [vmem:[#allocation3 + $0x138] sm:$0xf] %vm2497, %v2406
      %2525 = vst.msk [vmem:[#allocation3 + $0x144] sm:$0xf] %vm2497, %v2408
      %2526 = vst.msk [vmem:[#allocation3 + $0x150] sm:$0xf] %vm2497, %v2410
      %2527 = vst.msk [vmem:[#allocation3 + $0x15c] sm:$0xf] %vm2497, %v2412
      %2528 = vst.msk [vmem:[#allocation3 + $0x168] sm:$0xf] %vm2497, %v2414
      %2529 = vst.msk [vmem:[#allocation3 + $0x174] sm:$0xf] %vm2497, %v2416
      %2530 = vst.msk [vmem:[#allocation3 + $0x180] sm:$0xf] %vm2497, %v2418
      %2531 = vst.msk [vmem:[#allocation3 + $0x18c] sm:$0xf] %vm2497, %v2420
      %2532 = vst.msk [vmem:[#allocation3 + $0x198] sm:$0xf] %vm2497, %v2422
      %2533 = vst.msk [vmem:[#allocation3 + $0x1a4] sm:$0xf] %vm2497, %v2424
      %2534 = vst.msk [vmem:[#allocation3 + $0x1b0] sm:$0xf] %vm2497, %v2426
      %2535 = vst.msk [vmem:[#allocation3 + $0x1bc] sm:$0xf] %vm2497, %v2428
      %2536 = vst.msk [vmem:[#allocation3 + $0x1c8] sm:$0xf] %vm2497, %v2430
      %2537 = vst.msk [vmem:[#allocation3 + $0x1d4] sm:$0xf] %vm2497, %v2432
      %2538 = vst.msk [vmem:[#allocation3 + $0x1e0] sm:$0xf] %vm2497, %v2434
      %2539 = vst.msk [vmem:[#allocation3 + $0x1ec] sm:$0xf] %vm2497, %v2436
      %2540 = vst.msk [vmem:[#allocation3 + $0x1f8] sm:$0xf] %vm2497, %v2438
      %2541 = vst.msk [vmem:[#allocation3 + $0x204] sm:$0xf] %vm2497, %v2440
      %2542 = vst.msk [vmem:[#allocation3 + $0x210] sm:$0xf] %vm2497, %v2442
      %2543 = vst.msk [vmem:[#allocation3 + $0x21c] sm:$0xf] %vm2497, %v2444
      %2544 = vst.msk [vmem:[#allocation3 + $0x228] sm:$0xf] %vm2497, %v2446
      %2545 = vst.msk [vmem:[#allocation3 + $0x234] sm:$0xf] %vm2497, %v2448
      %v2546 = vld [vmem:[#allocation2 + $0xc] sm:$0x8]
      %v2547 = vld [vmem:[#allocation2 + $0x10] sm:$0xf]
      %v2548 = vld [vmem:[#allocation2 + $0x14] sm:$0xf]
      %v2549 = vld [vmem:[#allocation2 + $0x18] sm:$0xf]
      %v2550 = vld [vmem:[#allocation2 + $0x1c] sm:$0xf]
      %v2551 = vld [vmem:[#allocation2 + $0x20] sm:$0xf]
      %v2552 = vld [vmem:[#allocation2 + $0x24] sm:$0xf]
      %v2553 = vld [vmem:[#allocation2 + $0x28] sm:$0xf]
      %v2554 = vld [vmem:[#allocation2 + $0x2c] sm:$0xf]
      %v2555 = vld [vmem:[#allocation2 + $0x30] sm:$0xf]
      %v2556 = vld [vmem:[#allocation2 + $0x34] sm:$0xf]
      %v2557 = vld [vmem:[#allocation2 + $0x38] sm:$0xf]
      %v2558 = vld [vmem:[#allocation2 + $0x3c] sm:$0xf]
      %v2559 = vld [vmem:[#allocation2 + $0x40] sm:$0xf]
      %v2560 = vld [vmem:[#allocation2 + $0x44] sm:$0xf]
      %v2561 = vld [vmem:[#allocation2 + $0x48] sm:$0xf]
      %v2562 = vld [vmem:[#allocation2 + $0x4c] sm:$0xf]
      %v2563 = vld [vmem:[#allocation2 + $0x50] sm:$0xf]
      %v2564 = vld [vmem:[#allocation2 + $0x54] sm:$0xf]
      %v2565 = vld [vmem:[#allocation2 + $0x58] sm:$0xf]
      %v2566 = vld [vmem:[#allocation2 + $0x5c] sm:$0xf]
      %v2567 = vld [vmem:[#allocation2 + $0x60] sm:$0xf]
      %v2568 = vld [vmem:[#allocation2 + $0x64] sm:$0xf]
      %v2569 = vld [vmem:[#allocation2 + $0x68] sm:$0xf]
      %v2570 = vld [vmem:[#allocation2 + $0x6c] sm:$0xf]
      %v2571 = vld [vmem:[#allocation2 + $0x70] sm:$0xf]
      %v2572 = vld [vmem:[#allocation2 + $0x74] sm:$0xf]
      %v2573 = vld [vmem:[#allocation2 + $0x78] sm:$0xf]
      %v2574 = vld [vmem:[#allocation2 + $0x7c] sm:$0xf]
      %v2575 = vld [vmem:[#allocation2 + $0x80] sm:$0xf]
      %v2576 = vld [vmem:[#allocation2 + $0x84] sm:$0xf]
      %v2577 = vld [vmem:[#allocation2 + $0x88] sm:$0xf]
      %v2578 = vld [vmem:[#allocation2 + $0x8c] sm:$0xf]
      %v2579 = vld [vmem:[#allocation2 + $0x90] sm:$0xf]
      %v2580 = vld [vmem:[#allocation2 + $0x94] sm:$0xf]
      %v2581 = vld [vmem:[#allocation2 + $0x98] sm:$0xf]
      %v2582 = vld [vmem:[#allocation2 + $0x9c] sm:$0xf]
      %v2583 = vld [vmem:[#allocation2 + $0xa0] sm:$0xf]
      %v2584 = vld [vmem:[#allocation2 + $0xa4] sm:$0xf]
      %v2585 = vld [vmem:[#allocation2 + $0xa8] sm:$0xf]
      %v2586 = vld [vmem:[#allocation2 + $0xac] sm:$0xf]
      %v2587 = vld [vmem:[#allocation2 + $0xb0] sm:$0xf]
      %v2588 = vld [vmem:[#allocation2 + $0xb4] sm:$0xf]
      %v2589 = vld [vmem:[#allocation2 + $0xb8] sm:$0xf]
      %v2590 = vld [vmem:[#allocation2 + $0xbc] sm:$0xf]
      %v2591 = vld [vmem:[#allocation2 + $0xc0] sm:$0xf]
      %v2592 = vld [vmem:[#allocation2 + $0xc4] sm:$0xf]
      %v2593 = vld [vmem:[#allocation2 + $0xc8] sm:$0xf]
      %v2594 = vld [vmem:[#allocation2 + $0xcc] sm:$0xf]
      %v2596 = vshrl.u32 %v2546, 16
      %v2598 = vrot.slane %v2596, 7
      %v2599 = vrot.slane %v2598, 4
      %v2601 = vshrl.u32 %v2547, 16
      %v2603 = vrot.slane %v2601, 7
      %v2604 = vshll.u32 %v2547, 16
      %v2606 = vor.u32 %v2603, %v2604
      %v2607 = vsel %vm995, %v2599, %v2606
      %v2608 = vrot.slane %v2603, 4
      %v2610 = vshrl.u32 %v2548, 16
      %v2612 = vrot.slane %v2610, 7
      %v2613 = vshll.u32 %v2548, 16
      %v2615 = vor.u32 %v2612, %v2613
      %v2616 = vsel %vm995, %v2608, %v2615
      %v2617 = vrot.slane %v2612, 4
      %v2619 = vshrl.u32 %v2549, 16
      %v2621 = vrot.slane %v2619, 7
      %v2622 = vshll.u32 %v2549, 16
      %v2624 = vor.u32 %v2621, %v2622
      %v2625 = vsel %vm995, %v2617, %v2624
      %v2626 = vrot.slane %v2621, 4
      %v2628 = vshrl.u32 %v2550, 16
      %v2630 = vrot.slane %v2628, 7
      %v2631 = vshll.u32 %v2550, 16
      %v2633 = vor.u32 %v2630, %v2631
      %v2634 = vsel %vm995, %v2626, %v2633
      %v2635 = vrot.slane %v2630, 4
      %v2637 = vshrl.u32 %v2551, 16
      %v2639 = vrot.slane %v2637, 7
      %v2640 = vshll.u32 %v2551, 16
      %v2642 = vor.u32 %v2639, %v2640
      %v2643 = vsel %vm995, %v2635, %v2642
      %v2644 = vrot.slane %v2639, 4
      %v2646 = vshrl.u32 %v2552, 16
      %v2648 = vrot.slane %v2646, 7
      %v2649 = vshll.u32 %v2552, 16
      %v2651 = vor.u32 %v2648, %v2649
      %v2652 = vsel %vm995, %v2644, %v2651
      %v2653 = vrot.slane %v2648, 4
      %v2655 = vshrl.u32 %v2553, 16
      %v2657 = vrot.slane %v2655, 7
      %v2658 = vshll.u32 %v2553, 16
      %v2660 = vor.u32 %v2657, %v2658
      %v2661 = vsel %vm995, %v2653, %v2660
      %v2662 = vrot.slane %v2657, 4
      %v2664 = vshrl.u32 %v2554, 16
      %v2666 = vrot.slane %v2664, 7
      %v2667 = vshll.u32 %v2554, 16
      %v2669 = vor.u32 %v2666, %v2667
      %v2670 = vsel %vm995, %v2662, %v2669
      %v2671 = vrot.slane %v2666, 4
      %v2673 = vshrl.u32 %v2555, 16
      %v2675 = vrot.slane %v2673, 7
      %v2676 = vshll.u32 %v2555, 16
      %v2678 = vor.u32 %v2675, %v2676
      %v2679 = vsel %vm995, %v2671, %v2678
      %v2680 = vrot.slane %v2675, 4
      %v2682 = vshrl.u32 %v2556, 16
      %v2684 = vrot.slane %v2682, 7
      %v2685 = vshll.u32 %v2556, 16
      %v2687 = vor.u32 %v2684, %v2685
      %v2688 = vsel %vm995, %v2680, %v2687
      %v2689 = vrot.slane %v2684, 4
      %v2691 = vshrl.u32 %v2557, 16
      %v2693 = vrot.slane %v2691, 7
      %v2694 = vshll.u32 %v2557, 16
      %v2696 = vor.u32 %v2693, %v2694
      %v2697 = vsel %vm995, %v2689, %v2696
      %v2698 = vrot.slane %v2693, 4
      %v2700 = vshrl.u32 %v2558, 16
      %v2702 = vrot.slane %v2700, 7
      %v2703 = vshll.u32 %v2558, 16
      %v2705 = vor.u32 %v2702, %v2703
      %v2706 = vsel %vm995, %v2698, %v2705
      %v2707 = vrot.slane %v2702, 4
      %v2709 = vshrl.u32 %v2559, 16
      %v2711 = vrot.slane %v2709, 7
      %v2712 = vshll.u32 %v2559, 16
      %v2714 = vor.u32 %v2711, %v2712
      %v2715 = vsel %vm995, %v2707, %v2714
      %v2716 = vrot.slane %v2711, 4
      %v2718 = vshrl.u32 %v2560, 16
      %v2720 = vrot.slane %v2718, 7
      %v2721 = vshll.u32 %v2560, 16
      %v2723 = vor.u32 %v2720, %v2721
      %v2724 = vsel %vm995, %v2716, %v2723
      %v2725 = vrot.slane %v2720, 4
      %v2727 = vshrl.u32 %v2561, 16
      %v2729 = vrot.slane %v2727, 7
      %v2730 = vshll.u32 %v2561, 16
      %v2732 = vor.u32 %v2729, %v2730
      %v2733 = vsel %vm995, %v2725, %v2732
      %v2734 = vrot.slane %v2729, 4
      %v2736 = vshrl.u32 %v2562, 16
      %v2738 = vrot.slane %v2736, 7
      %v2739 = vshll.u32 %v2562, 16
      %v2741 = vor.u32 %v2738, %v2739
      %v2742 = vsel %vm995, %v2734, %v2741
      %v2743 = vrot.slane %v2738, 4
      %v2745 = vshrl.u32 %v2563, 16
      %v2747 = vrot.slane %v2745, 7
      %v2748 = vshll.u32 %v2563, 16
      %v2750 = vor.u32 %v2747, %v2748
      %v2751 = vsel %vm995, %v2743, %v2750
      %v2752 = vrot.slane %v2747, 4
      %v2754 = vshrl.u32 %v2564, 16
      %v2756 = vrot.slane %v2754, 7
      %v2757 = vshll.u32 %v2564, 16
      %v2759 = vor.u32 %v2756, %v2757
      %v2760 = vsel %vm995, %v2752, %v2759
      %v2761 = vrot.slane %v2756, 4
      %v2763 = vshrl.u32 %v2565, 16
      %v2765 = vrot.slane %v2763, 7
      %v2766 = vshll.u32 %v2565, 16
      %v2768 = vor.u32 %v2765, %v2766
      %v2769 = vsel %vm995, %v2761, %v2768
      %v2770 = vrot.slane %v2765, 4
      %v2772 = vshrl.u32 %v2566, 16
      %v2774 = vrot.slane %v2772, 7
      %v2775 = vshll.u32 %v2566, 16
      %v2777 = vor.u32 %v2774, %v2775
      %v2778 = vsel %vm995, %v2770, %v2777
      %v2779 = vrot.slane %v2774, 4
      %v2781 = vshrl.u32 %v2567, 16
      %v2783 = vrot.slane %v2781, 7
      %v2784 = vshll.u32 %v2567, 16
      %v2786 = vor.u32 %v2783, %v2784
      %v2787 = vsel %vm995, %v2779, %v2786
      %v2788 = vrot.slane %v2783, 4
      %v2790 = vshrl.u32 %v2568, 16
      %v2792 = vrot.slane %v2790, 7
      %v2793 = vshll.u32 %v2568, 16
      %v2795 = vor.u32 %v2792, %v2793
      %v2796 = vsel %vm995, %v2788, %v2795
      %v2797 = vrot.slane %v2792, 4
      %v2799 = vshrl.u32 %v2569, 16
      %v2801 = vrot.slane %v2799, 7
      %v2802 = vshll.u32 %v2569, 16
      %v2804 = vor.u32 %v2801, %v2802
      %v2805 = vsel %vm995, %v2797, %v2804
      %v2806 = vrot.slane %v2801, 4
      %v2808 = vshrl.u32 %v2570, 16
      %v2810 = vrot.slane %v2808, 7
      %v2811 = vshll.u32 %v2570, 16
      %v2813 = vor.u32 %v2810, %v2811
      %v2814 = vsel %vm995, %v2806, %v2813
      %v2815 = vrot.slane %v2810, 4
      %v2817 = vshrl.u32 %v2571, 16
      %v2819 = vrot.slane %v2817, 7
      %v2820 = vshll.u32 %v2571, 16
      %v2822 = vor.u32 %v2819, %v2820
      %v2823 = vsel %vm995, %v2815, %v2822
      %v2824 = vrot.slane %v2819, 4
      %v2826 = vshrl.u32 %v2572, 16
      %v2828 = vrot.slane %v2826, 7
      %v2829 = vshll.u32 %v2572, 16
      %v2831 = vor.u32 %v2828, %v2829
      %v2832 = vsel %vm995, %v2824, %v2831
      %v2833 = vrot.slane %v2828, 4
      %v2835 = vshrl.u32 %v2573, 16
      %v2837 = vrot.slane %v2835, 7
      %v2838 = vshll.u32 %v2573, 16
      %v2840 = vor.u32 %v2837, %v2838
      %v2841 = vsel %vm995, %v2833, %v2840
      %v2842 = vrot.slane %v2837, 4
      %v2844 = vshrl.u32 %v2574, 16
      %v2846 = vrot.slane %v2844, 7
      %v2847 = vshll.u32 %v2574, 16
      %v2849 = vor.u32 %v2846, %v2847
      %v2850 = vsel %vm995, %v2842, %v2849
      %v2851 = vrot.slane %v2846, 4
      %v2853 = vshrl.u32 %v2575, 16
      %v2855 = vrot.slane %v2853, 7
      %v2856 = vshll.u32 %v2575, 16
      %v2858 = vor.u32 %v2855, %v2856
      %v2859 = vsel %vm995, %v2851, %v2858
      %v2860 = vrot.slane %v2855, 4
      %v2862 = vshrl.u32 %v2576, 16
      %v2864 = vrot.slane %v2862, 7
      %v2865 = vshll.u32 %v2576, 16
      %v2867 = vor.u32 %v2864, %v2865
      %v2868 = vsel %vm995, %v2860, %v2867
      %v2869 = vrot.slane %v2864, 4
      %v2871 = vshrl.u32 %v2577, 16
      %v2873 = vrot.slane %v2871, 7
      %v2874 = vshll.u32 %v2577, 16
      %v2876 = vor.u32 %v2873, %v2874
      %v2877 = vsel %vm995, %v2869, %v2876
      %v2878 = vrot.slane %v2873, 4
      %v2880 = vshrl.u32 %v2578, 16
      %v2882 = vrot.slane %v2880, 7
      %v2883 = vshll.u32 %v2578, 16
      %v2885 = vor.u32 %v2882, %v2883
      %v2886 = vsel %vm995, %v2878, %v2885
      %v2887 = vrot.slane %v2882, 4
      %v2889 = vshrl.u32 %v2579, 16
      %v2891 = vrot.slane %v2889, 7
      %v2892 = vshll.u32 %v2579, 16
      %v2894 = vor.u32 %v2891, %v2892
      %v2895 = vsel %vm995, %v2887, %v2894
      %v2896 = vrot.slane %v2891, 4
      %v2898 = vshrl.u32 %v2580, 16
      %v2900 = vrot.slane %v2898, 7
      %v2901 = vshll.u32 %v2580, 16
      %v2903 = vor.u32 %v2900, %v2901
      %v2904 = vsel %vm995, %v2896, %v2903
      %v2905 = vrot.slane %v2900, 4
      %v2907 = vshrl.u32 %v2581, 16
      %v2909 = vrot.slane %v2907, 7
      %v2910 = vshll.u32 %v2581, 16
      %v2912 = vor.u32 %v2909, %v2910
      %v2913 = vsel %vm995, %v2905, %v2912
      %v2914 = vrot.slane %v2909, 4
      %v2916 = vshrl.u32 %v2582, 16
      %v2918 = vrot.slane %v2916, 7
      %v2919 = vshll.u32 %v2582, 16
      %v2921 = vor.u32 %v2918, %v2919
      %v2922 = vsel %vm995, %v2914, %v2921
      %v2923 = vrot.slane %v2918, 4
      %v2925 = vshrl.u32 %v2583, 16
      %v2927 = vrot.slane %v2925, 7
      %v2928 = vshll.u32 %v2583, 16
      %v2930 = vor.u32 %v2927, %v2928
      %v2931 = vsel %vm995, %v2923, %v2930
      %v2932 = vrot.slane %v2927, 4
      %v2934 = vshrl.u32 %v2584, 16
      %v2936 = vrot.slane %v2934, 7
      %v2937 = vshll.u32 %v2584, 16
      %v2939 = vor.u32 %v2936, %v2937
      %v2940 = vsel %vm995, %v2932, %v2939
      %v2941 = vrot.slane %v2936, 4
      %v2943 = vshrl.u32 %v2585, 16
      %v2945 = vrot.slane %v2943, 7
      %v2946 = vshll.u32 %v2585, 16
      %v2948 = vor.u32 %v2945, %v2946
      %v2949 = vsel %vm995, %v2941, %v2948
      %v2950 = vrot.slane %v2945, 4
      %v2952 = vshrl.u32 %v2586, 16
      %v2954 = vrot.slane %v2952, 7
      %v2955 = vshll.u32 %v2586, 16
      %v2957 = vor.u32 %v2954, %v2955
      %v2958 = vsel %vm995, %v2950, %v2957
      %v2959 = vrot.slane %v2954, 4
      %v2961 = vshrl.u32 %v2587, 16
      %v2963 = vrot.slane %v2961, 7
      %v2964 = vshll.u32 %v2587, 16
      %v2966 = vor.u32 %v2963, %v2964
      %v2967 = vsel %vm995, %v2959, %v2966
      %v2968 = vrot.slane %v2963, 4
      %v2970 = vshrl.u32 %v2588, 16
      %v2972 = vrot.slane %v2970, 7
      %v2973 = vshll.u32 %v2588, 16
      %v2975 = vor.u32 %v2972, %v2973
      %v2976 = vsel %vm995, %v2968, %v2975
      %v2977 = vrot.slane %v2972, 4
      %v2979 = vshrl.u32 %v2589, 16
      %v2981 = vrot.slane %v2979, 7
      %v2982 = vshll.u32 %v2589, 16
      %v2984 = vor.u32 %v2981, %v2982
      %v2985 = vsel %vm995, %v2977, %v2984
      %v2986 = vrot.slane %v2981, 4
      %v2988 = vshrl.u32 %v2590, 16
      %v2990 = vrot.slane %v2988, 7
      %v2991 = vshll.u32 %v2590, 16
      %v2993 = vor.u32 %v2990, %v2991
      %v2994 = vsel %vm995, %v2986, %v2993
      %v2995 = vrot.slane %v2990, 4
      %v2997 = vshrl.u32 %v2591, 16
      %v2999 = vrot.slane %v2997, 7
      %v3000 = vshll.u32 %v2591, 16
      %v3002 = vor.u32 %v2999, %v3000
      %v3003 = vsel %vm995, %v2995, %v3002
      %v3004 = vrot.slane %v2999, 4
      %v3006 = vshrl.u32 %v2592, 16
      %v3008 = vrot.slane %v3006, 7
      %v3009 = vshll.u32 %v2592, 16
      %v3011 = vor.u32 %v3008, %v3009
      %v3012 = vsel %vm995, %v3004, %v3011
      %v3013 = vrot.slane %v3008, 4
      %v3015 = vshrl.u32 %v2593, 16
      %v3017 = vrot.slane %v3015, 7
      %v3018 = vshll.u32 %v2593, 16
      %v3020 = vor.u32 %v3017, %v3018
      %v3021 = vsel %vm995, %v3013, %v3020
      %v3022 = vrot.slane %v3017, 4
      %v3024 = vshrl.u32 %v2594, 16
      %v3026 = vrot.slane %v3024, 7
      %v3027 = vshll.u32 %v2594, 16
      %v3029 = vor.u32 %v3026, %v3027
      %v3030 = vsel %vm995, %v3022, %v3029
      %3031 = vrot.lane.b32.xlu0 %v2607, 96
      %v3032 = vpop.permute.xlu0 %3031
      %3033 = vrot.lane.b32.xlu0 %v2616, 96
      %v3034 = vpop.permute.xlu0 %3033
      %3035 = vrot.lane.b32.xlu0 %v2625, 96
      %v3036 = vpop.permute.xlu0 %3035
      %3037 = vrot.lane.b32.xlu0 %v2634, 96
      %v3038 = vpop.permute.xlu0 %3037
      %3039 = vrot.lane.b32.xlu0 %v2643, 96
      %v3040 = vpop.permute.xlu0 %3039
      %3041 = vrot.lane.b32.xlu0 %v2652, 96
      %v3042 = vpop.permute.xlu0 %3041
      %3043 = vrot.lane.b32.xlu0 %v2661, 96
      %v3044 = vpop.permute.xlu0 %3043
      %3045 = vrot.lane.b32.xlu0 %v2670, 96
      %v3046 = vpop.permute.xlu0 %3045
      %3047 = vrot.lane.b32.xlu0 %v2679, 96
      %v3048 = vpop.permute.xlu0 %3047
      %3049 = vrot.lane.b32.xlu0 %v2688, 96
      %v3050 = vpop.permute.xlu0 %3049
      %3051 = vrot.lane.b32.xlu0 %v2697, 96
      %v3052 = vpop.permute.xlu0 %3051
      %3053 = vrot.lane.b32.xlu0 %v2706, 96
      %v3054 = vpop.permute.xlu0 %3053
      %3055 = vrot.lane.b32.xlu0 %v2715, 96
      %v3056 = vpop.permute.xlu0 %3055
      %3057 = vrot.lane.b32.xlu0 %v2724, 96
      %v3058 = vpop.permute.xlu0 %3057
      %3059 = vrot.lane.b32.xlu0 %v2733, 96
      %v3060 = vpop.permute.xlu0 %3059
      %3061 = vrot.lane.b32.xlu0 %v2742, 96
      %v3062 = vpop.permute.xlu0 %3061
      %3063 = vrot.lane.b32.xlu0 %v2751, 96
      %v3064 = vpop.permute.xlu0 %3063
      %3065 = vrot.lane.b32.xlu0 %v2760, 96
      %v3066 = vpop.permute.xlu0 %3065
      %3067 = vrot.lane.b32.xlu0 %v2769, 96
      %v3068 = vpop.permute.xlu0 %3067
      %3069 = vrot.lane.b32.xlu0 %v2778, 96
      %v3070 = vpop.permute.xlu0 %3069
      %3071 = vrot.lane.b32.xlu0 %v2787, 96
      %v3072 = vpop.permute.xlu0 %3071
      %3073 = vrot.lane.b32.xlu0 %v2796, 96
      %v3074 = vpop.permute.xlu0 %3073
      %3075 = vrot.lane.b32.xlu0 %v2805, 96
      %v3076 = vpop.permute.xlu0 %3075
      %3077 = vrot.lane.b32.xlu0 %v2814, 96
      %v3078 = vpop.permute.xlu0 %3077
      %3079 = vrot.lane.b32.xlu0 %v2823, 96
      %v3080 = vpop.permute.xlu0 %3079
      %3081 = vrot.lane.b32.xlu0 %v2832, 96
      %v3082 = vpop.permute.xlu0 %3081
      %3083 = vrot.lane.b32.xlu0 %v2841, 96
      %v3084 = vpop.permute.xlu0 %3083
      %3085 = vrot.lane.b32.xlu0 %v2850, 96
      %v3086 = vpop.permute.xlu0 %3085
      %3087 = vrot.lane.b32.xlu0 %v2859, 96
      %v3088 = vpop.permute.xlu0 %3087
      %3089 = vrot.lane.b32.xlu0 %v2868, 96
      %v3090 = vpop.permute.xlu0 %3089
      %3091 = vrot.lane.b32.xlu0 %v2877, 96
      %v3092 = vpop.permute.xlu0 %3091
      %3093 = vrot.lane.b32.xlu0 %v2886, 96
      %v3094 = vpop.permute.xlu0 %3093
      %3095 = vrot.lane.b32.xlu0 %v2895, 96
      %v3096 = vpop.permute.xlu0 %3095
      %3097 = vrot.lane.b32.xlu0 %v2904, 96
      %v3098 = vpop.permute.xlu0 %3097
      %3099 = vrot.lane.b32.xlu0 %v2913, 96
      %v3100 = vpop.permute.xlu0 %3099
      %3101 = vrot.lane.b32.xlu0 %v2922, 96
      %v3102 = vpop.permute.xlu0 %3101
      %3103 = vrot.lane.b32.xlu0 %v2931, 96
      %v3104 = vpop.permute.xlu0 %3103
      %3105 = vrot.lane.b32.xlu0 %v2940, 96
      %v3106 = vpop.permute.xlu0 %3105
      %3107 = vrot.lane.b32.xlu0 %v2949, 96
      %v3108 = vpop.permute.xlu0 %3107
      %3109 = vrot.lane.b32.xlu0 %v2958, 96
      %v3110 = vpop.permute.xlu0 %3109
      %3111 = vrot.lane.b32.xlu0 %v2967, 96
      %v3112 = vpop.permute.xlu0 %3111
      %3113 = vrot.lane.b32.xlu0 %v2976, 96
      %v3114 = vpop.permute.xlu0 %3113
      %3115 = vrot.lane.b32.xlu0 %v2985, 96
      %v3116 = vpop.permute.xlu0 %3115
      %3117 = vrot.lane.b32.xlu0 %v2994, 96
      %v3118 = vpop.permute.xlu0 %3117
      %3119 = vrot.lane.b32.xlu0 %v3003, 96
      %v3120 = vpop.permute.xlu0 %3119
      %3121 = vrot.lane.b32.xlu0 %v3012, 96
      %v3122 = vpop.permute.xlu0 %3121
      %3123 = vrot.lane.b32.xlu0 %v3021, 96
      %v3124 = vpop.permute.xlu0 %3123
      %3125 = vrot.lane.b32.xlu0 %v3030, 96
      %v3126 = vpop.permute.xlu0 %3125
      %vm3175 = vcmask 1044224
      %3176 = vst.msk [vmem:[#allocation3] sm:$0xf] %vm3175, %v3032
      %3177 = vst.msk [vmem:[#allocation3 + $0xc] sm:$0xf] %vm3175, %v3034
      %3178 = vst.msk [vmem:[#allocation3 + $0x18] sm:$0xf] %vm3175, %v3036
      %3179 = vst.msk [vmem:[#allocation3 + $0x24] sm:$0xf] %vm3175, %v3038
      %3180 = vst.msk [vmem:[#allocation3 + $0x30] sm:$0xf] %vm3175, %v3040
      %3181 = vst.msk [vmem:[#allocation3 + $0x3c] sm:$0xf] %vm3175, %v3042
      %3182 = vst.msk [vmem:[#allocation3 + $0x48] sm:$0xf] %vm3175, %v3044
      %3183 = vst.msk [vmem:[#allocation3 + $0x54] sm:$0xf] %vm3175, %v3046
      %3184 = vst.msk [vmem:[#allocation3 + $0x60] sm:$0xf] %vm3175, %v3048
      %3185 = vst.msk [vmem:[#allocation3 + $0x6c] sm:$0xf] %vm3175, %v3050
      %3186 = vst.msk [vmem:[#allocation3 + $0x78] sm:$0xf] %vm3175, %v3052
      %3187 = vst.msk [vmem:[#allocation3 + $0x84] sm:$0xf] %vm3175, %v3054
      %3188 = vst.msk [vmem:[#allocation3 + $0x90] sm:$0xf] %vm3175, %v3056
      %3189 = vst.msk [vmem:[#allocation3 + $0x9c] sm:$0xf] %vm3175, %v3058
      %3190 = vst.msk [vmem:[#allocation3 + $0xa8] sm:$0xf] %vm3175, %v3060
      %3191 = vst.msk [vmem:[#allocation3 + $0xb4] sm:$0xf] %vm3175, %v3062
      %3192 = vst.msk [vmem:[#allocation3 + $0xc0] sm:$0xf] %vm3175, %v3064
      %3193 = vst.msk [vmem:[#allocation3 + $0xcc] sm:$0xf] %vm3175, %v3066
      %3194 = vst.msk [vmem:[#allocation3 + $0xd8] sm:$0xf] %vm3175, %v3068
      %3195 = vst.msk [vmem:[#allocation3 + $0xe4] sm:$0xf] %vm3175, %v3070
      %3196 = vst.msk [vmem:[#allocation3 + $0xf0] sm:$0xf] %vm3175, %v3072
      %3197 = vst.msk [vmem:[#allocation3 + $0xfc] sm:$0xf] %vm3175, %v3074
      %3198 = vst.msk [vmem:[#allocation3 + $0x108] sm:$0xf] %vm3175, %v3076
      %3199 = vst.msk [vmem:[#allocation3 + $0x114] sm:$0xf] %vm3175, %v3078
      %3200 = vst.msk [vmem:[#allocation3 + $0x120] sm:$0xf] %vm3175, %v3080
      %3201 = vst.msk [vmem:[#allocation3 + $0x12c] sm:$0xf] %vm3175, %v3082
      %3202 = vst.msk [vmem:[#allocation3 + $0x138] sm:$0xf] %vm3175, %v3084
      %3203 = vst.msk [vmem:[#allocation3 + $0x144] sm:$0xf] %vm3175, %v3086
      %3204 = vst.msk [vmem:[#allocation3 + $0x150] sm:$0xf] %vm3175, %v3088
      %3205 = vst.msk [vmem:[#allocation3 + $0x15c] sm:$0xf] %vm3175, %v3090
      %3206 = vst.msk [vmem:[#allocation3 + $0x168] sm:$0xf] %vm3175, %v3092
      %3207 = vst.msk [vmem:[#allocation3 + $0x174] sm:$0xf] %vm3175, %v3094
      %3208 = vst.msk [vmem:[#allocation3 + $0x180] sm:$0xf] %vm3175, %v3096
      %3209 = vst.msk [vmem:[#allocation3 + $0x18c] sm:$0xf] %vm3175, %v3098
      %3210 = vst.msk [vmem:[#allocation3 + $0x198] sm:$0xf] %vm3175, %v3100
      %3211 = vst.msk [vmem:[#allocation3 + $0x1a4] sm:$0xf] %vm3175, %v3102
      %3212 = vst.msk [vmem:[#allocation3 + $0x1b0] sm:$0xf] %vm3175, %v3104
      %3213 = vst.msk [vmem:[#allocation3 + $0x1bc] sm:$0xf] %vm3175, %v3106
      %3214 = vst.msk [vmem:[#allocation3 + $0x1c8] sm:$0xf] %vm3175, %v3108
      %3215 = vst.msk [vmem:[#allocation3 + $0x1d4] sm:$0xf] %vm3175, %v3110
      %3216 = vst.msk [vmem:[#allocation3 + $0x1e0] sm:$0xf] %vm3175, %v3112
      %3217 = vst.msk [vmem:[#allocation3 + $0x1ec] sm:$0xf] %vm3175, %v3114
      %3218 = vst.msk [vmem:[#allocation3 + $0x1f8] sm:$0xf] %vm3175, %v3116
      %3219 = vst.msk [vmem:[#allocation3 + $0x204] sm:$0xf] %vm3175, %v3118
      %3220 = vst.msk [vmem:[#allocation3 + $0x210] sm:$0xf] %vm3175, %v3120
      %3221 = vst.msk [vmem:[#allocation3 + $0x21c] sm:$0xf] %vm3175, %v3122
      %3222 = vst.msk [vmem:[#allocation3 + $0x228] sm:$0xf] %vm3175, %v3124
      %3223 = vst.msk [vmem:[#allocation3 + $0x234] sm:$0xf] %vm3175, %v3126
      %v3224 = vld [vmem:[#allocation2 + $0x10] sm:$0xf]
      %v3225 = vld [vmem:[#allocation2 + $0x14] sm:$0xf]
      %v3226 = vld [vmem:[#allocation2 + $0x18] sm:$0xf]
      %v3227 = vld [vmem:[#allocation2 + $0x1c] sm:$0xf]
      %v3228 = vld [vmem:[#allocation2 + $0x20] sm:$0xf]
      %v3229 = vld [vmem:[#allocation2 + $0x24] sm:$0xf]
      %v3230 = vld [vmem:[#allocation2 + $0x28] sm:$0xf]
      %v3231 = vld [vmem:[#allocation2 + $0x2c] sm:$0xf]
      %v3232 = vld [vmem:[#allocation2 + $0x30] sm:$0xf]
      %v3233 = vld [vmem:[#allocation2 + $0x34] sm:$0xf]
      %v3234 = vld [vmem:[#allocation2 + $0x38] sm:$0xf]
      %v3235 = vld [vmem:[#allocation2 + $0x3c] sm:$0xf]
      %v3236 = vld [vmem:[#allocation2 + $0x40] sm:$0xf]
      %v3237 = vld [vmem:[#allocation2 + $0x44] sm:$0xf]
      %v3238 = vld [vmem:[#allocation2 + $0x48] sm:$0xf]
      %v3239 = vld [vmem:[#allocation2 + $0x4c] sm:$0xf]
      %v3240 = vld [vmem:[#allocation2 + $0x50] sm:$0xf]
      %v3241 = vld [vmem:[#allocation2 + $0x54] sm:$0xf]
      %v3242 = vld [vmem:[#allocation2 + $0x58] sm:$0xf]
      %v3243 = vld [vmem:[#allocation2 + $0x5c] sm:$0xf]
      %v3244 = vld [vmem:[#allocation2 + $0x60] sm:$0xf]
      %v3245 = vld [vmem:[#allocation2 + $0x64] sm:$0xf]
      %v3246 = vld [vmem:[#allocation2 + $0x68] sm:$0xf]
      %v3247 = vld [vmem:[#allocation2 + $0x6c] sm:$0xf]
      %v3248 = vld [vmem:[#allocation2 + $0x70] sm:$0xf]
      %v3249 = vld [vmem:[#allocation2 + $0x74] sm:$0xf]
      %v3250 = vld [vmem:[#allocation2 + $0x78] sm:$0xf]
      %v3251 = vld [vmem:[#allocation2 + $0x7c] sm:$0xf]
      %v3252 = vld [vmem:[#allocation2 + $0x80] sm:$0xf]
      %v3253 = vld [vmem:[#allocation2 + $0x84] sm:$0xf]
      %v3254 = vld [vmem:[#allocation2 + $0x88] sm:$0xf]
      %v3255 = vld [vmem:[#allocation2 + $0x8c] sm:$0xf]
      %v3256 = vld [vmem:[#allocation2 + $0x90] sm:$0xf]
      %v3257 = vld [vmem:[#allocation2 + $0x94] sm:$0xf]
      %v3258 = vld [vmem:[#allocation2 + $0x98] sm:$0xf]
      %v3259 = vld [vmem:[#allocation2 + $0x9c] sm:$0xf]
      %v3260 = vld [vmem:[#allocation2 + $0xa0] sm:$0xf]
      %v3261 = vld [vmem:[#allocation2 + $0xa4] sm:$0xf]
      %v3262 = vld [vmem:[#allocation2 + $0xa8] sm:$0xf]
      %v3263 = vld [vmem:[#allocation2 + $0xac] sm:$0xf]
      %v3264 = vld [vmem:[#allocation2 + $0xb0] sm:$0xf]
      %v3265 = vld [vmem:[#allocation2 + $0xb4] sm:$0xf]
      %v3266 = vld [vmem:[#allocation2 + $0xb8] sm:$0xf]
      %v3267 = vld [vmem:[#allocation2 + $0xbc] sm:$0xf]
      %v3268 = vld [vmem:[#allocation2 + $0xc0] sm:$0xf]
      %v3269 = vld [vmem:[#allocation2 + $0xc4] sm:$0xf]
      %v3270 = vld [vmem:[#allocation2 + $0xc8] sm:$0xf]
      %v3271 = vld [vmem:[#allocation2 + $0xcc] sm:$0xf]
      %3272 = vst.msk [vmem:[#allocation3 + $0x4] sm:$0xf] %vm887, %v3224
      %3273 = vst.msk [vmem:[#allocation3 + $0x10] sm:$0xf] %vm887, %v3225
      %3274 = vst.msk [vmem:[#allocation3 + $0x1c] sm:$0xf] %vm887, %v3226
      %3275 = vst.msk [vmem:[#allocation3 + $0x28] sm:$0xf] %vm887, %v3227
      %3276 = vst.msk [vmem:[#allocation3 + $0x34] sm:$0xf] %vm887, %v3228
      %3277 = vst.msk [vmem:[#allocation3 + $0x40] sm:$0xf] %vm887, %v3229
      %3278 = vst.msk [vmem:[#allocation3 + $0x4c] sm:$0xf] %vm887, %v3230
      %3279 = vst.msk [vmem:[#allocation3 + $0x58] sm:$0xf] %vm887, %v3231
      %3280 = vst.msk [vmem:[#allocation3 + $0x64] sm:$0xf] %vm887, %v3232
      %3281 = vst.msk [vmem:[#allocation3 + $0x70] sm:$0xf] %vm887, %v3233
      %3282 = vst.msk [vmem:[#allocation3 + $0x7c] sm:$0xf] %vm887, %v3234
      %3283 = vst.msk [vmem:[#allocation3 + $0x88] sm:$0xf] %vm887, %v3235
      %3284 = vst.msk [vmem:[#allocation3 + $0x94] sm:$0xf] %vm887, %v3236
      %3285 = vst.msk [vmem:[#allocation3 + $0xa0] sm:$0xf] %vm887, %v3237
      %3286 = vst.msk [vmem:[#allocation3 + $0xac] sm:$0xf] %vm887, %v3238
      %3287 = vst.msk [vmem:[#allocation3 + $0xb8] sm:$0xf] %vm887, %v3239
      %3288 = vst.msk [vmem:[#allocation3 + $0xc4] sm:$0xf] %vm887, %v3240
      %3289 = vst.msk [vmem:[#allocation3 + $0xd0] sm:$0xf] %vm887, %v3241
      %3290 = vst.msk [vmem:[#allocation3 + $0xdc] sm:$0xf] %vm887, %v3242
      %3291 = vst.msk [vmem:[#allocation3 + $0xe8] sm:$0xf] %vm887, %v3243
      %3292 = vst.msk [vmem:[#allocation3 + $0xf4] sm:$0xf] %vm887, %v3244
      %3293 = vst.msk [vmem:[#allocation3 + $0x100] sm:$0xf] %vm887, %v3245
      %3294 = vst.msk [vmem:[#allocation3 + $0x10c] sm:$0xf] %vm887, %v3246
      %3295 = vst.msk [vmem:[#allocation3 + $0x118] sm:$0xf] %vm887, %v3247
      %3296 = vst.msk [vmem:[#allocation3 + $0x124] sm:$0xf] %vm887, %v3248
      %3297 = vst.msk [vmem:[#allocation3 + $0x130] sm:$0xf] %vm887, %v3249
      %3298 = vst.msk [vmem:[#allocation3 + $0x13c] sm:$0xf] %vm887, %v3250
      %3299 = vst.msk [vmem:[#allocation3 + $0x148] sm:$0xf] %vm887, %v3251
      %3300 = vst.msk [vmem:[#allocation3 + $0x154] sm:$0xf] %vm887, %v3252
      %3301 = vst.msk [vmem:[#allocation3 + $0x160] sm:$0xf] %vm887, %v3253
      %3302 = vst.msk [vmem:[#allocation3 + $0x16c] sm:$0xf] %vm887, %v3254
      %3303 = vst.msk [vmem:[#allocation3 + $0x178] sm:$0xf] %vm887, %v3255
      %3304 = vst.msk [vmem:[#allocation3 + $0x184] sm:$0xf] %vm887, %v3256
      %3305 = vst.msk [vmem:[#allocation3 + $0x190] sm:$0xf] %vm887, %v3257
      %3306 = vst.msk [vmem:[#allocation3 + $0x19c] sm:$0xf] %vm887, %v3258
      %3307 = vst.msk [vmem:[#allocation3 + $0x1a8] sm:$0xf] %vm887, %v3259
      %3308 = vst.msk [vmem:[#allocation3 + $0x1b4] sm:$0xf] %vm887, %v3260
      %3309 = vst.msk [vmem:[#allocation3 + $0x1c0] sm:$0xf] %vm887, %v3261
      %3310 = vst.msk [vmem:[#allocation3 + $0x1cc] sm:$0xf] %vm887, %v3262
      %3311 = vst.msk [vmem:[#allocation3 + $0x1d8] sm:$0xf] %vm887, %v3263
      %3312 = vst.msk [vmem:[#allocation3 + $0x1e4] sm:$0xf] %vm887, %v3264
      %3313 = vst.msk [vmem:[#allocation3 + $0x1f0] sm:$0xf] %vm887, %v3265
      %3314 = vst.msk [vmem:[#allocation3 + $0x1fc] sm:$0xf] %vm887, %v3266
      %3315 = vst.msk [vmem:[#allocation3 + $0x208] sm:$0xf] %vm887, %v3267
      %3316 = vst.msk [vmem:[#allocation3 + $0x214] sm:$0xf] %vm887, %v3268
      %3317 = vst.msk [vmem:[#allocation3 + $0x220] sm:$0xf] %vm887, %v3269
      %3318 = vst.msk [vmem:[#allocation3 + $0x22c] sm:$0xf] %vm887, %v3270
      %3319 = vst.msk [vmem:[#allocation3 + $0x238] sm:$0xf] %vm887, %v3271
      %v3320 = vld [vmem:[#allocation2 + $0x10] sm:$0xf]
      %v3321 = vld [vmem:[#allocation2 + $0x14] sm:$0xf]
      %v3322 = vld [vmem:[#allocation2 + $0x18] sm:$0xf]
      %v3323 = vld [vmem:[#allocation2 + $0x1c] sm:$0xf]
      %v3324 = vld [vmem:[#allocation2 + $0x20] sm:$0xf]
      %v3325 = vld [vmem:[#allocation2 + $0x24] sm:$0xf]
      %v3326 = vld [vmem:[#allocation2 + $0x28] sm:$0xf]
      %v3327 = vld [vmem:[#allocation2 + $0x2c] sm:$0xf]
      %v3328 = vld [vmem:[#allocation2 + $0x30] sm:$0xf]
      %v3329 = vld [vmem:[#allocation2 + $0x34] sm:$0xf]
      %v3330 = vld [vmem:[#allocation2 + $0x38] sm:$0xf]
      %v3331 = vld [vmem:[#allocation2 + $0x3c] sm:$0xf]
      %v3332 = vld [vmem:[#allocation2 + $0x40] sm:$0xf]
      %v3333 = vld [vmem:[#allocation2 + $0x44] sm:$0xf]
      %v3334 = vld [vmem:[#allocation2 + $0x48] sm:$0xf]
      %v3335 = vld [vmem:[#allocation2 + $0x4c] sm:$0xf]
      %v3336 = vld [vmem:[#allocation2 + $0x50] sm:$0xf]
      %v3337 = vld [vmem:[#allocation2 + $0x54] sm:$0xf]
      %v3338 = vld [vmem:[#allocation2 + $0x58] sm:$0xf]
      %v3339 = vld [vmem:[#allocation2 + $0x5c] sm:$0xf]
      %v3340 = vld [vmem:[#allocation2 + $0x60] sm:$0xf]
      %v3341 = vld [vmem:[#allocation2 + $0x64] sm:$0xf]
      %v3342 = vld [vmem:[#allocation2 + $0x68] sm:$0xf]
      %v3343 = vld [vmem:[#allocation2 + $0x6c] sm:$0xf]
      %v3344 = vld [vmem:[#allocation2 + $0x70] sm:$0xf]
      %v3345 = vld [vmem:[#allocation2 + $0x74] sm:$0xf]
      %v3346 = vld [vmem:[#allocation2 + $0x78] sm:$0xf]
      %v3347 = vld [vmem:[#allocation2 + $0x7c] sm:$0xf]
      %v3348 = vld [vmem:[#allocation2 + $0x80] sm:$0xf]
      %v3349 = vld [vmem:[#allocation2 + $0x84] sm:$0xf]
      %v3350 = vld [vmem:[#allocation2 + $0x88] sm:$0xf]
      %v3351 = vld [vmem:[#allocation2 + $0x8c] sm:$0xf]
      %v3352 = vld [vmem:[#allocation2 + $0x90] sm:$0xf]
      %v3353 = vld [vmem:[#allocation2 + $0x94] sm:$0xf]
      %v3354 = vld [vmem:[#allocation2 + $0x98] sm:$0xf]
      %v3355 = vld [vmem:[#allocation2 + $0x9c] sm:$0xf]
      %v3356 = vld [vmem:[#allocation2 + $0xa0] sm:$0xf]
      %v3357 = vld [vmem:[#allocation2 + $0xa4] sm:$0xf]
      %v3358 = vld [vmem:[#allocation2 + $0xa8] sm:$0xf]
      %v3359 = vld [vmem:[#allocation2 + $0xac] sm:$0xf]
      %v3360 = vld [vmem:[#allocation2 + $0xb0] sm:$0xf]
      %v3361 = vld [vmem:[#allocation2 + $0xb4] sm:$0xf]
      %v3362 = vld [vmem:[#allocation2 + $0xb8] sm:$0xf]
      %v3363 = vld [vmem:[#allocation2 + $0xbc] sm:$0xf]
      %v3364 = vld [vmem:[#allocation2 + $0xc0] sm:$0xf]
      %v3365 = vld [vmem:[#allocation2 + $0xc4] sm:$0xf]
      %v3366 = vld [vmem:[#allocation2 + $0xc8] sm:$0xf]
      %v3367 = vld [vmem:[#allocation2 + $0xcc] sm:$0xf]
      %v3368 = vld [vmem:[#allocation2 + $0xd0] sm:$0x1]
      %v3370 = vshrl.u32 %v3320, 16
      %v3372 = vrot.slane %v3370, 4
      %v3373 = vshll.u32 %v3320, 16
      %v3375 = vrot.slane %v3373, 5
      %v3376 = vor.u32 %v3372, %v3375
      %v3377 = vrot.slane %v3376, 4
      %v3379 = vshll.u32 %v3321, 16
      %v3381 = vrot.slane %v3379, 5
      %v3382 = vsel %vm1868, %v3377, %v3381
      %v3383 = vshrl.u32 %v3321, 16
      %v3385 = vrot.slane %v3383, 4
      %v3386 = vor.u32 %v3385, %v3381
      %v3387 = vrot.slane %v3386, 4
      %v3389 = vshll.u32 %v3322, 16
      %v3391 = vrot.slane %v3389, 5
      %v3392 = vsel %vm1868, %v3387, %v3391
      %v3393 = vshrl.u32 %v3322, 16
      %v3395 = vrot.slane %v3393, 4
      %v3396 = vor.u32 %v3395, %v3391
      %v3397 = vrot.slane %v3396, 4
      %v3399 = vshll.u32 %v3323, 16
      %v3401 = vrot.slane %v3399, 5
      %v3402 = vsel %vm1868, %v3397, %v3401
      %v3403 = vshrl.u32 %v3323, 16
      %v3405 = vrot.slane %v3403, 4
      %v3406 = vor.u32 %v3405, %v3401
      %v3407 = vrot.slane %v3406, 4
      %v3409 = vshll.u32 %v3324, 16
      %v3411 = vrot.slane %v3409, 5
      %v3412 = vsel %vm1868, %v3407, %v3411
      %v3413 = vshrl.u32 %v3324, 16
      %v3415 = vrot.slane %v3413, 4
      %v3416 = vor.u32 %v3415, %v3411
      %v3417 = vrot.slane %v3416, 4
      %v3419 = vshll.u32 %v3325, 16
      %v3421 = vrot.slane %v3419, 5
      %v3422 = vsel %vm1868, %v3417, %v3421
      %v3423 = vshrl.u32 %v3325, 16
      %v3425 = vrot.slane %v3423, 4
      %v3426 = vor.u32 %v3425, %v3421
      %v3427 = vrot.slane %v3426, 4
      %v3429 = vshll.u32 %v3326, 16
      %v3431 = vrot.slane %v3429, 5
      %v3432 = vsel %vm1868, %v3427, %v3431
      %v3433 = vshrl.u32 %v3326, 16
      %v3435 = vrot.slane %v3433, 4
      %v3436 = vor.u32 %v3435, %v3431
      %v3437 = vrot.slane %v3436, 4
      %v3439 = vshll.u32 %v3327, 16
      %v3441 = vrot.slane %v3439, 5
      %v3442 = vsel %vm1868, %v3437, %v3441
      %v3443 = vshrl.u32 %v3327, 16
      %v3445 = vrot.slane %v3443, 4
      %v3446 = vor.u32 %v3445, %v3441
      %v3447 = vrot.slane %v3446, 4
      %v3449 = vshll.u32 %v3328, 16
      %v3451 = vrot.slane %v3449, 5
      %v3452 = vsel %vm1868, %v3447, %v3451
      %v3453 = vshrl.u32 %v3328, 16
      %v3455 = vrot.slane %v3453, 4
      %v3456 = vor.u32 %v3455, %v3451
      %v3457 = vrot.slane %v3456, 4
      %v3459 = vshll.u32 %v3329, 16
      %v3461 = vrot.slane %v3459, 5
      %v3462 = vsel %vm1868, %v3457, %v3461
      %v3463 = vshrl.u32 %v3329, 16
      %v3465 = vrot.slane %v3463, 4
      %v3466 = vor.u32 %v3465, %v3461
      %v3467 = vrot.slane %v3466, 4
      %v3469 = vshll.u32 %v3330, 16
      %v3471 = vrot.slane %v3469, 5
      %v3472 = vsel %vm1868, %v3467, %v3471
      %v3473 = vshrl.u32 %v3330, 16
      %v3475 = vrot.slane %v3473, 4
      %v3476 = vor.u32 %v3475, %v3471
      %v3477 = vrot.slane %v3476, 4
      %v3479 = vshll.u32 %v3331, 16
      %v3481 = vrot.slane %v3479, 5
      %v3482 = vsel %vm1868, %v3477, %v3481
      %v3483 = vshrl.u32 %v3331, 16
      %v3485 = vrot.slane %v3483, 4
      %v3486 = vor.u32 %v3485, %v3481
      %v3487 = vrot.slane %v3486, 4
      %v3489 = vshll.u32 %v3332, 16
      %v3491 = vrot.slane %v3489, 5
      %v3492 = vsel %vm1868, %v3487, %v3491
      %v3493 = vshrl.u32 %v3332, 16
      %v3495 = vrot.slane %v3493, 4
      %v3496 = vor.u32 %v3495, %v3491
      %v3497 = vrot.slane %v3496, 4
      %v3499 = vshll.u32 %v3333, 16
      %v3501 = vrot.slane %v3499, 5
      %v3502 = vsel %vm1868, %v3497, %v3501
      %v3503 = vshrl.u32 %v3333, 16
      %v3505 = vrot.slane %v3503, 4
      %v3506 = vor.u32 %v3505, %v3501
      %v3507 = vrot.slane %v3506, 4
      %v3509 = vshll.u32 %v3334, 16
      %v3511 = vrot.slane %v3509, 5
      %v3512 = vsel %vm1868, %v3507, %v3511
      %v3513 = vshrl.u32 %v3334, 16
      %v3515 = vrot.slane %v3513, 4
      %v3516 = vor.u32 %v3515, %v3511
      %v3517 = vrot.slane %v3516, 4
      %v3519 = vshll.u32 %v3335, 16
      %v3521 = vrot.slane %v3519, 5
      %v3522 = vsel %vm1868, %v3517, %v3521
      %v3523 = vshrl.u32 %v3335, 16
      %v3525 = vrot.slane %v3523, 4
      %v3526 = vor.u32 %v3525, %v3521
      %v3527 = vrot.slane %v3526, 4
      %v3529 = vshll.u32 %v3336, 16
      %v3531 = vrot.slane %v3529, 5
      %v3532 = vsel %vm1868, %v3527, %v3531
      %v3533 = vshrl.u32 %v3336, 16
      %v3535 = vrot.slane %v3533, 4
      %v3536 = vor.u32 %v3535, %v3531
      %v3537 = vrot.slane %v3536, 4
      %v3539 = vshll.u32 %v3337, 16
      %v3541 = vrot.slane %v3539, 5
      %v3542 = vsel %vm1868, %v3537, %v3541
      %v3543 = vshrl.u32 %v3337, 16
      %v3545 = vrot.slane %v3543, 4
      %v3546 = vor.u32 %v3545, %v3541
      %v3547 = vrot.slane %v3546, 4
      %v3549 = vshll.u32 %v3338, 16
      %v3551 = vrot.slane %v3549, 5
      %v3552 = vsel %vm1868, %v3547, %v3551
      %v3553 = vshrl.u32 %v3338, 16
      %v3555 = vrot.slane %v3553, 4
      %v3556 = vor.u32 %v3555, %v3551
      %v3557 = vrot.slane %v3556, 4
      %v3559 = vshll.u32 %v3339, 16
      %v3561 = vrot.slane %v3559, 5
      %v3562 = vsel %vm1868, %v3557, %v3561
      %v3563 = vshrl.u32 %v3339, 16
      %v3565 = vrot.slane %v3563, 4
      %v3566 = vor.u32 %v3565, %v3561
      %v3567 = vrot.slane %v3566, 4
      %v3569 = vshll.u32 %v3340, 16
      %v3571 = vrot.slane %v3569, 5
      %v3572 = vsel %vm1868, %v3567, %v3571
      %v3573 = vshrl.u32 %v3340, 16
      %v3575 = vrot.slane %v3573, 4
      %v3576 = vor.u32 %v3575, %v3571
      %v3577 = vrot.slane %v3576, 4
      %v3579 = vshll.u32 %v3341, 16
      %v3581 = vrot.slane %v3579, 5
      %v3582 = vsel %vm1868, %v3577, %v3581
      %v3583 = vshrl.u32 %v3341, 16
      %v3585 = vrot.slane %v3583, 4
      %v3586 = vor.u32 %v3585, %v3581
      %v3587 = vrot.slane %v3586, 4
      %v3589 = vshll.u32 %v3342, 16
      %v3591 = vrot.slane %v3589, 5
      %v3592 = vsel %vm1868, %v3587, %v3591
      %v3593 = vshrl.u32 %v3342, 16
      %v3595 = vrot.slane %v3593, 4
      %v3596 = vor.u32 %v3595, %v3591
      %v3597 = vrot.slane %v3596, 4
      %v3599 = vshll.u32 %v3343, 16
      %v3601 = vrot.slane %v3599, 5
      %v3602 = vsel %vm1868, %v3597, %v3601
      %v3603 = vshrl.u32 %v3343, 16
      %v3605 = vrot.slane %v3603, 4
      %v3606 = vor.u32 %v3605, %v3601
      %v3607 = vrot.slane %v3606, 4
      %v3609 = vshll.u32 %v3344, 16
      %v3611 = vrot.slane %v3609, 5
      %v3612 = vsel %vm1868, %v3607, %v3611
      %v3613 = vshrl.u32 %v3344, 16
      %v3615 = vrot.slane %v3613, 4
      %v3616 = vor.u32 %v3615, %v3611
      %v3617 = vrot.slane %v3616, 4
      %v3619 = vshll.u32 %v3345, 16
      %v3621 = vrot.slane %v3619, 5
      %v3622 = vsel %vm1868, %v3617, %v3621
      %v3623 = vshrl.u32 %v3345, 16
      %v3625 = vrot.slane %v3623, 4
      %v3626 = vor.u32 %v3625, %v3621
      %v3627 = vrot.slane %v3626, 4
      %v3629 = vshll.u32 %v3346, 16
      %v3631 = vrot.slane %v3629, 5
      %v3632 = vsel %vm1868, %v3627, %v3631
      %v3633 = vshrl.u32 %v3346, 16
      %v3635 = vrot.slane %v3633, 4
      %v3636 = vor.u32 %v3635, %v3631
      %v3637 = vrot.slane %v3636, 4
      %v3639 = vshll.u32 %v3347, 16
      %v3641 = vrot.slane %v3639, 5
      %v3642 = vsel %vm1868, %v3637, %v3641
      %v3643 = vshrl.u32 %v3347, 16
      %v3645 = vrot.slane %v3643, 4
      %v3646 = vor.u32 %v3645, %v3641
      %v3647 = vrot.slane %v3646, 4
      %v3649 = vshll.u32 %v3348, 16
      %v3651 = vrot.slane %v3649, 5
      %v3652 = vsel %vm1868, %v3647, %v3651
      %v3653 = vshrl.u32 %v3348, 16
      %v3655 = vrot.slane %v3653, 4
      %v3656 = vor.u32 %v3655, %v3651
      %v3657 = vrot.slane %v3656, 4
      %v3659 = vshll.u32 %v3349, 16
      %v3661 = vrot.slane %v3659, 5
      %v3662 = vsel %vm1868, %v3657, %v3661
      %v3663 = vshrl.u32 %v3349, 16
      %v3665 = vrot.slane %v3663, 4
      %v3666 = vor.u32 %v3665, %v3661
      %v3667 = vrot.slane %v3666, 4
      %v3669 = vshll.u32 %v3350, 16
      %v3671 = vrot.slane %v3669, 5
      %v3672 = vsel %vm1868, %v3667, %v3671
      %v3673 = vshrl.u32 %v3350, 16
      %v3675 = vrot.slane %v3673, 4
      %v3676 = vor.u32 %v3675, %v3671
      %v3677 = vrot.slane %v3676, 4
      %v3679 = vshll.u32 %v3351, 16
      %v3681 = vrot.slane %v3679, 5
      %v3682 = vsel %vm1868, %v3677, %v3681
      %v3683 = vshrl.u32 %v3351, 16
      %v3685 = vrot.slane %v3683, 4
      %v3686 = vor.u32 %v3685, %v3681
      %v3687 = vrot.slane %v3686, 4
      %v3689 = vshll.u32 %v3352, 16
      %v3691 = vrot.slane %v3689, 5
      %v3692 = vsel %vm1868, %v3687, %v3691
      %v3693 = vshrl.u32 %v3352, 16
      %v3695 = vrot.slane %v3693, 4
      %v3696 = vor.u32 %v3695, %v3691
      %v3697 = vrot.slane %v3696, 4
      %v3699 = vshll.u32 %v3353, 16
      %v3701 = vrot.slane %v3699, 5
      %v3702 = vsel %vm1868, %v3697, %v3701
      %v3703 = vshrl.u32 %v3353, 16
      %v3705 = vrot.slane %v3703, 4
      %v3706 = vor.u32 %v3705, %v3701
      %v3707 = vrot.slane %v3706, 4
      %v3709 = vshll.u32 %v3354, 16
      %v3711 = vrot.slane %v3709, 5
      %v3712 = vsel %vm1868, %v3707, %v3711
      %v3713 = vshrl.u32 %v3354, 16
      %v3715 = vrot.slane %v3713, 4
      %v3716 = vor.u32 %v3715, %v3711
      %v3717 = vrot.slane %v3716, 4
      %v3719 = vshll.u32 %v3355, 16
      %v3721 = vrot.slane %v3719, 5
      %v3722 = vsel %vm1868, %v3717, %v3721
      %v3723 = vshrl.u32 %v3355, 16
      %v3725 = vrot.slane %v3723, 4
      %v3726 = vor.u32 %v3725, %v3721
      %v3727 = vrot.slane %v3726, 4
      %v3729 = vshll.u32 %v3356, 16
      %v3731 = vrot.slane %v3729, 5
      %v3732 = vsel %vm1868, %v3727, %v3731
      %v3733 = vshrl.u32 %v3356, 16
      %v3735 = vrot.slane %v3733, 4
      %v3736 = vor.u32 %v3735, %v3731
      %v3737 = vrot.slane %v3736, 4
      %v3739 = vshll.u32 %v3357, 16
      %v3741 = vrot.slane %v3739, 5
      %v3742 = vsel %vm1868, %v3737, %v3741
      %v3743 = vshrl.u32 %v3357, 16
      %v3745 = vrot.slane %v3743, 4
      %v3746 = vor.u32 %v3745, %v3741
      %v3747 = vrot.slane %v3746, 4
      %v3749 = vshll.u32 %v3358, 16
      %v3751 = vrot.slane %v3749, 5
      %v3752 = vsel %vm1868, %v3747, %v3751
      %v3753 = vshrl.u32 %v3358, 16
      %v3755 = vrot.slane %v3753, 4
      %v3756 = vor.u32 %v3755, %v3751
      %v3757 = vrot.slane %v3756, 4
      %v3759 = vshll.u32 %v3359, 16
      %v3761 = vrot.slane %v3759, 5
      %v3762 = vsel %vm1868, %v3757, %v3761
      %v3763 = vshrl.u32 %v3359, 16
      %v3765 = vrot.slane %v3763, 4
      %v3766 = vor.u32 %v3765, %v3761
      %v3767 = vrot.slane %v3766, 4
      %v3769 = vshll.u32 %v3360, 16
      %v3771 = vrot.slane %v3769, 5
      %v3772 = vsel %vm1868, %v3767, %v3771
      %v3773 = vshrl.u32 %v3360, 16
      %v3775 = vrot.slane %v3773, 4
      %v3776 = vor.u32 %v3775, %v3771
      %v3777 = vrot.slane %v3776, 4
      %v3779 = vshll.u32 %v3361, 16
      %v3781 = vrot.slane %v3779, 5
      %v3782 = vsel %vm1868, %v3777, %v3781
      %v3783 = vshrl.u32 %v3361, 16
      %v3785 = vrot.slane %v3783, 4
      %v3786 = vor.u32 %v3785, %v3781
      %v3787 = vrot.slane %v3786, 4
      %v3789 = vshll.u32 %v3362, 16
      %v3791 = vrot.slane %v3789, 5
      %v3792 = vsel %vm1868, %v3787, %v3791
      %v3793 = vshrl.u32 %v3362, 16
      %v3795 = vrot.slane %v3793, 4
      %v3796 = vor.u32 %v3795, %v3791
      %v3797 = vrot.slane %v3796, 4
      %v3799 = vshll.u32 %v3363, 16
      %v3801 = vrot.slane %v3799, 5
      %v3802 = vsel %vm1868, %v3797, %v3801
      %v3803 = vshrl.u32 %v3363, 16
      %v3805 = vrot.slane %v3803, 4
      %v3806 = vor.u32 %v3805, %v3801
      %v3807 = vrot.slane %v3806, 4
      %v3809 = vshll.u32 %v3364, 16
      %v3811 = vrot.slane %v3809, 5
      %v3812 = vsel %vm1868, %v3807, %v3811
      %v3813 = vshrl.u32 %v3364, 16
      %v3815 = vrot.slane %v3813, 4
      %v3816 = vor.u32 %v3815, %v3811
      %v3817 = vrot.slane %v3816, 4
      %v3819 = vshll.u32 %v3365, 16
      %v3821 = vrot.slane %v3819, 5
      %v3822 = vsel %vm1868, %v3817, %v3821
      %v3823 = vshrl.u32 %v3365, 16
      %v3825 = vrot.slane %v3823, 4
      %v3826 = vor.u32 %v3825, %v3821
      %v3827 = vrot.slane %v3826, 4
      %v3829 = vshll.u32 %v3366, 16
      %v3831 = vrot.slane %v3829, 5
      %v3832 = vsel %vm1868, %v3827, %v3831
      %v3833 = vshrl.u32 %v3366, 16
      %v3835 = vrot.slane %v3833, 4
      %v3836 = vor.u32 %v3835, %v3831
      %v3837 = vrot.slane %v3836, 4
      %v3839 = vshll.u32 %v3367, 16
      %v3841 = vrot.slane %v3839, 5
      %v3842 = vsel %vm1868, %v3837, %v3841
      %v3843 = vshrl.u32 %v3367, 16
      %v3845 = vrot.slane %v3843, 4
      %v3846 = vor.u32 %v3845, %v3841
      %v3847 = vrot.slane %v3846, 4
      %v3849 = vshll.u32 %v3368, 16
      %v3851 = vrot.slane %v3849, 5
      %v3852 = vsel %vm1868, %v3847, %v3851
      %3853 = vrot.lane.b32.xlu0 %v3382, 32
      %v3854 = vpop.permute.xlu0 %3853
      %3855 = vrot.lane.b32.xlu0 %v3392, 32
      %v3856 = vpop.permute.xlu0 %3855
      %3857 = vrot.lane.b32.xlu0 %v3402, 32
      %v3858 = vpop.permute.xlu0 %3857
      %3859 = vrot.lane.b32.xlu0 %v3412, 32
      %v3860 = vpop.permute.xlu0 %3859
      %3861 = vrot.lane.b32.xlu0 %v3422, 32
      %v3862 = vpop.permute.xlu0 %3861
      %3863 = vrot.lane.b32.xlu0 %v3432, 32
      %v3864 = vpop.permute.xlu0 %3863
      %3865 = vrot.lane.b32.xlu0 %v3442, 32
      %v3866 = vpop.permute.xlu0 %3865
      %3867 = vrot.lane.b32.xlu0 %v3452, 32
      %v3868 = vpop.permute.xlu0 %3867
      %3869 = vrot.lane.b32.xlu0 %v3462, 32
      %v3870 = vpop.permute.xlu0 %3869
      %3871 = vrot.lane.b32.xlu0 %v3472, 32
      %v3872 = vpop.permute.xlu0 %3871
      %3873 = vrot.lane.b32.xlu0 %v3482, 32
      %v3874 = vpop.permute.xlu0 %3873
      %3875 = vrot.lane.b32.xlu0 %v3492, 32
      %v3876 = vpop.permute.xlu0 %3875
      %3877 = vrot.lane.b32.xlu0 %v3502, 32
      %v3878 = vpop.permute.xlu0 %3877
      %3879 = vrot.lane.b32.xlu0 %v3512, 32
      %v3880 = vpop.permute.xlu0 %3879
      %3881 = vrot.lane.b32.xlu0 %v3522, 32
      %v3882 = vpop.permute.xlu0 %3881
      %3883 = vrot.lane.b32.xlu0 %v3532, 32
      %v3884 = vpop.permute.xlu0 %3883
      %3885 = vrot.lane.b32.xlu0 %v3542, 32
      %v3886 = vpop.permute.xlu0 %3885
      %3887 = vrot.lane.b32.xlu0 %v3552, 32
      %v3888 = vpop.permute.xlu0 %3887
      %3889 = vrot.lane.b32.xlu0 %v3562, 32
      %v3890 = vpop.permute.xlu0 %3889
      %3891 = vrot.lane.b32.xlu0 %v3572, 32
      %v3892 = vpop.permute.xlu0 %3891
      %3893 = vrot.lane.b32.xlu0 %v3582, 32
      %v3894 = vpop.permute.xlu0 %3893
      %3895 = vrot.lane.b32.xlu0 %v3592, 32
      %v3896 = vpop.permute.xlu0 %3895
      %3897 = vrot.lane.b32.xlu0 %v3602, 32
      %v3898 = vpop.permute.xlu0 %3897
      %3899 = vrot.lane.b32.xlu0 %v3612, 32
      %v3900 = vpop.permute.xlu0 %3899
      %3901 = vrot.lane.b32.xlu0 %v3622, 32
      %v3902 = vpop.permute.xlu0 %3901
      %3903 = vrot.lane.b32.xlu0 %v3632, 32
      %v3904 = vpop.permute.xlu0 %3903
      %3905 = vrot.lane.b32.xlu0 %v3642, 32
      %v3906 = vpop.permute.xlu0 %3905
      %3907 = vrot.lane.b32.xlu0 %v3652, 32
      %v3908 = vpop.permute.xlu0 %3907
      %3909 = vrot.lane.b32.xlu0 %v3662, 32
      %v3910 = vpop.permute.xlu0 %3909
      %3911 = vrot.lane.b32.xlu0 %v3672, 32
      %v3912 = vpop.permute.xlu0 %3911
      %3913 = vrot.lane.b32.xlu0 %v3682, 32
      %v3914 = vpop.permute.xlu0 %3913
      %3915 = vrot.lane.b32.xlu0 %v3692, 32
      %v3916 = vpop.permute.xlu0 %3915
      %3917 = vrot.lane.b32.xlu0 %v3702, 32
      %v3918 = vpop.permute.xlu0 %3917
      %3919 = vrot.lane.b32.xlu0 %v3712, 32
      %v3920 = vpop.permute.xlu0 %3919
      %3921 = vrot.lane.b32.xlu0 %v3722, 32
      %v3922 = vpop.permute.xlu0 %3921
      %3923 = vrot.lane.b32.xlu0 %v3732, 32
      %v3924 = vpop.permute.xlu0 %3923
      %3925 = vrot.lane.b32.xlu0 %v3742, 32
      %v3926 = vpop.permute.xlu0 %3925
      %3927 = vrot.lane.b32.xlu0 %v3752, 32
      %v3928 = vpop.permute.xlu0 %3927
      %3929 = vrot.lane.b32.xlu0 %v3762, 32
      %v3930 = vpop.permute.xlu0 %3929
      %3931 = vrot.lane.b32.xlu0 %v3772, 32
      %v3932 = vpop.permute.xlu0 %3931
      %3933 = vrot.lane.b32.xlu0 %v3782, 32
      %v3934 = vpop.permute.xlu0 %3933
      %3935 = vrot.lane.b32.xlu0 %v3792, 32
      %v3936 = vpop.permute.xlu0 %3935
      %3937 = vrot.lane.b32.xlu0 %v3802, 32
      %v3938 = vpop.permute.xlu0 %3937
      %3939 = vrot.lane.b32.xlu0 %v3812, 32
      %v3940 = vpop.permute.xlu0 %3939
      %3941 = vrot.lane.b32.xlu0 %v3822, 32
      %v3942 = vpop.permute.xlu0 %3941
      %3943 = vrot.lane.b32.xlu0 %v3832, 32
      %v3944 = vpop.permute.xlu0 %3943
      %3945 = vrot.lane.b32.xlu0 %v3842, 32
      %v3946 = vpop.permute.xlu0 %3945
      %3947 = vrot.lane.b32.xlu0 %v3852, 32
      %v3948 = vpop.permute.xlu0 %3947
      %3997 = vst.msk [vmem:[#allocation3 + $0x4] sm:$0xf] %vm1768, %v3854
      %3998 = vst.msk [vmem:[#allocation3 + $0x10] sm:$0xf] %vm1768, %v3856
      %3999 = vst.msk [vmem:[#allocation3 + $0x1c] sm:$0xf] %vm1768, %v3858
      %4000 = vst.msk [vmem:[#allocation3 + $0x28] sm:$0xf] %vm1768, %v3860
      %4001 = vst.msk [vmem:[#allocation3 + $0x34] sm:$0xf] %vm1768, %v3862
      %4002 = vst.msk [vmem:[#allocation3 + $0x40] sm:$0xf] %vm1768, %v3864
      %4003 = vst.msk [vmem:[#allocation3 + $0x4c] sm:$0xf] %vm1768, %v3866
      %4004 = vst.msk [vmem:[#allocation3 + $0x58] sm:$0xf] %vm1768, %v3868
      %4005 = vst.msk [vmem:[#allocation3 + $0x64] sm:$0xf] %vm1768, %v3870
      %4006 = vst.msk [vmem:[#allocation3 + $0x70] sm:$0xf] %vm1768, %v3872
      %4007 = vst.msk [vmem:[#allocation3 + $0x7c] sm:$0xf] %vm1768, %v3874
      %4008 = vst.msk [vmem:[#allocation3 + $0x88] sm:$0xf] %vm1768, %v3876
      %4009 = vst.msk [vmem:[#allocation3 + $0x94] sm:$0xf] %vm1768, %v3878
      %4010 = vst.msk [vmem:[#allocation3 + $0xa0] sm:$0xf] %vm1768, %v3880
      %4011 = vst.msk [vmem:[#allocation3 + $0xac] sm:$0xf] %vm1768, %v3882
      %4012 = vst.msk [vmem:[#allocation3 + $0xb8] sm:$0xf] %vm1768, %v3884
      %4013 = vst.msk [vmem:[#allocation3 + $0xc4] sm:$0xf] %vm1768, %v3886
      %4014 = vst.msk [vmem:[#allocation3 + $0xd0] sm:$0xf] %vm1768, %v3888
      %4015 = vst.msk [vmem:[#allocation3 + $0xdc] sm:$0xf] %vm1768, %v3890
      %4016 = vst.msk [vmem:[#allocation3 + $0xe8] sm:$0xf] %vm1768, %v3892
      %4017 = vst.msk [vmem:[#allocation3 + $0xf4] sm:$0xf] %vm1768, %v3894
      %4018 = vst.msk [vmem:[#allocation3 + $0x100] sm:$0xf] %vm1768, %v3896
      %4019 = vst.msk [vmem:[#allocation3 + $0x10c] sm:$0xf] %vm1768, %v3898
      %4020 = vst.msk [vmem:[#allocation3 + $0x118] sm:$0xf] %vm1768, %v3900
      %4021 = vst.msk [vmem:[#allocation3 + $0x124] sm:$0xf] %vm1768, %v3902
      %4022 = vst.msk [vmem:[#allocation3 + $0x130] sm:$0xf] %vm1768, %v3904
      %4023 = vst.msk [vmem:[#allocation3 + $0x13c] sm:$0xf] %vm1768, %v3906
      %4024 = vst.msk [vmem:[#allocation3 + $0x148] sm:$0xf] %vm1768, %v3908
      %4025 = vst.msk [vmem:[#allocation3 + $0x154] sm:$0xf] %vm1768, %v3910
      %4026 = vst.msk [vmem:[#allocation3 + $0x160] sm:$0xf] %vm1768, %v3912
      %4027 = vst.msk [vmem:[#allocation3 + $0x16c] sm:$0xf] %vm1768, %v3914
      %4028 = vst.msk [vmem:[#allocation3 + $0x178] sm:$0xf] %vm1768, %v3916
      %4029 = vst.msk [vmem:[#allocation3 + $0x184] sm:$0xf] %vm1768, %v3918
      %4030 = vst.msk [vmem:[#allocation3 + $0x190] sm:$0xf] %vm1768, %v3920
      %4031 = vst.msk [vmem:[#allocation3 + $0x19c] sm:$0xf] %vm1768, %v3922
      %4032 = vst.msk [vmem:[#allocation3 + $0x1a8] sm:$0xf] %vm1768, %v3924
      %4033 = vst.msk [vmem:[#allocation3 + $0x1b4] sm:$0xf] %vm1768, %v3926
      %4034 = vst.msk [vmem:[#allocation3 + $0x1c0] sm:$0xf] %vm1768, %v3928
      %4035 = vst.msk [vmem:[#allocation3 + $0x1cc] sm:$0xf] %vm1768, %v3930
      %4036 = vst.msk [vmem:[#allocation3 + $0x1d8] sm:$0xf] %vm1768, %v3932
      %4037 = vst.msk [vmem:[#allocation3 + $0x1e4] sm:$0xf] %vm1768, %v3934
      %4038 = vst.msk [vmem:[#allocation3 + $0x1f0] sm:$0xf] %vm1768, %v3936
      %4039 = vst.msk [vmem:[#allocation3 + $0x1fc] sm:$0xf] %vm1768, %v3938
      %4040 = vst.msk [vmem:[#allocation3 + $0x208] sm:$0xf] %vm1768, %v3940
      %4041 = vst.msk [vmem:[#allocation3 + $0x214] sm:$0xf] %vm1768, %v3942
      %4042 = vst.msk [vmem:[#allocation3 + $0x220] sm:$0xf] %vm1768, %v3944
      %4043 = vst.msk [vmem:[#allocation3 + $0x22c] sm:$0xf] %vm1768, %v3946
      %4044 = vst.msk [vmem:[#allocation3 + $0x238] sm:$0xf] %vm1768, %v3948
      %v4045 = vld [vmem:[#allocation2 + $0x18] sm:$0x8]
      %v4046 = vld [vmem:[#allocation2 + $0x1c] sm:$0xf]
      %v4047 = vld [vmem:[#allocation2 + $0x20] sm:$0xf]
      %v4048 = vld [vmem:[#allocation2 + $0x24] sm:$0xf]
      %v4049 = vld [vmem:[#allocation2 + $0x28] sm:$0xf]
      %v4050 = vld [vmem:[#allocation2 + $0x2c] sm:$0xf]
      %v4051 = vld [vmem:[#allocation2 + $0x30] sm:$0xf]
      %v4052 = vld [vmem:[#allocation2 + $0x34] sm:$0xf]
      %v4053 = vld [vmem:[#allocation2 + $0x38] sm:$0xf]
      %v4054 = vld [vmem:[#allocation2 + $0x3c] sm:$0xf]
      %v4055 = vld [vmem:[#allocation2 + $0x40] sm:$0xf]
      %v4056 = vld [vmem:[#allocation2 + $0x44] sm:$0xf]
      %v4057 = vld [vmem:[#allocation2 + $0x48] sm:$0xf]
      %v4058 = vld [vmem:[#allocation2 + $0x4c] sm:$0xf]
      %v4059 = vld [vmem:[#allocation2 + $0x50] sm:$0xf]
      %v4060 = vld [vmem:[#allocation2 + $0x54] sm:$0xf]
      %v4061 = vld [vmem:[#allocation2 + $0x58] sm:$0xf]
      %v4062 = vld [vmem:[#allocation2 + $0x5c] sm:$0xf]
      %v4063 = vld [vmem:[#allocation2 + $0x60] sm:$0xf]
      %v4064 = vld [vmem:[#allocation2 + $0x64] sm:$0xf]
      %v4065 = vld [vmem:[#allocation2 + $0x68] sm:$0xf]
      %v4066 = vld [vmem:[#allocation2 + $0x6c] sm:$0xf]
      %v4067 = vld [vmem:[#allocation2 + $0x70] sm:$0xf]
      %v4068 = vld [vmem:[#allocation2 + $0x74] sm:$0xf]
      %v4069 = vld [vmem:[#allocation2 + $0x78] sm:$0xf]
      %v4070 = vld [vmem:[#allocation2 + $0x7c] sm:$0xf]
      %v4071 = vld [vmem:[#allocation2 + $0x80] sm:$0xf]
      %v4072 = vld [vmem:[#allocation2 + $0x84] sm:$0xf]
      %v4073 = vld [vmem:[#allocation2 + $0x88] sm:$0xf]
      %v4074 = vld [vmem:[#allocation2 + $0x8c] sm:$0xf]
      %v4075 = vld [vmem:[#allocation2 + $0x90] sm:$0xf]
      %v4076 = vld [vmem:[#allocation2 + $0x94] sm:$0xf]
      %v4077 = vld [vmem:[#allocation2 + $0x98] sm:$0xf]
      %v4078 = vld [vmem:[#allocation2 + $0x9c] sm:$0xf]
      %v4079 = vld [vmem:[#allocation2 + $0xa0] sm:$0xf]
      %v4080 = vld [vmem:[#allocation2 + $0xa4] sm:$0xf]
      %v4081 = vld [vmem:[#allocation2 + $0xa8] sm:$0xf]
      %v4082 = vld [vmem:[#allocation2 + $0xac] sm:$0xf]
      %v4083 = vld [vmem:[#allocation2 + $0xb0] sm:$0xf]
      %v4084 = vld [vmem:[#allocation2 + $0xb4] sm:$0xf]
      %v4085 = vld [vmem:[#allocation2 + $0xb8] sm:$0xf]
      %v4086 = vld [vmem:[#allocation2 + $0xbc] sm:$0xf]
      %v4087 = vld [vmem:[#allocation2 + $0xc0] sm:$0xf]
      %v4088 = vld [vmem:[#allocation2 + $0xc4] sm:$0xf]
      %v4089 = vld [vmem:[#allocation2 + $0xc8] sm:$0xf]
      %v4090 = vld [vmem:[#allocation2 + $0xcc] sm:$0xf]
      %v4091 = vld [vmem:[#allocation2 + $0xd0] sm:$0xf]
      %v4092 = vld [vmem:[#allocation2 + $0xd4] sm:$0xf]
      %v4093 = vld [vmem:[#allocation2 + $0xd8] sm:$0xf]
      %v4095 = vshrl.u32 %v4045, 16
      %v4097 = vrot.slane %v4095, 7
      %v4098 = vrot.slane %v4097, 4
      %v4100 = vshrl.u32 %v4046, 16
      %v4102 = vrot.slane %v4100, 7
      %v4103 = vshll.u32 %v4046, 16
      %v4105 = vor.u32 %v4102, %v4103
      %v4106 = vsel %vm995, %v4098, %v4105
      %v4107 = vrot.slane %v4102, 4
      %v4109 = vshrl.u32 %v4047, 16
      %v4111 = vrot.slane %v4109, 7
      %v4112 = vshll.u32 %v4047, 16
      %v4114 = vor.u32 %v4111, %v4112
      %v4115 = vsel %vm995, %v4107, %v4114
      %v4116 = vrot.slane %v4111, 4
      %v4118 = vshrl.u32 %v4048, 16
      %v4120 = vrot.slane %v4118, 7
      %v4121 = vshll.u32 %v4048, 16
      %v4123 = vor.u32 %v4120, %v4121
      %v4124 = vsel %vm995, %v4116, %v4123
      %v4125 = vrot.slane %v4120, 4
      %v4127 = vshrl.u32 %v4049, 16
      %v4129 = vrot.slane %v4127, 7
      %v4130 = vshll.u32 %v4049, 16
      %v4132 = vor.u32 %v4129, %v4130
      %v4133 = vsel %vm995, %v4125, %v4132
      %v4134 = vrot.slane %v4129, 4
      %v4136 = vshrl.u32 %v4050, 16
      %v4138 = vrot.slane %v4136, 7
      %v4139 = vshll.u32 %v4050, 16
      %v4141 = vor.u32 %v4138, %v4139
      %v4142 = vsel %vm995, %v4134, %v4141
      %v4143 = vrot.slane %v4138, 4
      %v4145 = vshrl.u32 %v4051, 16
      %v4147 = vrot.slane %v4145, 7
      %v4148 = vshll.u32 %v4051, 16
      %v4150 = vor.u32 %v4147, %v4148
      %v4151 = vsel %vm995, %v4143, %v4150
      %v4152 = vrot.slane %v4147, 4
      %v4154 = vshrl.u32 %v4052, 16
      %v4156 = vrot.slane %v4154, 7
      %v4157 = vshll.u32 %v4052, 16
      %v4159 = vor.u32 %v4156, %v4157
      %v4160 = vsel %vm995, %v4152, %v4159
      %v4161 = vrot.slane %v4156, 4
      %v4163 = vshrl.u32 %v4053, 16
      %v4165 = vrot.slane %v4163, 7
      %v4166 = vshll.u32 %v4053, 16
      %v4168 = vor.u32 %v4165, %v4166
      %v4169 = vsel %vm995, %v4161, %v4168
      %v4170 = vrot.slane %v4165, 4
      %v4172 = vshrl.u32 %v4054, 16
      %v4174 = vrot.slane %v4172, 7
      %v4175 = vshll.u32 %v4054, 16
      %v4177 = vor.u32 %v4174, %v4175
      %v4178 = vsel %vm995, %v4170, %v4177
      %v4179 = vrot.slane %v4174, 4
      %v4181 = vshrl.u32 %v4055, 16
      %v4183 = vrot.slane %v4181, 7
      %v4184 = vshll.u32 %v4055, 16
      %v4186 = vor.u32 %v4183, %v4184
      %v4187 = vsel %vm995, %v4179, %v4186
      %v4188 = vrot.slane %v4183, 4
      %v4190 = vshrl.u32 %v4056, 16
      %v4192 = vrot.slane %v4190, 7
      %v4193 = vshll.u32 %v4056, 16
      %v4195 = vor.u32 %v4192, %v4193
      %v4196 = vsel %vm995, %v4188, %v4195
      %v4197 = vrot.slane %v4192, 4
      %v4199 = vshrl.u32 %v4057, 16
      %v4201 = vrot.slane %v4199, 7
      %v4202 = vshll.u32 %v4057, 16
      %v4204 = vor.u32 %v4201, %v4202
      %v4205 = vsel %vm995, %v4197, %v4204
      %v4206 = vrot.slane %v4201, 4
      %v4208 = vshrl.u32 %v4058, 16
      %v4210 = vrot.slane %v4208, 7
      %v4211 = vshll.u32 %v4058, 16
      %v4213 = vor.u32 %v4210, %v4211
      %v4214 = vsel %vm995, %v4206, %v4213
      %v4215 = vrot.slane %v4210, 4
      %v4217 = vshrl.u32 %v4059, 16
      %v4219 = vrot.slane %v4217, 7
      %v4220 = vshll.u32 %v4059, 16
      %v4222 = vor.u32 %v4219, %v4220
      %v4223 = vsel %vm995, %v4215, %v4222
      %v4224 = vrot.slane %v4219, 4
      %v4226 = vshrl.u32 %v4060, 16
      %v4228 = vrot.slane %v4226, 7
      %v4229 = vshll.u32 %v4060, 16
      %v4231 = vor.u32 %v4228, %v4229
      %v4232 = vsel %vm995, %v4224, %v4231
      %v4233 = vrot.slane %v4228, 4
      %v4235 = vshrl.u32 %v4061, 16
      %v4237 = vrot.slane %v4235, 7
      %v4238 = vshll.u32 %v4061, 16
      %v4240 = vor.u32 %v4237, %v4238
      %v4241 = vsel %vm995, %v4233, %v4240
      %v4242 = vrot.slane %v4237, 4
      %v4244 = vshrl.u32 %v4062, 16
      %v4246 = vrot.slane %v4244, 7
      %v4247 = vshll.u32 %v4062, 16
      %v4249 = vor.u32 %v4246, %v4247
      %v4250 = vsel %vm995, %v4242, %v4249
      %v4251 = vrot.slane %v4246, 4
      %v4253 = vshrl.u32 %v4063, 16
      %v4255 = vrot.slane %v4253, 7
      %v4256 = vshll.u32 %v4063, 16
      %v4258 = vor.u32 %v4255, %v4256
      %v4259 = vsel %vm995, %v4251, %v4258
      %v4260 = vrot.slane %v4255, 4
      %v4262 = vshrl.u32 %v4064, 16
      %v4264 = vrot.slane %v4262, 7
      %v4265 = vshll.u32 %v4064, 16
      %v4267 = vor.u32 %v4264, %v4265
      %v4268 = vsel %vm995, %v4260, %v4267
      %v4269 = vrot.slane %v4264, 4
      %v4271 = vshrl.u32 %v4065, 16
      %v4273 = vrot.slane %v4271, 7
      %v4274 = vshll.u32 %v4065, 16
      %v4276 = vor.u32 %v4273, %v4274
      %v4277 = vsel %vm995, %v4269, %v4276
      %v4278 = vrot.slane %v4273, 4
      %v4280 = vshrl.u32 %v4066, 16
      %v4282 = vrot.slane %v4280, 7
      %v4283 = vshll.u32 %v4066, 16
      %v4285 = vor.u32 %v4282, %v4283
      %v4286 = vsel %vm995, %v4278, %v4285
      %v4287 = vrot.slane %v4282, 4
      %v4289 = vshrl.u32 %v4067, 16
      %v4291 = vrot.slane %v4289, 7
      %v4292 = vshll.u32 %v4067, 16
      %v4294 = vor.u32 %v4291, %v4292
      %v4295 = vsel %vm995, %v4287, %v4294
      %v4296 = vrot.slane %v4291, 4
      %v4298 = vshrl.u32 %v4068, 16
      %v4300 = vrot.slane %v4298, 7
      %v4301 = vshll.u32 %v4068, 16
      %v4303 = vor.u32 %v4300, %v4301
      %v4304 = vsel %vm995, %v4296, %v4303
      %v4305 = vrot.slane %v4300, 4
      %v4307 = vshrl.u32 %v4069, 16
      %v4309 = vrot.slane %v4307, 7
      %v4310 = vshll.u32 %v4069, 16
      %v4312 = vor.u32 %v4309, %v4310
      %v4313 = vsel %vm995, %v4305, %v4312
      %v4314 = vrot.slane %v4309, 4
      %v4316 = vshrl.u32 %v4070, 16
      %v4318 = vrot.slane %v4316, 7
      %v4319 = vshll.u32 %v4070, 16
      %v4321 = vor.u32 %v4318, %v4319
      %v4322 = vsel %vm995, %v4314, %v4321
      %v4323 = vrot.slane %v4318, 4
      %v4325 = vshrl.u32 %v4071, 16
      %v4327 = vrot.slane %v4325, 7
      %v4328 = vshll.u32 %v4071, 16
      %v4330 = vor.u32 %v4327, %v4328
      %v4331 = vsel %vm995, %v4323, %v4330
      %v4332 = vrot.slane %v4327, 4
      %v4334 = vshrl.u32 %v4072, 16
      %v4336 = vrot.slane %v4334, 7
      %v4337 = vshll.u32 %v4072, 16
      %v4339 = vor.u32 %v4336, %v4337
      %v4340 = vsel %vm995, %v4332, %v4339
      %v4341 = vrot.slane %v4336, 4
      %v4343 = vshrl.u32 %v4073, 16
      %v4345 = vrot.slane %v4343, 7
      %v4346 = vshll.u32 %v4073, 16
      %v4348 = vor.u32 %v4345, %v4346
      %v4349 = vsel %vm995, %v4341, %v4348
      %v4350 = vrot.slane %v4345, 4
      %v4352 = vshrl.u32 %v4074, 16
      %v4354 = vrot.slane %v4352, 7
      %v4355 = vshll.u32 %v4074, 16
      %v4357 = vor.u32 %v4354, %v4355
      %v4358 = vsel %vm995, %v4350, %v4357
      %v4359 = vrot.slane %v4354, 4
      %v4361 = vshrl.u32 %v4075, 16
      %v4363 = vrot.slane %v4361, 7
      %v4364 = vshll.u32 %v4075, 16
      %v4366 = vor.u32 %v4363, %v4364
      %v4367 = vsel %vm995, %v4359, %v4366
      %v4368 = vrot.slane %v4363, 4
      %v4370 = vshrl.u32 %v4076, 16
      %v4372 = vrot.slane %v4370, 7
      %v4373 = vshll.u32 %v4076, 16
      %v4375 = vor.u32 %v4372, %v4373
      %v4376 = vsel %vm995, %v4368, %v4375
      %v4377 = vrot.slane %v4372, 4
      %v4379 = vshrl.u32 %v4077, 16
      %v4381 = vrot.slane %v4379, 7
      %v4382 = vshll.u32 %v4077, 16
      %v4384 = vor.u32 %v4381, %v4382
      %v4385 = vsel %vm995, %v4377, %v4384
      %v4386 = vrot.slane %v4381, 4
      %v4388 = vshrl.u32 %v4078, 16
      %v4390 = vrot.slane %v4388, 7
      %v4391 = vshll.u32 %v4078, 16
      %v4393 = vor.u32 %v4390, %v4391
      %v4394 = vsel %vm995, %v4386, %v4393
      %v4395 = vrot.slane %v4390, 4
      %v4397 = vshrl.u32 %v4079, 16
      %v4399 = vrot.slane %v4397, 7
      %v4400 = vshll.u32 %v4079, 16
      %v4402 = vor.u32 %v4399, %v4400
      %v4403 = vsel %vm995, %v4395, %v4402
      %v4404 = vrot.slane %v4399, 4
      %v4406 = vshrl.u32 %v4080, 16
      %v4408 = vrot.slane %v4406, 7
      %v4409 = vshll.u32 %v4080, 16
      %v4411 = vor.u32 %v4408, %v4409
      %v4412 = vsel %vm995, %v4404, %v4411
      %v4413 = vrot.slane %v4408, 4
      %v4415 = vshrl.u32 %v4081, 16
      %v4417 = vrot.slane %v4415, 7
      %v4418 = vshll.u32 %v4081, 16
      %v4420 = vor.u32 %v4417, %v4418
      %v4421 = vsel %vm995, %v4413, %v4420
      %v4422 = vrot.slane %v4417, 4
      %v4424 = vshrl.u32 %v4082, 16
      %v4426 = vrot.slane %v4424, 7
      %v4427 = vshll.u32 %v4082, 16
      %v4429 = vor.u32 %v4426, %v4427
      %v4430 = vsel %vm995, %v4422, %v4429
      %v4431 = vrot.slane %v4426, 4
      %v4433 = vshrl.u32 %v4083, 16
      %v4435 = vrot.slane %v4433, 7
      %v4436 = vshll.u32 %v4083, 16
      %v4438 = vor.u32 %v4435, %v4436
      %v4439 = vsel %vm995, %v4431, %v4438
      %v4440 = vrot.slane %v4435, 4
      %v4442 = vshrl.u32 %v4084, 16
      %v4444 = vrot.slane %v4442, 7
      %v4445 = vshll.u32 %v4084, 16
      %v4447 = vor.u32 %v4444, %v4445
      %v4448 = vsel %vm995, %v4440, %v4447
      %v4449 = vrot.slane %v4444, 4
      %v4451 = vshrl.u32 %v4085, 16
      %v4453 = vrot.slane %v4451, 7
      %v4454 = vshll.u32 %v4085, 16
      %v4456 = vor.u32 %v4453, %v4454
      %v4457 = vsel %vm995, %v4449, %v4456
      %v4458 = vrot.slane %v4453, 4
      %v4460 = vshrl.u32 %v4086, 16
      %v4462 = vrot.slane %v4460, 7
      %v4463 = vshll.u32 %v4086, 16
      %v4465 = vor.u32 %v4462, %v4463
      %v4466 = vsel %vm995, %v4458, %v4465
      %v4467 = vrot.slane %v4462, 4
      %v4469 = vshrl.u32 %v4087, 16
      %v4471 = vrot.slane %v4469, 7
      %v4472 = vshll.u32 %v4087, 16
      %v4474 = vor.u32 %v4471, %v4472
      %v4475 = vsel %vm995, %v4467, %v4474
      %v4476 = vrot.slane %v4471, 4
      %v4478 = vshrl.u32 %v4088, 16
      %v4480 = vrot.slane %v4478, 7
      %v4481 = vshll.u32 %v4088, 16
      %v4483 = vor.u32 %v4480, %v4481
      %v4484 = vsel %vm995, %v4476, %v4483
      %v4485 = vrot.slane %v4480, 4
      %v4487 = vshrl.u32 %v4089, 16
      %v4489 = vrot.slane %v4487, 7
      %v4490 = vshll.u32 %v4089, 16
      %v4492 = vor.u32 %v4489, %v4490
      %v4493 = vsel %vm995, %v4485, %v4492
      %v4494 = vrot.slane %v4489, 4
      %v4496 = vshrl.u32 %v4090, 16
      %v4498 = vrot.slane %v4496, 7
      %v4499 = vshll.u32 %v4090, 16
      %v4501 = vor.u32 %v4498, %v4499
      %v4502 = vsel %vm995, %v4494, %v4501
      %v4503 = vrot.slane %v4498, 4
      %v4505 = vshrl.u32 %v4091, 16
      %v4507 = vrot.slane %v4505, 7
      %v4508 = vshll.u32 %v4091, 16
      %v4510 = vor.u32 %v4507, %v4508
      %v4511 = vsel %vm995, %v4503, %v4510
      %v4512 = vrot.slane %v4507, 4
      %v4514 = vshrl.u32 %v4092, 16
      %v4516 = vrot.slane %v4514, 7
      %v4517 = vshll.u32 %v4092, 16
      %v4519 = vor.u32 %v4516, %v4517
      %v4520 = vsel %vm995, %v4512, %v4519
      %v4521 = vrot.slane %v4516, 4
      %v4523 = vshrl.u32 %v4093, 16
      %v4525 = vrot.slane %v4523, 7
      %v4526 = vshll.u32 %v4093, 16
      %v4528 = vor.u32 %v4525, %v4526
      %v4529 = vsel %vm995, %v4521, %v4528
      %4530 = vrot.lane.b32.xlu0 %v4106, 64
      %v4531 = vpop.permute.xlu0 %4530
      %4532 = vrot.lane.b32.xlu0 %v4115, 64
      %v4533 = vpop.permute.xlu0 %4532
      %4534 = vrot.lane.b32.xlu0 %v4124, 64
      %v4535 = vpop.permute.xlu0 %4534
      %4536 = vrot.lane.b32.xlu0 %v4133, 64
      %v4537 = vpop.permute.xlu0 %4536
      %4538 = vrot.lane.b32.xlu0 %v4142, 64
      %v4539 = vpop.permute.xlu0 %4538
      %4540 = vrot.lane.b32.xlu0 %v4151, 64
      %v4541 = vpop.permute.xlu0 %4540
      %4542 = vrot.lane.b32.xlu0 %v4160, 64
      %v4543 = vpop.permute.xlu0 %4542
      %4544 = vrot.lane.b32.xlu0 %v4169, 64
      %v4545 = vpop.permute.xlu0 %4544
      %4546 = vrot.lane.b32.xlu0 %v4178, 64
      %v4547 = vpop.permute.xlu0 %4546
      %4548 = vrot.lane.b32.xlu0 %v4187, 64
      %v4549 = vpop.permute.xlu0 %4548
      %4550 = vrot.lane.b32.xlu0 %v4196, 64
      %v4551 = vpop.permute.xlu0 %4550
      %4552 = vrot.lane.b32.xlu0 %v4205, 64
      %v4553 = vpop.permute.xlu0 %4552
      %4554 = vrot.lane.b32.xlu0 %v4214, 64
      %v4555 = vpop.permute.xlu0 %4554
      %4556 = vrot.lane.b32.xlu0 %v4223, 64
      %v4557 = vpop.permute.xlu0 %4556
      %4558 = vrot.lane.b32.xlu0 %v4232, 64
      %v4559 = vpop.permute.xlu0 %4558
      %4560 = vrot.lane.b32.xlu0 %v4241, 64
      %v4561 = vpop.permute.xlu0 %4560
      %4562 = vrot.lane.b32.xlu0 %v4250, 64
      %v4563 = vpop.permute.xlu0 %4562
      %4564 = vrot.lane.b32.xlu0 %v4259, 64
      %v4565 = vpop.permute.xlu0 %4564
      %4566 = vrot.lane.b32.xlu0 %v4268, 64
      %v4567 = vpop.permute.xlu0 %4566
      %4568 = vrot.lane.b32.xlu0 %v4277, 64
      %v4569 = vpop.permute.xlu0 %4568
      %4570 = vrot.lane.b32.xlu0 %v4286, 64
      %v4571 = vpop.permute.xlu0 %4570
      %4572 = vrot.lane.b32.xlu0 %v4295, 64
      %v4573 = vpop.permute.xlu0 %4572
      %4574 = vrot.lane.b32.xlu0 %v4304, 64
      %v4575 = vpop.permute.xlu0 %4574
      %4576 = vrot.lane.b32.xlu0 %v4313, 64
      %v4577 = vpop.permute.xlu0 %4576
      %4578 = vrot.lane.b32.xlu0 %v4322, 64
      %v4579 = vpop.permute.xlu0 %4578
      %4580 = vrot.lane.b32.xlu0 %v4331, 64
      %v4581 = vpop.permute.xlu0 %4580
      %4582 = vrot.lane.b32.xlu0 %v4340, 64
      %v4583 = vpop.permute.xlu0 %4582
      %4584 = vrot.lane.b32.xlu0 %v4349, 64
      %v4585 = vpop.permute.xlu0 %4584
      %4586 = vrot.lane.b32.xlu0 %v4358, 64
      %v4587 = vpop.permute.xlu0 %4586
      %4588 = vrot.lane.b32.xlu0 %v4367, 64
      %v4589 = vpop.permute.xlu0 %4588
      %4590 = vrot.lane.b32.xlu0 %v4376, 64
      %v4591 = vpop.permute.xlu0 %4590
      %4592 = vrot.lane.b32.xlu0 %v4385, 64
      %v4593 = vpop.permute.xlu0 %4592
      %4594 = vrot.lane.b32.xlu0 %v4394, 64
      %v4595 = vpop.permute.xlu0 %4594
      %4596 = vrot.lane.b32.xlu0 %v4403, 64
      %v4597 = vpop.permute.xlu0 %4596
      %4598 = vrot.lane.b32.xlu0 %v4412, 64
      %v4599 = vpop.permute.xlu0 %4598
      %4600 = vrot.lane.b32.xlu0 %v4421, 64
      %v4601 = vpop.permute.xlu0 %4600
      %4602 = vrot.lane.b32.xlu0 %v4430, 64
      %v4603 = vpop.permute.xlu0 %4602
      %4604 = vrot.lane.b32.xlu0 %v4439, 64
      %v4605 = vpop.permute.xlu0 %4604
      %4606 = vrot.lane.b32.xlu0 %v4448, 64
      %v4607 = vpop.permute.xlu0 %4606
      %4608 = vrot.lane.b32.xlu0 %v4457, 64
      %v4609 = vpop.permute.xlu0 %4608
      %4610 = vrot.lane.b32.xlu0 %v4466, 64
      %v4611 = vpop.permute.xlu0 %4610
      %4612 = vrot.lane.b32.xlu0 %v4475, 64
      %v4613 = vpop.permute.xlu0 %4612
      %4614 = vrot.lane.b32.xlu0 %v4484, 64
      %v4615 = vpop.permute.xlu0 %4614
      %4616 = vrot.lane.b32.xlu0 %v4493, 64
      %v4617 = vpop.permute.xlu0 %4616
      %4618 = vrot.lane.b32.xlu0 %v4502, 64
      %v4619 = vpop.permute.xlu0 %4618
      %4620 = vrot.lane.b32.xlu0 %v4511, 64
      %v4621 = vpop.permute.xlu0 %4620
      %4622 = vrot.lane.b32.xlu0 %v4520, 64
      %v4623 = vpop.permute.xlu0 %4622
      %4624 = vrot.lane.b32.xlu0 %v4529, 64
      %v4625 = vpop.permute.xlu0 %4624
      %4674 = vst.msk [vmem:[#allocation3 + $0x4] sm:$0xf] %vm2497, %v4531
      %4675 = vst.msk [vmem:[#allocation3 + $0x10] sm:$0xf] %vm2497, %v4533
      %4676 = vst.msk [vmem:[#allocation3 + $0x1c] sm:$0xf] %vm2497, %v4535
      %4677 = vst.msk [vmem:[#allocation3 + $0x28] sm:$0xf] %vm2497, %v4537
      %4678 = vst.msk [vmem:[#allocation3 + $0x34] sm:$0xf] %vm2497, %v4539
      %4679 = vst.msk [vmem:[#allocation3 + $0x40] sm:$0xf] %vm2497, %v4541
      %4680 = vst.msk [vmem:[#allocation3 + $0x4c] sm:$0xf] %vm2497, %v4543
      %4681 = vst.msk [vmem:[#allocation3 + $0x58] sm:$0xf] %vm2497, %v4545
      %4682 = vst.msk [vmem:[#allocation3 + $0x64] sm:$0xf] %vm2497, %v4547
      %4683 = vst.msk [vmem:[#allocation3 + $0x70] sm:$0xf] %vm2497, %v4549
      %4684 = vst.msk [vmem:[#allocation3 + $0x7c] sm:$0xf] %vm2497, %v4551
      %4685 = vst.msk [vmem:[#allocation3 + $0x88] sm:$0xf] %vm2497, %v4553
      %4686 = vst.msk [vmem:[#allocation3 + $0x94] sm:$0xf] %vm2497, %v4555
      %4687 = vst.msk [vmem:[#allocation3 + $0xa0] sm:$0xf] %vm2497, %v4557
      %4688 = vst.msk [vmem:[#allocation3 + $0xac] sm:$0xf] %vm2497, %v4559
      %4689 = vst.msk [vmem:[#allocation3 + $0xb8] sm:$0xf] %vm2497, %v4561
      %4690 = vst.msk [vmem:[#allocation3 + $0xc4] sm:$0xf] %vm2497, %v4563
      %4691 = vst.msk [vmem:[#allocation3 + $0xd0] sm:$0xf] %vm2497, %v4565
      %4692 = vst.msk [vmem:[#allocation3 + $0xdc] sm:$0xf] %vm2497, %v4567
      %4693 = vst.msk [vmem:[#allocation3 + $0xe8] sm:$0xf] %vm2497, %v4569
      %4694 = vst.msk [vmem:[#allocation3 + $0xf4] sm:$0xf] %vm2497, %v4571
      %4695 = vst.msk [vmem:[#allocation3 + $0x100] sm:$0xf] %vm2497, %v4573
      %4696 = vst.msk [vmem:[#allocation3 + $0x10c] sm:$0xf] %vm2497, %v4575
      %4697 = vst.msk [vmem:[#allocation3 + $0x118] sm:$0xf] %vm2497, %v4577
      %4698 = vst.msk [vmem:[#allocation3 + $0x124] sm:$0xf] %vm2497, %v4579
      %4699 = vst.msk [vmem:[#allocation3 + $0x130] sm:$0xf] %vm2497, %v4581
      %4700 = vst.msk [vmem:[#allocation3 + $0x13c] sm:$0xf] %vm2497, %v4583
      %4701 = vst.msk [vmem:[#allocation3 + $0x148] sm:$0xf] %vm2497, %v4585
      %4702 = vst.msk [vmem:[#allocation3 + $0x154] sm:$0xf] %vm2497, %v4587
      %4703 = vst.msk [vmem:[#allocation3 + $0x160] sm:$0xf] %vm2497, %v4589
      %4704 = vst.msk [vmem:[#allocation3 + $0x16c] sm:$0xf] %vm2497, %v4591
      %4705 = vst.msk [vmem:[#allocation3 + $0x178] sm:$0xf] %vm2497, %v4593
      %4706 = vst.msk [vmem:[#allocation3 + $0x184] sm:$0xf] %vm2497, %v4595
      %4707 = vst.msk [vmem:[#allocation3 + $0x190] sm:$0xf] %vm2497, %v4597
      %4708 = vst.msk [vmem:[#allocation3 + $0x19c] sm:$0xf] %vm2497, %v4599
      %4709 = vst.msk [vmem:[#allocation3 + $0x1a8] sm:$0xf] %vm2497, %v4601
      %4710 = vst.msk [vmem:[#allocation3 + $0x1b4] sm:$0xf] %vm2497, %v4603
      %4711 = vst.msk [vmem:[#allocation3 + $0x1c0] sm:$0xf] %vm2497, %v4605
      %4712 = vst.msk [vmem:[#allocation3 + $0x1cc] sm:$0xf] %vm2497, %v4607
      %4713 = vst.msk [vmem:[#allocation3 + $0x1d8] sm:$0xf] %vm2497, %v4609
      %4714 = vst.msk [vmem:[#allocation3 + $0x1e4] sm:$0xf] %vm2497, %v4611
      %4715 = vst.msk [vmem:[#allocation3 + $0x1f0] sm:$0xf] %vm2497, %v4613
      %4716 = vst.msk [vmem:[#allocation3 + $0x1fc] sm:$0xf] %vm2497, %v4615
      %4717 = vst.msk [vmem:[#allocation3 + $0x208] sm:$0xf] %vm2497, %v4617
      %4718 = vst.msk [vmem:[#allocation3 + $0x214] sm:$0xf] %vm2497, %v4619
      %4719 = vst.msk [vmem:[#allocation3 + $0x220] sm:$0xf] %vm2497, %v4621
      %4720 = vst.msk [vmem:[#allocation3 + $0x22c] sm:$0xf] %vm2497, %v4623
      %4721 = vst.msk [vmem:[#allocation3 + $0x238] sm:$0xf] %vm2497, %v4625
      %v4722 = vld [vmem:[#allocation2 + $0x1c] sm:$0xf]
      %v4723 = vld [vmem:[#allocation2 + $0x20] sm:$0xf]
      %v4724 = vld [vmem:[#allocation2 + $0x24] sm:$0xf]
      %v4725 = vld [vmem:[#allocation2 + $0x28] sm:$0xf]
      %v4726 = vld [vmem:[#allocation2 + $0x2c] sm:$0xf]
      %v4727 = vld [vmem:[#allocation2 + $0x30] sm:$0xf]
      %v4728 = vld [vmem:[#allocation2 + $0x34] sm:$0xf]
      %v4729 = vld [vmem:[#allocation2 + $0x38] sm:$0xf]
      %v4730 = vld [vmem:[#allocation2 + $0x3c] sm:$0xf]
      %v4731 = vld [vmem:[#allocation2 + $0x40] sm:$0xf]
      %v4732 = vld [vmem:[#allocation2 + $0x44] sm:$0xf]
      %v4733 = vld [vmem:[#allocation2 + $0x48] sm:$0xf]
      %v4734 = vld [vmem:[#allocation2 + $0x4c] sm:$0xf]
      %v4735 = vld [vmem:[#allocation2 + $0x50] sm:$0xf]
      %v4736 = vld [vmem:[#allocation2 + $0x54] sm:$0xf]
      %v4737 = vld [vmem:[#allocation2 + $0x58] sm:$0xf]
      %v4738 = vld [vmem:[#allocation2 + $0x5c] sm:$0xf]
      %v4739 = vld [vmem:[#allocation2 + $0x60] sm:$0xf]
      %v4740 = vld [vmem:[#allocation2 + $0x64] sm:$0xf]
      %v4741 = vld [vmem:[#allocation2 + $0x68] sm:$0xf]
      %v4742 = vld [vmem:[#allocation2 + $0x6c] sm:$0xf]
      %v4743 = vld [vmem:[#allocation2 + $0x70] sm:$0xf]
      %v4744 = vld [vmem:[#allocation2 + $0x74] sm:$0xf]
      %v4745 = vld [vmem:[#allocation2 + $0x78] sm:$0xf]
      %v4746 = vld [vmem:[#allocation2 + $0x7c] sm:$0xf]
      %v4747 = vld [vmem:[#allocation2 + $0x80] sm:$0xf]
      %v4748 = vld [vmem:[#allocation2 + $0x84] sm:$0xf]
      %v4749 = vld [vmem:[#allocation2 + $0x88] sm:$0xf]
      %v4750 = vld [vmem:[#allocation2 + $0x8c] sm:$0xf]
      %v4751 = vld [vmem:[#allocation2 + $0x90] sm:$0xf]
      %v4752 = vld [vmem:[#allocation2 + $0x94] sm:$0xf]
      %v4753 = vld [vmem:[#allocation2 + $0x98] sm:$0xf]
      %v4754 = vld [vmem:[#allocation2 + $0x9c] sm:$0xf]
      %v4755 = vld [vmem:[#allocation2 + $0xa0] sm:$0xf]
      %v4756 = vld [vmem:[#allocation2 + $0xa4] sm:$0xf]
      %v4757 = vld [vmem:[#allocation2 + $0xa8] sm:$0xf]
      %v4758 = vld [vmem:[#allocation2 + $0xac] sm:$0xf]
      %v4759 = vld [vmem:[#allocation2 + $0xb0] sm:$0xf]
      %v4760 = vld [vmem:[#allocation2 + $0xb4] sm:$0xf]
      %v4761 = vld [vmem:[#allocation2 + $0xb8] sm:$0xf]
      %v4762 = vld [vmem:[#allocation2 + $0xbc] sm:$0xf]
      %v4763 = vld [vmem:[#allocation2 + $0xc0] sm:$0xf]
      %v4764 = vld [vmem:[#allocation2 + $0xc4] sm:$0xf]
      %v4765 = vld [vmem:[#allocation2 + $0xc8] sm:$0xf]
      %v4766 = vld [vmem:[#allocation2 + $0xcc] sm:$0xf]
      %v4767 = vld [vmem:[#allocation2 + $0xd0] sm:$0xf]
      %v4768 = vld [vmem:[#allocation2 + $0xd4] sm:$0xf]
      %v4769 = vld [vmem:[#allocation2 + $0xd8] sm:$0xf]
      %4818 = vrot.lane.b32.xlu0 %v4722, 96
      %v4819 = vpop.permute.xlu0 %4818
      %4820 = vrot.lane.b32.xlu0 %v4723, 96
      %v4821 = vpop.permute.xlu0 %4820
      %4822 = vrot.lane.b32.xlu0 %v4724, 96
      %v4823 = vpop.permute.xlu0 %4822
      %4824 = vrot.lane.b32.xlu0 %v4725, 96
      %v4825 = vpop.permute.xlu0 %4824
      %4826 = vrot.lane.b32.xlu0 %v4726, 96
      %v4827 = vpop.permute.xlu0 %4826
      %4828 = vrot.lane.b32.xlu0 %v4727, 96
      %v4829 = vpop.permute.xlu0 %4828
      %4830 = vrot.lane.b32.xlu0 %v4728, 96
      %v4831 = vpop.permute.xlu0 %4830
      %4832 = vrot.lane.b32.xlu0 %v4729, 96
      %v4833 = vpop.permute.xlu0 %4832
      %4834 = vrot.lane.b32.xlu0 %v4730, 96
      %v4835 = vpop.permute.xlu0 %4834
      %4836 = vrot.lane.b32.xlu0 %v4731, 96
      %v4837 = vpop.permute.xlu0 %4836
      %4838 = vrot.lane.b32.xlu0 %v4732, 96
      %v4839 = vpop.permute.xlu0 %4838
      %4840 = vrot.lane.b32.xlu0 %v4733, 96
      %v4841 = vpop.permute.xlu0 %4840
      %4842 = vrot.lane.b32.xlu0 %v4734, 96
      %v4843 = vpop.permute.xlu0 %4842
      %4844 = vrot.lane.b32.xlu0 %v4735, 96
      %v4845 = vpop.permute.xlu0 %4844
      %4846 = vrot.lane.b32.xlu0 %v4736, 96
      %v4847 = vpop.permute.xlu0 %4846
      %4848 = vrot.lane.b32.xlu0 %v4737, 96
      %v4849 = vpop.permute.xlu0 %4848
      %4850 = vrot.lane.b32.xlu0 %v4738, 96
      %v4851 = vpop.permute.xlu0 %4850
      %4852 = vrot.lane.b32.xlu0 %v4739, 96
      %v4853 = vpop.permute.xlu0 %4852
      %4854 = vrot.lane.b32.xlu0 %v4740, 96
      %v4855 = vpop.permute.xlu0 %4854
      %4856 = vrot.lane.b32.xlu0 %v4741, 96
      %v4857 = vpop.permute.xlu0 %4856
      %4858 = vrot.lane.b32.xlu0 %v4742, 96
      %v4859 = vpop.permute.xlu0 %4858
      %4860 = vrot.lane.b32.xlu0 %v4743, 96
      %v4861 = vpop.permute.xlu0 %4860
      %4862 = vrot.lane.b32.xlu0 %v4744, 96
      %v4863 = vpop.permute.xlu0 %4862
      %4864 = vrot.lane.b32.xlu0 %v4745, 96
      %v4865 = vpop.permute.xlu0 %4864
      %4866 = vrot.lane.b32.xlu0 %v4746, 96
      %v4867 = vpop.permute.xlu0 %4866
      %4868 = vrot.lane.b32.xlu0 %v4747, 96
      %v4869 = vpop.permute.xlu0 %4868
      %4870 = vrot.lane.b32.xlu0 %v4748, 96
      %v4871 = vpop.permute.xlu0 %4870
      %4872 = vrot.lane.b32.xlu0 %v4749, 96
      %v4873 = vpop.permute.xlu0 %4872
      %4874 = vrot.lane.b32.xlu0 %v4750, 96
      %v4875 = vpop.permute.xlu0 %4874
      %4876 = vrot.lane.b32.xlu0 %v4751, 96
      %v4877 = vpop.permute.xlu0 %4876
      %4878 = vrot.lane.b32.xlu0 %v4752, 96
      %v4879 = vpop.permute.xlu0 %4878
      %4880 = vrot.lane.b32.xlu0 %v4753, 96
      %v4881 = vpop.permute.xlu0 %4880
      %4882 = vrot.lane.b32.xlu0 %v4754, 96
      %v4883 = vpop.permute.xlu0 %4882
      %4884 = vrot.lane.b32.xlu0 %v4755, 96
      %v4885 = vpop.permute.xlu0 %4884
      %4886 = vrot.lane.b32.xlu0 %v4756, 96
      %v4887 = vpop.permute.xlu0 %4886
      %4888 = vrot.lane.b32.xlu0 %v4757, 96
      %v4889 = vpop.permute.xlu0 %4888
      %4890 = vrot.lane.b32.xlu0 %v4758, 96
      %v4891 = vpop.permute.xlu0 %4890
      %4892 = vrot.lane.b32.xlu0 %v4759, 96
      %v4893 = vpop.permute.xlu0 %4892
      %4894 = vrot.lane.b32.xlu0 %v4760, 96
      %v4895 = vpop.permute.xlu0 %4894
      %4896 = vrot.lane.b32.xlu0 %v4761, 96
      %v4897 = vpop.permute.xlu0 %4896
      %4898 = vrot.lane.b32.xlu0 %v4762, 96
      %v4899 = vpop.permute.xlu0 %4898
      %4900 = vrot.lane.b32.xlu0 %v4763, 96
      %v4901 = vpop.permute.xlu0 %4900
      %4902 = vrot.lane.b32.xlu0 %v4764, 96
      %v4903 = vpop.permute.xlu0 %4902
      %4904 = vrot.lane.b32.xlu0 %v4765, 96
      %v4905 = vpop.permute.xlu0 %4904
      %4906 = vrot.lane.b32.xlu0 %v4766, 96
      %v4907 = vpop.permute.xlu0 %4906
      %4908 = vrot.lane.b32.xlu0 %v4767, 96
      %v4909 = vpop.permute.xlu0 %4908
      %4910 = vrot.lane.b32.xlu0 %v4768, 96
      %v4911 = vpop.permute.xlu0 %4910
      %4912 = vrot.lane.b32.xlu0 %v4769, 96
      %v4913 = vpop.permute.xlu0 %4912
      %4962 = vst.msk [vmem:[#allocation3 + $0x4] sm:$0xf] %vm3175, %v4819
      %4963 = vst.msk [vmem:[#allocation3 + $0x10] sm:$0xf] %vm3175, %v4821
      %4964 = vst.msk [vmem:[#allocation3 + $0x1c] sm:$0xf] %vm3175, %v4823
      %4965 = vst.msk [vmem:[#allocation3 + $0x28] sm:$0xf] %vm3175, %v4825
      %4966 = vst.msk [vmem:[#allocation3 + $0x34] sm:$0xf] %vm3175, %v4827
      %4967 = vst.msk [vmem:[#allocation3 + $0x40] sm:$0xf] %vm3175, %v4829
      %4968 = vst.msk [vmem:[#allocation3 + $0x4c] sm:$0xf] %vm3175, %v4831
      %4969 = vst.msk [vmem:[#allocation3 + $0x58] sm:$0xf] %vm3175, %v4833
      %4970 = vst.msk [vmem:[#allocation3 + $0x64] sm:$0xf] %vm3175, %v4835
      %4971 = vst.msk [vmem:[#allocation3 + $0x70] sm:$0xf] %vm3175, %v4837
      %4972 = vst.msk [vmem:[#allocation3 + $0x7c] sm:$0xf] %vm3175, %v4839
      %4973 = vst.msk [vmem:[#allocation3 + $0x88] sm:$0xf] %vm3175, %v4841
      %4974 = vst.msk [vmem:[#allocation3 + $0x94] sm:$0xf] %vm3175, %v4843
      %4975 = vst.msk [vmem:[#allocation3 + $0xa0] sm:$0xf] %vm3175, %v4845
      %4976 = vst.msk [vmem:[#allocation3 + $0xac] sm:$0xf] %vm3175, %v4847
      %4977 = vst.msk [vmem:[#allocation3 + $0xb8] sm:$0xf] %vm3175, %v4849
      %4978 = vst.msk [vmem:[#allocation3 + $0xc4] sm:$0xf] %vm3175, %v4851
      %4979 = vst.msk [vmem:[#allocation3 + $0xd0] sm:$0xf] %vm3175, %v4853
      %4980 = vst.msk [vmem:[#allocation3 + $0xdc] sm:$0xf] %vm3175, %v4855
      %4981 = vst.msk [vmem:[#allocation3 + $0xe8] sm:$0xf] %vm3175, %v4857
      %4982 = vst.msk [vmem:[#allocation3 + $0xf4] sm:$0xf] %vm3175, %v4859
      %4983 = vst.msk [vmem:[#allocation3 + $0x100] sm:$0xf] %vm3175, %v4861
      %4984 = vst.msk [vmem:[#allocation3 + $0x10c] sm:$0xf] %vm3175, %v4863
      %4985 = vst.msk [vmem:[#allocation3 + $0x118] sm:$0xf] %vm3175, %v4865
      %4986 = vst.msk [vmem:[#allocation3 + $0x124] sm:$0xf] %vm3175, %v4867
      %4987 = vst.msk [vmem:[#allocation3 + $0x130] sm:$0xf] %vm3175, %v4869
      %4988 = vst.msk [vmem:[#allocation3 + $0x13c] sm:$0xf] %vm3175, %v4871
      %4989 = vst.msk [vmem:[#allocation3 + $0x148] sm:$0xf] %vm3175, %v4873
      %4990 = vst.msk [vmem:[#allocation3 + $0x154] sm:$0xf] %vm3175, %v4875
      %4991 = vst.msk [vmem:[#allocation3 + $0x160] sm:$0xf] %vm3175, %v4877
      %4992 = vst.msk [vmem:[#allocation3 + $0x16c] sm:$0xf] %vm3175, %v4879
      %4993 = vst.msk [vmem:[#allocation3 + $0x178] sm:$0xf] %vm3175, %v4881
      %4994 = vst.msk [vmem:[#allocation3 + $0x184] sm:$0xf] %vm3175, %v4883
      %4995 = vst.msk [vmem:[#allocation3 + $0x190] sm:$0xf] %vm3175, %v4885
      %4996 = vst.msk [vmem:[#allocation3 + $0x19c] sm:$0xf] %vm3175, %v4887
      %4997 = vst.msk [vmem:[#allocation3 + $0x1a8] sm:$0xf] %vm3175, %v4889
      %4998 = vst.msk [vmem:[#allocation3 + $0x1b4] sm:$0xf] %vm3175, %v4891
      %4999 = vst.msk [vmem:[#allocation3 + $0x1c0] sm:$0xf] %vm3175, %v4893
      %5000 = vst.msk [vmem:[#allocation3 + $0x1cc] sm:$0xf] %vm3175, %v4895
      %5001 = vst.msk [vmem:[#allocation3 + $0x1d8] sm:$0xf] %vm3175, %v4897
      %5002 = vst.msk [vmem:[#allocation3 + $0x1e4] sm:$0xf] %vm3175, %v4899
      %5003 = vst.msk [vmem:[#allocation3 + $0x1f0] sm:$0xf] %vm3175, %v4901
      %5004 = vst.msk [vmem:[#allocation3 + $0x1fc] sm:$0xf] %vm3175, %v4903
      %5005 = vst.msk [vmem:[#allocation3 + $0x208] sm:$0xf] %vm3175, %v4905
      %5006 = vst.msk [vmem:[#allocation3 + $0x214] sm:$0xf] %vm3175, %v4907
      %5007 = vst.msk [vmem:[#allocation3 + $0x220] sm:$0xf] %vm3175, %v4909
      %5008 = vst.msk [vmem:[#allocation3 + $0x22c] sm:$0xf] %vm3175, %v4911
      %5009 = vst.msk [vmem:[#allocation3 + $0x238] sm:$0xf] %vm3175, %v4913
      %v5010 = vld [vmem:[#allocation2 + $0x1c] sm:$0xf]
      %v5011 = vld [vmem:[#allocation2 + $0x20] sm:$0xf]
      %v5012 = vld [vmem:[#allocation2 + $0x24] sm:$0xf]
      %v5013 = vld [vmem:[#allocation2 + $0x28] sm:$0xf]
      %v5014 = vld [vmem:[#allocation2 + $0x2c] sm:$0xf]
      %v5015 = vld [vmem:[#allocation2 + $0x30] sm:$0xf]
      %v5016 = vld [vmem:[#allocation2 + $0x34] sm:$0xf]
      %v5017 = vld [vmem:[#allocation2 + $0x38] sm:$0xf]
      %v5018 = vld [vmem:[#allocation2 + $0x3c] sm:$0xf]
      %v5019 = vld [vmem:[#allocation2 + $0x40] sm:$0xf]
      %v5020 = vld [vmem:[#allocation2 + $0x44] sm:$0xf]
      %v5021 = vld [vmem:[#allocation2 + $0x48] sm:$0xf]
      %v5022 = vld [vmem:[#allocation2 + $0x4c] sm:$0xf]
      %v5023 = vld [vmem:[#allocation2 + $0x50] sm:$0xf]
      %v5024 = vld [vmem:[#allocation2 + $0x54] sm:$0xf]
      %v5025 = vld [vmem:[#allocation2 + $0x58] sm:$0xf]
      %v5026 = vld [vmem:[#allocation2 + $0x5c] sm:$0xf]
      %v5027 = vld [vmem:[#allocation2 + $0x60] sm:$0xf]
      %v5028 = vld [vmem:[#allocation2 + $0x64] sm:$0xf]
      %v5029 = vld [vmem:[#allocation2 + $0x68] sm:$0xf]
      %v5030 = vld [vmem:[#allocation2 + $0x6c] sm:$0xf]
      %v5031 = vld [vmem:[#allocation2 + $0x70] sm:$0xf]
      %v5032 = vld [vmem:[#allocation2 + $0x74] sm:$0xf]
      %v5033 = vld [vmem:[#allocation2 + $0x78] sm:$0xf]
      %v5034 = vld [vmem:[#allocation2 + $0x7c] sm:$0xf]
      %v5035 = vld [vmem:[#allocation2 + $0x80] sm:$0xf]
      %v5036 = vld [vmem:[#allocation2 + $0x84] sm:$0xf]
      %v5037 = vld [vmem:[#allocation2 + $0x88] sm:$0xf]
      %v5038 = vld [vmem:[#allocation2 + $0x8c] sm:$0xf]
      %v5039 = vld [vmem:[#allocation2 + $0x90] sm:$0xf]
      %v5040 = vld [vmem:[#allocation2 + $0x94] sm:$0xf]
      %v5041 = vld [vmem:[#allocation2 + $0x98] sm:$0xf]
      %v5042 = vld [vmem:[#allocation2 + $0x9c] sm:$0xf]
      %v5043 = vld [vmem:[#allocation2 + $0xa0] sm:$0xf]
      %v5044 = vld [vmem:[#allocation2 + $0xa4] sm:$0xf]
      %v5045 = vld [vmem:[#allocation2 + $0xa8] sm:$0xf]
      %v5046 = vld [vmem:[#allocation2 + $0xac] sm:$0xf]
      %v5047 = vld [vmem:[#allocation2 + $0xb0] sm:$0xf]
      %v5048 = vld [vmem:[#allocation2 + $0xb4] sm:$0xf]
      %v5049 = vld [vmem:[#allocation2 + $0xb8] sm:$0xf]
      %v5050 = vld [vmem:[#allocation2 + $0xbc] sm:$0xf]
      %v5051 = vld [vmem:[#allocation2 + $0xc0] sm:$0xf]
      %v5052 = vld [vmem:[#allocation2 + $0xc4] sm:$0xf]
      %v5053 = vld [vmem:[#allocation2 + $0xc8] sm:$0xf]
      %v5054 = vld [vmem:[#allocation2 + $0xcc] sm:$0xf]
      %v5055 = vld [vmem:[#allocation2 + $0xd0] sm:$0xf]
      %v5056 = vld [vmem:[#allocation2 + $0xd4] sm:$0xf]
      %v5057 = vld [vmem:[#allocation2 + $0xd8] sm:$0xf]
      %v5058 = vld [vmem:[#allocation2 + $0xdc] sm:$0x1]
      %v5060 = vshrl.u32 %v5010, 16
      %v5062 = vrot.slane %v5060, 4
      %v5063 = vshll.u32 %v5010, 16
      %v5065 = vrot.slane %v5063, 5
      %v5066 = vor.u32 %v5062, %v5065
      %v5067 = vrot.slane %v5066, 4
      %v5069 = vshll.u32 %v5011, 16
      %v5071 = vrot.slane %v5069, 5
      %v5072 = vsel %vm1868, %v5067, %v5071
      %v5073 = vshrl.u32 %v5011, 16
      %v5075 = vrot.slane %v5073, 4
      %v5076 = vor.u32 %v5075, %v5071
      %v5077 = vrot.slane %v5076, 4
      %v5079 = vshll.u32 %v5012, 16
      %v5081 = vrot.slane %v5079, 5
      %v5082 = vsel %vm1868, %v5077, %v5081
      %v5083 = vshrl.u32 %v5012, 16
      %v5085 = vrot.slane %v5083, 4
      %v5086 = vor.u32 %v5085, %v5081
      %v5087 = vrot.slane %v5086, 4
      %v5089 = vshll.u32 %v5013, 16
      %v5091 = vrot.slane %v5089, 5
      %v5092 = vsel %vm1868, %v5087, %v5091
      %v5093 = vshrl.u32 %v5013, 16
      %v5095 = vrot.slane %v5093, 4
      %v5096 = vor.u32 %v5095, %v5091
      %v5097 = vrot.slane %v5096, 4
      %v5099 = vshll.u32 %v5014, 16
      %v5101 = vrot.slane %v5099, 5
      %v5102 = vsel %vm1868, %v5097, %v5101
      %v5103 = vshrl.u32 %v5014, 16
      %v5105 = vrot.slane %v5103, 4
      %v5106 = vor.u32 %v5105, %v5101
      %v5107 = vrot.slane %v5106, 4
      %v5109 = vshll.u32 %v5015, 16
      %v5111 = vrot.slane %v5109, 5
      %v5112 = vsel %vm1868, %v5107, %v5111
      %v5113 = vshrl.u32 %v5015, 16
      %v5115 = vrot.slane %v5113, 4
      %v5116 = vor.u32 %v5115, %v5111
      %v5117 = vrot.slane %v5116, 4
      %v5119 = vshll.u32 %v5016, 16
      %v5121 = vrot.slane %v5119, 5
      %v5122 = vsel %vm1868, %v5117, %v5121
      %v5123 = vshrl.u32 %v5016, 16
      %v5125 = vrot.slane %v5123, 4
      %v5126 = vor.u32 %v5125, %v5121
      %v5127 = vrot.slane %v5126, 4
      %v5129 = vshll.u32 %v5017, 16
      %v5131 = vrot.slane %v5129, 5
      %v5132 = vsel %vm1868, %v5127, %v5131
      %v5133 = vshrl.u32 %v5017, 16
      %v5135 = vrot.slane %v5133, 4
      %v5136 = vor.u32 %v5135, %v5131
      %v5137 = vrot.slane %v5136, 4
      %v5139 = vshll.u32 %v5018, 16
      %v5141 = vrot.slane %v5139, 5
      %v5142 = vsel %vm1868, %v5137, %v5141
      %v5143 = vshrl.u32 %v5018, 16
      %v5145 = vrot.slane %v5143, 4
      %v5146 = vor.u32 %v5145, %v5141
      %v5147 = vrot.slane %v5146, 4
      %v5149 = vshll.u32 %v5019, 16
      %v5151 = vrot.slane %v5149, 5
      %v5152 = vsel %vm1868, %v5147, %v5151
      %v5153 = vshrl.u32 %v5019, 16
      %v5155 = vrot.slane %v5153, 4
      %v5156 = vor.u32 %v5155, %v5151
      %v5157 = vrot.slane %v5156, 4
      %v5159 = vshll.u32 %v5020, 16
      %v5161 = vrot.slane %v5159, 5
      %v5162 = vsel %vm1868, %v5157, %v5161
      %v5163 = vshrl.u32 %v5020, 16
      %v5165 = vrot.slane %v5163, 4
      %v5166 = vor.u32 %v5165, %v5161
      %v5167 = vrot.slane %v5166, 4
      %v5169 = vshll.u32 %v5021, 16
      %v5171 = vrot.slane %v5169, 5
      %v5172 = vsel %vm1868, %v5167, %v5171
      %v5173 = vshrl.u32 %v5021, 16
      %v5175 = vrot.slane %v5173, 4
      %v5176 = vor.u32 %v5175, %v5171
      %v5177 = vrot.slane %v5176, 4
      %v5179 = vshll.u32 %v5022, 16
      %v5181 = vrot.slane %v5179, 5
      %v5182 = vsel %vm1868, %v5177, %v5181
      %v5183 = vshrl.u32 %v5022, 16
      %v5185 = vrot.slane %v5183, 4
      %v5186 = vor.u32 %v5185, %v5181
      %v5187 = vrot.slane %v5186, 4
      %v5189 = vshll.u32 %v5023, 16
      %v5191 = vrot.slane %v5189, 5
      %v5192 = vsel %vm1868, %v5187, %v5191
      %v5193 = vshrl.u32 %v5023, 16
      %v5195 = vrot.slane %v5193, 4
      %v5196 = vor.u32 %v5195, %v5191
      %v5197 = vrot.slane %v5196, 4
      %v5199 = vshll.u32 %v5024, 16
      %v5201 = vrot.slane %v5199, 5
      %v5202 = vsel %vm1868, %v5197, %v5201
      %v5203 = vshrl.u32 %v5024, 16
      %v5205 = vrot.slane %v5203, 4
      %v5206 = vor.u32 %v5205, %v5201
      %v5207 = vrot.slane %v5206, 4
      %v5209 = vshll.u32 %v5025, 16
      %v5211 = vrot.slane %v5209, 5
      %v5212 = vsel %vm1868, %v5207, %v5211
      %v5213 = vshrl.u32 %v5025, 16
      %v5215 = vrot.slane %v5213, 4
      %v5216 = vor.u32 %v5215, %v5211
      %v5217 = vrot.slane %v5216, 4
      %v5219 = vshll.u32 %v5026, 16
      %v5221 = vrot.slane %v5219, 5
      %v5222 = vsel %vm1868, %v5217, %v5221
      %v5223 = vshrl.u32 %v5026, 16
      %v5225 = vrot.slane %v5223, 4
      %v5226 = vor.u32 %v5225, %v5221
      %v5227 = vrot.slane %v5226, 4
      %v5229 = vshll.u32 %v5027, 16
      %v5231 = vrot.slane %v5229, 5
      %v5232 = vsel %vm1868, %v5227, %v5231
      %v5233 = vshrl.u32 %v5027, 16
      %v5235 = vrot.slane %v5233, 4
      %v5236 = vor.u32 %v5235, %v5231
      %v5237 = vrot.slane %v5236, 4
      %v5239 = vshll.u32 %v5028, 16
      %v5241 = vrot.slane %v5239, 5
      %v5242 = vsel %vm1868, %v5237, %v5241
      %v5243 = vshrl.u32 %v5028, 16
      %v5245 = vrot.slane %v5243, 4
      %v5246 = vor.u32 %v5245, %v5241
      %v5247 = vrot.slane %v5246, 4
      %v5249 = vshll.u32 %v5029, 16
      %v5251 = vrot.slane %v5249, 5
      %v5252 = vsel %vm1868, %v5247, %v5251
      %v5253 = vshrl.u32 %v5029, 16
      %v5255 = vrot.slane %v5253, 4
      %v5256 = vor.u32 %v5255, %v5251
      %v5257 = vrot.slane %v5256, 4
      %v5259 = vshll.u32 %v5030, 16
      %v5261 = vrot.slane %v5259, 5
      %v5262 = vsel %vm1868, %v5257, %v5261
      %v5263 = vshrl.u32 %v5030, 16
      %v5265 = vrot.slane %v5263, 4
      %v5266 = vor.u32 %v5265, %v5261
      %v5267 = vrot.slane %v5266, 4
      %v5269 = vshll.u32 %v5031, 16
      %v5271 = vrot.slane %v5269, 5
      %v5272 = vsel %vm1868, %v5267, %v5271
      %v5273 = vshrl.u32 %v5031, 16
      %v5275 = vrot.slane %v5273, 4
      %v5276 = vor.u32 %v5275, %v5271
      %v5277 = vrot.slane %v5276, 4
      %v5279 = vshll.u32 %v5032, 16
      %v5281 = vrot.slane %v5279, 5
      %v5282 = vsel %vm1868, %v5277, %v5281
      %v5283 = vshrl.u32 %v5032, 16
      %v5285 = vrot.slane %v5283, 4
      %v5286 = vor.u32 %v5285, %v5281
      %v5287 = vrot.slane %v5286, 4
      %v5289 = vshll.u32 %v5033, 16
      %v5291 = vrot.slane %v5289, 5
      %v5292 = vsel %vm1868, %v5287, %v5291
      %v5293 = vshrl.u32 %v5033, 16
      %v5295 = vrot.slane %v5293, 4
      %v5296 = vor.u32 %v5295, %v5291
      %v5297 = vrot.slane %v5296, 4
      %v5299 = vshll.u32 %v5034, 16
      %v5301 = vrot.slane %v5299, 5
      %v5302 = vsel %vm1868, %v5297, %v5301
      %v5303 = vshrl.u32 %v5034, 16
      %v5305 = vrot.slane %v5303, 4
      %v5306 = vor.u32 %v5305, %v5301
      %v5307 = vrot.slane %v5306, 4
      %v5309 = vshll.u32 %v5035, 16
      %v5311 = vrot.slane %v5309, 5
      %v5312 = vsel %vm1868, %v5307, %v5311
      %v5313 = vshrl.u32 %v5035, 16
      %v5315 = vrot.slane %v5313, 4
      %v5316 = vor.u32 %v5315, %v5311
      %v5317 = vrot.slane %v5316, 4
      %v5319 = vshll.u32 %v5036, 16
      %v5321 = vrot.slane %v5319, 5
      %v5322 = vsel %vm1868, %v5317, %v5321
      %v5323 = vshrl.u32 %v5036, 16
      %v5325 = vrot.slane %v5323, 4
      %v5326 = vor.u32 %v5325, %v5321
      %v5327 = vrot.slane %v5326, 4
      %v5329 = vshll.u32 %v5037, 16
      %v5331 = vrot.slane %v5329, 5
      %v5332 = vsel %vm1868, %v5327, %v5331
      %v5333 = vshrl.u32 %v5037, 16
      %v5335 = vrot.slane %v5333, 4
      %v5336 = vor.u32 %v5335, %v5331
      %v5337 = vrot.slane %v5336, 4
      %v5339 = vshll.u32 %v5038, 16
      %v5341 = vrot.slane %v5339, 5
      %v5342 = vsel %vm1868, %v5337, %v5341
      %v5343 = vshrl.u32 %v5038, 16
      %v5345 = vrot.slane %v5343, 4
      %v5346 = vor.u32 %v5345, %v5341
      %v5347 = vrot.slane %v5346, 4
      %v5349 = vshll.u32 %v5039, 16
      %v5351 = vrot.slane %v5349, 5
      %v5352 = vsel %vm1868, %v5347, %v5351
      %v5353 = vshrl.u32 %v5039, 16
      %v5355 = vrot.slane %v5353, 4
      %v5356 = vor.u32 %v5355, %v5351
      %v5357 = vrot.slane %v5356, 4
      %v5359 = vshll.u32 %v5040, 16
      %v5361 = vrot.slane %v5359, 5
      %v5362 = vsel %vm1868, %v5357, %v5361
      %v5363 = vshrl.u32 %v5040, 16
      %v5365 = vrot.slane %v5363, 4
      %v5366 = vor.u32 %v5365, %v5361
      %v5367 = vrot.slane %v5366, 4
      %v5369 = vshll.u32 %v5041, 16
      %v5371 = vrot.slane %v5369, 5
      %v5372 = vsel %vm1868, %v5367, %v5371
      %v5373 = vshrl.u32 %v5041, 16
      %v5375 = vrot.slane %v5373, 4
      %v5376 = vor.u32 %v5375, %v5371
      %v5377 = vrot.slane %v5376, 4
      %v5379 = vshll.u32 %v5042, 16
      %v5381 = vrot.slane %v5379, 5
      %v5382 = vsel %vm1868, %v5377, %v5381
      %v5383 = vshrl.u32 %v5042, 16
      %v5385 = vrot.slane %v5383, 4
      %v5386 = vor.u32 %v5385, %v5381
      %v5387 = vrot.slane %v5386, 4
      %v5389 = vshll.u32 %v5043, 16
      %v5391 = vrot.slane %v5389, 5
      %v5392 = vsel %vm1868, %v5387, %v5391
      %v5393 = vshrl.u32 %v5043, 16
      %v5395 = vrot.slane %v5393, 4
      %v5396 = vor.u32 %v5395, %v5391
      %v5397 = vrot.slane %v5396, 4
      %v5399 = vshll.u32 %v5044, 16
      %v5401 = vrot.slane %v5399, 5
      %v5402 = vsel %vm1868, %v5397, %v5401
      %v5403 = vshrl.u32 %v5044, 16
      %v5405 = vrot.slane %v5403, 4
      %v5406 = vor.u32 %v5405, %v5401
      %v5407 = vrot.slane %v5406, 4
      %v5409 = vshll.u32 %v5045, 16
      %v5411 = vrot.slane %v5409, 5
      %v5412 = vsel %vm1868, %v5407, %v5411
      %v5413 = vshrl.u32 %v5045, 16
      %v5415 = vrot.slane %v5413, 4
      %v5416 = vor.u32 %v5415, %v5411
      %v5417 = vrot.slane %v5416, 4
      %v5419 = vshll.u32 %v5046, 16
      %v5421 = vrot.slane %v5419, 5
      %v5422 = vsel %vm1868, %v5417, %v5421
      %v5423 = vshrl.u32 %v5046, 16
      %v5425 = vrot.slane %v5423, 4
      %v5426 = vor.u32 %v5425, %v5421
      %v5427 = vrot.slane %v5426, 4
      %v5429 = vshll.u32 %v5047, 16
      %v5431 = vrot.slane %v5429, 5
      %v5432 = vsel %vm1868, %v5427, %v5431
      %v5433 = vshrl.u32 %v5047, 16
      %v5435 = vrot.slane %v5433, 4
      %v5436 = vor.u32 %v5435, %v5431
      %v5437 = vrot.slane %v5436, 4
      %v5439 = vshll.u32 %v5048, 16
      %v5441 = vrot.slane %v5439, 5
      %v5442 = vsel %vm1868, %v5437, %v5441
      %v5443 = vshrl.u32 %v5048, 16
      %v5445 = vrot.slane %v5443, 4
      %v5446 = vor.u32 %v5445, %v5441
      %v5447 = vrot.slane %v5446, 4
      %v5449 = vshll.u32 %v5049, 16
      %v5451 = vrot.slane %v5449, 5
      %v5452 = vsel %vm1868, %v5447, %v5451
      %v5453 = vshrl.u32 %v5049, 16
      %v5455 = vrot.slane %v5453, 4
      %v5456 = vor.u32 %v5455, %v5451
      %v5457 = vrot.slane %v5456, 4
      %v5459 = vshll.u32 %v5050, 16
      %v5461 = vrot.slane %v5459, 5
      %v5462 = vsel %vm1868, %v5457, %v5461
      %v5463 = vshrl.u32 %v5050, 16
      %v5465 = vrot.slane %v5463, 4
      %v5466 = vor.u32 %v5465, %v5461
      %v5467 = vrot.slane %v5466, 4
      %v5469 = vshll.u32 %v5051, 16
      %v5471 = vrot.slane %v5469, 5
      %v5472 = vsel %vm1868, %v5467, %v5471
      %v5473 = vshrl.u32 %v5051, 16
      %v5475 = vrot.slane %v5473, 4
      %v5476 = vor.u32 %v5475, %v5471
      %v5477 = vrot.slane %v5476, 4
      %v5479 = vshll.u32 %v5052, 16
      %v5481 = vrot.slane %v5479, 5
      %v5482 = vsel %vm1868, %v5477, %v5481
      %v5483 = vshrl.u32 %v5052, 16
      %v5485 = vrot.slane %v5483, 4
      %v5486 = vor.u32 %v5485, %v5481
      %v5487 = vrot.slane %v5486, 4
      %v5489 = vshll.u32 %v5053, 16
      %v5491 = vrot.slane %v5489, 5
      %v5492 = vsel %vm1868, %v5487, %v5491
      %v5493 = vshrl.u32 %v5053, 16
      %v5495 = vrot.slane %v5493, 4
      %v5496 = vor.u32 %v5495, %v5491
      %v5497 = vrot.slane %v5496, 4
      %v5499 = vshll.u32 %v5054, 16
      %v5501 = vrot.slane %v5499, 5
      %v5502 = vsel %vm1868, %v5497, %v5501
      %v5503 = vshrl.u32 %v5054, 16
      %v5505 = vrot.slane %v5503, 4
      %v5506 = vor.u32 %v5505, %v5501
      %v5507 = vrot.slane %v5506, 4
      %v5509 = vshll.u32 %v5055, 16
      %v5511 = vrot.slane %v5509, 5
      %v5512 = vsel %vm1868, %v5507, %v5511
      %v5513 = vshrl.u32 %v5055, 16
      %v5515 = vrot.slane %v5513, 4
      %v5516 = vor.u32 %v5515, %v5511
      %v5517 = vrot.slane %v5516, 4
      %v5519 = vshll.u32 %v5056, 16
      %v5521 = vrot.slane %v5519, 5
      %v5522 = vsel %vm1868, %v5517, %v5521
      %v5523 = vshrl.u32 %v5056, 16
      %v5525 = vrot.slane %v5523, 4
      %v5526 = vor.u32 %v5525, %v5521
      %v5527 = vrot.slane %v5526, 4
      %v5529 = vshll.u32 %v5057, 16
      %v5531 = vrot.slane %v5529, 5
      %v5532 = vsel %vm1868, %v5527, %v5531
      %v5533 = vshrl.u32 %v5057, 16
      %v5535 = vrot.slane %v5533, 4
      %v5536 = vor.u32 %v5535, %v5531
      %v5537 = vrot.slane %v5536, 4
      %v5539 = vshll.u32 %v5058, 16
      %v5541 = vrot.slane %v5539, 5
      %v5542 = vsel %vm1868, %v5537, %v5541
      %5591 = vst.msk [vmem:[#allocation3 + $0x8] sm:$0xf] %vm887, %v5072
      %5592 = vst.msk [vmem:[#allocation3 + $0x14] sm:$0xf] %vm887, %v5082
      %5593 = vst.msk [vmem:[#allocation3 + $0x20] sm:$0xf] %vm887, %v5092
      %5594 = vst.msk [vmem:[#allocation3 + $0x2c] sm:$0xf] %vm887, %v5102
      %5595 = vst.msk [vmem:[#allocation3 + $0x38] sm:$0xf] %vm887, %v5112
      %5596 = vst.msk [vmem:[#allocation3 + $0x44] sm:$0xf] %vm887, %v5122
      %5597 = vst.msk [vmem:[#allocation3 + $0x50] sm:$0xf] %vm887, %v5132
      %5598 = vst.msk [vmem:[#allocation3 + $0x5c] sm:$0xf] %vm887, %v5142
      %5599 = vst.msk [vmem:[#allocation3 + $0x68] sm:$0xf] %vm887, %v5152
      %5600 = vst.msk [vmem:[#allocation3 + $0x74] sm:$0xf] %vm887, %v5162
      %5601 = vst.msk [vmem:[#allocation3 + $0x80] sm:$0xf] %vm887, %v5172
      %5602 = vst.msk [vmem:[#allocation3 + $0x8c] sm:$0xf] %vm887, %v5182
      %5603 = vst.msk [vmem:[#allocation3 + $0x98] sm:$0xf] %vm887, %v5192
      %5604 = vst.msk [vmem:[#allocation3 + $0xa4] sm:$0xf] %vm887, %v5202
      %5605 = vst.msk [vmem:[#allocation3 + $0xb0] sm:$0xf] %vm887, %v5212
      %5606 = vst.msk [vmem:[#allocation3 + $0xbc] sm:$0xf] %vm887, %v5222
      %5607 = vst.msk [vmem:[#allocation3 + $0xc8] sm:$0xf] %vm887, %v5232
      %5608 = vst.msk [vmem:[#allocation3 + $0xd4] sm:$0xf] %vm887, %v5242
      %5609 = vst.msk [vmem:[#allocation3 + $0xe0] sm:$0xf] %vm887, %v5252
      %5610 = vst.msk [vmem:[#allocation3 + $0xec] sm:$0xf] %vm887, %v5262
      %5611 = vst.msk [vmem:[#allocation3 + $0xf8] sm:$0xf] %vm887, %v5272
      %5612 = vst.msk [vmem:[#allocation3 + $0x104] sm:$0xf] %vm887, %v5282
      %5613 = vst.msk [vmem:[#allocation3 + $0x110] sm:$0xf] %vm887, %v5292
      %5614 = vst.msk [vmem:[#allocation3 + $0x11c] sm:$0xf] %vm887, %v5302
      %5615 = vst.msk [vmem:[#allocation3 + $0x128] sm:$0xf] %vm887, %v5312
      %5616 = vst.msk [vmem:[#allocation3 + $0x134] sm:$0xf] %vm887, %v5322
      %5617 = vst.msk [vmem:[#allocation3 + $0x140] sm:$0xf] %vm887, %v5332
      %5618 = vst.msk [vmem:[#allocation3 + $0x14c] sm:$0xf] %vm887, %v5342
      %5619 = vst.msk [vmem:[#allocation3 + $0x158] sm:$0xf] %vm887, %v5352
      %5620 = vst.msk [vmem:[#allocation3 + $0x164] sm:$0xf] %vm887, %v5362
      %5621 = vst.msk [vmem:[#allocation3 + $0x170] sm:$0xf] %vm887, %v5372
      %5622 = vst.msk [vmem:[#allocation3 + $0x17c] sm:$0xf] %vm887, %v5382
      %5623 = vst.msk [vmem:[#allocation3 + $0x188] sm:$0xf] %vm887, %v5392
      %5624 = vst.msk [vmem:[#allocation3 + $0x194] sm:$0xf] %vm887, %v5402
      %5625 = vst.msk [vmem:[#allocation3 + $0x1a0] sm:$0xf] %vm887, %v5412
      %5626 = vst.msk [vmem:[#allocation3 + $0x1ac] sm:$0xf] %vm887, %v5422
      %5627 = vst.msk [vmem:[#allocation3 + $0x1b8] sm:$0xf] %vm887, %v5432
      %5628 = vst.msk [vmem:[#allocation3 + $0x1c4] sm:$0xf] %vm887, %v5442
      %5629 = vst.msk [vmem:[#allocation3 + $0x1d0] sm:$0xf] %vm887, %v5452
      %5630 = vst.msk [vmem:[#allocation3 + $0x1dc] sm:$0xf] %vm887, %v5462
      %5631 = vst.msk [vmem:[#allocation3 + $0x1e8] sm:$0xf] %vm887, %v5472
      %5632 = vst.msk [vmem:[#allocation3 + $0x1f4] sm:$0xf] %vm887, %v5482
      %5633 = vst.msk [vmem:[#allocation3 + $0x200] sm:$0xf] %vm887, %v5492
      %5634 = vst.msk [vmem:[#allocation3 + $0x20c] sm:$0xf] %vm887, %v5502
      %5635 = vst.msk [vmem:[#allocation3 + $0x218] sm:$0xf] %vm887, %v5512
      %5636 = vst.msk [vmem:[#allocation3 + $0x224] sm:$0xf] %vm887, %v5522
      %5637 = vst.msk [vmem:[#allocation3 + $0x230] sm:$0xf] %vm887, %v5532
      %5638 = vst.msk [vmem:[#allocation3 + $0x23c] sm:$0xf] %vm887, %v5542
      %v5639 = vld [vmem:[#allocation3] sm:$0xff]
      %v5640 = vld [vmem:[#allocation3 + $0x8] sm:$0xf]
      %v5641 = vld [vmem:[#allocation3 + $0xc] sm:$0xff]
      %v5642 = vld [vmem:[#allocation3 + $0x14] sm:$0xf]
      %v5643 = vld [vmem:[#allocation3 + $0x18] sm:$0xff]
      %v5644 = vld [vmem:[#allocation3 + $0x20] sm:$0xf]
      %v5645 = vld [vmem:[#allocation3 + $0x24] sm:$0xff]
      %v5646 = vld [vmem:[#allocation3 + $0x2c] sm:$0xf]
      %v5647 = vld [vmem:[#allocation3 + $0x30] sm:$0xff]
      %v5648 = vld [vmem:[#allocation3 + $0x38] sm:$0xf]
      %v5649 = vld [vmem:[#allocation3 + $0x3c] sm:$0xff]
      %v5650 = vld [vmem:[#allocation3 + $0x44] sm:$0xf]
      %v5651 = vld [vmem:[#allocation3 + $0x48] sm:$0xff]
      %v5652 = vld [vmem:[#allocation3 + $0x50] sm:$0xf]
      %v5653 = vld [vmem:[#allocation3 + $0x54] sm:$0xff]
      %v5654 = vld [vmem:[#allocation3 + $0x5c] sm:$0xf]
      %v5655 = vld [vmem:[#allocation3 + $0x60] sm:$0xff]
      %v5656 = vld [vmem:[#allocation3 + $0x68] sm:$0xf]
      %v5657 = vld [vmem:[#allocation3 + $0x6c] sm:$0xff]
      %v5658 = vld [vmem:[#allocation3 + $0x74] sm:$0xf]
      %v5659 = vld [vmem:[#allocation3 + $0x78] sm:$0xff]
      %v5660 = vld [vmem:[#allocation3 + $0x80] sm:$0xf]
      %v5661 = vld [vmem:[#allocation3 + $0x84] sm:$0xff]
      %v5662 = vld [vmem:[#allocation3 + $0x8c] sm:$0xf]
      %v5663 = vld [vmem:[#allocation3 + $0x90] sm:$0xff]
      %v5664 = vld [vmem:[#allocation3 + $0x98] sm:$0xf]
      %v5665 = vld [vmem:[#allocation3 + $0x9c] sm:$0xff]
      %v5666 = vld [vmem:[#allocation3 + $0xa4] sm:$0xf]
      %v5667 = vld [vmem:[#allocation3 + $0xa8] sm:$0xff]
      %v5668 = vld [vmem:[#allocation3 + $0xb0] sm:$0xf]
      %v5669 = vld [vmem:[#allocation3 + $0xb4] sm:$0xff]
      %v5670 = vld [vmem:[#allocation3 + $0xbc] sm:$0xf]
      %v5671 = vld [vmem:[#allocation3 + $0xc0] sm:$0xff]
      %v5672 = vld [vmem:[#allocation3 + $0xc8] sm:$0xf]
      %v5673 = vld [vmem:[#allocation3 + $0xcc] sm:$0xff]
      %v5674 = vld [vmem:[#allocation3 + $0xd4] sm:$0xf]
      %v5675 = vld [vmem:[#allocation3 + $0xd8] sm:$0xff]
      %v5676 = vld [vmem:[#allocation3 + $0xe0] sm:$0xf]
      %v5677 = vld [vmem:[#allocation3 + $0xe4] sm:$0xff]
      %v5678 = vld [vmem:[#allocation3 + $0xec] sm:$0xf]
      %v5679 = vld [vmem:[#allocation3 + $0xf0] sm:$0xff]
      %v5680 = vld [vmem:[#allocation3 + $0xf8] sm:$0xf]
      %v5681 = vld [vmem:[#allocation3 + $0xfc] sm:$0xff]
      %v5682 = vld [vmem:[#allocation3 + $0x104] sm:$0xf]
      %v5683 = vld [vmem:[#allocation3 + $0x108] sm:$0xff]
      %v5684 = vld [vmem:[#allocation3 + $0x110] sm:$0xf]
      %v5685 = vld [vmem:[#allocation3 + $0x114] sm:$0xff]
      %v5686 = vld [vmem:[#allocation3 + $0x11c] sm:$0xf]
      %v5687 = vld [vmem:[#allocation3 + $0x120] sm:$0xff]
      %v5688 = vld [vmem:[#allocation3 + $0x128] sm:$0xf]
      %v5689 = vld [vmem:[#allocation3 + $0x12c] sm:$0xff]
      %v5690 = vld [vmem:[#allocation3 + $0x134] sm:$0xf]
      %v5691 = vld [vmem:[#allocation3 + $0x138] sm:$0xff]
      %v5692 = vld [vmem:[#allocation3 + $0x140] sm:$0xf]
      %v5693 = vld [vmem:[#allocation3 + $0x144] sm:$0xff]
      %v5694 = vld [vmem:[#allocation3 + $0x14c] sm:$0xf]
      %v5695 = vld [vmem:[#allocation3 + $0x150] sm:$0xff]
      %v5696 = vld [vmem:[#allocation3 + $0x158] sm:$0xf]
      %v5697 = vld [vmem:[#allocation3 + $0x15c] sm:$0xff]
      %v5698 = vld [vmem:[#allocation3 + $0x164] sm:$0xf]
      %v5699 = vld [vmem:[#allocation3 + $0x168] sm:$0xff]
      %v5700 = vld [vmem:[#allocation3 + $0x170] sm:$0xf]
      %v5701 = vld [vmem:[#allocation3 + $0x174] sm:$0xff]
      %v5702 = vld [vmem:[#allocation3 + $0x17c] sm:$0xf]
      %v5703 = vld [vmem:[#allocation3 + $0x180] sm:$0xff]
      %v5704 = vld [vmem:[#allocation3 + $0x188] sm:$0xf]
      %v5705 = vld [vmem:[#allocation3 + $0x18c] sm:$0xff]
      %v5706 = vld [vmem:[#allocation3 + $0x194] sm:$0xf]
      %v5707 = vld [vmem:[#allocation3 + $0x198] sm:$0xff]
      %v5708 = vld [vmem:[#allocation3 + $0x1a0] sm:$0xf]
      %v5709 = vld [vmem:[#allocation3 + $0x1a4] sm:$0xff]
      %v5710 = vld [vmem:[#allocation3 + $0x1ac] sm:$0xf]
      %v5711 = vld [vmem:[#allocation3 + $0x1b0] sm:$0xff]
      %v5712 = vld [vmem:[#allocation3 + $0x1b8] sm:$0xf]
      %v5713 = vld [vmem:[#allocation3 + $0x1bc] sm:$0xff]
      %v5714 = vld [vmem:[#allocation3 + $0x1c4] sm:$0xf]
      %v5715 = vld [vmem:[#allocation3 + $0x1c8] sm:$0xff]
      %v5716 = vld [vmem:[#allocation3 + $0x1d0] sm:$0xf]
      %v5717 = vld [vmem:[#allocation3 + $0x1d4] sm:$0xff]
      %v5718 = vld [vmem:[#allocation3 + $0x1dc] sm:$0xf]
      %v5719 = vld [vmem:[#allocation3 + $0x1e0] sm:$0xff]
      %v5720 = vld [vmem:[#allocation3 + $0x1e8] sm:$0xf]
      %v5721 = vld [vmem:[#allocation3 + $0x1ec] sm:$0xff]
      %v5722 = vld [vmem:[#allocation3 + $0x1f4] sm:$0xf]
      %v5723 = vld [vmem:[#allocation3 + $0x1f8] sm:$0xff]
      %v5724 = vld [vmem:[#allocation3 + $0x200] sm:$0xf]
      %v5725 = vld [vmem:[#allocation3 + $0x204] sm:$0xff]
      %v5726 = vld [vmem:[#allocation3 + $0x20c] sm:$0xf]
      %v5727 = vld [vmem:[#allocation3 + $0x210] sm:$0xff]
      %v5728 = vld [vmem:[#allocation3 + $0x218] sm:$0xf]
      %v5729 = vld [vmem:[#allocation3 + $0x21c] sm:$0xff]
      %v5730 = vld [vmem:[#allocation3 + $0x224] sm:$0xf]
      %v5731 = vld [vmem:[#allocation3 + $0x228] sm:$0xff]
      %v5732 = vld [vmem:[#allocation3 + $0x230] sm:$0xf]
      %v5733 = vld [vmem:[#allocation3 + $0x234] sm:$0xff]
      %v5734 = vld [vmem:[#allocation3 + $0x23c] sm:$0xf]
      %v5735 = vld [vmem:[%s2] sm:$0xf]
      %v5736 = vld [vmem:[%s2 + $0x4] sm:$0xf]
      %v5737 = vld [vmem:[%s2 + $0x8] sm:$0xf]
      %v5738 = vld [vmem:[%s2 + $0xc] sm:$0xf]
      %v5739 = vld [vmem:[%s2 + $0x10] sm:$0xf]
      %v5740 = vld [vmem:[%s2 + $0x14] sm:$0xf]
      %v5741 = vld [vmem:[%s2 + $0x18] sm:$0xf]
      %v5742 = vld [vmem:[%s2 + $0x1c] sm:$0xf]
      %v5743 = vld [vmem:[%s2 + $0x20] sm:$0xf]
      %v5744 = vld [vmem:[%s2 + $0x24] sm:$0xf]
      %v5745 = vld [vmem:[%s2 + $0x28] sm:$0xf]
      %v5746 = vld [vmem:[%s2 + $0x2c] sm:$0xf]
      %v5747 = vld [vmem:[%s2 + $0x30] sm:$0xf]
      %v5748 = vld [vmem:[%s2 + $0x34] sm:$0xf]
      %v5749 = vld [vmem:[%s2 + $0x38] sm:$0xf]
      %v5750 = vld [vmem:[%s2 + $0x3c] sm:$0xf]
      %v5751 = vld [vmem:[%s2 + $0x40] sm:$0xf]
      %v5752 = vld [vmem:[%s2 + $0x44] sm:$0xf]
      %v5753 = vld [vmem:[%s2 + $0x48] sm:$0xf]
      %v5754 = vld [vmem:[%s2 + $0x4c] sm:$0xf]
      %v5755 = vld [vmem:[%s2 + $0x50] sm:$0xf]
      %v5756 = vld [vmem:[%s2 + $0x54] sm:$0xf]
      %v5757 = vld [vmem:[%s2 + $0x58] sm:$0xf]
      %v5758 = vld [vmem:[%s2 + $0x5c] sm:$0xf]
      %v5759 = vld [vmem:[%s2 + $0x60] sm:$0xf]
      %v5760 = vld [vmem:[%s2 + $0x64] sm:$0xf]
      %v5761 = vld [vmem:[%s2 + $0x68] sm:$0xf]
      %v5762 = vld [vmem:[%s2 + $0x6c] sm:$0xf]
      %v5763 = vld [vmem:[%s2 + $0x70] sm:$0xf]
      %v5764 = vld [vmem:[%s2 + $0x74] sm:$0xf]
      %v5765 = vld [vmem:[%s2 + $0x78] sm:$0xf]
      %v5766 = vld [vmem:[%s2 + $0x7c] sm:$0xf]
      %v5767 = vld [vmem:[%s2 + $0x80] sm:$0xf]
      %v5768 = vld [vmem:[%s2 + $0x84] sm:$0xf]
      %v5769 = vld [vmem:[%s2 + $0x88] sm:$0xf]
      %v5770 = vld [vmem:[%s2 + $0x8c] sm:$0xf]
      %v5771 = vld [vmem:[%s3] sm:$0x1]
      %v5773 = vperm.slane %v5771, 0
      %v5871 = vunpack.c.l.b16 %v5639
      %v5872 = vunpack.c.h.b16 %v5639
      %v5873 = vunpack.c.l.b16 %v5640
      %v5874 = vunpack.c.l.b16 %v5641
      %v5875 = vunpack.c.h.b16 %v5641
      %v5876 = vunpack.c.l.b16 %v5642
      %v5877 = vunpack.c.l.b16 %v5643
      %v5878 = vunpack.c.h.b16 %v5643
      %v5879 = vunpack.c.l.b16 %v5644
      %v5880 = vunpack.c.l.b16 %v5645
      %v5881 = vunpack.c.h.b16 %v5645
      %v5882 = vunpack.c.l.b16 %v5646
      %v5883 = vunpack.c.l.b16 %v5647
      %v5884 = vunpack.c.h.b16 %v5647
      %v5885 = vunpack.c.l.b16 %v5648
      %v5886 = vunpack.c.l.b16 %v5649
      %v5887 = vunpack.c.h.b16 %v5649
      %v5888 = vunpack.c.l.b16 %v5650
      %v5889 = vunpack.c.l.b16 %v5651
      %v5890 = vunpack.c.h.b16 %v5651
      %v5891 = vunpack.c.l.b16 %v5652
      %v5892 = vunpack.c.l.b16 %v5653
      %v5893 = vunpack.c.h.b16 %v5653
      %v5894 = vunpack.c.l.b16 %v5654
      %v5895 = vunpack.c.l.b16 %v5655
      %v5896 = vunpack.c.h.b16 %v5655
      %v5897 = vunpack.c.l.b16 %v5656
      %v5898 = vunpack.c.l.b16 %v5657
      %v5899 = vunpack.c.h.b16 %v5657
      %v5900 = vunpack.c.l.b16 %v5658
      %v5901 = vunpack.c.l.b16 %v5659
      %v5902 = vunpack.c.h.b16 %v5659
      %v5903 = vunpack.c.l.b16 %v5660
      %v5904 = vunpack.c.l.b16 %v5661
      %v5905 = vunpack.c.h.b16 %v5661
      %v5906 = vunpack.c.l.b16 %v5662
      %v5907 = vunpack.c.l.b16 %v5663
      %v5908 = vunpack.c.h.b16 %v5663
      %v5909 = vunpack.c.l.b16 %v5664
      %v5910 = vunpack.c.l.b16 %v5665
      %v5911 = vunpack.c.h.b16 %v5665
      %v5912 = vunpack.c.l.b16 %v5666
      %v5913 = vunpack.c.l.b16 %v5667
      %v5914 = vunpack.c.h.b16 %v5667
      %v5915 = vunpack.c.l.b16 %v5668
      %v5916 = vunpack.c.l.b16 %v5669
      %v5917 = vunpack.c.h.b16 %v5669
      %v5918 = vunpack.c.l.b16 %v5670
      %v5919 = vunpack.c.l.b16 %v5671
      %v5920 = vunpack.c.h.b16 %v5671
      %v5921 = vunpack.c.l.b16 %v5672
      %v5922 = vunpack.c.l.b16 %v5673
      %v5923 = vunpack.c.h.b16 %v5673
      %v5924 = vunpack.c.l.b16 %v5674
      %v5925 = vunpack.c.l.b16 %v5675
      %v5926 = vunpack.c.h.b16 %v5675
      %v5927 = vunpack.c.l.b16 %v5676
      %v5928 = vunpack.c.l.b16 %v5677
      %v5929 = vunpack.c.h.b16 %v5677
      %v5930 = vunpack.c.l.b16 %v5678
      %v5931 = vunpack.c.l.b16 %v5679
      %v5932 = vunpack.c.h.b16 %v5679
      %v5933 = vunpack.c.l.b16 %v5680
      %v5934 = vunpack.c.l.b16 %v5681
      %v5935 = vunpack.c.h.b16 %v5681
      %v5936 = vunpack.c.l.b16 %v5682
      %v5937 = vunpack.c.l.b16 %v5683
      %v5938 = vunpack.c.h.b16 %v5683
      %v5939 = vunpack.c.l.b16 %v5684
      %v5940 = vunpack.c.l.b16 %v5685
      %v5941 = vunpack.c.h.b16 %v5685
      %v5942 = vunpack.c.l.b16 %v5686
      %v5943 = vunpack.c.l.b16 %v5687
      %v5944 = vunpack.c.h.b16 %v5687
      %v5945 = vunpack.c.l.b16 %v5688
      %v5946 = vunpack.c.l.b16 %v5689
      %v5947 = vunpack.c.h.b16 %v5689
      %v5948 = vunpack.c.l.b16 %v5690
      %v5949 = vunpack.c.l.b16 %v5691
      %v5950 = vunpack.c.h.b16 %v5691
      %v5951 = vunpack.c.l.b16 %v5692
      %v5952 = vunpack.c.l.b16 %v5693
      %v5953 = vunpack.c.h.b16 %v5693
      %v5954 = vunpack.c.l.b16 %v5694
      %v5955 = vunpack.c.l.b16 %v5695
      %v5956 = vunpack.c.h.b16 %v5695
      %v5957 = vunpack.c.l.b16 %v5696
      %v5958 = vunpack.c.l.b16 %v5697
      %v5959 = vunpack.c.h.b16 %v5697
      %v5960 = vunpack.c.l.b16 %v5698
      %v5961 = vunpack.c.l.b16 %v5699
      %v5962 = vunpack.c.h.b16 %v5699
      %v5963 = vunpack.c.l.b16 %v5700
      %v5964 = vunpack.c.l.b16 %v5701
      %v5965 = vunpack.c.h.b16 %v5701
      %v5966 = vunpack.c.l.b16 %v5702
      %v5967 = vunpack.c.l.b16 %v5703
      %v5968 = vunpack.c.h.b16 %v5703
      %v5969 = vunpack.c.l.b16 %v5704
      %v5970 = vunpack.c.l.b16 %v5705
      %v5971 = vunpack.c.h.b16 %v5705
      %v5972 = vunpack.c.l.b16 %v5706
      %v5973 = vunpack.c.l.b16 %v5707
      %v5974 = vunpack.c.h.b16 %v5707
      %v5975 = vunpack.c.l.b16 %v5708
      %v5976 = vunpack.c.l.b16 %v5709
      %v5977 = vunpack.c.h.b16 %v5709
      %v5978 = vunpack.c.l.b16 %v5710
      %v5979 = vunpack.c.l.b16 %v5711
      %v5980 = vunpack.c.h.b16 %v5711
      %v5981 = vunpack.c.l.b16 %v5712
      %v5982 = vunpack.c.l.b16 %v5713
      %v5983 = vunpack.c.h.b16 %v5713
      %v5984 = vunpack.c.l.b16 %v5714
      %v5985 = vunpack.c.l.b16 %v5715
      %v5986 = vunpack.c.h.b16 %v5715
      %v5987 = vunpack.c.l.b16 %v5716
      %v5988 = vunpack.c.l.b16 %v5717
      %v5989 = vunpack.c.h.b16 %v5717
      %v5990 = vunpack.c.l.b16 %v5718
      %v5991 = vunpack.c.l.b16 %v5719
      %v5992 = vunpack.c.h.b16 %v5719
      %v5993 = vunpack.c.l.b16 %v5720
      %v5994 = vunpack.c.l.b16 %v5721
      %v5995 = vunpack.c.h.b16 %v5721
      %v5996 = vunpack.c.l.b16 %v5722
      %v5997 = vunpack.c.l.b16 %v5723
      %v5998 = vunpack.c.h.b16 %v5723
      %v5999 = vunpack.c.l.b16 %v5724
      %v6000 = vunpack.c.l.b16 %v5725
      %v6001 = vunpack.c.h.b16 %v5725
      %v6002 = vunpack.c.l.b16 %v5726
      %v6003 = vunpack.c.l.b16 %v5727
      %v6004 = vunpack.c.h.b16 %v5727
      %v6005 = vunpack.c.l.b16 %v5728
      %v6006 = vunpack.c.l.b16 %v5729
      %v6007 = vunpack.c.h.b16 %v5729
      %v6008 = vunpack.c.l.b16 %v5730
      %v6009 = vunpack.c.l.b16 %v5731
      %v6010 = vunpack.c.h.b16 %v5731
      %v6011 = vunpack.c.l.b16 %v5732
      %v6012 = vunpack.c.l.b16 %v5733
      %v6013 = vunpack.c.h.b16 %v5733
      %v6014 = vunpack.c.l.b16 %v5734
      %v6015 = vpack.c.b16 %v5874, %v5871
      %v6016 = vpack.c.b16 %v5875, %v5872
      %v6017 = vpack.c.b16 %v5876, %v5873
      %v6018 = vpack.c.b16 %v5880, %v5877
      %v6019 = vpack.c.b16 %v5881, %v5878
      %v6020 = vpack.c.b16 %v5882, %v5879
      %v6021 = vpack.c.b16 %v5886, %v5883
      %v6022 = vpack.c.b16 %v5887, %v5884
      %v6023 = vpack.c.b16 %v5888, %v5885
      %v6024 = vpack.c.b16 %v5892, %v5889
      %v6025 = vpack.c.b16 %v5893, %v5890
      %v6026 = vpack.c.b16 %v5894, %v5891
      %v6027 = vpack.c.b16 %v5898, %v5895
      %v6028 = vpack.c.b16 %v5899, %v5896
      %v6029 = vpack.c.b16 %v5900, %v5897
      %v6030 = vpack.c.b16 %v5904, %v5901
      %v6031 = vpack.c.b16 %v5905, %v5902
      %v6032 = vpack.c.b16 %v5906, %v5903
      %v6033 = vpack.c.b16 %v5910, %v5907
      %v6034 = vpack.c.b16 %v5911, %v5908
      %v6035 = vpack.c.b16 %v5912, %v5909
      %v6036 = vpack.c.b16 %v5916, %v5913
      %v6037 = vpack.c.b16 %v5917, %v5914
      %v6038 = vpack.c.b16 %v5918, %v5915
      %v6039 = vpack.c.b16 %v5922, %v5919
      %v6040 = vpack.c.b16 %v5923, %v5920
      %v6041 = vpack.c.b16 %v5924, %v5921
      %v6042 = vpack.c.b16 %v5928, %v5925
      %v6043 = vpack.c.b16 %v5929, %v5926
      %v6044 = vpack.c.b16 %v5930, %v5927
      %v6045 = vpack.c.b16 %v5934, %v5931
      %v6046 = vpack.c.b16 %v5935, %v5932
      %v6047 = vpack.c.b16 %v5936, %v5933
      %v6048 = vpack.c.b16 %v5940, %v5937
      %v6049 = vpack.c.b16 %v5941, %v5938
      %v6050 = vpack.c.b16 %v5942, %v5939
      %v6051 = vpack.c.b16 %v5946, %v5943
      %v6052 = vpack.c.b16 %v5947, %v5944
      %v6053 = vpack.c.b16 %v5948, %v5945
      %v6054 = vpack.c.b16 %v5952, %v5949
      %v6055 = vpack.c.b16 %v5953, %v5950
      %v6056 = vpack.c.b16 %v5954, %v5951
      %v6057 = vpack.c.b16 %v5958, %v5955
      %v6058 = vpack.c.b16 %v5959, %v5956
      %v6059 = vpack.c.b16 %v5960, %v5957
      %v6060 = vpack.c.b16 %v5964, %v5961
      %v6061 = vpack.c.b16 %v5965, %v5962
      %v6062 = vpack.c.b16 %v5966, %v5963
      %v6063 = vpack.c.b16 %v5970, %v5967
      %v6064 = vpack.c.b16 %v5971, %v5968
      %v6065 = vpack.c.b16 %v5972, %v5969
      %v6066 = vpack.c.b16 %v5976, %v5973
      %v6067 = vpack.c.b16 %v5977, %v5974
      %v6068 = vpack.c.b16 %v5978, %v5975
      %v6069 = vpack.c.b16 %v5982, %v5979
      %v6070 = vpack.c.b16 %v5983, %v5980
      %v6071 = vpack.c.b16 %v5984, %v5981
      %v6072 = vpack.c.b16 %v5988, %v5985
      %v6073 = vpack.c.b16 %v5989, %v5986
      %v6074 = vpack.c.b16 %v5990, %v5987
      %v6075 = vpack.c.b16 %v5994, %v5991
      %v6076 = vpack.c.b16 %v5995, %v5992
      %v6077 = vpack.c.b16 %v5996, %v5993
      %v6078 = vpack.c.b16 %v6000, %v5997
      %v6079 = vpack.c.b16 %v6001, %v5998
      %v6080 = vpack.c.b16 %v6002, %v5999
      %v6081 = vpack.c.b16 %v6006, %v6003
      %v6082 = vpack.c.b16 %v6007, %v6004
      %v6083 = vpack.c.b16 %v6008, %v6005
      %v6084 = vpack.c.b16 %v6012, %v6009
      %v6085 = vpack.c.b16 %v6013, %v6010
      %v6086 = vpack.c.b16 %v6014, %v6011
      %v6171 = vunpack.c.l.b16 %v5735
      %v6172 = vunpack.c.l.b16 %v5736
      %v6173 = vunpack.c.l.b16 %v5737
      %v6174 = vunpack.c.l.b16 %v5738
      %v6175 = vunpack.c.l.b16 %v5739
      %v6176 = vunpack.c.l.b16 %v5740
      %v6177 = vunpack.c.l.b16 %v5741
      %v6178 = vunpack.c.l.b16 %v5742
      %v6179 = vunpack.c.l.b16 %v5743
      %v6180 = vunpack.c.l.b16 %v5744
      %v6181 = vunpack.c.l.b16 %v5745
      %v6182 = vunpack.c.l.b16 %v5746
      %v6183 = vunpack.c.l.b16 %v5747
      %v6184 = vunpack.c.l.b16 %v5748
      %v6185 = vunpack.c.l.b16 %v5749
      %v6186 = vunpack.c.l.b16 %v5750
      %v6187 = vunpack.c.l.b16 %v5751
      %v6188 = vunpack.c.l.b16 %v5752
      %v6189 = vunpack.c.l.b16 %v5753
      %v6190 = vunpack.c.l.b16 %v5754
      %v6191 = vunpack.c.l.b16 %v5755
      %v6192 = vunpack.c.l.b16 %v5756
      %v6193 = vunpack.c.l.b16 %v5757
      %v6194 = vunpack.c.l.b16 %v5758
      %v6195 = vunpack.c.l.b16 %v5759
      %v6196 = vunpack.c.l.b16 %v5760
      %v6197 = vunpack.c.l.b16 %v5761
      %v6198 = vunpack.c.l.b16 %v5762
      %v6199 = vunpack.c.l.b16 %v5763
      %v6200 = vunpack.c.l.b16 %v5764
      %v6201 = vunpack.c.l.b16 %v5765
      %v6202 = vunpack.c.l.b16 %v5766
      %v6203 = vunpack.c.l.b16 %v5767
      %v6204 = vunpack.c.l.b16 %v5768
      %v6205 = vunpack.c.l.b16 %v5769
      %v6206 = vunpack.c.l.b16 %v5770
      %v6207 = vpack.c.b16 %v6172, %v6171
      %v6208 = vpack.c.b16 %v6174, %v6173
      %v6209 = vpack.c.b16 %v6176, %v6175
      %v6210 = vpack.c.b16 %v6178, %v6177
      %v6211 = vpack.c.b16 %v6180, %v6179
      %v6212 = vpack.c.b16 %v6182, %v6181
      %v6213 = vpack.c.b16 %v6184, %v6183
      %v6214 = vpack.c.b16 %v6186, %v6185
      %v6215 = vpack.c.b16 %v6188, %v6187
      %v6216 = vpack.c.b16 %v6190, %v6189
      %v6217 = vpack.c.b16 %v6192, %v6191
      %v6218 = vpack.c.b16 %v6194, %v6193
      %v6219 = vpack.c.b16 %v6196, %v6195
      %v6220 = vpack.c.b16 %v6198, %v6197
      %v6221 = vpack.c.b16 %v6200, %v6199
      %v6222 = vpack.c.b16 %v6202, %v6201
      %v6223 = vpack.c.b16 %v6204, %v6203
      %v6224 = vpack.c.b16 %v6206, %v6205
      %vm6243 = vcmask 261120
      %v6245 = vsel %vm6243, %v6017, 0
      %v6248 = vsel %vm6243, %v6020, 0
      %v6251 = vsel %vm6243, %v6023, 0
      %v6254 = vsel %vm6243, %v6026, 0
      %v6257 = vsel %vm6243, %v6029, 0
      %v6260 = vsel %vm6243, %v6032, 0
      %v6263 = vsel %vm6243, %v6035, 0
      %v6266 = vsel %vm6243, %v6038, 0
      %v6269 = vsel %vm6243, %v6041, 0
      %v6272 = vsel %vm6243, %v6044, 0
      %v6275 = vsel %vm6243, %v6047, 0
      %v6278 = vsel %vm6243, %v6050, 0
      %v6281 = vsel %vm6243, %v6053, 0
      %v6284 = vsel %vm6243, %v6056, 0
      %v6287 = vsel %vm6243, %v6059, 0
      %v6290 = vsel %vm6243, %v6062, 0
      %v6293 = vsel %vm6243, %v6065, 0
      %v6296 = vsel %vm6243, %v6068, 0
      %v6299 = vsel %vm6243, %v6071, 0
      %v6302 = vsel %vm6243, %v6074, 0
      %v6305 = vsel %vm6243, %v6077, 0
      %v6308 = vsel %vm6243, %v6080, 0
      %v6311 = vsel %vm6243, %v6083, 0
      %v6314 = vsel %vm6243, %v6086, 0
      %6316 = vmatpush.bf16.msra.mxu0 %v6214
      %6317 = vmatpush.bf16.msra.mxu0 %v6213
      %6318 = vmatpush.bf16.msra.mxu0 %v6212
      %6319 = vmatpush.bf16.msra.mxu0 %v6211
      %6320 = vmatpush.bf16.msra.mxu0 %v6210
      %6321 = vmatpush.bf16.msra.mxu0 %v6209
      %6322 = vmatpush.bf16.msra.mxu0 %v6208
      %6323 = vmatpush.bf16.msra.mxu0 %v6207
      %6324 = vmatmul.bf16.gmra.mxu0 %v6015
      %v6325 = vpop.f32.mrf.mxu0
      %v6326 = vadd.f32 %v5773, %v6325
      %v6327 = vpop.f32.mrf.mxu0
      %v6328 = vadd.f32 %v5773, %v6327
      %6329 = vmatmul.bf16.gmra.mxu0 %v6018
      %v6330 = vpop.f32.mrf.mxu0
      %v6331 = vadd.f32 %v5773, %v6330
      %v6332 = vpop.f32.mrf.mxu0
      %v6333 = vadd.f32 %v5773, %v6332
      %6334 = vmatmul.bf16.gmra.mxu0 %v6021
      %v6335 = vpop.f32.mrf.mxu0
      %v6336 = vadd.f32 %v5773, %v6335
      %v6337 = vpop.f32.mrf.mxu0
      %v6338 = vadd.f32 %v5773, %v6337
      %6339 = vmatmul.bf16.gmra.mxu0 %v6024
      %v6340 = vpop.f32.mrf.mxu0
      %v6341 = vadd.f32 %v5773, %v6340
      %v6342 = vpop.f32.mrf.mxu0
      %v6343 = vadd.f32 %v5773, %v6342
      %6344 = vmatmul.bf16.gmra.mxu0 %v6027
      %v6345 = vpop.f32.mrf.mxu0
      %v6346 = vadd.f32 %v5773, %v6345
      %v6347 = vpop.f32.mrf.mxu0
      %v6348 = vadd.f32 %v5773, %v6347
      %6349 = vmatmul.bf16.gmra.mxu0 %v6030
      %v6350 = vpop.f32.mrf.mxu0
      %v6351 = vadd.f32 %v5773, %v6350
      %v6352 = vpop.f32.mrf.mxu0
      %v6353 = vadd.f32 %v5773, %v6352
      %6354 = vmatmul.bf16.gmra.mxu0 %v6033
      %v6355 = vpop.f32.mrf.mxu0
      %v6356 = vadd.f32 %v5773, %v6355
      %v6357 = vpop.f32.mrf.mxu0
      %v6358 = vadd.f32 %v5773, %v6357
      %6359 = vmatmul.bf16.gmra.mxu0 %v6036
      %v6360 = vpop.f32.mrf.mxu0
      %v6361 = vadd.f32 %v5773, %v6360
      %v6362 = vpop.f32.mrf.mxu0
      %v6363 = vadd.f32 %v5773, %v6362
      %6364 = vmatmul.bf16.gmra.mxu0 %v6039
      %v6365 = vpop.f32.mrf.mxu0
      %v6366 = vadd.f32 %v5773, %v6365
      %v6367 = vpop.f32.mrf.mxu0
      %v6368 = vadd.f32 %v5773, %v6367
      %6369 = vmatmul.bf16.gmra.mxu0 %v6042
      %v6370 = vpop.f32.mrf.mxu0
      %v6371 = vadd.f32 %v5773, %v6370
      %v6372 = vpop.f32.mrf.mxu0
      %v6373 = vadd.f32 %v5773, %v6372
      %6374 = vmatmul.bf16.gmra.mxu0 %v6045
      %v6375 = vpop.f32.mrf.mxu0
      %v6376 = vadd.f32 %v5773, %v6375
      %v6377 = vpop.f32.mrf.mxu0
      %v6378 = vadd.f32 %v5773, %v6377
      %6379 = vmatmul.bf16.gmra.mxu0 %v6048
      %v6380 = vpop.f32.mrf.mxu0
      %v6381 = vadd.f32 %v5773, %v6380
      %v6382 = vpop.f32.mrf.mxu0
      %v6383 = vadd.f32 %v5773, %v6382
      %6384 = vmatmul.bf16.gmra.mxu0 %v6051
      %v6385 = vpop.f32.mrf.mxu0
      %v6386 = vadd.f32 %v5773, %v6385
      %v6387 = vpop.f32.mrf.mxu0
      %v6388 = vadd.f32 %v5773, %v6387
      %6389 = vmatmul.bf16.gmra.mxu0 %v6054
      %v6390 = vpop.f32.mrf.mxu0
      %v6391 = vadd.f32 %v5773, %v6390
      %v6392 = vpop.f32.mrf.mxu0
      %v6393 = vadd.f32 %v5773, %v6392
      %6394 = vmatmul.bf16.gmra.mxu0 %v6057
      %v6395 = vpop.f32.mrf.mxu0
      %v6396 = vadd.f32 %v5773, %v6395
      %v6397 = vpop.f32.mrf.mxu0
      %v6398 = vadd.f32 %v5773, %v6397
      %6399 = vmatmul.bf16.gmra.mxu0 %v6060
      %v6400 = vpop.f32.mrf.mxu0
      %v6401 = vadd.f32 %v5773, %v6400
      %v6402 = vpop.f32.mrf.mxu0
      %v6403 = vadd.f32 %v5773, %v6402
      %6404 = vmatmul.bf16.gmra.mxu0 %v6063
      %v6405 = vpop.f32.mrf.mxu0
      %v6406 = vadd.f32 %v5773, %v6405
      %v6407 = vpop.f32.mrf.mxu0
      %v6408 = vadd.f32 %v5773, %v6407
      %6409 = vmatmul.bf16.gmra.mxu0 %v6066
      %v6410 = vpop.f32.mrf.mxu0
      %v6411 = vadd.f32 %v5773, %v6410
      %v6412 = vpop.f32.mrf.mxu0
      %v6413 = vadd.f32 %v5773, %v6412
      %6414 = vmatmul.bf16.gmra.mxu0 %v6069
      %v6415 = vpop.f32.mrf.mxu0
      %v6416 = vadd.f32 %v5773, %v6415
      %v6417 = vpop.f32.mrf.mxu0
      %v6418 = vadd.f32 %v5773, %v6417
      %6419 = vmatmul.bf16.gmra.mxu0 %v6072
      %v6420 = vpop.f32.mrf.mxu0
      %v6421 = vadd.f32 %v5773, %v6420
      %v6422 = vpop.f32.mrf.mxu0
      %v6423 = vadd.f32 %v5773, %v6422
      %6424 = vmatmul.bf16.gmra.mxu0 %v6075
      %v6425 = vpop.f32.mrf.mxu0
      %v6426 = vadd.f32 %v5773, %v6425
      %v6427 = vpop.f32.mrf.mxu0
      %v6428 = vadd.f32 %v5773, %v6427
      %6429 = vmatmul.bf16.gmra.mxu0 %v6078
      %v6430 = vpop.f32.mrf.mxu0
      %v6431 = vadd.f32 %v5773, %v6430
      %v6432 = vpop.f32.mrf.mxu0
      %v6433 = vadd.f32 %v5773, %v6432
      %6434 = vmatmul.bf16.gmra.mxu0 %v6081
      %v6435 = vpop.f32.mrf.mxu0
      %v6436 = vadd.f32 %v5773, %v6435
      %v6437 = vpop.f32.mrf.mxu0
      %v6438 = vadd.f32 %v5773, %v6437
      %6439 = vmatmul.bf16.gmra.mxu0 %v6084
      %v6440 = vpop.f32.mrf.mxu0
      %v6441 = vadd.f32 %v5773, %v6440
      %v6442 = vpop.f32.mrf.mxu0
      %v6443 = vadd.f32 %v5773, %v6442
      %6444 = vdwg.mxu0
      %6445 = vmatpush.bf16.msra.mxu0 %v6222
      %6446 = vmatpush.bf16.msra.mxu0 %v6221
      %6447 = vmatpush.bf16.msra.mxu0 %v6220
      %6448 = vmatpush.bf16.msra.mxu0 %v6219
      %6449 = vmatpush.bf16.msra.mxu0 %v6218
      %6450 = vmatpush.bf16.msra.mxu0 %v6217
      %6451 = vmatpush.bf16.msra.mxu0 %v6216
      %6452 = vmatpush.bf16.msra.mxu0 %v6215
      %6453 = vmatmul.bf16.gmra.mxu0 %v6016
      %v6454 = vpop.f32.mrf.mxu0
      %v6455 = vadd.f32 %v6326, %v6454
      %v6456 = vpop.f32.mrf.mxu0
      %v6457 = vadd.f32 %v6328, %v6456
      %6458 = vmatmul.bf16.gmra.mxu0 %v6019
      %v6459 = vpop.f32.mrf.mxu0
      %v6460 = vadd.f32 %v6331, %v6459
      %v6461 = vpop.f32.mrf.mxu0
      %v6462 = vadd.f32 %v6333, %v6461
      %6463 = vmatmul.bf16.gmra.mxu0 %v6022
      %v6464 = vpop.f32.mrf.mxu0
      %v6465 = vadd.f32 %v6336, %v6464
      %v6466 = vpop.f32.mrf.mxu0
      %v6467 = vadd.f32 %v6338, %v6466
      %6468 = vmatmul.bf16.gmra.mxu0 %v6025
      %v6469 = vpop.f32.mrf.mxu0
      %v6470 = vadd.f32 %v6341, %v6469
      %v6471 = vpop.f32.mrf.mxu0
      %v6472 = vadd.f32 %v6343, %v6471
      %6473 = vmatmul.bf16.gmra.mxu0 %v6028
      %v6474 = vpop.f32.mrf.mxu0
      %v6475 = vadd.f32 %v6346, %v6474
      %v6476 = vpop.f32.mrf.mxu0
      %v6477 = vadd.f32 %v6348, %v6476
      %6478 = vmatmul.bf16.gmra.mxu0 %v6031
      %v6479 = vpop.f32.mrf.mxu0
      %v6480 = vadd.f32 %v6351, %v6479
      %v6481 = vpop.f32.mrf.mxu0
      %v6482 = vadd.f32 %v6353, %v6481
      %6483 = vmatmul.bf16.gmra.mxu0 %v6034
      %v6484 = vpop.f32.mrf.mxu0
      %v6485 = vadd.f32 %v6356, %v6484
      %v6486 = vpop.f32.mrf.mxu0
      %v6487 = vadd.f32 %v6358, %v6486
      %6488 = vmatmul.bf16.gmra.mxu0 %v6037
      %v6489 = vpop.f32.mrf.mxu0
      %v6490 = vadd.f32 %v6361, %v6489
      %v6491 = vpop.f32.mrf.mxu0
      %v6492 = vadd.f32 %v6363, %v6491
      %6493 = vmatmul.bf16.gmra.mxu0 %v6040
      %v6494 = vpop.f32.mrf.mxu0
      %v6495 = vadd.f32 %v6366, %v6494
      %v6496 = vpop.f32.mrf.mxu0
      %v6497 = vadd.f32 %v6368, %v6496
      %6498 = vmatmul.bf16.gmra.mxu0 %v6043
      %v6499 = vpop.f32.mrf.mxu0
      %v6500 = vadd.f32 %v6371, %v6499
      %v6501 = vpop.f32.mrf.mxu0
      %v6502 = vadd.f32 %v6373, %v6501
      %6503 = vmatmul.bf16.gmra.mxu0 %v6046
      %v6504 = vpop.f32.mrf.mxu0
      %v6505 = vadd.f32 %v6376, %v6504
      %v6506 = vpop.f32.mrf.mxu0
      %v6507 = vadd.f32 %v6378, %v6506
      %6508 = vmatmul.bf16.gmra.mxu0 %v6049
      %v6509 = vpop.f32.mrf.mxu0
      %v6510 = vadd.f32 %v6381, %v6509
      %v6511 = vpop.f32.mrf.mxu0
      %v6512 = vadd.f32 %v6383, %v6511
      %6513 = vmatmul.bf16.gmra.mxu0 %v6052
      %v6514 = vpop.f32.mrf.mxu0
      %v6515 = vadd.f32 %v6386, %v6514
      %v6516 = vpop.f32.mrf.mxu0
      %v6517 = vadd.f32 %v6388, %v6516
      %6518 = vmatmul.bf16.gmra.mxu0 %v6055
      %v6519 = vpop.f32.mrf.mxu0
      %v6520 = vadd.f32 %v6391, %v6519
      %v6521 = vpop.f32.mrf.mxu0
      %v6522 = vadd.f32 %v6393, %v6521
      %6523 = vmatmul.bf16.gmra.mxu0 %v6058
      %v6524 = vpop.f32.mrf.mxu0
      %v6525 = vadd.f32 %v6396, %v6524
      %v6526 = vpop.f32.mrf.mxu0
      %v6527 = vadd.f32 %v6398, %v6526
      %6528 = vmatmul.bf16.gmra.mxu0 %v6061
      %v6529 = vpop.f32.mrf.mxu0
      %v6530 = vadd.f32 %v6401, %v6529
      %v6531 = vpop.f32.mrf.mxu0
      %v6532 = vadd.f32 %v6403, %v6531
      %6533 = vmatmul.bf16.gmra.mxu0 %v6064
      %v6534 = vpop.f32.mrf.mxu0
      %v6535 = vadd.f32 %v6406, %v6534
      %v6536 = vpop.f32.mrf.mxu0
      %v6537 = vadd.f32 %v6408, %v6536
      %6538 = vmatmul.bf16.gmra.mxu0 %v6067
      %v6539 = vpop.f32.mrf.mxu0
      %v6540 = vadd.f32 %v6411, %v6539
      %v6541 = vpop.f32.mrf.mxu0
      %v6542 = vadd.f32 %v6413, %v6541
      %6543 = vmatmul.bf16.gmra.mxu0 %v6070
      %v6544 = vpop.f32.mrf.mxu0
      %v6545 = vadd.f32 %v6416, %v6544
      %v6546 = vpop.f32.mrf.mxu0
      %v6547 = vadd.f32 %v6418, %v6546
      %6548 = vmatmul.bf16.gmra.mxu0 %v6073
      %v6549 = vpop.f32.mrf.mxu0
      %v6550 = vadd.f32 %v6421, %v6549
      %v6551 = vpop.f32.mrf.mxu0
      %v6552 = vadd.f32 %v6423, %v6551
      %6553 = vmatmul.bf16.gmra.mxu0 %v6076
      %v6554 = vpop.f32.mrf.mxu0
      %v6555 = vadd.f32 %v6426, %v6554
      %v6556 = vpop.f32.mrf.mxu0
      %v6557 = vadd.f32 %v6428, %v6556
      %6558 = vmatmul.bf16.gmra.mxu0 %v6079
      %v6559 = vpop.f32.mrf.mxu0
      %v6560 = vadd.f32 %v6431, %v6559
      %v6561 = vpop.f32.mrf.mxu0
      %v6562 = vadd.f32 %v6433, %v6561
      %6563 = vmatmul.bf16.gmra.mxu0 %v6082
      %v6564 = vpop.f32.mrf.mxu0
      %v6565 = vadd.f32 %v6436, %v6564
      %v6566 = vpop.f32.mrf.mxu0
      %v6567 = vadd.f32 %v6438, %v6566
      %6568 = vmatmul.bf16.gmra.mxu0 %v6085
      %v6569 = vpop.f32.mrf.mxu0
      %v6570 = vadd.f32 %v6441, %v6569
      %v6571 = vpop.f32.mrf.mxu0
      %v6572 = vadd.f32 %v6443, %v6571
      %6573 = vdwg.mxu0
      %6574 = vmatpush.bf16.msra.mxu0 0
      %6575 = vmatpush.bf16.msra.mxu0 0
      %6576 = vmatpush.bf16.msra.mxu0 0
      %6577 = vmatpush.bf16.msra.mxu0 0
      %6578 = vmatpush.bf16.msra.mxu0 0
      %6579 = vmatpush.bf16.msra.mxu0 0
      %6580 = vmatpush.bf16.msra.mxu0 %v6224
      %6581 = vmatpush.bf16.msra.mxu0 %v6223
      %6582 = vmatmul.bf16.gmra.mxu0 %v6245
      %v6583 = vpop.f32.mrf.mxu0
      %v6584 = vadd.f32 %v6455, %v6583
      %v6585 = vpop.f32.mrf.mxu0
      %v6586 = vadd.f32 %v6457, %v6585
      %6587 = vmatmul.bf16.gmra.mxu0 %v6248
      %v6588 = vpop.f32.mrf.mxu0
      %v6589 = vadd.f32 %v6460, %v6588
      %v6590 = vpop.f32.mrf.mxu0
      %v6591 = vadd.f32 %v6462, %v6590
      %6592 = vmatmul.bf16.gmra.mxu0 %v6251
      %v6593 = vpop.f32.mrf.mxu0
      %v6594 = vadd.f32 %v6465, %v6593
      %v6595 = vpop.f32.mrf.mxu0
      %v6596 = vadd.f32 %v6467, %v6595
      %6597 = vmatmul.bf16.gmra.mxu0 %v6254
      %v6598 = vpop.f32.mrf.mxu0
      %v6599 = vadd.f32 %v6470, %v6598
      %v6600 = vpop.f32.mrf.mxu0
      %v6601 = vadd.f32 %v6472, %v6600
      %6602 = vmatmul.bf16.gmra.mxu0 %v6257
      %v6603 = vpop.f32.mrf.mxu0
      %v6604 = vadd.f32 %v6475, %v6603
      %v6605 = vpop.f32.mrf.mxu0
      %v6606 = vadd.f32 %v6477, %v6605
      %6607 = vmatmul.bf16.gmra.mxu0 %v6260
      %v6608 = vpop.f32.mrf.mxu0
      %v6609 = vadd.f32 %v6480, %v6608
      %v6610 = vpop.f32.mrf.mxu0
      %v6611 = vadd.f32 %v6482, %v6610
      %6612 = vmatmul.bf16.gmra.mxu0 %v6263
      %v6613 = vpop.f32.mrf.mxu0
      %v6614 = vadd.f32 %v6485, %v6613
      %v6615 = vpop.f32.mrf.mxu0
      %v6616 = vadd.f32 %v6487, %v6615
      %6617 = vmatmul.bf16.gmra.mxu0 %v6266
      %v6618 = vpop.f32.mrf.mxu0
      %v6619 = vadd.f32 %v6490, %v6618
      %v6620 = vpop.f32.mrf.mxu0
      %v6621 = vadd.f32 %v6492, %v6620
      %6622 = vmatmul.bf16.gmra.mxu0 %v6269
      %v6623 = vpop.f32.mrf.mxu0
      %v6624 = vadd.f32 %v6495, %v6623
      %v6625 = vpop.f32.mrf.mxu0
      %v6626 = vadd.f32 %v6497, %v6625
      %6627 = vmatmul.bf16.gmra.mxu0 %v6272
      %v6628 = vpop.f32.mrf.mxu0
      %v6629 = vadd.f32 %v6500, %v6628
      %v6630 = vpop.f32.mrf.mxu0
      %v6631 = vadd.f32 %v6502, %v6630
      %6632 = vmatmul.bf16.gmra.mxu0 %v6275
      %v6633 = vpop.f32.mrf.mxu0
      %v6634 = vadd.f32 %v6505, %v6633
      %v6635 = vpop.f32.mrf.mxu0
      %v6636 = vadd.f32 %v6507, %v6635
      %6637 = vmatmul.bf16.gmra.mxu0 %v6278
      %v6638 = vpop.f32.mrf.mxu0
      %v6639 = vadd.f32 %v6510, %v6638
      %v6640 = vpop.f32.mrf.mxu0
      %v6641 = vadd.f32 %v6512, %v6640
      %6642 = vmatmul.bf16.gmra.mxu0 %v6281
      %v6643 = vpop.f32.mrf.mxu0
      %v6644 = vadd.f32 %v6515, %v6643
      %v6645 = vpop.f32.mrf.mxu0
      %v6646 = vadd.f32 %v6517, %v6645
      %6647 = vmatmul.bf16.gmra.mxu0 %v6284
      %v6648 = vpop.f32.mrf.mxu0
      %v6649 = vadd.f32 %v6520, %v6648
      %v6650 = vpop.f32.mrf.mxu0
      %v6651 = vadd.f32 %v6522, %v6650
      %6652 = vmatmul.bf16.gmra.mxu0 %v6287
      %v6653 = vpop.f32.mrf.mxu0
      %v6654 = vadd.f32 %v6525, %v6653
      %v6655 = vpop.f32.mrf.mxu0
      %v6656 = vadd.f32 %v6527, %v6655
      %6657 = vmatmul.bf16.gmra.mxu0 %v6290
      %v6658 = vpop.f32.mrf.mxu0
      %v6659 = vadd.f32 %v6530, %v6658
      %v6660 = vpop.f32.mrf.mxu0
      %v6661 = vadd.f32 %v6532, %v6660
      %6662 = vmatmul.bf16.gmra.mxu0 %v6293
      %v6663 = vpop.f32.mrf.mxu0
      %v6664 = vadd.f32 %v6535, %v6663
      %v6665 = vpop.f32.mrf.mxu0
      %v6666 = vadd.f32 %v6537, %v6665
      %6667 = vmatmul.bf16.gmra.mxu0 %v6296
      %v6668 = vpop.f32.mrf.mxu0
      %v6669 = vadd.f32 %v6540, %v6668
      %v6670 = vpop.f32.mrf.mxu0
      %v6671 = vadd.f32 %v6542, %v6670
      %6672 = vmatmul.bf16.gmra.mxu0 %v6299
      %v6673 = vpop.f32.mrf.mxu0
      %v6674 = vadd.f32 %v6545, %v6673
      %v6675 = vpop.f32.mrf.mxu0
      %v6676 = vadd.f32 %v6547, %v6675
      %6677 = vmatmul.bf16.gmra.mxu0 %v6302
      %v6678 = vpop.f32.mrf.mxu0
      %v6679 = vadd.f32 %v6550, %v6678
      %v6680 = vpop.f32.mrf.mxu0
      %v6681 = vadd.f32 %v6552, %v6680
      %6682 = vmatmul.bf16.gmra.mxu0 %v6305
      %v6683 = vpop.f32.mrf.mxu0
      %v6684 = vadd.f32 %v6555, %v6683
      %v6685 = vpop.f32.mrf.mxu0
      %v6686 = vadd.f32 %v6557, %v6685
      %6687 = vmatmul.bf16.gmra.mxu0 %v6308
      %v6688 = vpop.f32.mrf.mxu0
      %v6689 = vadd.f32 %v6560, %v6688
      %v6690 = vpop.f32.mrf.mxu0
      %v6691 = vadd.f32 %v6562, %v6690
      %6692 = vmatmul.bf16.gmra.mxu0 %v6311
      %v6693 = vpop.f32.mrf.mxu0
      %v6694 = vadd.f32 %v6565, %v6693
      %v6695 = vpop.f32.mrf.mxu0
      %v6696 = vadd.f32 %v6567, %v6695
      %6697 = vmatmul.bf16.gmra.mxu0 %v6314
      %v6698 = vpop.f32.mrf.mxu0
      %v6699 = vadd.f32 %v6570, %v6698
      %v6700 = vpop.f32.mrf.mxu0
      %v6701 = vadd.f32 %v6572, %v6700
      %6702 = vdwg.mxu0
      %v6703 = vmax.f32 %v6584, 0.0
      %v6704 = vmax.f32 %v6586, 0.0
      %v6705 = vmax.f32 %v6589, 0.0
      %v6706 = vmax.f32 %v6591, 0.0
      %v6707 = vmax.f32 %v6594, 0.0
      %v6708 = vmax.f32 %v6596, 0.0
      %v6709 = vmax.f32 %v6599, 0.0
      %v6710 = vmax.f32 %v6601, 0.0
      %v6711 = vmax.f32 %v6604, 0.0
      %v6712 = vmax.f32 %v6606, 0.0
      %v6713 = vmax.f32 %v6609, 0.0
      %v6714 = vmax.f32 %v6611, 0.0
      %v6715 = vmax.f32 %v6614, 0.0
      %v6716 = vmax.f32 %v6616, 0.0
      %v6717 = vmax.f32 %v6619, 0.0
      %v6718 = vmax.f32 %v6621, 0.0
      %v6719 = vmax.f32 %v6624, 0.0
      %v6720 = vmax.f32 %v6626, 0.0
      %v6721 = vmax.f32 %v6629, 0.0
      %v6722 = vmax.f32 %v6631, 0.0
      %v6723 = vmax.f32 %v6634, 0.0
      %v6724 = vmax.f32 %v6636, 0.0
      %v6725 = vmax.f32 %v6639, 0.0
      %v6726 = vmax.f32 %v6641, 0.0
      %v6727 = vmax.f32 %v6644, 0.0
      %v6728 = vmax.f32 %v6646, 0.0
      %v6729 = vmax.f32 %v6649, 0.0
      %v6730 = vmax.f32 %v6651, 0.0
      %v6731 = vmax.f32 %v6654, 0.0
      %v6732 = vmax.f32 %v6656, 0.0
      %v6733 = vmax.f32 %v6659, 0.0
      %v6734 = vmax.f32 %v6661, 0.0
      %v6735 = vmax.f32 %v6664, 0.0
      %v6736 = vmax.f32 %v6666, 0.0
      %v6737 = vmax.f32 %v6669, 0.0
      %v6738 = vmax.f32 %v6671, 0.0
      %v6739 = vmax.f32 %v6674, 0.0
      %v6740 = vmax.f32 %v6676, 0.0
      %v6741 = vmax.f32 %v6679, 0.0
      %v6742 = vmax.f32 %v6681, 0.0
      %v6743 = vmax.f32 %v6684, 0.0
      %v6744 = vmax.f32 %v6686, 0.0
      %v6745 = vmax.f32 %v6689, 0.0
      %v6746 = vmax.f32 %v6691, 0.0
      %v6747 = vmax.f32 %v6694, 0.0
      %v6748 = vmax.f32 %v6696, 0.0
      %v6749 = vmax.f32 %v6699, 0.0
      %v6750 = vmax.f32 %v6701, 0.0
      %v6751 = vpack.c.bf16 %v6704, %v6703
      %v6752 = vpack.c.bf16 %v6706, %v6705
      %v6753 = vpack.c.bf16 %v6708, %v6707
      %v6754 = vpack.c.bf16 %v6710, %v6709
      %v6755 = vpack.c.bf16 %v6712, %v6711
      %v6756 = vpack.c.bf16 %v6714, %v6713
      %v6757 = vpack.c.bf16 %v6716, %v6715
      %v6758 = vpack.c.bf16 %v6718, %v6717
      %v6759 = vpack.c.bf16 %v6720, %v6719
      %v6760 = vpack.c.bf16 %v6722, %v6721
      %v6761 = vpack.c.bf16 %v6724, %v6723
      %v6762 = vpack.c.bf16 %v6726, %v6725
      %v6763 = vpack.c.bf16 %v6728, %v6727
      %v6764 = vpack.c.bf16 %v6730, %v6729
      %v6765 = vpack.c.bf16 %v6732, %v6731
      %v6766 = vpack.c.bf16 %v6734, %v6733
      %v6767 = vpack.c.bf16 %v6736, %v6735
      %v6768 = vpack.c.bf16 %v6738, %v6737
      %v6769 = vpack.c.bf16 %v6740, %v6739
      %v6770 = vpack.c.bf16 %v6742, %v6741
      %v6771 = vpack.c.bf16 %v6744, %v6743
      %v6772 = vpack.c.bf16 %v6746, %v6745
      %v6773 = vpack.c.bf16 %v6748, %v6747
      %v6774 = vpack.c.bf16 %v6750, %v6749
      %v6775 = vld [vmem:[%s4] sm:$0xff]
      %v6776 = vld [vmem:[%s4 + $0x8] sm:$0xf]
      %v6777 = vld [vmem:[%s4 + $0xc] sm:$0xff]
      %v6778 = vld [vmem:[%s4 + $0x14] sm:$0xf]
      %v6779 = vld [vmem:[%s4 + $0x18] sm:$0xff]
      %v6780 = vld [vmem:[%s4 + $0x20] sm:$0xf]
      %v6781 = vld [vmem:[%s4 + $0x24] sm:$0xff]
      %v6782 = vld [vmem:[%s4 + $0x2c] sm:$0xf]
      %v6783 = vld [vmem:[%s4 + $0x30] sm:$0xff]
      %v6784 = vld [vmem:[%s4 + $0x38] sm:$0xf]
      %v6785 = vld [vmem:[%s4 + $0x3c] sm:$0xff]
      %v6786 = vld [vmem:[%s4 + $0x44] sm:$0xf]
      %v6787 = vld [vmem:[%s4 + $0x48] sm:$0xff]
      %v6788 = vld [vmem:[%s4 + $0x50] sm:$0xf]
      %v6789 = vld [vmem:[%s4 + $0x54] sm:$0xff]
      %v6790 = vld [vmem:[%s4 + $0x5c] sm:$0xf]
      %v6791 = vld [vmem:[%s5] sm:$0x7]
      %v6793 = vperm.slane %v6791, 0
      %v6794 = vperm.slane %v6791, 1
      %v6795 = vperm.slane %v6791, 2
      %v6815 = vunpack.c.l.b16 %v6775
      %v6816 = vunpack.c.h.b16 %v6775
      %v6817 = vunpack.c.l.b16 %v6776
      %v6818 = vunpack.c.l.b16 %v6777
      %v6819 = vunpack.c.h.b16 %v6777
      %v6820 = vunpack.c.l.b16 %v6778
      %v6821 = vunpack.c.l.b16 %v6779
      %v6822 = vunpack.c.h.b16 %v6779
      %v6823 = vunpack.c.l.b16 %v6780
      %v6824 = vunpack.c.l.b16 %v6781
      %v6825 = vunpack.c.h.b16 %v6781
      %v6826 = vunpack.c.l.b16 %v6782
      %v6827 = vunpack.c.l.b16 %v6783
      %v6828 = vunpack.c.h.b16 %v6783
      %v6829 = vunpack.c.l.b16 %v6784
      %v6830 = vunpack.c.l.b16 %v6785
      %v6831 = vunpack.c.h.b16 %v6785
      %v6832 = vunpack.c.l.b16 %v6786
      %v6833 = vunpack.c.l.b16 %v6787
      %v6834 = vunpack.c.h.b16 %v6787
      %v6835 = vunpack.c.l.b16 %v6788
      %v6836 = vunpack.c.l.b16 %v6789
      %v6837 = vunpack.c.h.b16 %v6789
      %v6838 = vunpack.c.l.b16 %v6790
      %v6839 = vpack.c.b16 %v6818, %v6815
      %v6840 = vpack.c.b16 %v6819, %v6816
      %v6841 = vpack.c.b16 %v6820, %v6817
      %v6842 = vpack.c.b16 %v6824, %v6821
      %v6843 = vpack.c.b16 %v6825, %v6822
      %v6844 = vpack.c.b16 %v6826, %v6823
      %v6845 = vpack.c.b16 %v6830, %v6827
      %v6846 = vpack.c.b16 %v6831, %v6828
      %v6847 = vpack.c.b16 %v6832, %v6829
      %v6848 = vpack.c.b16 %v6836, %v6833
      %v6849 = vpack.c.b16 %v6837, %v6834
      %v6850 = vpack.c.b16 %v6838, %v6835
      %vm6863 = vcmask 523264
      %v6865 = vsel %vm6863, %v6751, 0
      %v6868 = vsel %vm6863, %v6752, 0
      %v6871 = vsel %vm6863, %v6753, 0
      %v6874 = vsel %vm6863, %v6754, 0
      %v6877 = vsel %vm6863, %v6755, 0
      %v6880 = vsel %vm6863, %v6756, 0
      %v6883 = vsel %vm6863, %v6757, 0
      %v6886 = vsel %vm6863, %v6758, 0
      %v6889 = vsel %vm6863, %v6759, 0
      %v6892 = vsel %vm6863, %v6760, 0
      %v6895 = vsel %vm6863, %v6761, 0
      %v6898 = vsel %vm6863, %v6762, 0
      %v6901 = vsel %vm6863, %v6763, 0
      %v6904 = vsel %vm6863, %v6764, 0
      %v6907 = vsel %vm6863, %v6765, 0
      %v6910 = vsel %vm6863, %v6766, 0
      %v6913 = vsel %vm6863, %v6767, 0
      %v6916 = vsel %vm6863, %v6768, 0
      %v6919 = vsel %vm6863, %v6769, 0
      %v6922 = vsel %vm6863, %v6770, 0
      %v6925 = vsel %vm6863, %v6771, 0
      %v6928 = vsel %vm6863, %v6772, 0
      %v6931 = vsel %vm6863, %v6773, 0
      %v6934 = vsel %vm6863, %v6774, 0
      %6936 = vmatpush.bf16.msra.mxu0 0
      %6937 = vmatpush.bf16.msra.mxu0 0
      %6938 = vmatpush.bf16.msra.mxu0 0
      %6939 = vmatpush.bf16.msra.mxu0 0
      %6940 = vmatpush.bf16.msra.mxu0 %v6848
      %6941 = vmatpush.bf16.msra.mxu0 %v6845
      %6942 = vmatpush.bf16.msra.mxu0 %v6842
      %6943 = vmatpush.bf16.msra.mxu0 %v6839
      %6944 = vmatmul.bf16.gmra.mxu0 %v6865
      %v6945 = vpop.f32.mrf.mxu0
      %v6946 = vadd.f32 %v6793, %v6945
      %v6947 = vpop.f32.mrf.mxu0
      %v6948 = vadd.f32 %v6793, %v6947
      %6949 = vmatmul.bf16.gmra.mxu0 %v6868
      %v6950 = vpop.f32.mrf.mxu0
      %v6951 = vadd.f32 %v6793, %v6950
      %v6952 = vpop.f32.mrf.mxu0
      %v6953 = vadd.f32 %v6793, %v6952
      %6954 = vmatmul.bf16.gmra.mxu0 %v6871
      %v6955 = vpop.f32.mrf.mxu0
      %v6956 = vadd.f32 %v6793, %v6955
      %v6957 = vpop.f32.mrf.mxu0
      %v6958 = vadd.f32 %v6793, %v6957
      %6959 = vmatmul.bf16.gmra.mxu0 %v6874
      %v6960 = vpop.f32.mrf.mxu0
      %v6961 = vadd.f32 %v6793, %v6960
      %v6962 = vpop.f32.mrf.mxu0
      %v6963 = vadd.f32 %v6793, %v6962
      %6964 = vmatmul.bf16.gmra.mxu0 %v6877
      %v6965 = vpop.f32.mrf.mxu0
      %v6966 = vadd.f32 %v6793, %v6965
      %v6967 = vpop.f32.mrf.mxu0
      %v6968 = vadd.f32 %v6793, %v6967
      %6969 = vmatmul.bf16.gmra.mxu0 %v6880
      %v6970 = vpop.f32.mrf.mxu0
      %v6971 = vadd.f32 %v6793, %v6970
      %v6972 = vpop.f32.mrf.mxu0
      %v6973 = vadd.f32 %v6793, %v6972
      %6974 = vmatmul.bf16.gmra.mxu0 %v6883
      %v6975 = vpop.f32.mrf.mxu0
      %v6976 = vadd.f32 %v6793, %v6975
      %v6977 = vpop.f32.mrf.mxu0
      %v6978 = vadd.f32 %v6793, %v6977
      %6979 = vmatmul.bf16.gmra.mxu0 %v6886
      %v6980 = vpop.f32.mrf.mxu0
      %v6981 = vadd.f32 %v6793, %v6980
      %v6982 = vpop.f32.mrf.mxu0
      %v6983 = vadd.f32 %v6793, %v6982
      %6984 = vmatmul.bf16.gmra.mxu0 %v6889
      %v6985 = vpop.f32.mrf.mxu0
      %v6986 = vadd.f32 %v6793, %v6985
      %v6987 = vpop.f32.mrf.mxu0
      %v6988 = vadd.f32 %v6793, %v6987
      %6989 = vmatmul.bf16.gmra.mxu0 %v6892
      %v6990 = vpop.f32.mrf.mxu0
      %v6991 = vadd.f32 %v6793, %v6990
      %v6992 = vpop.f32.mrf.mxu0
      %v6993 = vadd.f32 %v6793, %v6992
      %6994 = vmatmul.bf16.gmra.mxu0 %v6895
      %v6995 = vpop.f32.mrf.mxu0
      %v6996 = vadd.f32 %v6793, %v6995
      %v6997 = vpop.f32.mrf.mxu0
      %v6998 = vadd.f32 %v6793, %v6997
      %6999 = vmatmul.bf16.gmra.mxu0 %v6898
      %v7000 = vpop.f32.mrf.mxu0
      %v7001 = vadd.f32 %v6793, %v7000
      %v7002 = vpop.f32.mrf.mxu0
      %v7003 = vadd.f32 %v6793, %v7002
      %7004 = vmatmul.bf16.gmra.mxu0 %v6901
      %v7005 = vpop.f32.mrf.mxu0
      %v7006 = vadd.f32 %v6793, %v7005
      %v7007 = vpop.f32.mrf.mxu0
      %v7008 = vadd.f32 %v6793, %v7007
      %7009 = vmatmul.bf16.gmra.mxu0 %v6904
      %v7010 = vpop.f32.mrf.mxu0
      %v7011 = vadd.f32 %v6793, %v7010
      %v7012 = vpop.f32.mrf.mxu0
      %v7013 = vadd.f32 %v6793, %v7012
      %7014 = vmatmul.bf16.gmra.mxu0 %v6907
      %v7015 = vpop.f32.mrf.mxu0
      %v7016 = vadd.f32 %v6793, %v7015
      %v7017 = vpop.f32.mrf.mxu0
      %v7018 = vadd.f32 %v6793, %v7017
      %7019 = vmatmul.bf16.gmra.mxu0 %v6910
      %v7020 = vpop.f32.mrf.mxu0
      %v7021 = vadd.f32 %v6793, %v7020
      %v7022 = vpop.f32.mrf.mxu0
      %v7023 = vadd.f32 %v6793, %v7022
      %7024 = vmatmul.bf16.gmra.mxu0 %v6913
      %v7025 = vpop.f32.mrf.mxu0
      %v7026 = vadd.f32 %v6793, %v7025
      %v7027 = vpop.f32.mrf.mxu0
      %v7028 = vadd.f32 %v6793, %v7027
      %7029 = vmatmul.bf16.gmra.mxu0 %v6916
      %v7030 = vpop.f32.mrf.mxu0
      %v7031 = vadd.f32 %v6793, %v7030
      %v7032 = vpop.f32.mrf.mxu0
      %v7033 = vadd.f32 %v6793, %v7032
      %7034 = vmatmul.bf16.gmra.mxu0 %v6919
      %v7035 = vpop.f32.mrf.mxu0
      %v7036 = vadd.f32 %v6793, %v7035
      %v7037 = vpop.f32.mrf.mxu0
      %v7038 = vadd.f32 %v6793, %v7037
      %7039 = vmatmul.bf16.gmra.mxu0 %v6922
      %v7040 = vpop.f32.mrf.mxu0
      %v7041 = vadd.f32 %v6793, %v7040
      %v7042 = vpop.f32.mrf.mxu0
      %v7043 = vadd.f32 %v6793, %v7042
      %7044 = vmatmul.bf16.gmra.mxu0 %v6925
      %v7045 = vpop.f32.mrf.mxu0
      %v7046 = vadd.f32 %v6793, %v7045
      %v7047 = vpop.f32.mrf.mxu0
      %v7048 = vadd.f32 %v6793, %v7047
      %7049 = vmatmul.bf16.gmra.mxu0 %v6928
      %v7050 = vpop.f32.mrf.mxu0
      %v7051 = vadd.f32 %v6793, %v7050
      %v7052 = vpop.f32.mrf.mxu0
      %v7053 = vadd.f32 %v6793, %v7052
      %7054 = vmatmul.bf16.gmra.mxu0 %v6931
      %v7055 = vpop.f32.mrf.mxu0
      %v7056 = vadd.f32 %v6793, %v7055
      %v7057 = vpop.f32.mrf.mxu0
      %v7058 = vadd.f32 %v6793, %v7057
      %7059 = vmatmul.bf16.gmra.mxu0 %v6934
      %v7060 = vpop.f32.mrf.mxu0
      %v7061 = vadd.f32 %v6793, %v7060
      %v7062 = vpop.f32.mrf.mxu0
      %v7063 = vadd.f32 %v6793, %v7062
      %7064 = vdwg.mxu0
      %7065 = vmatpush.bf16.msra.mxu0 0
      %7066 = vmatpush.bf16.msra.mxu0 0
      %7067 = vmatpush.bf16.msra.mxu0 0
      %7068 = vmatpush.bf16.msra.mxu0 0
      %7069 = vmatpush.bf16.msra.mxu0 %v6849
      %7070 = vmatpush.bf16.msra.mxu0 %v6846
      %7071 = vmatpush.bf16.msra.mxu0 %v6843
      %7072 = vmatpush.bf16.msra.mxu0 %v6840
      %7073 = vmatmul.bf16.gmra.mxu0 %v6865
      %v7074 = vpop.f32.mrf.mxu0
      %v7075 = vadd.f32 %v6794, %v7074
      %v7076 = vpop.f32.mrf.mxu0
      %v7077 = vadd.f32 %v6794, %v7076
      %7078 = vmatmul.bf16.gmra.mxu0 %v6868
      %v7079 = vpop.f32.mrf.mxu0
      %v7080 = vadd.f32 %v6794, %v7079
      %v7081 = vpop.f32.mrf.mxu0
      %v7082 = vadd.f32 %v6794, %v7081
      %7083 = vmatmul.bf16.gmra.mxu0 %v6871
      %v7084 = vpop.f32.mrf.mxu0
      %v7085 = vadd.f32 %v6794, %v7084
      %v7086 = vpop.f32.mrf.mxu0
      %v7087 = vadd.f32 %v6794, %v7086
      %7088 = vmatmul.bf16.gmra.mxu0 %v6874
      %v7089 = vpop.f32.mrf.mxu0
      %v7090 = vadd.f32 %v6794, %v7089
      %v7091 = vpop.f32.mrf.mxu0
      %v7092 = vadd.f32 %v6794, %v7091
      %7093 = vmatmul.bf16.gmra.mxu0 %v6877
      %v7094 = vpop.f32.mrf.mxu0
      %v7095 = vadd.f32 %v6794, %v7094
      %v7096 = vpop.f32.mrf.mxu0
      %v7097 = vadd.f32 %v6794, %v7096
      %7098 = vmatmul.bf16.gmra.mxu0 %v6880
      %v7099 = vpop.f32.mrf.mxu0
      %v7100 = vadd.f32 %v6794, %v7099
      %v7101 = vpop.f32.mrf.mxu0
      %v7102 = vadd.f32 %v6794, %v7101
      %7103 = vmatmul.bf16.gmra.mxu0 %v6883
      %v7104 = vpop.f32.mrf.mxu0
      %v7105 = vadd.f32 %v6794, %v7104
      %v7106 = vpop.f32.mrf.mxu0
      %v7107 = vadd.f32 %v6794, %v7106
      %7108 = vmatmul.bf16.gmra.mxu0 %v6886
      %v7109 = vpop.f32.mrf.mxu0
      %v7110 = vadd.f32 %v6794, %v7109
      %v7111 = vpop.f32.mrf.mxu0
      %v7112 = vadd.f32 %v6794, %v7111
      %7113 = vmatmul.bf16.gmra.mxu0 %v6889
      %v7114 = vpop.f32.mrf.mxu0
      %v7115 = vadd.f32 %v6794, %v7114
      %v7116 = vpop.f32.mrf.mxu0
      %v7117 = vadd.f32 %v6794, %v7116
      %7118 = vmatmul.bf16.gmra.mxu0 %v6892
      %v7119 = vpop.f32.mrf.mxu0
      %v7120 = vadd.f32 %v6794, %v7119
      %v7121 = vpop.f32.mrf.mxu0
      %v7122 = vadd.f32 %v6794, %v7121
      %7123 = vmatmul.bf16.gmra.mxu0 %v6895
      %v7124 = vpop.f32.mrf.mxu0
      %v7125 = vadd.f32 %v6794, %v7124
      %v7126 = vpop.f32.mrf.mxu0
      %v7127 = vadd.f32 %v6794, %v7126
      %7128 = vmatmul.bf16.gmra.mxu0 %v6898
      %v7129 = vpop.f32.mrf.mxu0
      %v7130 = vadd.f32 %v6794, %v7129
      %v7131 = vpop.f32.mrf.mxu0
      %v7132 = vadd.f32 %v6794, %v7131
      %7133 = vmatmul.bf16.gmra.mxu0 %v6901
      %v7134 = vpop.f32.mrf.mxu0
      %v7135 = vadd.f32 %v6794, %v7134
      %v7136 = vpop.f32.mrf.mxu0
      %v7137 = vadd.f32 %v6794, %v7136
      %7138 = vmatmul.bf16.gmra.mxu0 %v6904
      %v7139 = vpop.f32.mrf.mxu0
      %v7140 = vadd.f32 %v6794, %v7139
      %v7141 = vpop.f32.mrf.mxu0
      %v7142 = vadd.f32 %v6794, %v7141
      %7143 = vmatmul.bf16.gmra.mxu0 %v6907
      %v7144 = vpop.f32.mrf.mxu0
      %v7145 = vadd.f32 %v6794, %v7144
      %v7146 = vpop.f32.mrf.mxu0
      %v7147 = vadd.f32 %v6794, %v7146
      %7148 = vmatmul.bf16.gmra.mxu0 %v6910
      %v7149 = vpop.f32.mrf.mxu0
      %v7150 = vadd.f32 %v6794, %v7149
      %v7151 = vpop.f32.mrf.mxu0
      %v7152 = vadd.f32 %v6794, %v7151
      %7153 = vmatmul.bf16.gmra.mxu0 %v6913
      %v7154 = vpop.f32.mrf.mxu0
      %v7155 = vadd.f32 %v6794, %v7154
      %v7156 = vpop.f32.mrf.mxu0
      %v7157 = vadd.f32 %v6794, %v7156
      %7158 = vmatmul.bf16.gmra.mxu0 %v6916
      %v7159 = vpop.f32.mrf.mxu0
      %v7160 = vadd.f32 %v6794, %v7159
      %v7161 = vpop.f32.mrf.mxu0
      %v7162 = vadd.f32 %v6794, %v7161
      %7163 = vmatmul.bf16.gmra.mxu0 %v6919
      %v7164 = vpop.f32.mrf.mxu0
      %v7165 = vadd.f32 %v6794, %v7164
      %v7166 = vpop.f32.mrf.mxu0
      %v7167 = vadd.f32 %v6794, %v7166
      %7168 = vmatmul.bf16.gmra.mxu0 %v6922
      %v7169 = vpop.f32.mrf.mxu0
      %v7170 = vadd.f32 %v6794, %v7169
      %v7171 = vpop.f32.mrf.mxu0
      %v7172 = vadd.f32 %v6794, %v7171
      %7173 = vmatmul.bf16.gmra.mxu0 %v6925
      %v7174 = vpop.f32.mrf.mxu0
      %v7175 = vadd.f32 %v6794, %v7174
      %v7176 = vpop.f32.mrf.mxu0
      %v7177 = vadd.f32 %v6794, %v7176
      %7178 = vmatmul.bf16.gmra.mxu0 %v6928
      %v7179 = vpop.f32.mrf.mxu0
      %v7180 = vadd.f32 %v6794, %v7179
      %v7181 = vpop.f32.mrf.mxu0
      %v7182 = vadd.f32 %v6794, %v7181
      %7183 = vmatmul.bf16.gmra.mxu0 %v6931
      %v7184 = vpop.f32.mrf.mxu0
      %v7185 = vadd.f32 %v6794, %v7184
      %v7186 = vpop.f32.mrf.mxu0
      %v7187 = vadd.f32 %v6794, %v7186
      %7188 = vmatmul.bf16.gmra.mxu0 %v6934
      %v7189 = vpop.f32.mrf.mxu0
      %v7190 = vadd.f32 %v6794, %v7189
      %v7191 = vpop.f32.mrf.mxu0
      %v7192 = vadd.f32 %v6794, %v7191
      %7193 = vdwg.mxu0
      %7194 = vmatpush.bf16.msra.mxu0 0
      %7195 = vmatpush.bf16.msra.mxu0 0
      %7196 = vmatpush.bf16.msra.mxu0 0
      %7197 = vmatpush.bf16.msra.mxu0 0
      %7198 = vmatpush.bf16.msra.mxu0 %v6850
      %7199 = vmatpush.bf16.msra.mxu0 %v6847
      %7200 = vmatpush.bf16.msra.mxu0 %v6844
      %7201 = vmatpush.bf16.msra.mxu0 %v6841
      %7202 = vmatmul.bf16.gmra.mxu0 %v6865
      %v7203 = vpop.f32.mrf.mxu0
      %v7204 = vadd.f32 %v6795, %v7203
      %v7205 = vpop.f32.mrf.mxu0
      %v7206 = vadd.f32 %v6795, %v7205
      %7207 = vmatmul.bf16.gmra.mxu0 %v6868
      %v7208 = vpop.f32.mrf.mxu0
      %v7209 = vadd.f32 %v6795, %v7208
      %v7210 = vpop.f32.mrf.mxu0
      %v7211 = vadd.f32 %v6795, %v7210
      %7212 = vmatmul.bf16.gmra.mxu0 %v6871
      %v7213 = vpop.f32.mrf.mxu0
      %v7214 = vadd.f32 %v6795, %v7213
      %v7215 = vpop.f32.mrf.mxu0
      %v7216 = vadd.f32 %v6795, %v7215
      %7217 = vmatmul.bf16.gmra.mxu0 %v6874
      %v7218 = vpop.f32.mrf.mxu0
      %v7219 = vadd.f32 %v6795, %v7218
      %v7220 = vpop.f32.mrf.mxu0
      %v7221 = vadd.f32 %v6795, %v7220
      %7222 = vmatmul.bf16.gmra.mxu0 %v6877
      %v7223 = vpop.f32.mrf.mxu0
      %v7224 = vadd.f32 %v6795, %v7223
      %v7225 = vpop.f32.mrf.mxu0
      %v7226 = vadd.f32 %v6795, %v7225
      %7227 = vmatmul.bf16.gmra.mxu0 %v6880
      %v7228 = vpop.f32.mrf.mxu0
      %v7229 = vadd.f32 %v6795, %v7228
      %v7230 = vpop.f32.mrf.mxu0
      %v7231 = vadd.f32 %v6795, %v7230
      %7232 = vmatmul.bf16.gmra.mxu0 %v6883
      %v7233 = vpop.f32.mrf.mxu0
      %v7234 = vadd.f32 %v6795, %v7233
      %v7235 = vpop.f32.mrf.mxu0
      %v7236 = vadd.f32 %v6795, %v7235
      %7237 = vmatmul.bf16.gmra.mxu0 %v6886
      %v7238 = vpop.f32.mrf.mxu0
      %v7239 = vadd.f32 %v6795, %v7238
      %v7240 = vpop.f32.mrf.mxu0
      %v7241 = vadd.f32 %v6795, %v7240
      %7242 = vmatmul.bf16.gmra.mxu0 %v6889
      %v7243 = vpop.f32.mrf.mxu0
      %v7244 = vadd.f32 %v6795, %v7243
      %v7245 = vpop.f32.mrf.mxu0
      %v7246 = vadd.f32 %v6795, %v7245
      %7247 = vmatmul.bf16.gmra.mxu0 %v6892
      %v7248 = vpop.f32.mrf.mxu0
      %v7249 = vadd.f32 %v6795, %v7248
      %v7250 = vpop.f32.mrf.mxu0
      %v7251 = vadd.f32 %v6795, %v7250
      %7252 = vmatmul.bf16.gmra.mxu0 %v6895
      %v7253 = vpop.f32.mrf.mxu0
      %v7254 = vadd.f32 %v6795, %v7253
      %v7255 = vpop.f32.mrf.mxu0
      %v7256 = vadd.f32 %v6795, %v7255
      %7257 = vmatmul.bf16.gmra.mxu0 %v6898
      %v7258 = vpop.f32.mrf.mxu0
      %v7259 = vadd.f32 %v6795, %v7258
      %v7260 = vpop.f32.mrf.mxu0
      %v7261 = vadd.f32 %v6795, %v7260
      %7262 = vmatmul.bf16.gmra.mxu0 %v6901
      %v7263 = vpop.f32.mrf.mxu0
      %v7264 = vadd.f32 %v6795, %v7263
      %v7265 = vpop.f32.mrf.mxu0
      %v7266 = vadd.f32 %v6795, %v7265
      %7267 = vmatmul.bf16.gmra.mxu0 %v6904
      %v7268 = vpop.f32.mrf.mxu0
      %v7269 = vadd.f32 %v6795, %v7268
      %v7270 = vpop.f32.mrf.mxu0
      %v7271 = vadd.f32 %v6795, %v7270
      %7272 = vmatmul.bf16.gmra.mxu0 %v6907
      %v7273 = vpop.f32.mrf.mxu0
      %v7274 = vadd.f32 %v6795, %v7273
      %v7275 = vpop.f32.mrf.mxu0
      %v7276 = vadd.f32 %v6795, %v7275
      %7277 = vmatmul.bf16.gmra.mxu0 %v6910
      %v7278 = vpop.f32.mrf.mxu0
      %v7279 = vadd.f32 %v6795, %v7278
      %v7280 = vpop.f32.mrf.mxu0
      %v7281 = vadd.f32 %v6795, %v7280
      %7282 = vmatmul.bf16.gmra.mxu0 %v6913
      %v7283 = vpop.f32.mrf.mxu0
      %v7284 = vadd.f32 %v6795, %v7283
      %v7285 = vpop.f32.mrf.mxu0
      %v7286 = vadd.f32 %v6795, %v7285
      %7287 = vmatmul.bf16.gmra.mxu0 %v6916
      %v7288 = vpop.f32.mrf.mxu0
      %v7289 = vadd.f32 %v6795, %v7288
      %v7290 = vpop.f32.mrf.mxu0
      %v7291 = vadd.f32 %v6795, %v7290
      %7292 = vmatmul.bf16.gmra.mxu0 %v6919
      %v7293 = vpop.f32.mrf.mxu0
      %v7294 = vadd.f32 %v6795, %v7293
      %v7295 = vpop.f32.mrf.mxu0
      %v7296 = vadd.f32 %v6795, %v7295
      %7297 = vmatmul.bf16.gmra.mxu0 %v6922
      %v7298 = vpop.f32.mrf.mxu0
      %v7299 = vadd.f32 %v6795, %v7298
      %v7300 = vpop.f32.mrf.mxu0
      %v7301 = vadd.f32 %v6795, %v7300
      %7302 = vmatmul.bf16.gmra.mxu0 %v6925
      %v7303 = vpop.f32.mrf.mxu0
      %v7304 = vadd.f32 %v6795, %v7303
      %v7305 = vpop.f32.mrf.mxu0
      %v7306 = vadd.f32 %v6795, %v7305
      %7307 = vmatmul.bf16.gmra.mxu0 %v6928
      %v7308 = vpop.f32.mrf.mxu0
      %v7309 = vadd.f32 %v6795, %v7308
      %v7310 = vpop.f32.mrf.mxu0
      %v7311 = vadd.f32 %v6795, %v7310
      %7312 = vmatmul.bf16.gmra.mxu0 %v6931
      %v7313 = vpop.f32.mrf.mxu0
      %v7314 = vadd.f32 %v6795, %v7313
      %v7315 = vpop.f32.mrf.mxu0
      %v7316 = vadd.f32 %v6795, %v7315
      %7317 = vmatmul.bf16.gmra.mxu0 %v6934
      %v7318 = vpop.f32.mrf.mxu0
      %v7319 = vadd.f32 %v6795, %v7318
      %v7320 = vpop.f32.mrf.mxu0
      %v7321 = vadd.f32 %v6795, %v7320
      %7322 = vdwg.mxu0
      %v7323 = vmax.f32 %v7204, 0.0
      %v7324 = vmax.f32 %v7206, 0.0
      %v7325 = vmax.f32 %v7209, 0.0
      %v7326 = vmax.f32 %v7211, 0.0
      %v7327 = vmax.f32 %v7214, 0.0
      %v7328 = vmax.f32 %v7216, 0.0
      %v7329 = vmax.f32 %v7219, 0.0
      %v7330 = vmax.f32 %v7221, 0.0
      %v7331 = vmax.f32 %v7224, 0.0
      %v7332 = vmax.f32 %v7226, 0.0
      %v7333 = vmax.f32 %v7229, 0.0
      %v7334 = vmax.f32 %v7231, 0.0
      %v7335 = vmax.f32 %v7234, 0.0
      %v7336 = vmax.f32 %v7236, 0.0
      %v7337 = vmax.f32 %v7239, 0.0
      %v7338 = vmax.f32 %v7241, 0.0
      %v7339 = vmax.f32 %v7244, 0.0
      %v7340 = vmax.f32 %v7246, 0.0
      %v7341 = vmax.f32 %v7249, 0.0
      %v7342 = vmax.f32 %v7251, 0.0
      %v7343 = vmax.f32 %v7254, 0.0
      %v7344 = vmax.f32 %v7256, 0.0
      %v7345 = vmax.f32 %v7259, 0.0
      %v7346 = vmax.f32 %v7261, 0.0
      %v7347 = vmax.f32 %v7264, 0.0
      %v7348 = vmax.f32 %v7266, 0.0
      %v7349 = vmax.f32 %v7269, 0.0
      %v7350 = vmax.f32 %v7271, 0.0
      %v7351 = vmax.f32 %v7274, 0.0
      %v7352 = vmax.f32 %v7276, 0.0
      %v7353 = vmax.f32 %v7279, 0.0
      %v7354 = vmax.f32 %v7281, 0.0
      %v7355 = vmax.f32 %v7284, 0.0
      %v7356 = vmax.f32 %v7286, 0.0
      %v7357 = vmax.f32 %v7289, 0.0
      %v7358 = vmax.f32 %v7291, 0.0
      %v7359 = vmax.f32 %v7294, 0.0
      %v7360 = vmax.f32 %v7296, 0.0
      %v7361 = vmax.f32 %v7299, 0.0
      %v7362 = vmax.f32 %v7301, 0.0
      %v7363 = vmax.f32 %v7304, 0.0
      %v7364 = vmax.f32 %v7306, 0.0
      %v7365 = vmax.f32 %v7309, 0.0
      %v7366 = vmax.f32 %v7311, 0.0
      %v7367 = vmax.f32 %v7314, 0.0
      %v7368 = vmax.f32 %v7316, 0.0
      %v7369 = vmax.f32 %v7319, 0.0
      %v7370 = vmax.f32 %v7321, 0.0
      %v7371 = vand.u32 2147483647, %v7204
      %v7372 = vand.u32 2147483647, %v7206
      %v7373 = vand.u32 2147483647, %v7209
      %v7374 = vand.u32 2147483647, %v7211
      %v7375 = vand.u32 2147483647, %v7214
      %v7376 = vand.u32 2147483647, %v7216
      %v7377 = vand.u32 2147483647, %v7219
      %v7378 = vand.u32 2147483647, %v7221
      %v7379 = vand.u32 2147483647, %v7224
      %v7380 = vand.u32 2147483647, %v7226
      %v7381 = vand.u32 2147483647, %v7229
      %v7382 = vand.u32 2147483647, %v7231
      %v7383 = vand.u32 2147483647, %v7234
      %v7384 = vand.u32 2147483647, %v7236
      %v7385 = vand.u32 2147483647, %v7239
      %v7386 = vand.u32 2147483647, %v7241
      %v7387 = vand.u32 2147483647, %v7244
      %v7388 = vand.u32 2147483647, %v7246
      %v7389 = vand.u32 2147483647, %v7249
      %v7390 = vand.u32 2147483647, %v7251
      %v7391 = vand.u32 2147483647, %v7254
      %v7392 = vand.u32 2147483647, %v7256
      %v7393 = vand.u32 2147483647, %v7259
      %v7394 = vand.u32 2147483647, %v7261
      %v7395 = vand.u32 2147483647, %v7264
      %v7396 = vand.u32 2147483647, %v7266
      %v7397 = vand.u32 2147483647, %v7269
      %v7398 = vand.u32 2147483647, %v7271
      %v7399 = vand.u32 2147483647, %v7274
      %v7400 = vand.u32 2147483647, %v7276
      %v7401 = vand.u32 2147483647, %v7279
      %v7402 = vand.u32 2147483647, %v7281
      %v7403 = vand.u32 2147483647, %v7284
      %v7404 = vand.u32 2147483647, %v7286
      %v7405 = vand.u32 2147483647, %v7289
      %v7406 = vand.u32 2147483647, %v7291
      %v7407 = vand.u32 2147483647, %v7294
      %v7408 = vand.u32 2147483647, %v7296
      %v7409 = vand.u32 2147483647, %v7299
      %v7410 = vand.u32 2147483647, %v7301
      %v7411 = vand.u32 2147483647, %v7304
      %v7412 = vand.u32 2147483647, %v7306
      %v7413 = vand.u32 2147483647, %v7309
      %v7414 = vand.u32 2147483647, %v7311
      %v7415 = vand.u32 2147483647, %v7314
      %v7416 = vand.u32 2147483647, %v7316
      %v7417 = vand.u32 2147483647, %v7319
      %v7418 = vand.u32 2147483647, %v7321
      %v7419 = vsub.f32 0.0, %v7371
      %v7420 = vsub.f32 0.0, %v7372
      %v7421 = vsub.f32 0.0, %v7373
      %v7422 = vsub.f32 0.0, %v7374
      %v7423 = vsub.f32 0.0, %v7375
      %v7424 = vsub.f32 0.0, %v7376
      %v7425 = vsub.f32 0.0, %v7377
      %v7426 = vsub.f32 0.0, %v7378
      %v7427 = vsub.f32 0.0, %v7379
      %v7428 = vsub.f32 0.0, %v7380
      %v7429 = vsub.f32 0.0, %v7381
      %v7430 = vsub.f32 0.0, %v7382
      %v7431 = vsub.f32 0.0, %v7383
      %v7432 = vsub.f32 0.0, %v7384
      %v7433 = vsub.f32 0.0, %v7385
      %v7434 = vsub.f32 0.0, %v7386
      %v7435 = vsub.f32 0.0, %v7387
      %v7436 = vsub.f32 0.0, %v7388
      %v7437 = vsub.f32 0.0, %v7389
      %v7438 = vsub.f32 0.0, %v7390
      %v7439 = vsub.f32 0.0, %v7391
      %v7440 = vsub.f32 0.0, %v7392
      %v7441 = vsub.f32 0.0, %v7393
      %v7442 = vsub.f32 0.0, %v7394
      %v7443 = vsub.f32 0.0, %v7395
      %v7444 = vsub.f32 0.0, %v7396
      %v7445 = vsub.f32 0.0, %v7397
      %v7446 = vsub.f32 0.0, %v7398
      %v7447 = vsub.f32 0.0, %v7399
      %v7448 = vsub.f32 0.0, %v7400
      %v7449 = vsub.f32 0.0, %v7401
      %v7450 = vsub.f32 0.0, %v7402
      %v7451 = vsub.f32 0.0, %v7403
      %v7452 = vsub.f32 0.0, %v7404
      %v7453 = vsub.f32 0.0, %v7405
      %v7454 = vsub.f32 0.0, %v7406
      %v7455 = vsub.f32 0.0, %v7407
      %v7456 = vsub.f32 0.0, %v7408
      %v7457 = vsub.f32 0.0, %v7409
      %v7458 = vsub.f32 0.0, %v7410
      %v7459 = vsub.f32 0.0, %v7411
      %v7460 = vsub.f32 0.0, %v7412
      %v7461 = vsub.f32 0.0, %v7413
      %v7462 = vsub.f32 0.0, %v7414
      %v7463 = vsub.f32 0.0, %v7415
      %v7464 = vsub.f32 0.0, %v7416
      %v7465 = vsub.f32 0.0, %v7417
      %v7466 = vsub.f32 0.0, %v7418
      %v7467 = vmul.f32 %v7419, 1.442695
      %v7468 = vpow.pop %v7467
      %v7469 = vmul.f32 %v7420, 1.442695
      %v7470 = vpow.pop %v7469
      %v7471 = vmul.f32 %v7421, 1.442695
      %v7472 = vpow.pop %v7471
      %v7473 = vmul.f32 %v7422, 1.442695
      %v7474 = vpow.pop %v7473
      %v7475 = vmul.f32 %v7423, 1.442695
      %v7476 = vpow.pop %v7475
      %v7477 = vmul.f32 %v7424, 1.442695
      %v7478 = vpow.pop %v7477
      %v7479 = vmul.f32 %v7425, 1.442695
      %v7480 = vpow.pop %v7479
      %v7481 = vmul.f32 %v7426, 1.442695
      %v7482 = vpow.pop %v7481
      %v7483 = vmul.f32 %v7427, 1.442695
      %v7484 = vpow.pop %v7483
      %v7485 = vmul.f32 %v7428, 1.442695
      %v7486 = vpow.pop %v7485
      %v7487 = vmul.f32 %v7429, 1.442695
      %v7488 = vpow.pop %v7487
      %v7489 = vmul.f32 %v7430, 1.442695
      %v7490 = vpow.pop %v7489
      %v7491 = vmul.f32 %v7431, 1.442695
      %v7492 = vpow.pop %v7491
      %v7493 = vmul.f32 %v7432, 1.442695
      %v7494 = vpow.pop %v7493
      %v7495 = vmul.f32 %v7433, 1.442695
      %v7496 = vpow.pop %v7495
      %v7497 = vmul.f32 %v7434, 1.442695
      %v7498 = vpow.pop %v7497
      %v7499 = vmul.f32 %v7435, 1.442695
      %v7500 = vpow.pop %v7499
      %v7501 = vmul.f32 %v7436, 1.442695
      %v7502 = vpow.pop %v7501
      %v7503 = vmul.f32 %v7437, 1.442695
      %v7504 = vpow.pop %v7503
      %v7505 = vmul.f32 %v7438, 1.442695
      %v7506 = vpow.pop %v7505
      %v7507 = vmul.f32 %v7439, 1.442695
      %v7508 = vpow.pop %v7507
      %v7509 = vmul.f32 %v7440, 1.442695
      %v7510 = vpow.pop %v7509
      %v7511 = vmul.f32 %v7441, 1.442695
      %v7512 = vpow.pop %v7511
      %v7513 = vmul.f32 %v7442, 1.442695
      %v7514 = vpow.pop %v7513
      %v7515 = vmul.f32 %v7443, 1.442695
      %v7516 = vpow.pop %v7515
      %v7517 = vmul.f32 %v7444, 1.442695
      %v7518 = vpow.pop %v7517
      %v7519 = vmul.f32 %v7445, 1.442695
      %v7520 = vpow.pop %v7519
      %v7521 = vmul.f32 %v7446, 1.442695
      %v7522 = vpow.pop %v7521
      %v7523 = vmul.f32 %v7447, 1.442695
      %v7524 = vpow.pop %v7523
      %v7525 = vmul.f32 %v7448, 1.442695
      %v7526 = vpow.pop %v7525
      %v7527 = vmul.f32 %v7449, 1.442695
      %v7528 = vpow.pop %v7527
      %v7529 = vmul.f32 %v7450, 1.442695
      %v7530 = vpow.pop %v7529
      %v7531 = vmul.f32 %v7451, 1.442695
      %v7532 = vpow.pop %v7531
      %v7533 = vmul.f32 %v7452, 1.442695
      %v7534 = vpow.pop %v7533
      %v7535 = vmul.f32 %v7453, 1.442695
      %v7536 = vpow.pop %v7535
      %v7537 = vmul.f32 %v7454, 1.442695
      %v7538 = vpow.pop %v7537
      %v7539 = vmul.f32 %v7455, 1.442695
      %v7540 = vpow.pop %v7539
      %v7541 = vmul.f32 %v7456, 1.442695
      %v7542 = vpow.pop %v7541
      %v7543 = vmul.f32 %v7457, 1.442695
      %v7544 = vpow.pop %v7543
      %v7545 = vmul.f32 %v7458, 1.442695
      %v7546 = vpow.pop %v7545
      %v7547 = vmul.f32 %v7459, 1.442695
      %v7548 = vpow.pop %v7547
      %v7549 = vmul.f32 %v7460, 1.442695
      %v7550 = vpow.pop %v7549
      %v7551 = vmul.f32 %v7461, 1.442695
      %v7552 = vpow.pop %v7551
      %v7553 = vmul.f32 %v7462, 1.442695
      %v7554 = vpow.pop %v7553
      %v7555 = vmul.f32 %v7463, 1.442695
      %v7556 = vpow.pop %v7555
      %v7557 = vmul.f32 %v7464, 1.442695
      %v7558 = vpow.pop %v7557
      %v7559 = vmul.f32 %v7465, 1.442695
      %v7560 = vpow.pop %v7559
      %v7561 = vmul.f32 %v7466, 1.442695
      %v7562 = vpow.pop %v7561
      %v7563 = vadd.f32 %v7468, 1.0
      %v7564 = vadd.f32 %v7470, 1.0
      %v7565 = vadd.f32 %v7472, 1.0
      %v7566 = vadd.f32 %v7474, 1.0
      %v7567 = vadd.f32 %v7476, 1.0
      %v7568 = vadd.f32 %v7478, 1.0
      %v7569 = vadd.f32 %v7480, 1.0
      %v7570 = vadd.f32 %v7482, 1.0
      %v7571 = vadd.f32 %v7484, 1.0
      %v7572 = vadd.f32 %v7486, 1.0
      %v7573 = vadd.f32 %v7488, 1.0
      %v7574 = vadd.f32 %v7490, 1.0
      %v7575 = vadd.f32 %v7492, 1.0
      %v7576 = vadd.f32 %v7494, 1.0
      %v7577 = vadd.f32 %v7496, 1.0
      %v7578 = vadd.f32 %v7498, 1.0
      %v7579 = vadd.f32 %v7500, 1.0
      %v7580 = vadd.f32 %v7502, 1.0
      %v7581 = vadd.f32 %v7504, 1.0
      %v7582 = vadd.f32 %v7506, 1.0
      %v7583 = vadd.f32 %v7508, 1.0
      %v7584 = vadd.f32 %v7510, 1.0
      %v7585 = vadd.f32 %v7512, 1.0
      %v7586 = vadd.f32 %v7514, 1.0
      %v7587 = vadd.f32 %v7516, 1.0
      %v7588 = vadd.f32 %v7518, 1.0
      %v7589 = vadd.f32 %v7520, 1.0
      %v7590 = vadd.f32 %v7522, 1.0
      %v7591 = vadd.f32 %v7524, 1.0
      %v7592 = vadd.f32 %v7526, 1.0
      %v7593 = vadd.f32 %v7528, 1.0
      %v7594 = vadd.f32 %v7530, 1.0
      %v7595 = vadd.f32 %v7532, 1.0
      %v7596 = vadd.f32 %v7534, 1.0
      %v7597 = vadd.f32 %v7536, 1.0
      %v7598 = vadd.f32 %v7538, 1.0
      %v7599 = vadd.f32 %v7540, 1.0
      %v7600 = vadd.f32 %v7542, 1.0
      %v7601 = vadd.f32 %v7544, 1.0
      %v7602 = vadd.f32 %v7546, 1.0
      %v7603 = vadd.f32 %v7548, 1.0
      %v7604 = vadd.f32 %v7550, 1.0
      %v7605 = vadd.f32 %v7552, 1.0
      %v7606 = vadd.f32 %v7554, 1.0
      %v7607 = vadd.f32 %v7556, 1.0
      %v7608 = vadd.f32 %v7558, 1.0
      %v7609 = vadd.f32 %v7560, 1.0
      %v7610 = vadd.f32 %v7562, 1.0
      %v7611 = vlog2.pop %v7563
      %v7612 = vmul.f32 %v7611, 0.6931472
      %v7613 = vlog2.pop %v7564
      %v7614 = vmul.f32 %v7613, 0.6931472
      %v7615 = vlog2.pop %v7565
      %v7616 = vmul.f32 %v7615, 0.6931472
      %v7617 = vlog2.pop %v7566
      %v7618 = vmul.f32 %v7617, 0.6931472
      %v7619 = vlog2.pop %v7567
      %v7620 = vmul.f32 %v7619, 0.6931472
      %v7621 = vlog2.pop %v7568
      %v7622 = vmul.f32 %v7621, 0.6931472
      %v7623 = vlog2.pop %v7569
      %v7624 = vmul.f32 %v7623, 0.6931472
      %v7625 = vlog2.pop %v7570
      %v7626 = vmul.f32 %v7625, 0.6931472
      %v7627 = vlog2.pop %v7571
      %v7628 = vmul.f32 %v7627, 0.6931472
      %v7629 = vlog2.pop %v7572
      %v7630 = vmul.f32 %v7629, 0.6931472
      %v7631 = vlog2.pop %v7573
      %v7632 = vmul.f32 %v7631, 0.6931472
      %v7633 = vlog2.pop %v7574
      %v7634 = vmul.f32 %v7633, 0.6931472
      %v7635 = vlog2.pop %v7575
      %v7636 = vmul.f32 %v7635, 0.6931472
      %v7637 = vlog2.pop %v7576
      %v7638 = vmul.f32 %v7637, 0.6931472
      %v7639 = vlog2.pop %v7577
      %v7640 = vmul.f32 %v7639, 0.6931472
      %v7641 = vlog2.pop %v7578
      %v7642 = vmul.f32 %v7641, 0.6931472
      %v7643 = vlog2.pop %v7579
      %v7644 = vmul.f32 %v7643, 0.6931472
      %v7645 = vlog2.pop %v7580
      %v7646 = vmul.f32 %v7645, 0.6931472
      %v7647 = vlog2.pop %v7581
      %v7648 = vmul.f32 %v7647, 0.6931472
      %v7649 = vlog2.pop %v7582
      %v7650 = vmul.f32 %v7649, 0.6931472
      %v7651 = vlog2.pop %v7583
      %v7652 = vmul.f32 %v7651, 0.6931472
      %v7653 = vlog2.pop %v7584
      %v7654 = vmul.f32 %v7653, 0.6931472
      %v7655 = vlog2.pop %v7585
      %v7656 = vmul.f32 %v7655, 0.6931472
      %v7657 = vlog2.pop %v7586
      %v7658 = vmul.f32 %v7657, 0.6931472
      %v7659 = vlog2.pop %v7587
      %v7660 = vmul.f32 %v7659, 0.6931472
      %v7661 = vlog2.pop %v7588
      %v7662 = vmul.f32 %v7661, 0.6931472
      %v7663 = vlog2.pop %v7589
      %v7664 = vmul.f32 %v7663, 0.6931472
      %v7665 = vlog2.pop %v7590
      %v7666 = vmul.f32 %v7665, 0.6931472
      %v7667 = vlog2.pop %v7591
      %v7668 = vmul.f32 %v7667, 0.6931472
      %v7669 = vlog2.pop %v7592
      %v7670 = vmul.f32 %v7669, 0.6931472
      %v7671 = vlog2.pop %v7593
      %v7672 = vmul.f32 %v7671, 0.6931472
      %v7673 = vlog2.pop %v7594
      %v7674 = vmul.f32 %v7673, 0.6931472
      %v7675 = vlog2.pop %v7595
      %v7676 = vmul.f32 %v7675, 0.6931472
      %v7677 = vlog2.pop %v7596
      %v7678 = vmul.f32 %v7677, 0.6931472
      %v7679 = vlog2.pop %v7597
      %v7680 = vmul.f32 %v7679, 0.6931472
      %v7681 = vlog2.pop %v7598
      %v7682 = vmul.f32 %v7681, 0.6931472
      %v7683 = vlog2.pop %v7599
      %v7684 = vmul.f32 %v7683, 0.6931472
      %v7685 = vlog2.pop %v7600
      %v7686 = vmul.f32 %v7685, 0.6931472
      %v7687 = vlog2.pop %v7601
      %v7688 = vmul.f32 %v7687, 0.6931472
      %v7689 = vlog2.pop %v7602
      %v7690 = vmul.f32 %v7689, 0.6931472
      %v7691 = vlog2.pop %v7603
      %v7692 = vmul.f32 %v7691, 0.6931472
      %v7693 = vlog2.pop %v7604
      %v7694 = vmul.f32 %v7693, 0.6931472
      %v7695 = vlog2.pop %v7605
      %v7696 = vmul.f32 %v7695, 0.6931472
      %v7697 = vlog2.pop %v7606
      %v7698 = vmul.f32 %v7697, 0.6931472
      %v7699 = vlog2.pop %v7607
      %v7700 = vmul.f32 %v7699, 0.6931472
      %v7701 = vlog2.pop %v7608
      %v7702 = vmul.f32 %v7701, 0.6931472
      %v7703 = vlog2.pop %v7609
      %v7704 = vmul.f32 %v7703, 0.6931472
      %v7705 = vlog2.pop %v7610
      %v7706 = vmul.f32 %v7705, 0.6931472
      %v7707 = vadd.f32 %v7323, %v7612
      %v7708 = vadd.f32 %v7324, %v7614
      %v7709 = vadd.f32 %v7325, %v7616
      %v7710 = vadd.f32 %v7326, %v7618
      %v7711 = vadd.f32 %v7327, %v7620
      %v7712 = vadd.f32 %v7328, %v7622
      %v7713 = vadd.f32 %v7329, %v7624
      %v7714 = vadd.f32 %v7330, %v7626
      %v7715 = vadd.f32 %v7331, %v7628
      %v7716 = vadd.f32 %v7332, %v7630
      %v7717 = vadd.f32 %v7333, %v7632
      %v7718 = vadd.f32 %v7334, %v7634
      %v7719 = vadd.f32 %v7335, %v7636
      %v7720 = vadd.f32 %v7336, %v7638
      %v7721 = vadd.f32 %v7337, %v7640
      %v7722 = vadd.f32 %v7338, %v7642
      %v7723 = vadd.f32 %v7339, %v7644
      %v7724 = vadd.f32 %v7340, %v7646
      %v7725 = vadd.f32 %v7341, %v7648
      %v7726 = vadd.f32 %v7342, %v7650
      %v7727 = vadd.f32 %v7343, %v7652
      %v7728 = vadd.f32 %v7344, %v7654
      %v7729 = vadd.f32 %v7345, %v7656
      %v7730 = vadd.f32 %v7346, %v7658
      %v7731 = vadd.f32 %v7347, %v7660
      %v7732 = vadd.f32 %v7348, %v7662
      %v7733 = vadd.f32 %v7349, %v7664
      %v7734 = vadd.f32 %v7350, %v7666
      %v7735 = vadd.f32 %v7351, %v7668
      %v7736 = vadd.f32 %v7352, %v7670
      %v7737 = vadd.f32 %v7353, %v7672
      %v7738 = vadd.f32 %v7354, %v7674
      %v7739 = vadd.f32 %v7355, %v7676
      %v7740 = vadd.f32 %v7356, %v7678
      %v7741 = vadd.f32 %v7357, %v7680
      %v7742 = vadd.f32 %v7358, %v7682
      %v7743 = vadd.f32 %v7359, %v7684
      %v7744 = vadd.f32 %v7360, %v7686
      %v7745 = vadd.f32 %v7361, %v7688
      %v7746 = vadd.f32 %v7362, %v7690
      %v7747 = vadd.f32 %v7363, %v7692
      %v7748 = vadd.f32 %v7364, %v7694
      %v7749 = vadd.f32 %v7365, %v7696
      %v7750 = vadd.f32 %v7366, %v7698
      %v7751 = vadd.f32 %v7367, %v7700
      %v7752 = vadd.f32 %v7368, %v7702
      %v7753 = vadd.f32 %v7369, %v7704
      %v7754 = vadd.f32 %v7370, %v7706
      %v7755 = vadd.f32 %v7707, 1e-06
      %v7756 = vadd.f32 %v7708, 1e-06
      %v7757 = vadd.f32 %v7709, 1e-06
      %v7758 = vadd.f32 %v7710, 1e-06
      %v7759 = vadd.f32 %v7711, 1e-06
      %v7760 = vadd.f32 %v7712, 1e-06
      %v7761 = vadd.f32 %v7713, 1e-06
      %v7762 = vadd.f32 %v7714, 1e-06
      %v7763 = vadd.f32 %v7715, 1e-06
      %v7764 = vadd.f32 %v7716, 1e-06
      %v7765 = vadd.f32 %v7717, 1e-06
      %v7766 = vadd.f32 %v7718, 1e-06
      %v7767 = vadd.f32 %v7719, 1e-06
      %v7768 = vadd.f32 %v7720, 1e-06
      %v7769 = vadd.f32 %v7721, 1e-06
      %v7770 = vadd.f32 %v7722, 1e-06
      %v7771 = vadd.f32 %v7723, 1e-06
      %v7772 = vadd.f32 %v7724, 1e-06
      %v7773 = vadd.f32 %v7725, 1e-06
      %v7774 = vadd.f32 %v7726, 1e-06
      %v7775 = vadd.f32 %v7727, 1e-06
      %v7776 = vadd.f32 %v7728, 1e-06
      %v7777 = vadd.f32 %v7729, 1e-06
      %v7778 = vadd.f32 %v7730, 1e-06
      %v7779 = vadd.f32 %v7731, 1e-06
      %v7780 = vadd.f32 %v7732, 1e-06
      %v7781 = vadd.f32 %v7733, 1e-06
      %v7782 = vadd.f32 %v7734, 1e-06
      %v7783 = vadd.f32 %v7735, 1e-06
      %v7784 = vadd.f32 %v7736, 1e-06
      %v7785 = vadd.f32 %v7737, 1e-06
      %v7786 = vadd.f32 %v7738, 1e-06
      %v7787 = vadd.f32 %v7739, 1e-06
      %v7788 = vadd.f32 %v7740, 1e-06
      %v7789 = vadd.f32 %v7741, 1e-06
      %v7790 = vadd.f32 %v7742, 1e-06
      %v7791 = vadd.f32 %v7743, 1e-06
      %v7792 = vadd.f32 %v7744, 1e-06
      %v7793 = vadd.f32 %v7745, 1e-06
      %v7794 = vadd.f32 %v7746, 1e-06
      %v7795 = vadd.f32 %v7747, 1e-06
      %v7796 = vadd.f32 %v7748, 1e-06
      %v7797 = vadd.f32 %v7749, 1e-06
      %v7798 = vadd.f32 %v7750, 1e-06
      %v7799 = vadd.f32 %v7751, 1e-06
      %v7800 = vadd.f32 %v7752, 1e-06
      %v7801 = vadd.f32 %v7753, 1e-06
      %v7802 = vadd.f32 %v7754, 1e-06
      %v7803 = vmul.f32 %v7075, %v7075
      %v7804 = vmul.f32 %v7077, %v7077
      %v7805 = vmul.f32 %v7080, %v7080
      %v7806 = vmul.f32 %v7082, %v7082
      %v7807 = vmul.f32 %v7085, %v7085
      %v7808 = vmul.f32 %v7087, %v7087
      %v7809 = vmul.f32 %v7090, %v7090
      %v7810 = vmul.f32 %v7092, %v7092
      %v7811 = vmul.f32 %v7095, %v7095
      %v7812 = vmul.f32 %v7097, %v7097
      %v7813 = vmul.f32 %v7100, %v7100
      %v7814 = vmul.f32 %v7102, %v7102
      %v7815 = vmul.f32 %v7105, %v7105
      %v7816 = vmul.f32 %v7107, %v7107
      %v7817 = vmul.f32 %v7110, %v7110
      %v7818 = vmul.f32 %v7112, %v7112
      %v7819 = vmul.f32 %v7115, %v7115
      %v7820 = vmul.f32 %v7117, %v7117
      %v7821 = vmul.f32 %v7120, %v7120
      %v7822 = vmul.f32 %v7122, %v7122
      %v7823 = vmul.f32 %v7125, %v7125
      %v7824 = vmul.f32 %v7127, %v7127
      %v7825 = vmul.f32 %v7130, %v7130
      %v7826 = vmul.f32 %v7132, %v7132
      %v7827 = vmul.f32 %v7135, %v7135
      %v7828 = vmul.f32 %v7137, %v7137
      %v7829 = vmul.f32 %v7140, %v7140
      %v7830 = vmul.f32 %v7142, %v7142
      %v7831 = vmul.f32 %v7145, %v7145
      %v7832 = vmul.f32 %v7147, %v7147
      %v7833 = vmul.f32 %v7150, %v7150
      %v7834 = vmul.f32 %v7152, %v7152
      %v7835 = vmul.f32 %v7155, %v7155
      %v7836 = vmul.f32 %v7157, %v7157
      %v7837 = vmul.f32 %v7160, %v7160
      %v7838 = vmul.f32 %v7162, %v7162
      %v7839 = vmul.f32 %v7165, %v7165
      %v7840 = vmul.f32 %v7167, %v7167
      %v7841 = vmul.f32 %v7170, %v7170
      %v7842 = vmul.f32 %v7172, %v7172
      %v7843 = vmul.f32 %v7175, %v7175
      %v7844 = vmul.f32 %v7177, %v7177
      %v7845 = vmul.f32 %v7180, %v7180
      %v7846 = vmul.f32 %v7182, %v7182
      %v7847 = vmul.f32 %v7185, %v7185
      %v7848 = vmul.f32 %v7187, %v7187
      %v7849 = vmul.f32 %v7190, %v7190
      %v7850 = vmul.f32 %v7192, %v7192
      %7851 = vadd.xlane.f32.xlu0 %v7803
      %v7852 = vpop.xlane.xlu0 %7851
      %7853 = vadd.xlane.f32.xlu0 %v7804
      %v7854 = vpop.xlane.xlu0 %7853
      %7855 = vadd.xlane.f32.xlu0 %v7805
      %v7856 = vpop.xlane.xlu0 %7855
      %7857 = vadd.xlane.f32.xlu0 %v7806
      %v7858 = vpop.xlane.xlu0 %7857
      %7859 = vadd.xlane.f32.xlu0 %v7807
      %v7860 = vpop.xlane.xlu0 %7859
      %7861 = vadd.xlane.f32.xlu0 %v7808
      %v7862 = vpop.xlane.xlu0 %7861
      %7863 = vadd.xlane.f32.xlu0 %v7809
      %v7864 = vpop.xlane.xlu0 %7863
      %7865 = vadd.xlane.f32.xlu0 %v7810
      %v7866 = vpop.xlane.xlu0 %7865
      %7867 = vadd.xlane.f32.xlu0 %v7811
      %v7868 = vpop.xlane.xlu0 %7867
      %7869 = vadd.xlane.f32.xlu0 %v7812
      %v7870 = vpop.xlane.xlu0 %7869
      %7871 = vadd.xlane.f32.xlu0 %v7813
      %v7872 = vpop.xlane.xlu0 %7871
      %7873 = vadd.xlane.f32.xlu0 %v7814
      %v7874 = vpop.xlane.xlu0 %7873
      %7875 = vadd.xlane.f32.xlu0 %v7815
      %v7876 = vpop.xlane.xlu0 %7875
      %7877 = vadd.xlane.f32.xlu0 %v7816
      %v7878 = vpop.xlane.xlu0 %7877
      %7879 = vadd.xlane.f32.xlu0 %v7817
      %v7880 = vpop.xlane.xlu0 %7879
      %7881 = vadd.xlane.f32.xlu0 %v7818
      %v7882 = vpop.xlane.xlu0 %7881
      %7883 = vadd.xlane.f32.xlu0 %v7819
      %v7884 = vpop.xlane.xlu0 %7883
      %7885 = vadd.xlane.f32.xlu0 %v7820
      %v7886 = vpop.xlane.xlu0 %7885
      %7887 = vadd.xlane.f32.xlu0 %v7821
      %v7888 = vpop.xlane.xlu0 %7887
      %7889 = vadd.xlane.f32.xlu0 %v7822
      %v7890 = vpop.xlane.xlu0 %7889
      %7891 = vadd.xlane.f32.xlu0 %v7823
      %v7892 = vpop.xlane.xlu0 %7891
      %7893 = vadd.xlane.f32.xlu0 %v7824
      %v7894 = vpop.xlane.xlu0 %7893
      %7895 = vadd.xlane.f32.xlu0 %v7825
      %v7896 = vpop.xlane.xlu0 %7895
      %7897 = vadd.xlane.f32.xlu0 %v7826
      %v7898 = vpop.xlane.xlu0 %7897
      %7899 = vadd.xlane.f32.xlu0 %v7827
      %v7900 = vpop.xlane.xlu0 %7899
      %7901 = vadd.xlane.f32.xlu0 %v7828
      %v7902 = vpop.xlane.xlu0 %7901
      %7903 = vadd.xlane.f32.xlu0 %v7829
      %v7904 = vpop.xlane.xlu0 %7903
      %7905 = vadd.xlane.f32.xlu0 %v7830
      %v7906 = vpop.xlane.xlu0 %7905
      %7907 = vadd.xlane.f32.xlu0 %v7831
      %v7908 = vpop.xlane.xlu0 %7907
      %7909 = vadd.xlane.f32.xlu0 %v7832
      %v7910 = vpop.xlane.xlu0 %7909
      %7911 = vadd.xlane.f32.xlu0 %v7833
      %v7912 = vpop.xlane.xlu0 %7911
      %7913 = vadd.xlane.f32.xlu0 %v7834
      %v7914 = vpop.xlane.xlu0 %7913
      %7915 = vadd.xlane.f32.xlu0 %v7835
      %v7916 = vpop.xlane.xlu0 %7915
      %7917 = vadd.xlane.f32.xlu0 %v7836
      %v7918 = vpop.xlane.xlu0 %7917
      %7919 = vadd.xlane.f32.xlu0 %v7837
      %v7920 = vpop.xlane.xlu0 %7919
      %7921 = vadd.xlane.f32.xlu0 %v7838
      %v7922 = vpop.xlane.xlu0 %7921
      %7923 = vadd.xlane.f32.xlu0 %v7839
      %v7924 = vpop.xlane.xlu0 %7923
      %7925 = vadd.xlane.f32.xlu0 %v7840
      %v7926 = vpop.xlane.xlu0 %7925
      %7927 = vadd.xlane.f32.xlu0 %v7841
      %v7928 = vpop.xlane.xlu0 %7927
      %7929 = vadd.xlane.f32.xlu0 %v7842
      %v7930 = vpop.xlane.xlu0 %7929
      %7931 = vadd.xlane.f32.xlu0 %v7843
      %v7932 = vpop.xlane.xlu0 %7931
      %7933 = vadd.xlane.f32.xlu0 %v7844
      %v7934 = vpop.xlane.xlu0 %7933
      %7935 = vadd.xlane.f32.xlu0 %v7845
      %v7936 = vpop.xlane.xlu0 %7935
      %7937 = vadd.xlane.f32.xlu0 %v7846
      %v7938 = vpop.xlane.xlu0 %7937
      %7939 = vadd.xlane.f32.xlu0 %v7847
      %v7940 = vpop.xlane.xlu0 %7939
      %7941 = vadd.xlane.f32.xlu0 %v7848
      %v7942 = vpop.xlane.xlu0 %7941
      %7943 = vadd.xlane.f32.xlu0 %v7849
      %v7944 = vpop.xlane.xlu0 %7943
      %7945 = vadd.xlane.f32.xlu0 %v7850
      %v7946 = vpop.xlane.xlu0 %7945
      %v7947 = vmul.f32 %v7852, 0.25
      %v7948 = vmul.f32 %v7854, 0.25
      %v7949 = vmul.f32 %v7856, 0.25
      %v7950 = vmul.f32 %v7858, 0.25
      %v7951 = vmul.f32 %v7860, 0.25
      %v7952 = vmul.f32 %v7862, 0.25
      %v7953 = vmul.f32 %v7864, 0.25
      %v7954 = vmul.f32 %v7866, 0.25
      %v7955 = vmul.f32 %v7868, 0.25
      %v7956 = vmul.f32 %v7870, 0.25
      %v7957 = vmul.f32 %v7872, 0.25
      %v7958 = vmul.f32 %v7874, 0.25
      %v7959 = vmul.f32 %v7876, 0.25
      %v7960 = vmul.f32 %v7878, 0.25
      %v7961 = vmul.f32 %v7880, 0.25
      %v7962 = vmul.f32 %v7882, 0.25
      %v7963 = vmul.f32 %v7884, 0.25
      %v7964 = vmul.f32 %v7886, 0.25
      %v7965 = vmul.f32 %v7888, 0.25
      %v7966 = vmul.f32 %v7890, 0.25
      %v7967 = vmul.f32 %v7892, 0.25
      %v7968 = vmul.f32 %v7894, 0.25
      %v7969 = vmul.f32 %v7896, 0.25
      %v7970 = vmul.f32 %v7898, 0.25
      %v7971 = vmul.f32 %v7900, 0.25
      %v7972 = vmul.f32 %v7902, 0.25
      %v7973 = vmul.f32 %v7904, 0.25
      %v7974 = vmul.f32 %v7906, 0.25
      %v7975 = vmul.f32 %v7908, 0.25
      %v7976 = vmul.f32 %v7910, 0.25
      %v7977 = vmul.f32 %v7912, 0.25
      %v7978 = vmul.f32 %v7914, 0.25
      %v7979 = vmul.f32 %v7916, 0.25
      %v7980 = vmul.f32 %v7918, 0.25
      %v7981 = vmul.f32 %v7920, 0.25
      %v7982 = vmul.f32 %v7922, 0.25
      %v7983 = vmul.f32 %v7924, 0.25
      %v7984 = vmul.f32 %v7926, 0.25
      %v7985 = vmul.f32 %v7928, 0.25
      %v7986 = vmul.f32 %v7930, 0.25
      %v7987 = vmul.f32 %v7932, 0.25
      %v7988 = vmul.f32 %v7934, 0.25
      %v7989 = vmul.f32 %v7936, 0.25
      %v7990 = vmul.f32 %v7938, 0.25
      %v7991 = vmul.f32 %v7940, 0.25
      %v7992 = vmul.f32 %v7942, 0.25
      %v7993 = vmul.f32 %v7944, 0.25
      %v7994 = vmul.f32 %v7946, 0.25
      %v7995 = vmax.f32 %v7947, 1e-24
      %v7996 = vmax.f32 %v7948, 1e-24
      %v7997 = vmax.f32 %v7949, 1e-24
      %v7998 = vmax.f32 %v7950, 1e-24
      %v7999 = vmax.f32 %v7951, 1e-24
      %v8000 = vmax.f32 %v7952, 1e-24
      %v8001 = vmax.f32 %v7953, 1e-24
      %v8002 = vmax.f32 %v7954, 1e-24
      %v8003 = vmax.f32 %v7955, 1e-24
      %v8004 = vmax.f32 %v7956, 1e-24
      %v8005 = vmax.f32 %v7957, 1e-24
      %v8006 = vmax.f32 %v7958, 1e-24
      %v8007 = vmax.f32 %v7959, 1e-24
      %v8008 = vmax.f32 %v7960, 1e-24
      %v8009 = vmax.f32 %v7961, 1e-24
      %v8010 = vmax.f32 %v7962, 1e-24
      %v8011 = vmax.f32 %v7963, 1e-24
      %v8012 = vmax.f32 %v7964, 1e-24
      %v8013 = vmax.f32 %v7965, 1e-24
      %v8014 = vmax.f32 %v7966, 1e-24
      %v8015 = vmax.f32 %v7967, 1e-24
      %v8016 = vmax.f32 %v7968, 1e-24
      %v8017 = vmax.f32 %v7969, 1e-24
      %v8018 = vmax.f32 %v7970, 1e-24
      %v8019 = vmax.f32 %v7971, 1e-24
      %v8020 = vmax.f32 %v7972, 1e-24
      %v8021 = vmax.f32 %v7973, 1e-24
      %v8022 = vmax.f32 %v7974, 1e-24
      %v8023 = vmax.f32 %v7975, 1e-24
      %v8024 = vmax.f32 %v7976, 1e-24
      %v8025 = vmax.f32 %v7977, 1e-24
      %v8026 = vmax.f32 %v7978, 1e-24
      %v8027 = vmax.f32 %v7979, 1e-24
      %v8028 = vmax.f32 %v7980, 1e-24
      %v8029 = vmax.f32 %v7981, 1e-24
      %v8030 = vmax.f32 %v7982, 1e-24
      %v8031 = vmax.f32 %v7983, 1e-24
      %v8032 = vmax.f32 %v7984, 1e-24
      %v8033 = vmax.f32 %v7985, 1e-24
      %v8034 = vmax.f32 %v7986, 1e-24
      %v8035 = vmax.f32 %v7987, 1e-24
      %v8036 = vmax.f32 %v7988, 1e-24
      %v8037 = vmax.f32 %v7989, 1e-24
      %v8038 = vmax.f32 %v7990, 1e-24
      %v8039 = vmax.f32 %v7991, 1e-24
      %v8040 = vmax.f32 %v7992, 1e-24
      %v8041 = vmax.f32 %v7993, 1e-24
      %v8042 = vmax.f32 %v7994, 1e-24
      %v8043 = vrsqrt.pop %v7995
      %v8044 = vmul.f32 %v8043, %v7995
      %v8045 = vmul.f32 %v8044, %v8043
      %v8046 = vmul.f32 0.5, %v8045
      %v8047 = vsub.f32 1.5, %v8046
      %v8048 = vmul.f32 %v8043, %v8047
      %vm8049 = vweird.f32 %v7995
      %vm8050 = vweird.f32 %v8043
      %vm8051 = vmor %vm8049, %vm8050
      %v8052 = vsel %vm8051, %v8043, %v8048
      %v8053 = vrsqrt.pop %v7996
      %v8054 = vmul.f32 %v8053, %v7996
      %v8055 = vmul.f32 %v8054, %v8053
      %v8056 = vmul.f32 0.5, %v8055
      %v8057 = vsub.f32 1.5, %v8056
      %v8058 = vmul.f32 %v8053, %v8057
      %vm8059 = vweird.f32 %v7996
      %vm8060 = vweird.f32 %v8053
      %vm8061 = vmor %vm8059, %vm8060
      %v8062 = vsel %vm8061, %v8053, %v8058
      %v8063 = vrsqrt.pop %v7997
      %v8064 = vmul.f32 %v8063, %v7997
      %v8065 = vmul.f32 %v8064, %v8063
      %v8066 = vmul.f32 0.5, %v8065
      %v8067 = vsub.f32 1.5, %v8066
      %v8068 = vmul.f32 %v8063, %v8067
      %vm8069 = vweird.f32 %v7997
      %vm8070 = vweird.f32 %v8063
      %vm8071 = vmor %vm8069, %vm8070
      %v8072 = vsel %vm8071, %v8063, %v8068
      %v8073 = vrsqrt.pop %v7998
      %v8074 = vmul.f32 %v8073, %v7998
      %v8075 = vmul.f32 %v8074, %v8073
      %v8076 = vmul.f32 0.5, %v8075
      %v8077 = vsub.f32 1.5, %v8076
      %v8078 = vmul.f32 %v8073, %v8077
      %vm8079 = vweird.f32 %v7998
      %vm8080 = vweird.f32 %v8073
      %vm8081 = vmor %vm8079, %vm8080
      %v8082 = vsel %vm8081, %v8073, %v8078
      %v8083 = vrsqrt.pop %v7999
      %v8084 = vmul.f32 %v8083, %v7999
      %v8085 = vmul.f32 %v8084, %v8083
      %v8086 = vmul.f32 0.5, %v8085
      %v8087 = vsub.f32 1.5, %v8086
      %v8088 = vmul.f32 %v8083, %v8087
      %vm8089 = vweird.f32 %v7999
      %vm8090 = vweird.f32 %v8083
      %vm8091 = vmor %vm8089, %vm8090
      %v8092 = vsel %vm8091, %v8083, %v8088
      %v8093 = vrsqrt.pop %v8000
      %v8094 = vmul.f32 %v8093, %v8000
      %v8095 = vmul.f32 %v8094, %v8093
      %v8096 = vmul.f32 0.5, %v8095
      %v8097 = vsub.f32 1.5, %v8096
      %v8098 = vmul.f32 %v8093, %v8097
      %vm8099 = vweird.f32 %v8000
      %vm8100 = vweird.f32 %v8093
      %vm8101 = vmor %vm8099, %vm8100
      %v8102 = vsel %vm8101, %v8093, %v8098
      %v8103 = vrsqrt.pop %v8001
      %v8104 = vmul.f32 %v8103, %v8001
      %v8105 = vmul.f32 %v8104, %v8103
      %v8106 = vmul.f32 0.5, %v8105
      %v8107 = vsub.f32 1.5, %v8106
      %v8108 = vmul.f32 %v8103, %v8107
      %vm8109 = vweird.f32 %v8001
      %vm8110 = vweird.f32 %v8103
      %vm8111 = vmor %vm8109, %vm8110
      %v8112 = vsel %vm8111, %v8103, %v8108
      %v8113 = vrsqrt.pop %v8002
      %v8114 = vmul.f32 %v8113, %v8002
      %v8115 = vmul.f32 %v8114, %v8113
      %v8116 = vmul.f32 0.5, %v8115
      %v8117 = vsub.f32 1.5, %v8116
      %v8118 = vmul.f32 %v8113, %v8117
      %vm8119 = vweird.f32 %v8002
      %vm8120 = vweird.f32 %v8113
      %vm8121 = vmor %vm8119, %vm8120
      %v8122 = vsel %vm8121, %v8113, %v8118
      %v8123 = vrsqrt.pop %v8003
      %v8124 = vmul.f32 %v8123, %v8003
      %v8125 = vmul.f32 %v8124, %v8123
      %v8126 = vmul.f32 0.5, %v8125
      %v8127 = vsub.f32 1.5, %v8126
      %v8128 = vmul.f32 %v8123, %v8127
      %vm8129 = vweird.f32 %v8003
      %vm8130 = vweird.f32 %v8123
      %vm8131 = vmor %vm8129, %vm8130
      %v8132 = vsel %vm8131, %v8123, %v8128
      %v8133 = vrsqrt.pop %v8004
      %v8134 = vmul.f32 %v8133, %v8004
      %v8135 = vmul.f32 %v8134, %v8133
      %v8136 = vmul.f32 0.5, %v8135
      %v8137 = vsub.f32 1.5, %v8136
      %v8138 = vmul.f32 %v8133, %v8137
      %vm8139 = vweird.f32 %v8004
      %vm8140 = vweird.f32 %v8133
      %vm8141 = vmor %vm8139, %vm8140
      %v8142 = vsel %vm8141, %v8133, %v8138
      %v8143 = vrsqrt.pop %v8005
      %v8144 = vmul.f32 %v8143, %v8005
      %v8145 = vmul.f32 %v8144, %v8143
      %v8146 = vmul.f32 0.5, %v8145
      %v8147 = vsub.f32 1.5, %v8146
      %v8148 = vmul.f32 %v8143, %v8147
      %vm8149 = vweird.f32 %v8005
      %vm8150 = vweird.f32 %v8143
      %vm8151 = vmor %vm8149, %vm8150
      %v8152 = vsel %vm8151, %v8143, %v8148
      %v8153 = vrsqrt.pop %v8006
      %v8154 = vmul.f32 %v8153, %v8006
      %v8155 = vmul.f32 %v8154, %v8153
      %v8156 = vmul.f32 0.5, %v8155
      %v8157 = vsub.f32 1.5, %v8156
      %v8158 = vmul.f32 %v8153, %v8157
      %vm8159 = vweird.f32 %v8006
      %vm8160 = vweird.f32 %v8153
      %vm8161 = vmor %vm8159, %vm8160
      %v8162 = vsel %vm8161, %v8153, %v8158
      %v8163 = vrsqrt.pop %v8007
      %v8164 = vmul.f32 %v8163, %v8007
      %v8165 = vmul.f32 %v8164, %v8163
      %v8166 = vmul.f32 0.5, %v8165
      %v8167 = vsub.f32 1.5, %v8166
      %v8168 = vmul.f32 %v8163, %v8167
      %vm8169 = vweird.f32 %v8007
      %vm8170 = vweird.f32 %v8163
      %vm8171 = vmor %vm8169, %vm8170
      %v8172 = vsel %vm8171, %v8163, %v8168
      %v8173 = vrsqrt.pop %v8008
      %v8174 = vmul.f32 %v8173, %v8008
      %v8175 = vmul.f32 %v8174, %v8173
      %v8176 = vmul.f32 0.5, %v8175
      %v8177 = vsub.f32 1.5, %v8176
      %v8178 = vmul.f32 %v8173, %v8177
      %vm8179 = vweird.f32 %v8008
      %vm8180 = vweird.f32 %v8173
      %vm8181 = vmor %vm8179, %vm8180
      %v8182 = vsel %vm8181, %v8173, %v8178
      %v8183 = vrsqrt.pop %v8009
      %v8184 = vmul.f32 %v8183, %v8009
      %v8185 = vmul.f32 %v8184, %v8183
      %v8186 = vmul.f32 0.5, %v8185
      %v8187 = vsub.f32 1.5, %v8186
      %v8188 = vmul.f32 %v8183, %v8187
      %vm8189 = vweird.f32 %v8009
      %vm8190 = vweird.f32 %v8183
      %vm8191 = vmor %vm8189, %vm8190
      %v8192 = vsel %vm8191, %v8183, %v8188
      %v8193 = vrsqrt.pop %v8010
      %v8194 = vmul.f32 %v8193, %v8010
      %v8195 = vmul.f32 %v8194, %v8193
      %v8196 = vmul.f32 0.5, %v8195
      %v8197 = vsub.f32 1.5, %v8196
      %v8198 = vmul.f32 %v8193, %v8197
      %vm8199 = vweird.f32 %v8010
      %vm8200 = vweird.f32 %v8193
      %vm8201 = vmor %vm8199, %vm8200
      %v8202 = vsel %vm8201, %v8193, %v8198
      %v8203 = vrsqrt.pop %v8011
      %v8204 = vmul.f32 %v8203, %v8011
      %v8205 = vmul.f32 %v8204, %v8203
      %v8206 = vmul.f32 0.5, %v8205
      %v8207 = vsub.f32 1.5, %v8206
      %v8208 = vmul.f32 %v8203, %v8207
      %vm8209 = vweird.f32 %v8011
      %vm8210 = vweird.f32 %v8203
      %vm8211 = vmor %vm8209, %vm8210
      %v8212 = vsel %vm8211, %v8203, %v8208
      %v8213 = vrsqrt.pop %v8012
      %v8214 = vmul.f32 %v8213, %v8012
      %v8215 = vmul.f32 %v8214, %v8213
      %v8216 = vmul.f32 0.5, %v8215
      %v8217 = vsub.f32 1.5, %v8216
      %v8218 = vmul.f32 %v8213, %v8217
      %vm8219 = vweird.f32 %v8012
      %vm8220 = vweird.f32 %v8213
      %vm8221 = vmor %vm8219, %vm8220
      %v8222 = vsel %vm8221, %v8213, %v8218
      %v8223 = vrsqrt.pop %v8013
      %v8224 = vmul.f32 %v8223, %v8013
      %v8225 = vmul.f32 %v8224, %v8223
      %v8226 = vmul.f32 0.5, %v8225
      %v8227 = vsub.f32 1.5, %v8226
      %v8228 = vmul.f32 %v8223, %v8227
      %vm8229 = vweird.f32 %v8013
      %vm8230 = vweird.f32 %v8223
      %vm8231 = vmor %vm8229, %vm8230
      %v8232 = vsel %vm8231, %v8223, %v8228
      %v8233 = vrsqrt.pop %v8014
      %v8234 = vmul.f32 %v8233, %v8014
      %v8235 = vmul.f32 %v8234, %v8233
      %v8236 = vmul.f32 0.5, %v8235
      %v8237 = vsub.f32 1.5, %v8236
      %v8238 = vmul.f32 %v8233, %v8237
      %vm8239 = vweird.f32 %v8014
      %vm8240 = vweird.f32 %v8233
      %vm8241 = vmor %vm8239, %vm8240
      %v8242 = vsel %vm8241, %v8233, %v8238
      %v8243 = vrsqrt.pop %v8015
      %v8244 = vmul.f32 %v8243, %v8015
      %v8245 = vmul.f32 %v8244, %v8243
      %v8246 = vmul.f32 0.5, %v8245
      %v8247 = vsub.f32 1.5, %v8246
      %v8248 = vmul.f32 %v8243, %v8247
      %vm8249 = vweird.f32 %v8015
      %vm8250 = vweird.f32 %v8243
      %vm8251 = vmor %vm8249, %vm8250
      %v8252 = vsel %vm8251, %v8243, %v8248
      %v8253 = vrsqrt.pop %v8016
      %v8254 = vmul.f32 %v8253, %v8016
      %v8255 = vmul.f32 %v8254, %v8253
      %v8256 = vmul.f32 0.5, %v8255
      %v8257 = vsub.f32 1.5, %v8256
      %v8258 = vmul.f32 %v8253, %v8257
      %vm8259 = vweird.f32 %v8016
      %vm8260 = vweird.f32 %v8253
      %vm8261 = vmor %vm8259, %vm8260
      %v8262 = vsel %vm8261, %v8253, %v8258
      %v8263 = vrsqrt.pop %v8017
      %v8264 = vmul.f32 %v8263, %v8017
      %v8265 = vmul.f32 %v8264, %v8263
      %v8266 = vmul.f32 0.5, %v8265
      %v8267 = vsub.f32 1.5, %v8266
      %v8268 = vmul.f32 %v8263, %v8267
      %vm8269 = vweird.f32 %v8017
      %vm8270 = vweird.f32 %v8263
      %vm8271 = vmor %vm8269, %vm8270
      %v8272 = vsel %vm8271, %v8263, %v8268
      %v8273 = vrsqrt.pop %v8018
      %v8274 = vmul.f32 %v8273, %v8018
      %v8275 = vmul.f32 %v8274, %v8273
      %v8276 = vmul.f32 0.5, %v8275
      %v8277 = vsub.f32 1.5, %v8276
      %v8278 = vmul.f32 %v8273, %v8277
      %vm8279 = vweird.f32 %v8018
      %vm8280 = vweird.f32 %v8273
      %vm8281 = vmor %vm8279, %vm8280
      %v8282 = vsel %vm8281, %v8273, %v8278
      %v8283 = vrsqrt.pop %v8019
      %v8284 = vmul.f32 %v8283, %v8019
      %v8285 = vmul.f32 %v8284, %v8283
      %v8286 = vmul.f32 0.5, %v8285
      %v8287 = vsub.f32 1.5, %v8286
      %v8288 = vmul.f32 %v8283, %v8287
      %vm8289 = vweird.f32 %v8019
      %vm8290 = vweird.f32 %v8283
      %vm8291 = vmor %vm8289, %vm8290
      %v8292 = vsel %vm8291, %v8283, %v8288
      %v8293 = vrsqrt.pop %v8020
      %v8294 = vmul.f32 %v8293, %v8020
      %v8295 = vmul.f32 %v8294, %v8293
      %v8296 = vmul.f32 0.5, %v8295
      %v8297 = vsub.f32 1.5, %v8296
      %v8298 = vmul.f32 %v8293, %v8297
      %vm8299 = vweird.f32 %v8020
      %vm8300 = vweird.f32 %v8293
      %vm8301 = vmor %vm8299, %vm8300
      %v8302 = vsel %vm8301, %v8293, %v8298
      %v8303 = vrsqrt.pop %v8021
      %v8304 = vmul.f32 %v8303, %v8021
      %v8305 = vmul.f32 %v8304, %v8303
      %v8306 = vmul.f32 0.5, %v8305
      %v8307 = vsub.f32 1.5, %v8306
      %v8308 = vmul.f32 %v8303, %v8307
      %vm8309 = vweird.f32 %v8021
      %vm8310 = vweird.f32 %v8303
      %vm8311 = vmor %vm8309, %vm8310
      %v8312 = vsel %vm8311, %v8303, %v8308
      %v8313 = vrsqrt.pop %v8022
      %v8314 = vmul.f32 %v8313, %v8022
      %v8315 = vmul.f32 %v8314, %v8313
      %v8316 = vmul.f32 0.5, %v8315
      %v8317 = vsub.f32 1.5, %v8316
      %v8318 = vmul.f32 %v8313, %v8317
      %vm8319 = vweird.f32 %v8022
      %vm8320 = vweird.f32 %v8313
      %vm8321 = vmor %vm8319, %vm8320
      %v8322 = vsel %vm8321, %v8313, %v8318
      %v8323 = vrsqrt.pop %v8023
      %v8324 = vmul.f32 %v8323, %v8023
      %v8325 = vmul.f32 %v8324, %v8323
      %v8326 = vmul.f32 0.5, %v8325
      %v8327 = vsub.f32 1.5, %v8326
      %v8328 = vmul.f32 %v8323, %v8327
      %vm8329 = vweird.f32 %v8023
      %vm8330 = vweird.f32 %v8323
      %vm8331 = vmor %vm8329, %vm8330
      %v8332 = vsel %vm8331, %v8323, %v8328
      %v8333 = vrsqrt.pop %v8024
      %v8334 = vmul.f32 %v8333, %v8024
      %v8335 = vmul.f32 %v8334, %v8333
      %v8336 = vmul.f32 0.5, %v8335
      %v8337 = vsub.f32 1.5, %v8336
      %v8338 = vmul.f32 %v8333, %v8337
      %vm8339 = vweird.f32 %v8024
      %vm8340 = vweird.f32 %v8333
      %vm8341 = vmor %vm8339, %vm8340
      %v8342 = vsel %vm8341, %v8333, %v8338
      %v8343 = vrsqrt.pop %v8025
      %v8344 = vmul.f32 %v8343, %v8025
      %v8345 = vmul.f32 %v8344, %v8343
      %v8346 = vmul.f32 0.5, %v8345
      %v8347 = vsub.f32 1.5, %v8346
      %v8348 = vmul.f32 %v8343, %v8347
      %vm8349 = vweird.f32 %v8025
      %vm8350 = vweird.f32 %v8343
      %vm8351 = vmor %vm8349, %vm8350
      %v8352 = vsel %vm8351, %v8343, %v8348
      %v8353 = vrsqrt.pop %v8026
      %v8354 = vmul.f32 %v8353, %v8026
      %v8355 = vmul.f32 %v8354, %v8353
      %v8356 = vmul.f32 0.5, %v8355
      %v8357 = vsub.f32 1.5, %v8356
      %v8358 = vmul.f32 %v8353, %v8357
      %vm8359 = vweird.f32 %v8026
      %vm8360 = vweird.f32 %v8353
      %vm8361 = vmor %vm8359, %vm8360
      %v8362 = vsel %vm8361, %v8353, %v8358
      %v8363 = vrsqrt.pop %v8027
      %v8364 = vmul.f32 %v8363, %v8027
      %v8365 = vmul.f32 %v8364, %v8363
      %v8366 = vmul.f32 0.5, %v8365
      %v8367 = vsub.f32 1.5, %v8366
      %v8368 = vmul.f32 %v8363, %v8367
      %vm8369 = vweird.f32 %v8027
      %vm8370 = vweird.f32 %v8363
      %vm8371 = vmor %vm8369, %vm8370
      %v8372 = vsel %vm8371, %v8363, %v8368
      %v8373 = vrsqrt.pop %v8028
      %v8374 = vmul.f32 %v8373, %v8028
      %v8375 = vmul.f32 %v8374, %v8373
      %v8376 = vmul.f32 0.5, %v8375
      %v8377 = vsub.f32 1.5, %v8376
      %v8378 = vmul.f32 %v8373, %v8377
      %vm8379 = vweird.f32 %v8028
      %vm8380 = vweird.f32 %v8373
      %vm8381 = vmor %vm8379, %vm8380
      %v8382 = vsel %vm8381, %v8373, %v8378
      %v8383 = vrsqrt.pop %v8029
      %v8384 = vmul.f32 %v8383, %v8029
      %v8385 = vmul.f32 %v8384, %v8383
      %v8386 = vmul.f32 0.5, %v8385
      %v8387 = vsub.f32 1.5, %v8386
      %v8388 = vmul.f32 %v8383, %v8387
      %vm8389 = vweird.f32 %v8029
      %vm8390 = vweird.f32 %v8383
      %vm8391 = vmor %vm8389, %vm8390
      %v8392 = vsel %vm8391, %v8383, %v8388
      %v8393 = vrsqrt.pop %v8030
      %v8394 = vmul.f32 %v8393, %v8030
      %v8395 = vmul.f32 %v8394, %v8393
      %v8396 = vmul.f32 0.5, %v8395
      %v8397 = vsub.f32 1.5, %v8396
      %v8398 = vmul.f32 %v8393, %v8397
      %vm8399 = vweird.f32 %v8030
      %vm8400 = vweird.f32 %v8393
      %vm8401 = vmor %vm8399, %vm8400
      %v8402 = vsel %vm8401, %v8393, %v8398
      %v8403 = vrsqrt.pop %v8031
      %v8404 = vmul.f32 %v8403, %v8031
      %v8405 = vmul.f32 %v8404, %v8403
      %v8406 = vmul.f32 0.5, %v8405
      %v8407 = vsub.f32 1.5, %v8406
      %v8408 = vmul.f32 %v8403, %v8407
      %vm8409 = vweird.f32 %v8031
      %vm8410 = vweird.f32 %v8403
      %vm8411 = vmor %vm8409, %vm8410
      %v8412 = vsel %vm8411, %v8403, %v8408
      %v8413 = vrsqrt.pop %v8032
      %v8414 = vmul.f32 %v8413, %v8032
      %v8415 = vmul.f32 %v8414, %v8413
      %v8416 = vmul.f32 0.5, %v8415
      %v8417 = vsub.f32 1.5, %v8416
      %v8418 = vmul.f32 %v8413, %v8417
      %vm8419 = vweird.f32 %v8032
      %vm8420 = vweird.f32 %v8413
      %vm8421 = vmor %vm8419, %vm8420
      %v8422 = vsel %vm8421, %v8413, %v8418
      %v8423 = vrsqrt.pop %v8033
      %v8424 = vmul.f32 %v8423, %v8033
      %v8425 = vmul.f32 %v8424, %v8423
      %v8426 = vmul.f32 0.5, %v8425
      %v8427 = vsub.f32 1.5, %v8426
      %v8428 = vmul.f32 %v8423, %v8427
      %vm8429 = vweird.f32 %v8033
      %vm8430 = vweird.f32 %v8423
      %vm8431 = vmor %vm8429, %vm8430
      %v8432 = vsel %vm8431, %v8423, %v8428
      %v8433 = vrsqrt.pop %v8034
      %v8434 = vmul.f32 %v8433, %v8034
      %v8435 = vmul.f32 %v8434, %v8433
      %v8436 = vmul.f32 0.5, %v8435
      %v8437 = vsub.f32 1.5, %v8436
      %v8438 = vmul.f32 %v8433, %v8437
      %vm8439 = vweird.f32 %v8034
      %vm8440 = vweird.f32 %v8433
      %vm8441 = vmor %vm8439, %vm8440
      %v8442 = vsel %vm8441, %v8433, %v8438
      %v8443 = vrsqrt.pop %v8035
      %v8444 = vmul.f32 %v8443, %v8035
      %v8445 = vmul.f32 %v8444, %v8443
      %v8446 = vmul.f32 0.5, %v8445
      %v8447 = vsub.f32 1.5, %v8446
      %v8448 = vmul.f32 %v8443, %v8447
      %vm8449 = vweird.f32 %v8035
      %vm8450 = vweird.f32 %v8443
      %vm8451 = vmor %vm8449, %vm8450
      %v8452 = vsel %vm8451, %v8443, %v8448
      %v8453 = vrsqrt.pop %v8036
      %v8454 = vmul.f32 %v8453, %v8036
      %v8455 = vmul.f32 %v8454, %v8453
      %v8456 = vmul.f32 0.5, %v8455
      %v8457 = vsub.f32 1.5, %v8456
      %v8458 = vmul.f32 %v8453, %v8457
      %vm8459 = vweird.f32 %v8036
      %vm8460 = vweird.f32 %v8453
      %vm8461 = vmor %vm8459, %vm8460
      %v8462 = vsel %vm8461, %v8453, %v8458
      %v8463 = vrsqrt.pop %v8037
      %v8464 = vmul.f32 %v8463, %v8037
      %v8465 = vmul.f32 %v8464, %v8463
      %v8466 = vmul.f32 0.5, %v8465
      %v8467 = vsub.f32 1.5, %v8466
      %v8468 = vmul.f32 %v8463, %v8467
      %vm8469 = vweird.f32 %v8037
      %vm8470 = vweird.f32 %v8463
      %vm8471 = vmor %vm8469, %vm8470
      %v8472 = vsel %vm8471, %v8463, %v8468
      %v8473 = vrsqrt.pop %v8038
      %v8474 = vmul.f32 %v8473, %v8038
      %v8475 = vmul.f32 %v8474, %v8473
      %v8476 = vmul.f32 0.5, %v8475
      %v8477 = vsub.f32 1.5, %v8476
      %v8478 = vmul.f32 %v8473, %v8477
      %vm8479 = vweird.f32 %v8038
      %vm8480 = vweird.f32 %v8473
      %vm8481 = vmor %vm8479, %vm8480
      %v8482 = vsel %vm8481, %v8473, %v8478
      %v8483 = vrsqrt.pop %v8039
      %v8484 = vmul.f32 %v8483, %v8039
      %v8485 = vmul.f32 %v8484, %v8483
      %v8486 = vmul.f32 0.5, %v8485
      %v8487 = vsub.f32 1.5, %v8486
      %v8488 = vmul.f32 %v8483, %v8487
      %vm8489 = vweird.f32 %v8039
      %vm8490 = vweird.f32 %v8483
      %vm8491 = vmor %vm8489, %vm8490
      %v8492 = vsel %vm8491, %v8483, %v8488
      %v8493 = vrsqrt.pop %v8040
      %v8494 = vmul.f32 %v8493, %v8040
      %v8495 = vmul.f32 %v8494, %v8493
      %v8496 = vmul.f32 0.5, %v8495
      %v8497 = vsub.f32 1.5, %v8496
      %v8498 = vmul.f32 %v8493, %v8497
      %vm8499 = vweird.f32 %v8040
      %vm8500 = vweird.f32 %v8493
      %vm8501 = vmor %vm8499, %vm8500
      %v8502 = vsel %vm8501, %v8493, %v8498
      %v8503 = vrsqrt.pop %v8041
      %v8504 = vmul.f32 %v8503, %v8041
      %v8505 = vmul.f32 %v8504, %v8503
      %v8506 = vmul.f32 0.5, %v8505
      %v8507 = vsub.f32 1.5, %v8506
      %v8508 = vmul.f32 %v8503, %v8507
      %vm8509 = vweird.f32 %v8041
      %vm8510 = vweird.f32 %v8503
      %vm8511 = vmor %vm8509, %vm8510
      %v8512 = vsel %vm8511, %v8503, %v8508
      %v8513 = vrsqrt.pop %v8042
      %v8514 = vmul.f32 %v8513, %v8042
      %v8515 = vmul.f32 %v8514, %v8513
      %v8516 = vmul.f32 0.5, %v8515
      %v8517 = vsub.f32 1.5, %v8516
      %v8518 = vmul.f32 %v8513, %v8517
      %vm8519 = vweird.f32 %v8042
      %vm8520 = vweird.f32 %v8513
      %vm8521 = vmor %vm8519, %vm8520
      %v8522 = vsel %vm8521, %v8513, %v8518
      %v8523 = vmul.f32 %v7075, %v8052
      %v8524 = vmul.f32 %v7077, %v8062
      %v8525 = vmul.f32 %v7080, %v8072
      %v8526 = vmul.f32 %v7082, %v8082
      %v8527 = vmul.f32 %v7085, %v8092
      %v8528 = vmul.f32 %v7087, %v8102
      %v8529 = vmul.f32 %v7090, %v8112
      %v8530 = vmul.f32 %v7092, %v8122
      %v8531 = vmul.f32 %v7095, %v8132
      %v8532 = vmul.f32 %v7097, %v8142
      %v8533 = vmul.f32 %v7100, %v8152
      %v8534 = vmul.f32 %v7102, %v8162
      %v8535 = vmul.f32 %v7105, %v8172
      %v8536 = vmul.f32 %v7107, %v8182
      %v8537 = vmul.f32 %v7110, %v8192
      %v8538 = vmul.f32 %v7112, %v8202
      %v8539 = vmul.f32 %v7115, %v8212
      %v8540 = vmul.f32 %v7117, %v8222
      %v8541 = vmul.f32 %v7120, %v8232
      %v8542 = vmul.f32 %v7122, %v8242
      %v8543 = vmul.f32 %v7125, %v8252
      %v8544 = vmul.f32 %v7127, %v8262
      %v8545 = vmul.f32 %v7130, %v8272
      %v8546 = vmul.f32 %v7132, %v8282
      %v8547 = vmul.f32 %v7135, %v8292
      %v8548 = vmul.f32 %v7137, %v8302
      %v8549 = vmul.f32 %v7140, %v8312
      %v8550 = vmul.f32 %v7142, %v8322
      %v8551 = vmul.f32 %v7145, %v8332
      %v8552 = vmul.f32 %v7147, %v8342
      %v8553 = vmul.f32 %v7150, %v8352
      %v8554 = vmul.f32 %v7152, %v8362
      %v8555 = vmul.f32 %v7155, %v8372
      %v8556 = vmul.f32 %v7157, %v8382
      %v8557 = vmul.f32 %v7160, %v8392
      %v8558 = vmul.f32 %v7162, %v8402
      %v8559 = vmul.f32 %v7165, %v8412
      %v8560 = vmul.f32 %v7167, %v8422
      %v8561 = vmul.f32 %v7170, %v8432
      %v8562 = vmul.f32 %v7172, %v8442
      %v8563 = vmul.f32 %v7175, %v8452
      %v8564 = vmul.f32 %v7177, %v8462
      %v8565 = vmul.f32 %v7180, %v8472
      %v8566 = vmul.f32 %v7182, %v8482
      %v8567 = vmul.f32 %v7185, %v8492
      %v8568 = vmul.f32 %v7187, %v8502
      %v8569 = vmul.f32 %v7190, %v8512
      %v8570 = vmul.f32 %v7192, %v8522
      %v8571 = vld [vmem:[%s6] sm:$0x1]
      %v8573 = vperm.slane %v8571, 0
      %v8575 = vsub.f32 %v8523, %v8573
      %v8576 = vsub.f32 %v8524, %v8573
      %v8577 = vsub.f32 %v8525, %v8573
      %v8578 = vsub.f32 %v8526, %v8573
      %v8579 = vsub.f32 %v8527, %v8573
      %v8580 = vsub.f32 %v8528, %v8573
      %v8581 = vsub.f32 %v8529, %v8573
      %v8582 = vsub.f32 %v8530, %v8573
      %v8583 = vsub.f32 %v8531, %v8573
      %v8584 = vsub.f32 %v8532, %v8573
      %v8585 = vsub.f32 %v8533, %v8573
      %v8586 = vsub.f32 %v8534, %v8573
      %v8587 = vsub.f32 %v8535, %v8573
      %v8588 = vsub.f32 %v8536, %v8573
      %v8589 = vsub.f32 %v8537, %v8573
      %v8590 = vsub.f32 %v8538, %v8573
      %v8591 = vsub.f32 %v8539, %v8573
      %v8592 = vsub.f32 %v8540, %v8573
      %v8593 = vsub.f32 %v8541, %v8573
      %v8594 = vsub.f32 %v8542, %v8573
      %v8595 = vsub.f32 %v8543, %v8573
      %v8596 = vsub.f32 %v8544, %v8573
      %v8597 = vsub.f32 %v8545, %v8573
      %v8598 = vsub.f32 %v8546, %v8573
      %v8599 = vsub.f32 %v8547, %v8573
      %v8600 = vsub.f32 %v8548, %v8573
      %v8601 = vsub.f32 %v8549, %v8573
      %v8602 = vsub.f32 %v8550, %v8573
      %v8603 = vsub.f32 %v8551, %v8573
      %v8604 = vsub.f32 %v8552, %v8573
      %v8605 = vsub.f32 %v8553, %v8573
      %v8606 = vsub.f32 %v8554, %v8573
      %v8607 = vsub.f32 %v8555, %v8573
      %v8608 = vsub.f32 %v8556, %v8573
      %v8609 = vsub.f32 %v8557, %v8573
      %v8610 = vsub.f32 %v8558, %v8573
      %v8611 = vsub.f32 %v8559, %v8573
      %v8612 = vsub.f32 %v8560, %v8573
      %v8613 = vsub.f32 %v8561, %v8573
      %v8614 = vsub.f32 %v8562, %v8573
      %v8615 = vsub.f32 %v8563, %v8573
      %v8616 = vsub.f32 %v8564, %v8573
      %v8617 = vsub.f32 %v8565, %v8573
      %v8618 = vsub.f32 %v8566, %v8573
      %v8619 = vsub.f32 %v8567, %v8573
      %v8620 = vsub.f32 %v8568, %v8573
      %v8621 = vsub.f32 %v8569, %v8573
      %v8622 = vsub.f32 %v8570, %v8573
      %v8623 = vld [vmem:[%s7] sm:$0x1]
      %v8625 = vperm.slane %v8623, 0
      %v8627 = vadd.f32 %v7755, %v8625
      %v8628 = vadd.f32 %v7756, %v8625
      %v8629 = vadd.f32 %v7757, %v8625
      %v8630 = vadd.f32 %v7758, %v8625
      %v8631 = vadd.f32 %v7759, %v8625
      %v8632 = vadd.f32 %v7760, %v8625
      %v8633 = vadd.f32 %v7761, %v8625
      %v8634 = vadd.f32 %v7762, %v8625
      %v8635 = vadd.f32 %v7763, %v8625
      %v8636 = vadd.f32 %v7764, %v8625
      %v8637 = vadd.f32 %v7765, %v8625
      %v8638 = vadd.f32 %v7766, %v8625
      %v8639 = vadd.f32 %v7767, %v8625
      %v8640 = vadd.f32 %v7768, %v8625
      %v8641 = vadd.f32 %v7769, %v8625
      %v8642 = vadd.f32 %v7770, %v8625
      %v8643 = vadd.f32 %v7771, %v8625
      %v8644 = vadd.f32 %v7772, %v8625
      %v8645 = vadd.f32 %v7773, %v8625
      %v8646 = vadd.f32 %v7774, %v8625
      %v8647 = vadd.f32 %v7775, %v8625
      %v8648 = vadd.f32 %v7776, %v8625
      %v8649 = vadd.f32 %v7777, %v8625
      %v8650 = vadd.f32 %v7778, %v8625
      %v8651 = vadd.f32 %v7779, %v8625
      %v8652 = vadd.f32 %v7780, %v8625
      %v8653 = vadd.f32 %v7781, %v8625
      %v8654 = vadd.f32 %v7782, %v8625
      %v8655 = vadd.f32 %v7783, %v8625
      %v8656 = vadd.f32 %v7784, %v8625
      %v8657 = vadd.f32 %v7785, %v8625
      %v8658 = vadd.f32 %v7786, %v8625
      %v8659 = vadd.f32 %v7787, %v8625
      %v8660 = vadd.f32 %v7788, %v8625
      %v8661 = vadd.f32 %v7789, %v8625
      %v8662 = vadd.f32 %v7790, %v8625
      %v8663 = vadd.f32 %v7791, %v8625
      %v8664 = vadd.f32 %v7792, %v8625
      %v8665 = vadd.f32 %v7793, %v8625
      %v8666 = vadd.f32 %v7794, %v8625
      %v8667 = vadd.f32 %v7795, %v8625
      %v8668 = vadd.f32 %v7796, %v8625
      %v8669 = vadd.f32 %v7797, %v8625
      %v8670 = vadd.f32 %v7798, %v8625
      %v8671 = vadd.f32 %v7799, %v8625
      %v8672 = vadd.f32 %v7800, %v8625
      %v8673 = vadd.f32 %v7801, %v8625
      %v8674 = vadd.f32 %v7802, %v8625
      %v8675 = vmul.f32 %v8575, %v8575
      %v8676 = vmul.f32 %v8576, %v8576
      %v8677 = vmul.f32 %v8577, %v8577
      %v8678 = vmul.f32 %v8578, %v8578
      %v8679 = vmul.f32 %v8579, %v8579
      %v8680 = vmul.f32 %v8580, %v8580
      %v8681 = vmul.f32 %v8581, %v8581
      %v8682 = vmul.f32 %v8582, %v8582
      %v8683 = vmul.f32 %v8583, %v8583
      %v8684 = vmul.f32 %v8584, %v8584
      %v8685 = vmul.f32 %v8585, %v8585
      %v8686 = vmul.f32 %v8586, %v8586
      %v8687 = vmul.f32 %v8587, %v8587
      %v8688 = vmul.f32 %v8588, %v8588
      %v8689 = vmul.f32 %v8589, %v8589
      %v8690 = vmul.f32 %v8590, %v8590
      %v8691 = vmul.f32 %v8591, %v8591
      %v8692 = vmul.f32 %v8592, %v8592
      %v8693 = vmul.f32 %v8593, %v8593
      %v8694 = vmul.f32 %v8594, %v8594
      %v8695 = vmul.f32 %v8595, %v8595
      %v8696 = vmul.f32 %v8596, %v8596
      %v8697 = vmul.f32 %v8597, %v8597
      %v8698 = vmul.f32 %v8598, %v8598
      %v8699 = vmul.f32 %v8599, %v8599
      %v8700 = vmul.f32 %v8600, %v8600
      %v8701 = vmul.f32 %v8601, %v8601
      %v8702 = vmul.f32 %v8602, %v8602
      %v8703 = vmul.f32 %v8603, %v8603
      %v8704 = vmul.f32 %v8604, %v8604
      %v8705 = vmul.f32 %v8605, %v8605
      %v8706 = vmul.f32 %v8606, %v8606
      %v8707 = vmul.f32 %v8607, %v8607
      %v8708 = vmul.f32 %v8608, %v8608
      %v8709 = vmul.f32 %v8609, %v8609
      %v8710 = vmul.f32 %v8610, %v8610
      %v8711 = vmul.f32 %v8611, %v8611
      %v8712 = vmul.f32 %v8612, %v8612
      %v8713 = vmul.f32 %v8613, %v8613
      %v8714 = vmul.f32 %v8614, %v8614
      %v8715 = vmul.f32 %v8615, %v8615
      %v8716 = vmul.f32 %v8616, %v8616
      %v8717 = vmul.f32 %v8617, %v8617
      %v8718 = vmul.f32 %v8618, %v8618
      %v8719 = vmul.f32 %v8619, %v8619
      %v8720 = vmul.f32 %v8620, %v8620
      %v8721 = vmul.f32 %v8621, %v8621
      %v8722 = vmul.f32 %v8622, %v8622
      %v8723 = vrcp.pop %v8627
      %v8724 = vrcp.pop %v8628
      %v8725 = vrcp.pop %v8629
      %v8726 = vrcp.pop %v8630
      %v8727 = vrcp.pop %v8631
      %v8728 = vrcp.pop %v8632
      %v8729 = vrcp.pop %v8633
      %v8730 = vrcp.pop %v8634
      %v8731 = vrcp.pop %v8635
      %v8732 = vrcp.pop %v8636
      %v8733 = vrcp.pop %v8637
      %v8734 = vrcp.pop %v8638
      %v8735 = vrcp.pop %v8639
      %v8736 = vrcp.pop %v8640
      %v8737 = vrcp.pop %v8641
      %v8738 = vrcp.pop %v8642
      %v8739 = vrcp.pop %v8643
      %v8740 = vrcp.pop %v8644
      %v8741 = vrcp.pop %v8645
      %v8742 = vrcp.pop %v8646
      %v8743 = vrcp.pop %v8647
      %v8744 = vrcp.pop %v8648
      %v8745 = vrcp.pop %v8649
      %v8746 = vrcp.pop %v8650
      %v8747 = vrcp.pop %v8651
      %v8748 = vrcp.pop %v8652
      %v8749 = vrcp.pop %v8653
      %v8750 = vrcp.pop %v8654
      %v8751 = vrcp.pop %v8655
      %v8752 = vrcp.pop %v8656
      %v8753 = vrcp.pop %v8657
      %v8754 = vrcp.pop %v8658
      %v8755 = vrcp.pop %v8659
      %v8756 = vrcp.pop %v8660
      %v8757 = vrcp.pop %v8661
      %v8758 = vrcp.pop %v8662
      %v8759 = vrcp.pop %v8663
      %v8760 = vrcp.pop %v8664
      %v8761 = vrcp.pop %v8665
      %v8762 = vrcp.pop %v8666
      %v8763 = vrcp.pop %v8667
      %v8764 = vrcp.pop %v8668
      %v8765 = vrcp.pop %v8669
      %v8766 = vrcp.pop %v8670
      %v8767 = vrcp.pop %v8671
      %v8768 = vrcp.pop %v8672
      %v8769 = vrcp.pop %v8673
      %v8770 = vrcp.pop %v8674
      %v8771 = vmul.f32 %v8675, %v8723
      %v8772 = vmul.f32 %v8676, %v8724
      %v8773 = vmul.f32 %v8677, %v8725
      %v8774 = vmul.f32 %v8678, %v8726
      %v8775 = vmul.f32 %v8679, %v8727
      %v8776 = vmul.f32 %v8680, %v8728
      %v8777 = vmul.f32 %v8681, %v8729
      %v8778 = vmul.f32 %v8682, %v8730
      %v8779 = vmul.f32 %v8683, %v8731
      %v8780 = vmul.f32 %v8684, %v8732
      %v8781 = vmul.f32 %v8685, %v8733
      %v8782 = vmul.f32 %v8686, %v8734
      %v8783 = vmul.f32 %v8687, %v8735
      %v8784 = vmul.f32 %v8688, %v8736
      %v8785 = vmul.f32 %v8689, %v8737
      %v8786 = vmul.f32 %v8690, %v8738
      %v8787 = vmul.f32 %v8691, %v8739
      %v8788 = vmul.f32 %v8692, %v8740
      %v8789 = vmul.f32 %v8693, %v8741
      %v8790 = vmul.f32 %v8694, %v8742
      %v8791 = vmul.f32 %v8695, %v8743
      %v8792 = vmul.f32 %v8696, %v8744
      %v8793 = vmul.f32 %v8697, %v8745
      %v8794 = vmul.f32 %v8698, %v8746
      %v8795 = vmul.f32 %v8699, %v8747
      %v8796 = vmul.f32 %v8700, %v8748
      %v8797 = vmul.f32 %v8701, %v8749
      %v8798 = vmul.f32 %v8702, %v8750
      %v8799 = vmul.f32 %v8703, %v8751
      %v8800 = vmul.f32 %v8704, %v8752
      %v8801 = vmul.f32 %v8705, %v8753
      %v8802 = vmul.f32 %v8706, %v8754
      %v8803 = vmul.f32 %v8707, %v8755
      %v8804 = vmul.f32 %v8708, %v8756
      %v8805 = vmul.f32 %v8709, %v8757
      %v8806 = vmul.f32 %v8710, %v8758
      %v8807 = vmul.f32 %v8711, %v8759
      %v8808 = vmul.f32 %v8712, %v8760
      %v8809 = vmul.f32 %v8713, %v8761
      %v8810 = vmul.f32 %v8714, %v8762
      %v8811 = vmul.f32 %v8715, %v8763
      %v8812 = vmul.f32 %v8716, %v8764
      %v8813 = vmul.f32 %v8717, %v8765
      %v8814 = vmul.f32 %v8718, %v8766
      %v8815 = vmul.f32 %v8719, %v8767
      %v8816 = vmul.f32 %v8720, %v8768
      %v8817 = vmul.f32 %v8721, %v8769
      %v8818 = vmul.f32 %v8722, %v8770
      %v8819 = vlog2.pop %v8627
      %v8820 = vmul.f32 %v8819, 0.6931472
      %v8821 = vlog2.pop %v8628
      %v8822 = vmul.f32 %v8821, 0.6931472
      %v8823 = vlog2.pop %v8629
      %v8824 = vmul.f32 %v8823, 0.6931472
      %v8825 = vlog2.pop %v8630
      %v8826 = vmul.f32 %v8825, 0.6931472
      %v8827 = vlog2.pop %v8631
      %v8828 = vmul.f32 %v8827, 0.6931472
      %v8829 = vlog2.pop %v8632
      %v8830 = vmul.f32 %v8829, 0.6931472
      %v8831 = vlog2.pop %v8633
      %v8832 = vmul.f32 %v8831, 0.6931472
      %v8833 = vlog2.pop %v8634
      %v8834 = vmul.f32 %v8833, 0.6931472
      %v8835 = vlog2.pop %v8635
      %v8836 = vmul.f32 %v8835, 0.6931472
      %v8837 = vlog2.pop %v8636
      %v8838 = vmul.f32 %v8837, 0.6931472
      %v8839 = vlog2.pop %v8637
      %v8840 = vmul.f32 %v8839, 0.6931472
      %v8841 = vlog2.pop %v8638
      %v8842 = vmul.f32 %v8841, 0.6931472
      %v8843 = vlog2.pop %v8639
      %v8844 = vmul.f32 %v8843, 0.6931472
      %v8845 = vlog2.pop %v8640
      %v8846 = vmul.f32 %v8845, 0.6931472
      %v8847 = vlog2.pop %v8641
      %v8848 = vmul.f32 %v8847, 0.6931472
      %v8849 = vlog2.pop %v8642
      %v8850 = vmul.f32 %v8849, 0.6931472
      %v8851 = vlog2.pop %v8643
      %v8852 = vmul.f32 %v8851, 0.6931472
      %v8853 = vlog2.pop %v8644
      %v8854 = vmul.f32 %v8853, 0.6931472
      %v8855 = vlog2.pop %v8645
      %v8856 = vmul.f32 %v8855, 0.6931472
      %v8857 = vlog2.pop %v8646
      %v8858 = vmul.f32 %v8857, 0.6931472
      %v8859 = vlog2.pop %v8647
      %v8860 = vmul.f32 %v8859, 0.6931472
      %v8861 = vlog2.pop %v8648
      %v8862 = vmul.f32 %v8861, 0.6931472
      %v8863 = vlog2.pop %v8649
      %v8864 = vmul.f32 %v8863, 0.6931472
      %v8865 = vlog2.pop %v8650
      %v8866 = vmul.f32 %v8865, 0.6931472
      %v8867 = vlog2.pop %v8651
      %v8868 = vmul.f32 %v8867, 0.6931472
      %v8869 = vlog2.pop %v8652
      %v8870 = vmul.f32 %v8869, 0.6931472
      %v8871 = vlog2.pop %v8653
      %v8872 = vmul.f32 %v8871, 0.6931472
      %v8873 = vlog2.pop %v8654
      %v8874 = vmul.f32 %v8873, 0.6931472
      %v8875 = vlog2.pop %v8655
      %v8876 = vmul.f32 %v8875, 0.6931472
      %v8877 = vlog2.pop %v8656
      %v8878 = vmul.f32 %v8877, 0.6931472
      %v8879 = vlog2.pop %v8657
      %v8880 = vmul.f32 %v8879, 0.6931472
      %v8881 = vlog2.pop %v8658
      %v8882 = vmul.f32 %v8881, 0.6931472
      %v8883 = vlog2.pop %v8659
      %v8884 = vmul.f32 %v8883, 0.6931472
      %v8885 = vlog2.pop %v8660
      %v8886 = vmul.f32 %v8885, 0.6931472
      %v8887 = vlog2.pop %v8661
      %v8888 = vmul.f32 %v8887, 0.6931472
      %v8889 = vlog2.pop %v8662
      %v8890 = vmul.f32 %v8889, 0.6931472
      %v8891 = vlog2.pop %v8663
      %v8892 = vmul.f32 %v8891, 0.6931472
      %v8893 = vlog2.pop %v8664
      %v8894 = vmul.f32 %v8893, 0.6931472
      %v8895 = vlog2.pop %v8665
      %v8896 = vmul.f32 %v8895, 0.6931472
      %v8897 = vlog2.pop %v8666
      %v8898 = vmul.f32 %v8897, 0.6931472
      %v8899 = vlog2.pop %v8667
      %v8900 = vmul.f32 %v8899, 0.6931472
      %v8901 = vlog2.pop %v8668
      %v8902 = vmul.f32 %v8901, 0.6931472
      %v8903 = vlog2.pop %v8669
      %v8904 = vmul.f32 %v8903, 0.6931472
      %v8905 = vlog2.pop %v8670
      %v8906 = vmul.f32 %v8905, 0.6931472
      %v8907 = vlog2.pop %v8671
      %v8908 = vmul.f32 %v8907, 0.6931472
      %v8909 = vlog2.pop %v8672
      %v8910 = vmul.f32 %v8909, 0.6931472
      %v8911 = vlog2.pop %v8673
      %v8912 = vmul.f32 %v8911, 0.6931472
      %v8913 = vlog2.pop %v8674
      %v8914 = vmul.f32 %v8913, 0.6931472
      %v8915 = vadd.f32 %v8771, %v8820
      %v8916 = vadd.f32 %v8772, %v8822
      %v8917 = vadd.f32 %v8773, %v8824
      %v8918 = vadd.f32 %v8774, %v8826
      %v8919 = vadd.f32 %v8775, %v8828
      %v8920 = vadd.f32 %v8776, %v8830
      %v8921 = vadd.f32 %v8777, %v8832
      %v8922 = vadd.f32 %v8778, %v8834
      %v8923 = vadd.f32 %v8779, %v8836
      %v8924 = vadd.f32 %v8780, %v8838
      %v8925 = vadd.f32 %v8781, %v8840
      %v8926 = vadd.f32 %v8782, %v8842
      %v8927 = vadd.f32 %v8783, %v8844
      %v8928 = vadd.f32 %v8784, %v8846
      %v8929 = vadd.f32 %v8785, %v8848
      %v8930 = vadd.f32 %v8786, %v8850
      %v8931 = vadd.f32 %v8787, %v8852
      %v8932 = vadd.f32 %v8788, %v8854
      %v8933 = vadd.f32 %v8789, %v8856
      %v8934 = vadd.f32 %v8790, %v8858
      %v8935 = vadd.f32 %v8791, %v8860
      %v8936 = vadd.f32 %v8792, %v8862
      %v8937 = vadd.f32 %v8793, %v8864
      %v8938 = vadd.f32 %v8794, %v8866
      %v8939 = vadd.f32 %v8795, %v8868
      %v8940 = vadd.f32 %v8796, %v8870
      %v8941 = vadd.f32 %v8797, %v8872
      %v8942 = vadd.f32 %v8798, %v8874
      %v8943 = vadd.f32 %v8799, %v8876
      %v8944 = vadd.f32 %v8800, %v8878
      %v8945 = vadd.f32 %v8801, %v8880
      %v8946 = vadd.f32 %v8802, %v8882
      %v8947 = vadd.f32 %v8803, %v8884
      %v8948 = vadd.f32 %v8804, %v8886
      %v8949 = vadd.f32 %v8805, %v8888
      %v8950 = vadd.f32 %v8806, %v8890
      %v8951 = vadd.f32 %v8807, %v8892
      %v8952 = vadd.f32 %v8808, %v8894
      %v8953 = vadd.f32 %v8809, %v8896
      %v8954 = vadd.f32 %v8810, %v8898
      %v8955 = vadd.f32 %v8811, %v8900
      %v8956 = vadd.f32 %v8812, %v8902
      %v8957 = vadd.f32 %v8813, %v8904
      %v8958 = vadd.f32 %v8814, %v8906
      %v8959 = vadd.f32 %v8815, %v8908
      %v8960 = vadd.f32 %v8816, %v8910
      %v8961 = vadd.f32 %v8817, %v8912
      %v8962 = vadd.f32 %v8818, %v8914
      %v8963 = vld [vmem:[%s8] sm:$0xff]
      %v8964 = vld [vmem:[%s8 + $0x8] sm:$0xff]
      %v8965 = vld [vmem:[%s8 + $0x10] sm:$0xff]
      %v8966 = vld [vmem:[%s8 + $0x18] sm:$0xff]
      %v8967 = vld [vmem:[%s8 + $0x20] sm:$0xff]
      %v8968 = vld [vmem:[%s8 + $0x28] sm:$0xff]
      %v8969 = vld [vmem:[%s8 + $0x30] sm:$0xff]
      %v8970 = vld [vmem:[%s8 + $0x38] sm:$0xff]
      %v8971 = vld [vmem:[%s8 + $0x40] sm:$0xff]
      %v8972 = vld [vmem:[%s8 + $0x48] sm:$0xff]
      %v8973 = vld [vmem:[%s8 + $0x50] sm:$0xff]
      %v8974 = vld [vmem:[%s8 + $0x58] sm:$0xff]
      %v8975 = vld [vmem:[%s8 + $0x60] sm:$0xff]
      %v8976 = vld [vmem:[%s8 + $0x68] sm:$0xff]
      %v8977 = vld [vmem:[%s8 + $0x70] sm:$0xff]
      %v8978 = vld [vmem:[%s8 + $0x78] sm:$0xff]
      %8979 = vmatpush.msra.mxu0 %v8978
      %8980 = vmatpush.msra.mxu0 %v8977
      %8981 = vmatpush.msra.mxu0 %v8976
      %8982 = vmatpush.msra.mxu0 %v8975
      %8983 = vmatpush.msra.mxu0 %v8974
      %8984 = vmatpush.msra.mxu0 %v8973
      %8985 = vmatpush.msra.mxu0 %v8972
      %8986 = vmatpush.msra.mxu0 %v8971
      %8987 = vmatpush.msra.mxu0 %v8970
      %8988 = vmatpush.msra.mxu0 %v8969
      %8989 = vmatpush.msra.mxu0 %v8968
      %8990 = vmatpush.msra.mxu0 %v8967
      %8991 = vmatpush.msra.mxu0 %v8966
      %8992 = vmatpush.msra.mxu0 %v8965
      %8993 = vmatpush.msra.mxu0 %v8964
      %8994 = vmatpush.msra.mxu0 %v8963
      %8995 = vmatmul.f32.gmra.mxu0 %v8915
      %v8996 = vpop.f32.mrf.mxu0
      %v8997 = vadd.f32 0.0, %v8996
      %8998 = vmatmul.f32.gmra.mxu0 %v8916
      %v8999 = vpop.f32.mrf.mxu0
      %v9000 = vadd.f32 0.0, %v8999
      %9001 = vmatmul.f32.gmra.mxu0 %v8917
      %v9002 = vpop.f32.mrf.mxu0
      %v9003 = vadd.f32 0.0, %v9002
      %9004 = vmatmul.f32.gmra.mxu0 %v8918
      %v9005 = vpop.f32.mrf.mxu0
      %v9006 = vadd.f32 0.0, %v9005
      %9007 = vmatmul.f32.gmra.mxu0 %v8919
      %v9008 = vpop.f32.mrf.mxu0
      %v9009 = vadd.f32 0.0, %v9008
      %9010 = vmatmul.f32.gmra.mxu0 %v8920
      %v9011 = vpop.f32.mrf.mxu0
      %v9012 = vadd.f32 0.0, %v9011
      %9013 = vmatmul.f32.gmra.mxu0 %v8921
      %v9014 = vpop.f32.mrf.mxu0
      %v9015 = vadd.f32 0.0, %v9014
      %9016 = vmatmul.f32.gmra.mxu0 %v8922
      %v9017 = vpop.f32.mrf.mxu0
      %v9018 = vadd.f32 0.0, %v9017
      %9019 = vmatmul.f32.gmra.mxu0 %v8923
      %v9020 = vpop.f32.mrf.mxu0
      %v9021 = vadd.f32 0.0, %v9020
      %9022 = vmatmul.f32.gmra.mxu0 %v8924
      %v9023 = vpop.f32.mrf.mxu0
      %v9024 = vadd.f32 0.0, %v9023
      %9025 = vmatmul.f32.gmra.mxu0 %v8925
      %v9026 = vpop.f32.mrf.mxu0
      %v9027 = vadd.f32 0.0, %v9026
      %9028 = vmatmul.f32.gmra.mxu0 %v8926
      %v9029 = vpop.f32.mrf.mxu0
      %v9030 = vadd.f32 0.0, %v9029
      %9031 = vmatmul.f32.gmra.mxu0 %v8927
      %v9032 = vpop.f32.mrf.mxu0
      %v9033 = vadd.f32 0.0, %v9032
      %9034 = vmatmul.f32.gmra.mxu0 %v8928
      %v9035 = vpop.f32.mrf.mxu0
      %v9036 = vadd.f32 0.0, %v9035
      %9037 = vmatmul.f32.gmra.mxu0 %v8929
      %v9038 = vpop.f32.mrf.mxu0
      %v9039 = vadd.f32 0.0, %v9038
      %9040 = vmatmul.f32.gmra.mxu0 %v8930
      %v9041 = vpop.f32.mrf.mxu0
      %v9042 = vadd.f32 0.0, %v9041
      %9043 = vmatmul.f32.gmra.mxu0 %v8931
      %v9044 = vpop.f32.mrf.mxu0
      %v9045 = vadd.f32 0.0, %v9044
      %9046 = vmatmul.f32.gmra.mxu0 %v8932
      %v9047 = vpop.f32.mrf.mxu0
      %v9048 = vadd.f32 0.0, %v9047
      %9049 = vmatmul.f32.gmra.mxu0 %v8933
      %v9050 = vpop.f32.mrf.mxu0
      %v9051 = vadd.f32 0.0, %v9050
      %9052 = vmatmul.f32.gmra.mxu0 %v8934
      %v9053 = vpop.f32.mrf.mxu0
      %v9054 = vadd.f32 0.0, %v9053
      %9055 = vmatmul.f32.gmra.mxu0 %v8935
      %v9056 = vpop.f32.mrf.mxu0
      %v9057 = vadd.f32 0.0, %v9056
      %9058 = vmatmul.f32.gmra.mxu0 %v8936
      %v9059 = vpop.f32.mrf.mxu0
      %v9060 = vadd.f32 0.0, %v9059
      %9061 = vmatmul.f32.gmra.mxu0 %v8937
      %v9062 = vpop.f32.mrf.mxu0
      %v9063 = vadd.f32 0.0, %v9062
      %9064 = vmatmul.f32.gmra.mxu0 %v8938
      %v9065 = vpop.f32.mrf.mxu0
      %v9066 = vadd.f32 0.0, %v9065
      %9067 = vmatmul.f32.gmra.mxu0 %v8939
      %v9068 = vpop.f32.mrf.mxu0
      %v9069 = vadd.f32 0.0, %v9068
      %9070 = vmatmul.f32.gmra.mxu0 %v8940
      %v9071 = vpop.f32.mrf.mxu0
      %v9072 = vadd.f32 0.0, %v9071
      %9073 = vmatmul.f32.gmra.mxu0 %v8941
      %v9074 = vpop.f32.mrf.mxu0
      %v9075 = vadd.f32 0.0, %v9074
      %9076 = vmatmul.f32.gmra.mxu0 %v8942
      %v9077 = vpop.f32.mrf.mxu0
      %v9078 = vadd.f32 0.0, %v9077
      %9079 = vmatmul.f32.gmra.mxu0 %v8943
      %v9080 = vpop.f32.mrf.mxu0
      %v9081 = vadd.f32 0.0, %v9080
      %9082 = vmatmul.f32.gmra.mxu0 %v8944
      %v9083 = vpop.f32.mrf.mxu0
      %v9084 = vadd.f32 0.0, %v9083
      %9085 = vmatmul.f32.gmra.mxu0 %v8945
      %v9086 = vpop.f32.mrf.mxu0
      %v9087 = vadd.f32 0.0, %v9086
      %9088 = vmatmul.f32.gmra.mxu0 %v8946
      %v9089 = vpop.f32.mrf.mxu0
      %v9090 = vadd.f32 0.0, %v9089
      %9091 = vmatmul.f32.gmra.mxu0 %v8947
      %v9092 = vpop.f32.mrf.mxu0
      %v9093 = vadd.f32 0.0, %v9092
      %9094 = vmatmul.f32.gmra.mxu0 %v8948
      %v9095 = vpop.f32.mrf.mxu0
      %v9096 = vadd.f32 0.0, %v9095
      %9097 = vmatmul.f32.gmra.mxu0 %v8949
      %v9098 = vpop.f32.mrf.mxu0
      %v9099 = vadd.f32 0.0, %v9098
      %9100 = vmatmul.f32.gmra.mxu0 %v8950
      %v9101 = vpop.f32.mrf.mxu0
      %v9102 = vadd.f32 0.0, %v9101
      %9103 = vmatmul.f32.gmra.mxu0 %v8951
      %v9104 = vpop.f32.mrf.mxu0
      %v9105 = vadd.f32 0.0, %v9104
      %9106 = vmatmul.f32.gmra.mxu0 %v8952
      %v9107 = vpop.f32.mrf.mxu0
      %v9108 = vadd.f32 0.0, %v9107
      %9109 = vmatmul.f32.gmra.mxu0 %v8953
      %v9110 = vpop.f32.mrf.mxu0
      %v9111 = vadd.f32 0.0, %v9110
      %9112 = vmatmul.f32.gmra.mxu0 %v8954
      %v9113 = vpop.f32.mrf.mxu0
      %v9114 = vadd.f32 0.0, %v9113
      %9115 = vmatmul.f32.gmra.mxu0 %v8955
      %v9116 = vpop.f32.mrf.mxu0
      %v9117 = vadd.f32 0.0, %v9116
      %9118 = vmatmul.f32.gmra.mxu0 %v8956
      %v9119 = vpop.f32.mrf.mxu0
      %v9120 = vadd.f32 0.0, %v9119
      %9121 = vmatmul.f32.gmra.mxu0 %v8957
      %v9122 = vpop.f32.mrf.mxu0
      %v9123 = vadd.f32 0.0, %v9122
      %9124 = vmatmul.f32.gmra.mxu0 %v8958
      %v9125 = vpop.f32.mrf.mxu0
      %v9126 = vadd.f32 0.0, %v9125
      %9127 = vmatmul.f32.gmra.mxu0 %v8959
      %v9128 = vpop.f32.mrf.mxu0
      %v9129 = vadd.f32 0.0, %v9128
      %9130 = vmatmul.f32.gmra.mxu0 %v8960
      %v9131 = vpop.f32.mrf.mxu0
      %v9132 = vadd.f32 0.0, %v9131
      %9133 = vmatmul.f32.gmra.mxu0 %v8961
      %v9134 = vpop.f32.mrf.mxu0
      %v9135 = vadd.f32 0.0, %v9134
      %9136 = vmatmul.f32.gmra.mxu0 %v8962
      %v9137 = vpop.f32.mrf.mxu0
      %v9138 = vadd.f32 0.0, %v9137
      %9139 = vdwg.mxu0
      %v9140 = vlaneseq
      %v9141 = vand.u32 %v9140, 127
      %vm9142 = vcmp.lt.s32.totalorder %v9141, 4
      %vm9143 = vcmp.ge.s32.totalorder %v9141, 8
      %vm9144 = vcmp.lt.s32.totalorder %v9141, 40
      %vm9145 = vmand %vm9143, %vm9144
      %v9146 = vsel %vm9142, 1, 0
      %vm9147 = vcmp.eq.s32.totalorder %v9146, 1
      %v9148 = vsel %vm9147, %v6946, 0.0
      %v9149 = vsel %vm9147, %v6948, 0.0
      %v9150 = vsel %vm9147, %v6951, 0.0
      %v9151 = vsel %vm9147, %v6953, 0.0
      %v9152 = vsel %vm9147, %v6956, 0.0
      %v9153 = vsel %vm9147, %v6958, 0.0
      %v9154 = vsel %vm9147, %v6961, 0.0
      %v9155 = vsel %vm9147, %v6963, 0.0
      %v9156 = vsel %vm9147, %v6966, 0.0
      %v9157 = vsel %vm9147, %v6968, 0.0
      %v9158 = vsel %vm9147, %v6971, 0.0
      %v9159 = vsel %vm9147, %v6973, 0.0
      %v9160 = vsel %vm9147, %v6976, 0.0
      %v9161 = vsel %vm9147, %v6978, 0.0
      %v9162 = vsel %vm9147, %v6981, 0.0
      %v9163 = vsel %vm9147, %v6983, 0.0
      %v9164 = vsel %vm9147, %v6986, 0.0
      %v9165 = vsel %vm9147, %v6988, 0.0
      %v9166 = vsel %vm9147, %v6991, 0.0
      %v9167 = vsel %vm9147, %v6993, 0.0
      %v9168 = vsel %vm9147, %v6996, 0.0
      %v9169 = vsel %vm9147, %v6998, 0.0
      %v9170 = vsel %vm9147, %v7001, 0.0
      %v9171 = vsel %vm9147, %v7003, 0.0
      %v9172 = vsel %vm9147, %v7006, 0.0
      %v9173 = vsel %vm9147, %v7008, 0.0
      %v9174 = vsel %vm9147, %v7011, 0.0
      %v9175 = vsel %vm9147, %v7013, 0.0
      %v9176 = vsel %vm9147, %v7016, 0.0
      %v9177 = vsel %vm9147, %v7018, 0.0
      %v9178 = vsel %vm9147, %v7021, 0.0
      %v9179 = vsel %vm9147, %v7023, 0.0
      %v9180 = vsel %vm9147, %v7026, 0.0
      %v9181 = vsel %vm9147, %v7028, 0.0
      %v9182 = vsel %vm9147, %v7031, 0.0
      %v9183 = vsel %vm9147, %v7033, 0.0
      %v9184 = vsel %vm9147, %v7036, 0.0
      %v9185 = vsel %vm9147, %v7038, 0.0
      %v9186 = vsel %vm9147, %v7041, 0.0
      %v9187 = vsel %vm9147, %v7043, 0.0
      %v9188 = vsel %vm9147, %v7046, 0.0
      %v9189 = vsel %vm9147, %v7048, 0.0
      %v9190 = vsel %vm9147, %v7051, 0.0
      %v9191 = vsel %vm9147, %v7053, 0.0
      %v9192 = vsel %vm9147, %v7056, 0.0
      %v9193 = vsel %vm9147, %v7058, 0.0
      %v9194 = vsel %vm9147, %v7061, 0.0
      %v9195 = vsel %vm9147, %v7063, 0.0
      %v9196 = vmax.f32 %v6946, 0.0
      %v9197 = vmax.f32 %v6948, 0.0
      %v9198 = vmax.f32 %v6951, 0.0
      %v9199 = vmax.f32 %v6953, 0.0
      %v9200 = vmax.f32 %v6956, 0.0
      %v9201 = vmax.f32 %v6958, 0.0
      %v9202 = vmax.f32 %v6961, 0.0
      %v9203 = vmax.f32 %v6963, 0.0
      %v9204 = vmax.f32 %v6966, 0.0
      %v9205 = vmax.f32 %v6968, 0.0
      %v9206 = vmax.f32 %v6971, 0.0
      %v9207 = vmax.f32 %v6973, 0.0
      %v9208 = vmax.f32 %v6976, 0.0
      %v9209 = vmax.f32 %v6978, 0.0
      %v9210 = vmax.f32 %v6981, 0.0
      %v9211 = vmax.f32 %v6983, 0.0
      %v9212 = vmax.f32 %v6986, 0.0
      %v9213 = vmax.f32 %v6988, 0.0
      %v9214 = vmax.f32 %v6991, 0.0
      %v9215 = vmax.f32 %v6993, 0.0
      %v9216 = vmax.f32 %v6996, 0.0
      %v9217 = vmax.f32 %v6998, 0.0
      %v9218 = vmax.f32 %v7001, 0.0
      %v9219 = vmax.f32 %v7003, 0.0
      %v9220 = vmax.f32 %v7006, 0.0
      %v9221 = vmax.f32 %v7008, 0.0
      %v9222 = vmax.f32 %v7011, 0.0
      %v9223 = vmax.f32 %v7013, 0.0
      %v9224 = vmax.f32 %v7016, 0.0
      %v9225 = vmax.f32 %v7018, 0.0
      %v9226 = vmax.f32 %v7021, 0.0
      %v9227 = vmax.f32 %v7023, 0.0
      %v9228 = vmax.f32 %v7026, 0.0
      %v9229 = vmax.f32 %v7028, 0.0
      %v9230 = vmax.f32 %v7031, 0.0
      %v9231 = vmax.f32 %v7033, 0.0
      %v9232 = vmax.f32 %v7036, 0.0
      %v9233 = vmax.f32 %v7038, 0.0
      %v9234 = vmax.f32 %v7041, 0.0
      %v9235 = vmax.f32 %v7043, 0.0
      %v9236 = vmax.f32 %v7046, 0.0
      %v9237 = vmax.f32 %v7048, 0.0
      %v9238 = vmax.f32 %v7051, 0.0
      %v9239 = vmax.f32 %v7053, 0.0
      %v9240 = vmax.f32 %v7056, 0.0
      %v9241 = vmax.f32 %v7058, 0.0
      %v9242 = vmax.f32 %v7061, 0.0
      %v9243 = vmax.f32 %v7063, 0.0
      %v9244 = vand.u32 2147483647, %v6946
      %v9245 = vand.u32 2147483647, %v6948
      %v9246 = vand.u32 2147483647, %v6951
      %v9247 = vand.u32 2147483647, %v6953
      %v9248 = vand.u32 2147483647, %v6956
      %v9249 = vand.u32 2147483647, %v6958
      %v9250 = vand.u32 2147483647, %v6961
      %v9251 = vand.u32 2147483647, %v6963
      %v9252 = vand.u32 2147483647, %v6966
      %v9253 = vand.u32 2147483647, %v6968
      %v9254 = vand.u32 2147483647, %v6971
      %v9255 = vand.u32 2147483647, %v6973
      %v9256 = vand.u32 2147483647, %v6976
      %v9257 = vand.u32 2147483647, %v6978
      %v9258 = vand.u32 2147483647, %v6981
      %v9259 = vand.u32 2147483647, %v6983
      %v9260 = vand.u32 2147483647, %v6986
      %v9261 = vand.u32 2147483647, %v6988
      %v9262 = vand.u32 2147483647, %v6991
      %v9263 = vand.u32 2147483647, %v6993
      %v9264 = vand.u32 2147483647, %v6996
      %v9265 = vand.u32 2147483647, %v6998
      %v9266 = vand.u32 2147483647, %v7001
      %v9267 = vand.u32 2147483647, %v7003
      %v9268 = vand.u32 2147483647, %v7006
      %v9269 = vand.u32 2147483647, %v7008
      %v9270 = vand.u32 2147483647, %v7011
      %v9271 = vand.u32 2147483647, %v7013
      %v9272 = vand.u32 2147483647, %v7016
      %v9273 = vand.u32 2147483647, %v7018
      %v9274 = vand.u32 2147483647, %v7021
      %v9275 = vand.u32 2147483647, %v7023
      %v9276 = vand.u32 2147483647, %v7026
      %v9277 = vand.u32 2147483647, %v7028
      %v9278 = vand.u32 2147483647, %v7031
      %v9279 = vand.u32 2147483647, %v7033
      %v9280 = vand.u32 2147483647, %v7036
      %v9281 = vand.u32 2147483647, %v7038
      %v9282 = vand.u32 2147483647, %v7041
      %v9283 = vand.u32 2147483647, %v7043
      %v9284 = vand.u32 2147483647, %v7046
      %v9285 = vand.u32 2147483647, %v7048
      %v9286 = vand.u32 2147483647, %v7051
      %v9287 = vand.u32 2147483647, %v7053
      %v9288 = vand.u32 2147483647, %v7056
      %v9289 = vand.u32 2147483647, %v7058
      %v9290 = vand.u32 2147483647, %v7061
      %v9291 = vand.u32 2147483647, %v7063
      %v9292 = vsub.f32 0.0, %v9244
      %v9293 = vsub.f32 0.0, %v9245
      %v9294 = vsub.f32 0.0, %v9246
      %v9295 = vsub.f32 0.0, %v9247
      %v9296 = vsub.f32 0.0, %v9248
      %v9297 = vsub.f32 0.0, %v9249
      %v9298 = vsub.f32 0.0, %v9250
      %v9299 = vsub.f32 0.0, %v9251
      %v9300 = vsub.f32 0.0, %v9252
      %v9301 = vsub.f32 0.0, %v9253
      %v9302 = vsub.f32 0.0, %v9254
      %v9303 = vsub.f32 0.0, %v9255
      %v9304 = vsub.f32 0.0, %v9256
      %v9305 = vsub.f32 0.0, %v9257
      %v9306 = vsub.f32 0.0, %v9258
      %v9307 = vsub.f32 0.0, %v9259
      %v9308 = vsub.f32 0.0, %v9260
      %v9309 = vsub.f32 0.0, %v9261
      %v9310 = vsub.f32 0.0, %v9262
      %v9311 = vsub.f32 0.0, %v9263
      %v9312 = vsub.f32 0.0, %v9264
      %v9313 = vsub.f32 0.0, %v9265
      %v9314 = vsub.f32 0.0, %v9266
      %v9315 = vsub.f32 0.0, %v9267
      %v9316 = vsub.f32 0.0, %v9268
      %v9317 = vsub.f32 0.0, %v9269
      %v9318 = vsub.f32 0.0, %v9270
      %v9319 = vsub.f32 0.0, %v9271
      %v9320 = vsub.f32 0.0, %v9272
      %v9321 = vsub.f32 0.0, %v9273
      %v9322 = vsub.f32 0.0, %v9274
      %v9323 = vsub.f32 0.0, %v9275
      %v9324 = vsub.f32 0.0, %v9276
      %v9325 = vsub.f32 0.0, %v9277
      %v9326 = vsub.f32 0.0, %v9278
      %v9327 = vsub.f32 0.0, %v9279
      %v9328 = vsub.f32 0.0, %v9280
      %v9329 = vsub.f32 0.0, %v9281
      %v9330 = vsub.f32 0.0, %v9282
      %v9331 = vsub.f32 0.0, %v9283
      %v9332 = vsub.f32 0.0, %v9284
      %v9333 = vsub.f32 0.0, %v9285
      %v9334 = vsub.f32 0.0, %v9286
      %v9335 = vsub.f32 0.0, %v9287
      %v9336 = vsub.f32 0.0, %v9288
      %v9337 = vsub.f32 0.0, %v9289
      %v9338 = vsub.f32 0.0, %v9290
      %v9339 = vsub.f32 0.0, %v9291
      %v9340 = vmul.f32 %v9292, 1.442695
      %v9341 = vpow.pop %v9340
      %v9342 = vmul.f32 %v9293, 1.442695
      %v9343 = vpow.pop %v9342
      %v9344 = vmul.f32 %v9294, 1.442695
      %v9345 = vpow.pop %v9344
      %v9346 = vmul.f32 %v9295, 1.442695
      %v9347 = vpow.pop %v9346
      %v9348 = vmul.f32 %v9296, 1.442695
      %v9349 = vpow.pop %v9348
      %v9350 = vmul.f32 %v9297, 1.442695
      %v9351 = vpow.pop %v9350
      %v9352 = vmul.f32 %v9298, 1.442695
      %v9353 = vpow.pop %v9352
      %v9354 = vmul.f32 %v9299, 1.442695
      %v9355 = vpow.pop %v9354
      %v9356 = vmul.f32 %v9300, 1.442695
      %v9357 = vpow.pop %v9356
      %v9358 = vmul.f32 %v9301, 1.442695
      %v9359 = vpow.pop %v9358
      %v9360 = vmul.f32 %v9302, 1.442695
      %v9361 = vpow.pop %v9360
      %v9362 = vmul.f32 %v9303, 1.442695
      %v9363 = vpow.pop %v9362
      %v9364 = vmul.f32 %v9304, 1.442695
      %v9365 = vpow.pop %v9364
      %v9366 = vmul.f32 %v9305, 1.442695
      %v9367 = vpow.pop %v9366
      %v9368 = vmul.f32 %v9306, 1.442695
      %v9369 = vpow.pop %v9368
      %v9370 = vmul.f32 %v9307, 1.442695
      %v9371 = vpow.pop %v9370
      %v9372 = vmul.f32 %v9308, 1.442695
      %v9373 = vpow.pop %v9372
      %v9374 = vmul.f32 %v9309, 1.442695
      %v9375 = vpow.pop %v9374
      %v9376 = vmul.f32 %v9310, 1.442695
      %v9377 = vpow.pop %v9376
      %v9378 = vmul.f32 %v9311, 1.442695
      %v9379 = vpow.pop %v9378
      %v9380 = vmul.f32 %v9312, 1.442695
      %v9381 = vpow.pop %v9380
      %v9382 = vmul.f32 %v9313, 1.442695
      %v9383 = vpow.pop %v9382
      %v9384 = vmul.f32 %v9314, 1.442695
      %v9385 = vpow.pop %v9384
      %v9386 = vmul.f32 %v9315, 1.442695
      %v9387 = vpow.pop %v9386
      %v9388 = vmul.f32 %v9316, 1.442695
      %v9389 = vpow.pop %v9388
      %v9390 = vmul.f32 %v9317, 1.442695
      %v9391 = vpow.pop %v9390
      %v9392 = vmul.f32 %v9318, 1.442695
      %v9393 = vpow.pop %v9392
      %v9394 = vmul.f32 %v9319, 1.442695
      %v9395 = vpow.pop %v9394
      %v9396 = vmul.f32 %v9320, 1.442695
      %v9397 = vpow.pop %v9396
      %v9398 = vmul.f32 %v9321, 1.442695
      %v9399 = vpow.pop %v9398
      %v9400 = vmul.f32 %v9322, 1.442695
      %v9401 = vpow.pop %v9400
      %v9402 = vmul.f32 %v9323, 1.442695
      %v9403 = vpow.pop %v9402
      %v9404 = vmul.f32 %v9324, 1.442695
      %v9405 = vpow.pop %v9404
      %v9406 = vmul.f32 %v9325, 1.442695
      %v9407 = vpow.pop %v9406
      %v9408 = vmul.f32 %v9326, 1.442695
      %v9409 = vpow.pop %v9408
      %v9410 = vmul.f32 %v9327, 1.442695
      %v9411 = vpow.pop %v9410
      %v9412 = vmul.f32 %v9328, 1.442695
      %v9413 = vpow.pop %v9412
      %v9414 = vmul.f32 %v9329, 1.442695
      %v9415 = vpow.pop %v9414
      %v9416 = vmul.f32 %v9330, 1.442695
      %v9417 = vpow.pop %v9416
      %v9418 = vmul.f32 %v9331, 1.442695
      %v9419 = vpow.pop %v9418
      %v9420 = vmul.f32 %v9332, 1.442695
      %v9421 = vpow.pop %v9420
      %v9422 = vmul.f32 %v9333, 1.442695
      %v9423 = vpow.pop %v9422
      %v9424 = vmul.f32 %v9334, 1.442695
      %v9425 = vpow.pop %v9424
      %v9426 = vmul.f32 %v9335, 1.442695
      %v9427 = vpow.pop %v9426
      %v9428 = vmul.f32 %v9336, 1.442695
      %v9429 = vpow.pop %v9428
      %v9430 = vmul.f32 %v9337, 1.442695
      %v9431 = vpow.pop %v9430
      %v9432 = vmul.f32 %v9338, 1.442695
      %v9433 = vpow.pop %v9432
      %v9434 = vmul.f32 %v9339, 1.442695
      %v9435 = vpow.pop %v9434
      %v9436 = vadd.f32 %v9341, 1.0
      %v9437 = vadd.f32 %v9343, 1.0
      %v9438 = vadd.f32 %v9345, 1.0
      %v9439 = vadd.f32 %v9347, 1.0
      %v9440 = vadd.f32 %v9349, 1.0
      %v9441 = vadd.f32 %v9351, 1.0
      %v9442 = vadd.f32 %v9353, 1.0
      %v9443 = vadd.f32 %v9355, 1.0
      %v9444 = vadd.f32 %v9357, 1.0
      %v9445 = vadd.f32 %v9359, 1.0
      %v9446 = vadd.f32 %v9361, 1.0
      %v9447 = vadd.f32 %v9363, 1.0
      %v9448 = vadd.f32 %v9365, 1.0
      %v9449 = vadd.f32 %v9367, 1.0
      %v9450 = vadd.f32 %v9369, 1.0
      %v9451 = vadd.f32 %v9371, 1.0
      %v9452 = vadd.f32 %v9373, 1.0
      %v9453 = vadd.f32 %v9375, 1.0
      %v9454 = vadd.f32 %v9377, 1.0
      %v9455 = vadd.f32 %v9379, 1.0
      %v9456 = vadd.f32 %v9381, 1.0
      %v9457 = vadd.f32 %v9383, 1.0
      %v9458 = vadd.f32 %v9385, 1.0
      %v9459 = vadd.f32 %v9387, 1.0
      %v9460 = vadd.f32 %v9389, 1.0
      %v9461 = vadd.f32 %v9391, 1.0
      %v9462 = vadd.f32 %v9393, 1.0
      %v9463 = vadd.f32 %v9395, 1.0
      %v9464 = vadd.f32 %v9397, 1.0
      %v9465 = vadd.f32 %v9399, 1.0
      %v9466 = vadd.f32 %v9401, 1.0
      %v9467 = vadd.f32 %v9403, 1.0
      %v9468 = vadd.f32 %v9405, 1.0
      %v9469 = vadd.f32 %v9407, 1.0
      %v9470 = vadd.f32 %v9409, 1.0
      %v9471 = vadd.f32 %v9411, 1.0
      %v9472 = vadd.f32 %v9413, 1.0
      %v9473 = vadd.f32 %v9415, 1.0
      %v9474 = vadd.f32 %v9417, 1.0
      %v9475 = vadd.f32 %v9419, 1.0
      %v9476 = vadd.f32 %v9421, 1.0
      %v9477 = vadd.f32 %v9423, 1.0
      %v9478 = vadd.f32 %v9425, 1.0
      %v9479 = vadd.f32 %v9427, 1.0
      %v9480 = vadd.f32 %v9429, 1.0
      %v9481 = vadd.f32 %v9431, 1.0
      %v9482 = vadd.f32 %v9433, 1.0
      %v9483 = vadd.f32 %v9435, 1.0
      %v9484 = vlog2.pop %v9436
      %v9485 = vmul.f32 %v9484, 0.6931472
      %v9486 = vlog2.pop %v9437
      %v9487 = vmul.f32 %v9486, 0.6931472
      %v9488 = vlog2.pop %v9438
      %v9489 = vmul.f32 %v9488, 0.6931472
      %v9490 = vlog2.pop %v9439
      %v9491 = vmul.f32 %v9490, 0.6931472
      %v9492 = vlog2.pop %v9440
      %v9493 = vmul.f32 %v9492, 0.6931472
      %v9494 = vlog2.pop %v9441
      %v9495 = vmul.f32 %v9494, 0.6931472
      %v9496 = vlog2.pop %v9442
      %v9497 = vmul.f32 %v9496, 0.6931472
      %v9498 = vlog2.pop %v9443
      %v9499 = vmul.f32 %v9498, 0.6931472
      %v9500 = vlog2.pop %v9444
      %v9501 = vmul.f32 %v9500, 0.6931472
      %v9502 = vlog2.pop %v9445
      %v9503 = vmul.f32 %v9502, 0.6931472
      %v9504 = vlog2.pop %v9446
      %v9505 = vmul.f32 %v9504, 0.6931472
      %v9506 = vlog2.pop %v9447
      %v9507 = vmul.f32 %v9506, 0.6931472
      %v9508 = vlog2.pop %v9448
      %v9509 = vmul.f32 %v9508, 0.6931472
      %v9510 = vlog2.pop %v9449
      %v9511 = vmul.f32 %v9510, 0.6931472
      %v9512 = vlog2.pop %v9450
      %v9513 = vmul.f32 %v9512, 0.6931472
      %v9514 = vlog2.pop %v9451
      %v9515 = vmul.f32 %v9514, 0.6931472
      %v9516 = vlog2.pop %v9452
      %v9517 = vmul.f32 %v9516, 0.6931472
      %v9518 = vlog2.pop %v9453
      %v9519 = vmul.f32 %v9518, 0.6931472
      %v9520 = vlog2.pop %v9454
      %v9521 = vmul.f32 %v9520, 0.6931472
      %v9522 = vlog2.pop %v9455
      %v9523 = vmul.f32 %v9522, 0.6931472
      %v9524 = vlog2.pop %v9456
      %v9525 = vmul.f32 %v9524, 0.6931472
      %v9526 = vlog2.pop %v9457
      %v9527 = vmul.f32 %v9526, 0.6931472
      %v9528 = vlog2.pop %v9458
      %v9529 = vmul.f32 %v9528, 0.6931472
      %v9530 = vlog2.pop %v9459
      %v9531 = vmul.f32 %v9530, 0.6931472
      %v9532 = vlog2.pop %v9460
      %v9533 = vmul.f32 %v9532, 0.6931472
      %v9534 = vlog2.pop %v9461
      %v9535 = vmul.f32 %v9534, 0.6931472
      %v9536 = vlog2.pop %v9462
      %v9537 = vmul.f32 %v9536, 0.6931472
      %v9538 = vlog2.pop %v9463
      %v9539 = vmul.f32 %v9538, 0.6931472
      %v9540 = vlog2.pop %v9464
      %v9541 = vmul.f32 %v9540, 0.6931472
      %v9542 = vlog2.pop %v9465
      %v9543 = vmul.f32 %v9542, 0.6931472
      %v9544 = vlog2.pop %v9466
      %v9545 = vmul.f32 %v9544, 0.6931472
      %v9546 = vlog2.pop %v9467
      %v9547 = vmul.f32 %v9546, 0.6931472
      %v9548 = vlog2.pop %v9468
      %v9549 = vmul.f32 %v9548, 0.6931472
      %v9550 = vlog2.pop %v9469
      %v9551 = vmul.f32 %v9550, 0.6931472
      %v9552 = vlog2.pop %v9470
      %v9553 = vmul.f32 %v9552, 0.6931472
      %v9554 = vlog2.pop %v9471
      %v9555 = vmul.f32 %v9554, 0.6931472
      %v9556 = vlog2.pop %v9472
      %v9557 = vmul.f32 %v9556, 0.6931472
      %v9558 = vlog2.pop %v9473
      %v9559 = vmul.f32 %v9558, 0.6931472
      %v9560 = vlog2.pop %v9474
      %v9561 = vmul.f32 %v9560, 0.6931472
      %v9562 = vlog2.pop %v9475
      %v9563 = vmul.f32 %v9562, 0.6931472
      %v9564 = vlog2.pop %v9476
      %v9565 = vmul.f32 %v9564, 0.6931472
      %v9566 = vlog2.pop %v9477
      %v9567 = vmul.f32 %v9566, 0.6931472
      %v9568 = vlog2.pop %v9478
      %v9569 = vmul.f32 %v9568, 0.6931472
      %v9570 = vlog2.pop %v9479
      %v9571 = vmul.f32 %v9570, 0.6931472
      %v9572 = vlog2.pop %v9480
      %v9573 = vmul.f32 %v9572, 0.6931472
      %v9574 = vlog2.pop %v9481
      %v9575 = vmul.f32 %v9574, 0.6931472
      %v9576 = vlog2.pop %v9482
      %v9577 = vmul.f32 %v9576, 0.6931472
      %v9578 = vlog2.pop %v9483
      %v9579 = vmul.f32 %v9578, 0.6931472
      %v9580 = vadd.f32 %v9196, %v9485
      %v9581 = vadd.f32 %v9197, %v9487
      %v9582 = vadd.f32 %v9198, %v9489
      %v9583 = vadd.f32 %v9199, %v9491
      %v9584 = vadd.f32 %v9200, %v9493
      %v9585 = vadd.f32 %v9201, %v9495
      %v9586 = vadd.f32 %v9202, %v9497
      %v9587 = vadd.f32 %v9203, %v9499
      %v9588 = vadd.f32 %v9204, %v9501
      %v9589 = vadd.f32 %v9205, %v9503
      %v9590 = vadd.f32 %v9206, %v9505
      %v9591 = vadd.f32 %v9207, %v9507
      %v9592 = vadd.f32 %v9208, %v9509
      %v9593 = vadd.f32 %v9209, %v9511
      %v9594 = vadd.f32 %v9210, %v9513
      %v9595 = vadd.f32 %v9211, %v9515
      %v9596 = vadd.f32 %v9212, %v9517
      %v9597 = vadd.f32 %v9213, %v9519
      %v9598 = vadd.f32 %v9214, %v9521
      %v9599 = vadd.f32 %v9215, %v9523
      %v9600 = vadd.f32 %v9216, %v9525
      %v9601 = vadd.f32 %v9217, %v9527
      %v9602 = vadd.f32 %v9218, %v9529
      %v9603 = vadd.f32 %v9219, %v9531
      %v9604 = vadd.f32 %v9220, %v9533
      %v9605 = vadd.f32 %v9221, %v9535
      %v9606 = vadd.f32 %v9222, %v9537
      %v9607 = vadd.f32 %v9223, %v9539
      %v9608 = vadd.f32 %v9224, %v9541
      %v9609 = vadd.f32 %v9225, %v9543
      %v9610 = vadd.f32 %v9226, %v9545
      %v9611 = vadd.f32 %v9227, %v9547
      %v9612 = vadd.f32 %v9228, %v9549
      %v9613 = vadd.f32 %v9229, %v9551
      %v9614 = vadd.f32 %v9230, %v9553
      %v9615 = vadd.f32 %v9231, %v9555
      %v9616 = vadd.f32 %v9232, %v9557
      %v9617 = vadd.f32 %v9233, %v9559
      %v9618 = vadd.f32 %v9234, %v9561
      %v9619 = vadd.f32 %v9235, %v9563
      %v9620 = vadd.f32 %v9236, %v9565
      %v9621 = vadd.f32 %v9237, %v9567
      %v9622 = vadd.f32 %v9238, %v9569
      %v9623 = vadd.f32 %v9239, %v9571
      %v9624 = vadd.f32 %v9240, %v9573
      %v9625 = vadd.f32 %v9241, %v9575
      %v9626 = vadd.f32 %v9242, %v9577
      %v9627 = vadd.f32 %v9243, %v9579
      %v9628 = vadd.f32 %v9580, 1e-06
      %v9629 = vadd.f32 %v9581, 1e-06
      %v9630 = vadd.f32 %v9582, 1e-06
      %v9631 = vadd.f32 %v9583, 1e-06
      %v9632 = vadd.f32 %v9584, 1e-06
      %v9633 = vadd.f32 %v9585, 1e-06
      %v9634 = vadd.f32 %v9586, 1e-06
      %v9635 = vadd.f32 %v9587, 1e-06
      %v9636 = vadd.f32 %v9588, 1e-06
      %v9637 = vadd.f32 %v9589, 1e-06
      %v9638 = vadd.f32 %v9590, 1e-06
      %v9639 = vadd.f32 %v9591, 1e-06
      %v9640 = vadd.f32 %v9592, 1e-06
      %v9641 = vadd.f32 %v9593, 1e-06
      %v9642 = vadd.f32 %v9594, 1e-06
      %v9643 = vadd.f32 %v9595, 1e-06
      %v9644 = vadd.f32 %v9596, 1e-06
      %v9645 = vadd.f32 %v9597, 1e-06
      %v9646 = vadd.f32 %v9598, 1e-06
      %v9647 = vadd.f32 %v9599, 1e-06
      %v9648 = vadd.f32 %v9600, 1e-06
      %v9649 = vadd.f32 %v9601, 1e-06
      %v9650 = vadd.f32 %v9602, 1e-06
      %v9651 = vadd.f32 %v9603, 1e-06
      %v9652 = vadd.f32 %v9604, 1e-06
      %v9653 = vadd.f32 %v9605, 1e-06
      %v9654 = vadd.f32 %v9606, 1e-06
      %v9655 = vadd.f32 %v9607, 1e-06
      %v9656 = vadd.f32 %v9608, 1e-06
      %v9657 = vadd.f32 %v9609, 1e-06
      %v9658 = vadd.f32 %v9610, 1e-06
      %v9659 = vadd.f32 %v9611, 1e-06
      %v9660 = vadd.f32 %v9612, 1e-06
      %v9661 = vadd.f32 %v9613, 1e-06
      %v9662 = vadd.f32 %v9614, 1e-06
      %v9663 = vadd.f32 %v9615, 1e-06
      %v9664 = vadd.f32 %v9616, 1e-06
      %v9665 = vadd.f32 %v9617, 1e-06
      %v9666 = vadd.f32 %v9618, 1e-06
      %v9667 = vadd.f32 %v9619, 1e-06
      %v9668 = vadd.f32 %v9620, 1e-06
      %v9669 = vadd.f32 %v9621, 1e-06
      %v9670 = vadd.f32 %v9622, 1e-06
      %v9671 = vadd.f32 %v9623, 1e-06
      %v9672 = vadd.f32 %v9624, 1e-06
      %v9673 = vadd.f32 %v9625, 1e-06
      %v9674 = vadd.f32 %v9626, 1e-06
      %v9675 = vadd.f32 %v9627, 1e-06
      %v9676 = vsel %vm9145, 1, 0
      %vm9677 = vcmp.eq.s32.totalorder %v9676, 1
      %v9678 = vsel %vm9677, %v9628, 0.0
      %v9679 = vsel %vm9677, %v9629, 0.0
      %v9680 = vsel %vm9677, %v9630, 0.0
      %v9681 = vsel %vm9677, %v9631, 0.0
      %v9682 = vsel %vm9677, %v9632, 0.0
      %v9683 = vsel %vm9677, %v9633, 0.0
      %v9684 = vsel %vm9677, %v9634, 0.0
      %v9685 = vsel %vm9677, %v9635, 0.0
      %v9686 = vsel %vm9677, %v9636, 0.0
      %v9687 = vsel %vm9677, %v9637, 0.0
      %v9688 = vsel %vm9677, %v9638, 0.0
      %v9689 = vsel %vm9677, %v9639, 0.0
      %v9690 = vsel %vm9677, %v9640, 0.0
      %v9691 = vsel %vm9677, %v9641, 0.0
      %v9692 = vsel %vm9677, %v9642, 0.0
      %v9693 = vsel %vm9677, %v9643, 0.0
      %v9694 = vsel %vm9677, %v9644, 0.0
      %v9695 = vsel %vm9677, %v9645, 0.0
      %v9696 = vsel %vm9677, %v9646, 0.0
      %v9697 = vsel %vm9677, %v9647, 0.0
      %v9698 = vsel %vm9677, %v9648, 0.0
      %v9699 = vsel %vm9677, %v9649, 0.0
      %v9700 = vsel %vm9677, %v9650, 0.0
      %v9701 = vsel %vm9677, %v9651, 0.0
      %v9702 = vsel %vm9677, %v9652, 0.0
      %v9703 = vsel %vm9677, %v9653, 0.0
      %v9704 = vsel %vm9677, %v9654, 0.0
      %v9705 = vsel %vm9677, %v9655, 0.0
      %v9706 = vsel %vm9677, %v9656, 0.0
      %v9707 = vsel %vm9677, %v9657, 0.0
      %v9708 = vsel %vm9677, %v9658, 0.0
      %v9709 = vsel %vm9677, %v9659, 0.0
      %v9710 = vsel %vm9677, %v9660, 0.0
      %v9711 = vsel %vm9677, %v9661, 0.0
      %v9712 = vsel %vm9677, %v9662, 0.0
      %v9713 = vsel %vm9677, %v9663, 0.0
      %v9714 = vsel %vm9677, %v9664, 0.0
      %v9715 = vsel %vm9677, %v9665, 0.0
      %v9716 = vsel %vm9677, %v9666, 0.0
      %v9717 = vsel %vm9677, %v9667, 0.0
      %v9718 = vsel %vm9677, %v9668, 0.0
      %v9719 = vsel %vm9677, %v9669, 0.0
      %v9720 = vsel %vm9677, %v9670, 0.0
      %v9721 = vsel %vm9677, %v9671, 0.0
      %v9722 = vsel %vm9677, %v9672, 0.0
      %v9723 = vsel %vm9677, %v9673, 0.0
      %v9724 = vsel %vm9677, %v9674, 0.0
      %v9725 = vsel %vm9677, %v9675, 0.0
      %v9726 = vadd.f32 %v9148, %v9678
      %v9727 = vadd.f32 %v9149, %v9679
      %v9728 = vadd.f32 %v9150, %v9680
      %v9729 = vadd.f32 %v9151, %v9681
      %v9730 = vadd.f32 %v9152, %v9682
      %v9731 = vadd.f32 %v9153, %v9683
      %v9732 = vadd.f32 %v9154, %v9684
      %v9733 = vadd.f32 %v9155, %v9685
      %v9734 = vadd.f32 %v9156, %v9686
      %v9735 = vadd.f32 %v9157, %v9687
      %v9736 = vadd.f32 %v9158, %v9688
      %v9737 = vadd.f32 %v9159, %v9689
      %v9738 = vadd.f32 %v9160, %v9690
      %v9739 = vadd.f32 %v9161, %v9691
      %v9740 = vadd.f32 %v9162, %v9692
      %v9741 = vadd.f32 %v9163, %v9693
      %v9742 = vadd.f32 %v9164, %v9694
      %v9743 = vadd.f32 %v9165, %v9695
      %v9744 = vadd.f32 %v9166, %v9696
      %v9745 = vadd.f32 %v9167, %v9697
      %v9746 = vadd.f32 %v9168, %v9698
      %v9747 = vadd.f32 %v9169, %v9699
      %v9748 = vadd.f32 %v9170, %v9700
      %v9749 = vadd.f32 %v9171, %v9701
      %v9750 = vadd.f32 %v9172, %v9702
      %v9751 = vadd.f32 %v9173, %v9703
      %v9752 = vadd.f32 %v9174, %v9704
      %v9753 = vadd.f32 %v9175, %v9705
      %v9754 = vadd.f32 %v9176, %v9706
      %v9755 = vadd.f32 %v9177, %v9707
      %v9756 = vadd.f32 %v9178, %v9708
      %v9757 = vadd.f32 %v9179, %v9709
      %v9758 = vadd.f32 %v9180, %v9710
      %v9759 = vadd.f32 %v9181, %v9711
      %v9760 = vadd.f32 %v9182, %v9712
      %v9761 = vadd.f32 %v9183, %v9713
      %v9762 = vadd.f32 %v9184, %v9714
      %v9763 = vadd.f32 %v9185, %v9715
      %v9764 = vadd.f32 %v9186, %v9716
      %v9765 = vadd.f32 %v9187, %v9717
      %v9766 = vadd.f32 %v9188, %v9718
      %v9767 = vadd.f32 %v9189, %v9719
      %v9768 = vadd.f32 %v9190, %v9720
      %v9769 = vadd.f32 %v9191, %v9721
      %v9770 = vadd.f32 %v9192, %v9722
      %v9771 = vadd.f32 %v9193, %v9723
      %v9772 = vadd.f32 %v9194, %v9724
      %v9773 = vadd.f32 %v9195, %v9725
      %v9774 = vadd.f32 %v9726, %v8997
      %v9775 = vadd.f32 %v9727, %v9000
      %v9776 = vadd.f32 %v9728, %v9003
      %v9777 = vadd.f32 %v9729, %v9006
      %v9778 = vadd.f32 %v9730, %v9009
      %v9779 = vadd.f32 %v9731, %v9012
      %v9780 = vadd.f32 %v9732, %v9015
      %v9781 = vadd.f32 %v9733, %v9018
      %v9782 = vadd.f32 %v9734, %v9021
      %v9783 = vadd.f32 %v9735, %v9024
      %v9784 = vadd.f32 %v9736, %v9027
      %v9785 = vadd.f32 %v9737, %v9030
      %v9786 = vadd.f32 %v9738, %v9033
      %v9787 = vadd.f32 %v9739, %v9036
      %v9788 = vadd.f32 %v9740, %v9039
      %v9789 = vadd.f32 %v9741, %v9042
      %v9790 = vadd.f32 %v9742, %v9045
      %v9791 = vadd.f32 %v9743, %v9048
      %v9792 = vadd.f32 %v9744, %v9051
      %v9793 = vadd.f32 %v9745, %v9054
      %v9794 = vadd.f32 %v9746, %v9057
      %v9795 = vadd.f32 %v9747, %v9060
      %v9796 = vadd.f32 %v9748, %v9063
      %v9797 = vadd.f32 %v9749, %v9066
      %v9798 = vadd.f32 %v9750, %v9069
      %v9799 = vadd.f32 %v9751, %v9072
      %v9800 = vadd.f32 %v9752, %v9075
      %v9801 = vadd.f32 %v9753, %v9078
      %v9802 = vadd.f32 %v9754, %v9081
      %v9803 = vadd.f32 %v9755, %v9084
      %v9804 = vadd.f32 %v9756, %v9087
      %v9805 = vadd.f32 %v9757, %v9090
      %v9806 = vadd.f32 %v9758, %v9093
      %v9807 = vadd.f32 %v9759, %v9096
      %v9808 = vadd.f32 %v9760, %v9099
      %v9809 = vadd.f32 %v9761, %v9102
      %v9810 = vadd.f32 %v9762, %v9105
      %v9811 = vadd.f32 %v9763, %v9108
      %v9812 = vadd.f32 %v9764, %v9111
      %v9813 = vadd.f32 %v9765, %v9114
      %v9814 = vadd.f32 %v9766, %v9117
      %v9815 = vadd.f32 %v9767, %v9120
      %v9816 = vadd.f32 %v9768, %v9123
      %v9817 = vadd.f32 %v9769, %v9126
      %v9818 = vadd.f32 %v9770, %v9129
      %v9819 = vadd.f32 %v9771, %v9132
      %v9820 = vadd.f32 %v9772, %v9135
      %v9821 = vadd.f32 %v9773, %v9138
      %9822 = vst [vmem:[%s332] sm:$0xff] %v9774
      %9823 = vst [vmem:[%s332 + $0x8] sm:$0xff] %v9775
      %9824 = vst [vmem:[%s332 + $0x10] sm:$0xff] %v9776
      %9825 = vst [vmem:[%s332 + $0x18] sm:$0xff] %v9777
      %9826 = vst [vmem:[%s332 + $0x20] sm:$0xff] %v9778
      %9827 = vst [vmem:[%s332 + $0x28] sm:$0xff] %v9779
      %9828 = vst [vmem:[%s332 + $0x30] sm:$0xff] %v9780
      %9829 = vst [vmem:[%s332 + $0x38] sm:$0xff] %v9781
      %9830 = vst [vmem:[%s332 + $0x40] sm:$0xff] %v9782
      %9831 = vst [vmem:[%s332 + $0x48] sm:$0xff] %v9783
      %9832 = vst [vmem:[%s332 + $0x50] sm:$0xff] %v9784
      %9833 = vst [vmem:[%s332 + $0x58] sm:$0xff] %v9785
      %9834 = vst [vmem:[%s332 + $0x60] sm:$0xff] %v9786
      %9835 = vst [vmem:[%s332 + $0x68] sm:$0xff] %v9787
      %9836 = vst [vmem:[%s332 + $0x70] sm:$0xff] %v9788
      %9837 = vst [vmem:[%s332 + $0x78] sm:$0xff] %v9789
      %9838 = vst [vmem:[%s332 + $0x80] sm:$0xff] %v9790
      %9839 = vst [vmem:[%s332 + $0x88] sm:$0xff] %v9791
      %9840 = vst [vmem:[%s332 + $0x90] sm:$0xff] %v9792
      %9841 = vst [vmem:[%s332 + $0x98] sm:$0xff] %v9793
      %9842 = vst [vmem:[%s332 + $0xa0] sm:$0xff] %v9794
      %9843 = vst [vmem:[%s332 + $0xa8] sm:$0xff] %v9795
      %9844 = vst [vmem:[%s332 + $0xb0] sm:$0xff] %v9796
      %9845 = vst [vmem:[%s332 + $0xb8] sm:$0xff] %v9797
      %9846 = vst [vmem:[%s332 + $0xc0] sm:$0xff] %v9798
      %9847 = vst [vmem:[%s332 + $0xc8] sm:$0xff] %v9799
      %9848 = vst [vmem:[%s332 + $0xd0] sm:$0xff] %v9800
      %9849 = vst [vmem:[%s332 + $0xd8] sm:$0xff] %v9801
      %9850 = vst [vmem:[%s332 + $0xe0] sm:$0xff] %v9802
      %9851 = vst [vmem:[%s332 + $0xe8] sm:$0xff] %v9803
      %9852 = vst [vmem:[%s332 + $0xf0] sm:$0xff] %v9804
      %9853 = vst [vmem:[%s332 + $0xf8] sm:$0xff] %v9805
      %9854 = vst [vmem:[%s332 + $0x100] sm:$0xff] %v9806
      %9855 = vst [vmem:[%s332 + $0x108] sm:$0xff] %v9807
      %9856 = vst [vmem:[%s332 + $0x110] sm:$0xff] %v9808
      %9857 = vst [vmem:[%s332 + $0x118] sm:$0xff] %v9809
      %9858 = vst [vmem:[%s332 + $0x120] sm:$0xff] %v9810
      %9859 = vst [vmem:[%s332 + $0x128] sm:$0xff] %v9811
      %9860 = vst [vmem:[%s332 + $0x130] sm:$0xff] %v9812
      %9861 = vst [vmem:[%s332 + $0x138] sm:$0xff] %v9813
      %9862 = vst [vmem:[%s332 + $0x140] sm:$0xff] %v9814
      %9863 = vst [vmem:[%s332 + $0x148] sm:$0xff] %v9815
      %9864 = vst [vmem:[%s332 + $0x150] sm:$0xff] %v9816
      %9865 = vst [vmem:[%s332 + $0x158] sm:$0xff] %v9817
      %9866 = vst [vmem:[%s332 + $0x160] sm:$0xff] %v9818
      %9867 = vst [vmem:[%s332 + $0x168] sm:$0xff] %v9819
      %9868 = vst [vmem:[%s332 + $0x170] sm:$0xff] %v9820
      %9869 = vst [vmem:[%s332 + $0x178] sm:$0xff] %v9821
      %p9870 = scmp.lt.s32.totalorder %s20, 1
      %s9871 = scalar_select %p9870, %s20, 1
      %s9872 = smul.addr %s9871, 48
      %s9873 = smul.addr %s9872, 8
      %s9874 = scalar_lea.vmem %s9, %s9873
      // Predicated region
      $region57: #{_unet_proto_forward.1} parent=55 // pred_check
        %p9875 = pneg %p232
      $region58: #{_unet_proto_forward.1} parent=55 // pred_check_branch
        %9877 = sbr.rel (%p9875) target = $region60
      $region59: #{_unet_proto_forward.1} parent=55 // pred_region
        _
      $region60: #{_unet_proto_forward.1} parent=55 // pred_fallthru
        _
    $region56: #{_unet_proto_forward.1} parent=5 // pred_fallthru
      _
    %p9878 = scmp.le.s32.totalorder 2, %s15
    // Predicated region
    $region61: #{_unet_proto_forward.1} parent=5 // pred_check
      %p9879 = pneg %p9878
    $region62: #{_unet_proto_forward.1} parent=5 // pred_check_branch
      %9881 = sbr.rel (%p9879) target = $region64
    $region63: #{_unet_proto_forward.1} parent=5 // pred_region
      %s9882 = ssub.s32 %s15, 2
      // Predicated region
      $region65: #{_unet_proto_forward.1} parent=63 // pred_check
        %p9883 = pneg %p238
      $region66: #{_unet_proto_forward.1} parent=63 // pred_check_branch
        %9885 = sbr.rel (%p9883) target = $region68
      $region67: #{_unet_proto_forward.1} parent=63 // pred_region
        %p9886 = scmp.lt.s32.totalorder %s21, 1
        %s9887 = scalar_select %p9886, %s21, 1
        %s9888 = smul.addr %s9887, 48
        %s9889 = smul.addr %s9888, 8
        %s9890 = scalar_lea.vmem %s9, %s9889
      $region68: #{_unet_proto_forward.1} parent=63 // pred_fallthru
        _
    $region64: #{_unet_proto_forward.1} parent=5 // pred_fallthru
      _
  $region6: #{_unet_proto_forward.1} parent=0 // loop_footer
    %s19 = sadd.s32 1, %s15
  $region7: #{_unet_proto_forward.1} parent=0 // loop_footer_branch
    %14 = sbr.rel target = $region3
  $region8: #{_unet_proto_forward.1} parent=0 // loop_exit
    _

</llo_original>
